<compile_context>
chip_gen: v5e
topology: v5e:2x2
jax: 0.10.0
libtpu: 0.0.40
codegen_flags: <defaults>
</compile_context>

<pallas_src>
import functools
import math

import jax
import jax.numpy as jnp
from jax import lax
from jax.experimental import pallas as pl
from jax.experimental.pallas import tpu as pltpu

LANE = 128


def _full_spec(shape):
    """Whole-array block (same block every grid step -> DMA'd once)."""
    n = len(shape)
    return pl.BlockSpec(shape, lambda *_: (0,) * n)


def _cparams():
    # TODO(synk): on v7x use pltpu.CORE_PARALLEL (or pl.core_map) for the batch
    # axis so the serial GRU recurrence is split across both TensorCores;
    # plain "parallel" does not change codegen there.
    return pltpu.CompilerParams(
        dimension_semantics=("parallel",),
        vmem_limit_bytes=64 * 1024 * 1024)  # raise to 96-128 MiB on v6e


def _sigmoid(x):
    return 1.0 / (1.0 + jnp.exp(-x))


def _pick_batch_tile(b_padded, per_seq_bytes, fixed_bytes,
                     budget_bytes=40 * 1024 * 1024):
    """Largest multiple-of-8 divisor of the (padded) batch whose per-grid-step
    VMEM footprint fits an explicit byte budget (v7x 64 MiB aware)."""
    cands = [d for d in range(b_padded, 7, -1)
             if b_padded % d == 0 and d % 8 == 0]
    for d in cands:
        if fixed_bytes + d * per_seq_bytes <= budget_bytes:
            return d
    return 8


def _pick_tile_m(m, pref=512):
    if m <= pref:
        return m
    for t in range(pref, 7, -8):
        if m % t == 0:
            return t
    return m


# ------------- fused biGRU + linear2 + attention1 + LayerNorm1 -------------
def _bigru_attn1_kernel(x_ref, wi_ref, bi_ref, wh_ref, bh_ref,
                        w2_ref, b2_ref, wq_ref, wk_ref, wv_ref, wo_ref,
                        bq_ref, bk_ref, bv_ref, bo_ref, g_ref, be_ref,
                        o_ref, gif_s, gib_s, hf_s, hb_s, *, num_heads):
    S, TB, D = x_ref.shape
    H = o_ref.shape[-1]
    H3 = 3 * H

    # Hoisted input projections: single (S*TB,768)@(768,768) bf16 matmul for
    # both directions (full MXU lane util), f32 accumulate, bf16 staging.
    x2 = x_ref[...].reshape(S * TB, D)                       # bf16 block, no cast
    gi = jnp.dot(x2, wi_ref[...], preferred_element_type=jnp.float32) + bi_ref[...]
    gif_s[...] = gi[:, :H3].reshape(S, TB, H3).astype(jnp.bfloat16)
    gib_s[...] = gi[:, H3:].reshape(S, TB, H3).astype(jnp.bfloat16)

    wh = wh_ref[...]                                         # (2, H, 3H) [fwd,bwd]
    bh = bh_ref[...]                                         # (2, 1, 3H)

    def step(t, h):          # h: (2, TB, H); dir0 fwd @ t, dir1 bwd @ S-1-t
        tb = S - 1 - t
        gf = gif_s[t].astype(jnp.float32)                    # contiguous (TB,3H) slab
        gb = gib_s[tb].astype(jnp.float32)
        gi_t = jnp.stack([gf, gb], axis=0)                   # (2, TB, 3H)
        gh = lax.dot_general(h, wh, (((2,), (1,)), ((0,), (0,))),
                             preferred_element_type=jnp.float32) + bh
        # PyTorch GRU gate order r | z | n (gate math kept f32)
        r = _sigmoid(gi_t[..., :H] + gh[..., :H])
        z = _sigmoid(gi_t[..., H:2 * H] + gh[..., H:2 * H])
        n = jnp.tanh(gi_t[..., 2 * H:] + r * gh[..., 2 * H:])
        h_new = (1.0 - z) * n + z * h
        hf_s[t] = h_new[0]                                   # full-lane (TB,H) stores
        hb_s[tb] = h_new[1]
        return h_new

    lax.fori_loop(0, S, step, jnp.zeros((2, TB, H), jnp.float32))

    # Fused linear2 (split-K over [fwd | bwd], no lane concat).
    lf = hf_s[...].reshape(S * TB, H)
    lb = hb_s[...].reshape(S * TB, H)
    w2 = w2_ref[...]
    lin2 = (jnp.dot(lf, w2[:H, :], preferred_element_type=jnp.float32)
            + jnp.dot(lb, w2[H:, :], preferred_element_type=jnp.float32)
            + b2_ref[...])                                   # (S*TB, H)

    # Fused MHA (batched q/k/v projections, per-sequence scores) + LayerNorm1.
    q = jnp.dot(lin2, wq_ref[...], preferred_element_type=jnp.float32) + bq_ref[...]
    k = jnp.dot(lin2, wk_ref[...], preferred_element_type=jnp.float32) + bk_ref[...]
    v = jnp.dot(lin2, wv_ref[...], preferred_element_type=jnp.float32) + bv_ref[...]
    q3 = q.reshape(S, TB, H)
    k3 = k.reshape(S, TB, H)
    v3 = v.reshape(S, TB, H)
    hd = H // num_heads
    scale = 1.0 / math.sqrt(hd)
    # TODO(synk): batch heads/sequences in one leading-batch dot_general
    # (pltpu.einshape relayout) instead of this static per-sequence unroll.
    ctx_all = []
    for b in range(TB):
        qb = q3[:, b, :] * scale
        kb = k3[:, b, :]
        vb = v3[:, b, :]
        heads = []
        for hI in range(num_heads):
            lo = hI * hd
            s = lax.dot_general(qb[:, lo:lo + hd], kb[:, lo:lo + hd],
                                (((1,), (1,)), ((), ())),
                                preferred_element_type=jnp.float32)   # (S, S)
            s = s - jnp.max(s, axis=-1, keepdims=True)
            pm = jnp.exp(s)
            pm = pm * pl.reciprocal(jnp.sum(pm, axis=-1, keepdims=True),
                                    approx=True)
            heads.append(jnp.dot(pm, vb[:, lo:lo + hd],
                                 preferred_element_type=jnp.float32))
        ctx_all.append(jnp.concatenate(heads, axis=-1))               # (S, H)
    ctx = jnp.stack(ctx_all, axis=0)                                  # (TB, S, H)
    attn = (jnp.dot(ctx.reshape(TB * S, H), wo_ref[...],
                    preferred_element_type=jnp.float32) + bo_ref[...])
    mu = jnp.mean(attn, axis=-1, keepdims=True)
    var = jnp.mean(jnp.square(attn - mu), axis=-1, keepdims=True)
    yn = (attn - mu) * lax.rsqrt(var + 1e-5) * g_ref[...] + be_ref[...]
    o_ref[...] = yn.reshape(TB, S, H)


def bigru_attn1(x, p, num_heads=2):
    S, B, D = x.shape                                        # time-major bf16
    H = p['lin2_w'].shape[1]
    per_seq = (2 * S * D * 2            # double-buffered bf16 x block
               + 2 * S * 3 * H * 2      # bf16 gate scratches (fwd + bwd)
               + 2 * S * H * 4          # f32 hidden-state scratches
               + 2 * S * H * 4)         # double-buffered f32 output block
    TB = _pick_batch_tile(B, per_seq, fixed_bytes=4 << 20)
    weights = [p['gru_wi'], p['gru_bi'], p['gru_wh'], p['gru_bh'],
               p['lin2_w'], p['lin2_b'],
               p['attn1_wq'], p['attn1_wk'], p['attn1_wv'], p['attn1_wo'],
               p['attn1_bq'], p['attn1_bk'], p['attn1_bv'], p['attn1_bo'],
               p['ln1_g'], p['ln1_b']]
    kern = functools.partial(_bigru_attn1_kernel, num_heads=num_heads)
    return pl.pallas_call(
        kern,
        out_shape=jax.ShapeDtypeStruct((B, S, H), jnp.float32),
        grid=(B // TB,),
        in_specs=[pl.BlockSpec((S, TB, D), lambda b: (0, b, 0))]
                 + [_full_spec(w.shape) for w in weights],
        out_specs=pl.BlockSpec((TB, S, H), lambda b: (b, 0, 0)),
        scratch_shapes=[
            pltpu.VMEM((S, TB, 3 * H), jnp.bfloat16),   # gi forward (time-major)
            pltpu.VMEM((S, TB, 3 * H), jnp.bfloat16),   # gi backward
            pltpu.VMEM((S, TB, H), jnp.float32),        # fwd hidden states
            pltpu.VMEM((S, TB, H), jnp.float32),        # bwd hidden states
        ],
        compiler_params=_cparams(),
    )(x, *weights)


# -- fused 3x Conv1d(k=3,p=1)+ReLU + linear1 + attention2 + LayerNorm2 (padded) --
def _conv_attn2_kernel(x_ref, w_ref, b_ref, w1_ref, b1_ref,
                       wq_ref, wk_ref, wv_ref, wo_ref,
                       bq_ref, bk_ref, bv_ref, bo_ref, g_ref, be_ref,
                       o_ref, *, num_heads):
    S, TB, D = x_ref.shape
    C3 = w_ref.shape[-1]                 # 192 = 3 convs x 64 channels
    E = w1_ref.shape[-1]                 # 64
    EP = o_ref.shape[-1]                 # 128 (lane-padded output)
    R = S * TB

    x = x_ref[...].reshape(R, D)                              # bf16, no cast
    # out[t] = x[t-1]@w0 + x[t]@w1 + x[t+1]@w2 (zero-padded boundaries);
    # with time-major rows a +/-1 time shift is +/-TB rows of the flat matmuls.
    y0 = jnp.dot(x, w_ref[0], preferred_element_type=jnp.float32)
    y1 = jnp.dot(x, w_ref[1], preferred_element_type=jnp.float32)
    y2 = jnp.dot(x, w_ref[2], preferred_element_type=jnp.float32)
    zpad = jnp.zeros((TB, C3), jnp.float32)
    left = jnp.concatenate([zpad, y0[:R - TB, :]], axis=0)     # y0 shifted to t-1
    right = jnp.concatenate([y2[TB:, :], zpad], axis=0)        # y2 shifted to t+1
    # TODO(synk): pltpu.roll(+iota mask) would move these shifts to the XLU slot.
    h = jnp.maximum(y1 + left + right + b_ref[...], 0.0)       # (R, 192) conv+ReLU
    lin1 = (jnp.dot(h, w1_ref[...], preferred_element_type=jnp.float32)
            + b1_ref[...])                                     # (R, 64)

    # Fused MHA (nh=2, hd=32) + LayerNorm2 at native 64 width.
    q = jnp.dot(lin1, wq_ref[...], preferred_element_type=jnp.float32) + bq_ref[...]
    k = jnp.dot(lin1, wk_ref[...], preferred_element_type=jnp.float32) + bk_ref[...]
    v = jnp.dot(lin1, wv_ref[...], preferred_element_type=jnp.float32) + bv_ref[...]
    q3 = q.reshape(S, TB, E)
    k3 = k.reshape(S, TB, E)
    v3 = v.reshape(S, TB, E)
    hd = E // num_heads
    scale = 1.0 / math.sqrt(hd)
    ctx_all = []
    for b in range(TB):
        qb = q3[:, b, :] * scale
        kb = k3[:, b, :]
        vb = v3[:, b, :]
        heads = []
        for hI in range(num_heads):
            lo = hI * hd
            s = lax.dot_general(qb[:, lo:lo + hd], kb[:, lo:lo + hd],
                                (((1,), (1,)), ((), ())),
                                preferred_element_type=jnp.float32)
            s = s - jnp.max(s, axis=-1, keepdims=True)
            pm = jnp.exp(s)
            pm = pm * pl.reciprocal(jnp.sum(pm, axis=-1, keepdims=True),
                                    approx=True)
            heads.append(jnp.dot(pm, vb[:, lo:lo + hd],
                                 preferred_element_type=jnp.float32))
        ctx_all.append(jnp.concatenate(heads, axis=-1))        # (S, E)
    ctx = jnp.stack(ctx_all, axis=0)                           # (TB, S, E)
    attn = (jnp.dot(ctx.reshape(TB * S, E), wo_ref[...],
                    preferred_element_type=jnp.float32) + bo_ref[...])
    mu = jnp.mean(attn, axis=-1, keepdims=True)
    var = jnp.mean(jnp.square(attn - mu), axis=-1, keepdims=True)
    yn = (attn - mu) * lax.rsqrt(var + 1e-5) * g_ref[...] + be_ref[...]
    yn = yn.reshape(TB, S, E)
    # Lane-pad the 64-wide branch output to 128 so the HBM store is lane-dense.
    o_ref[...] = jnp.concatenate(
        [yn, jnp.zeros((TB, S, EP - E), jnp.float32)], axis=-1)


def conv_attn2(x, p, num_heads=2, out_pad=LANE):
    S, B, D = x.shape                                          # time-major bf16
    E = p['lin1_w'].shape[1]
    C3 = p['conv_w'].shape[-1]
    per_seq = (2 * S * D * 2            # double-buffered bf16 x block
               + 2 * S * out_pad * 4    # double-buffered padded f32 output
               + 4 * S * C3 * 4         # conv tap intermediates
               + 6 * S * E * 4)         # lin1 / q / k / v / ctx values
    TB = _pick_batch_tile(B, per_seq, fixed_bytes=4 << 20)
    weights = [p['conv_w'], p['conv_b'], p['lin1_w'], p['lin1_b'],
               p['attn2_wq'], p['attn2_wk'], p['attn2_wv'], p['attn2_wo'],
               p['attn2_bq'], p['attn2_bk'], p['attn2_bv'], p['attn2_bo'],
               p['ln2_g'], p['ln2_b']]
    kern = functools.partial(_conv_attn2_kernel, num_heads=num_heads)
    return pl.pallas_call(
        kern,
        out_shape=jax.ShapeDtypeStruct((B, S, out_pad), jnp.float32),
        grid=(B // TB,),
        in_specs=[pl.BlockSpec((S, TB, D), lambda b: (0, b, 0))]
                 + [_full_spec(w.shape) for w in weights],
        out_specs=pl.BlockSpec((TB, S, out_pad), lambda b: (b, 0, 0)),
        compiler_params=_cparams(),
    )(x, *weights)


# --------------- final classifier: split-K, lane-padded logits ---------------
def _fc_kernel(a1_ref, a2_ref, w1_ref, w2_ref, b_ref, o_ref):
    o_ref[...] = (jnp.dot(a1_ref[...], w1_ref[...],
                          preferred_element_type=jnp.float32)
                  + jnp.dot(a2_ref[...], w2_ref[...],
                            preferred_element_type=jnp.float32)
                  + b_ref[...])


def fc_head(attn1, attn2p, p, num_labels):
    B, S, H = attn1.shape
    EP = attn2p.shape[-1]
    M = B * S
    N = p['fc_w1_pad'].shape[1]                 # 128 lane-dense padded logits
    a1 = attn1.reshape(M, H)
    a2 = attn2p.reshape(M, EP)
    TM = _pick_tile_m(M)
    out = pl.pallas_call(
        _fc_kernel,
        out_shape=jax.ShapeDtypeStruct((M, N), jnp.float32),
        grid=(M // TM,),
        in_specs=[pl.BlockSpec((TM, H), lambda i: (i, 0)),
                  pl.BlockSpec((TM, EP), lambda i: (i, 0)),
                  _full_spec(p['fc_w1_pad'].shape),
                  _full_spec(p['fc_w2_pad'].shape),
                  _full_spec(p['fc_b_pad'].shape)],
        out_specs=pl.BlockSpec((TM, N), lambda i: (i, 0)),
        compiler_params=_cparams(),
    )(a1, a2, p['fc_w1_pad'], p['fc_w2_pad'], p['fc_b_pad'])
    return out[:, :num_labels].reshape(B, S, num_labels)


# ----------------------------- parameters & forward -----------------------------
def init_params(key, vocab_size=32, d_model=768, conv_c=64, lstm_h=128,
                num_labels=51, padded_labels=128):
    ks = iter(jax.random.split(key, 48))

    def nrm(shape, scale=0.02, dtype=jnp.float32):
        return (scale * jax.random.normal(next(ks), shape, jnp.float32)).astype(dtype)

    p = {}
    # TODO(synk): the pretrained BertModel encoder has no in-script equivalent;
    # a deterministic bf16 embedding lookup stands in for bert(...).last_hidden_state.
    p['emb'] = nrm((vocab_size, d_model), 1.0, jnp.bfloat16)

    # Bidirectional GRU (PyTorch gate order r|z|n).  Input-projection weights of
    # both directions are concatenated on N -> one full-width bf16 MXU matmul.
    p['gru_wi'] = nrm((d_model, 6 * lstm_h), dtype=jnp.bfloat16)  # [fwd | bwd]
    p['gru_bi'] = nrm((1, 6 * lstm_h))
    p['gru_wh'] = nrm((2, lstm_h, 3 * lstm_h))                    # [fwd, bwd]
    p['gru_bh'] = nrm((2, 1, 3 * lstm_h))

    # Three Conv1d(768->64, k=3, pad=1) stacked on output channels (3,768,192);
    # channel order [conv1 | conv2 | conv3] matches torch.cat((c1,c2,c3), dim=1).
    p['conv_w'] = nrm((3, d_model, 3 * conv_c), dtype=jnp.bfloat16)
    p['conv_b'] = nrm((1, 3 * conv_c))
    p['lin1_w'] = nrm((3 * conv_c, conv_c))
    p['lin1_b'] = nrm((1, conv_c))
    p['lin2_w'] = nrm((2 * lstm_h, lstm_h))
    p['lin2_b'] = nrm((1, lstm_h))

    for name, E in (('attn1', lstm_h), ('attn2', conv_c)):
        for w in ('wq', 'wk', 'wv', 'wo'):
            p[f'{name}_{w}'] = nrm((E, E))
        for b in ('bq', 'bk', 'bv', 'bo'):
            p[f'{name}_{b}'] = nrm((1, E))
    p['ln1_g'] = jnp.ones((1, lstm_h), jnp.float32)
    p['ln1_b'] = jnp.zeros((1, lstm_h), jnp.float32)
    p['ln2_g'] = jnp.ones((1, conv_c), jnp.float32)
    p['ln2_b'] = jnp.zeros((1, conv_c), jnp.float32)

    # Classifier split along K ([attn1 | attn2]) and lane-padded to 128 labels;
    # the attn2 K-block is row-padded to 128 to match the lane-padded branch.
    fc_w = nrm((lstm_h + conv_c, num_labels))
    fc_b = nrm((1, num_labels))
    pad_n = padded_labels - num_labels
    p['fc_w1_pad'] = jnp.pad(fc_w[:lstm_h], ((0, 0), (0, pad_n)))
    p['fc_w2_pad'] = jnp.pad(fc_w[lstm_h:], ((0, LANE - conv_c), (0, pad_n)))
    p['fc_b_pad'] = jnp.pad(fc_b, ((0, 0), (0, pad_n)))
    return p


def bert_seq_tagger_forward(input_ids, p, num_labels=51):
    B, S = input_ids.shape
    # TODO(synk): bf16 embedding lookup stands in for the BERT encoder output;
    # it is gathered time-major so both branch kernels see contiguous per-step
    # slabs.  Dropout layers are identity (eval semantics).
    seq_out = p['emb'][jnp.transpose(input_ids)]               # (S, B, 768) bf16
    b_pad = ((B + 7) // 8) * 8                                 # sublane-friendly tiles
    if b_pad != B:
        seq_out = jnp.pad(seq_out, ((0, 0), (0, b_pad - B), (0, 0)))

    attn1 = bigru_attn1(seq_out, p)[:B]                        # (B, S, 128)
    attn2p = conv_attn2(seq_out, p)[:B]                        # (B, S, 128), lanes 64: zero
    return fc_head(attn1, attn2p, p, num_labels)               # (B, S, 51)


if __name__ == "__main__":
    key = jax.random.PRNGKey(0)
    pkey, dkey = jax.random.split(key)
    params = init_params(pkey)

    B, S, vocab = 2, 8, 32
    input_ids = jax.random.randint(dkey, (B, S), 0, vocab, dtype=jnp.int32)

    logits = jax.jit(bert_seq_tagger_forward)(input_ids, params)
    jax.block_until_ready(logits)
    assert logits.shape == (B, S, 51), logits.shape
    assert bool(jnp.all(jnp.isfinite(logits)))
    print("KERNEL_OK")
</pallas_src>

<mosaic_0001>
module attributes {stable_mosaic.version = 11 : i64} {
  func.func @_bigru_attn1_kernel(%arg0: i32, %arg1: memref<8x8x768xbf16, #tpu.memory_space<vmem>>, %arg2: memref<768x768xbf16, #tpu.memory_space<vmem>>, %arg3: memref<1x768xf32, #tpu.memory_space<vmem>>, %arg4: memref<2x128x384xf32, #tpu.memory_space<vmem>>, %arg5: memref<2x1x384xf32, #tpu.memory_space<vmem>>, %arg6: memref<256x128xf32, #tpu.memory_space<vmem>>, %arg7: memref<1x128xf32, #tpu.memory_space<vmem>>, %arg8: memref<128x128xf32, #tpu.memory_space<vmem>>, %arg9: memref<128x128xf32, #tpu.memory_space<vmem>>, %arg10: memref<128x128xf32, #tpu.memory_space<vmem>>, %arg11: memref<128x128xf32, #tpu.memory_space<vmem>>, %arg12: memref<1x128xf32, #tpu.memory_space<vmem>>, %arg13: memref<1x128xf32, #tpu.memory_space<vmem>>, %arg14: memref<1x128xf32, #tpu.memory_space<vmem>>, %arg15: memref<1x128xf32, #tpu.memory_space<vmem>>, %arg16: memref<1x128xf32, #tpu.memory_space<vmem>>, %arg17: memref<1x128xf32, #tpu.memory_space<vmem>>, %arg18: memref<8x8x128xf32, #tpu.memory_space<vmem>>, %arg19: memref<8x8x384xbf16, #tpu.memory_space<vmem>>, %arg20: memref<8x8x384xbf16, #tpu.memory_space<vmem>>, %arg21: memref<8x8x128xf32, #tpu.memory_space<vmem>>, %arg22: memref<8x8x128xf32, #tpu.memory_space<vmem>>) attributes {dimension_semantics = [#tpu.dimension_semantics<parallel>], iteration_bounds = array<i64: 1>, scalar_prefetch = 0 : i64, scratch_operands = 4 : i64, tpu.core_type = #tpu.core_type<tc>, window_params = [{transform_indices = @transform_0, window_bounds = array<i64: 8, 8, 768>}, {pipeline_mode = #tpu.pipeline_mode<synchronous>, transform_indices = @transform_1, window_bounds = array<i64: 768, 768>}, {pipeline_mode = #tpu.pipeline_mode<synchronous>, transform_indices = @transform_2, window_bounds = array<i64: 1, 768>}, {pipeline_mode = #tpu.pipeline_mode<synchronous>, transform_indices = @transform_3, window_bounds = array<i64: 2, 128, 384>}, {pipeline_mode = #tpu.pipeline_mode<synchronous>, transform_indices = @transform_4, window_bounds = array<i64: 2, 1, 384>}, {pipeline_mode = #tpu.pipeline_mode<synchronous>, transform_indices = @transform_5, window_bounds = array<i64: 256, 128>}, {pipeline_mode = #tpu.pipeline_mode<synchronous>, transform_indices = @transform_6, window_bounds = array<i64: 1, 128>}, {pipeline_mode = #tpu.pipeline_mode<synchronous>, transform_indices = @transform_7, window_bounds = array<i64: 128, 128>}, {pipeline_mode = #tpu.pipeline_mode<synchronous>, transform_indices = @transform_8, window_bounds = array<i64: 128, 128>}, {pipeline_mode = #tpu.pipeline_mode<synchronous>, transform_indices = @transform_9, window_bounds = array<i64: 128, 128>}, {pipeline_mode = #tpu.pipeline_mode<synchronous>, transform_indices = @transform_10, window_bounds = array<i64: 128, 128>}, {pipeline_mode = #tpu.pipeline_mode<synchronous>, transform_indices = @transform_11, window_bounds = array<i64: 1, 128>}, {pipeline_mode = #tpu.pipeline_mode<synchronous>, transform_indices = @transform_12, window_bounds = array<i64: 1, 128>}, {pipeline_mode = #tpu.pipeline_mode<synchronous>, transform_indices = @transform_13, window_bounds = array<i64: 1, 128>}, {pipeline_mode = #tpu.pipeline_mode<synchronous>, transform_indices = @transform_14, window_bounds = array<i64: 1, 128>}, {pipeline_mode = #tpu.pipeline_mode<synchronous>, transform_indices = @transform_15, window_bounds = array<i64: 1, 128>}, {pipeline_mode = #tpu.pipeline_mode<synchronous>, transform_indices = @transform_16, window_bounds = array<i64: 1, 128>}, {transform_indices = @transform_17, window_bounds = array<i64: 8, 8, 128>}]} {
    %c0 = arith.constant 0 : index
    %c0_0 = arith.constant 0 : index
    %c0_1 = arith.constant 0 : index
    %0 = vector.load %arg1[%c0, %c0_0, %c0_1] : memref<8x8x768xbf16, #tpu.memory_space<vmem>>, vector<8x8x768xbf16>
    %1 = vector.shape_cast %0 : vector<8x8x768xbf16> to vector<64x768xbf16>
    %c0_2 = arith.constant 0 : index
    %c0_3 = arith.constant 0 : index
    %2 = vector.load %arg2[%c0_2, %c0_3] : memref<768x768xbf16, #tpu.memory_space<vmem>>, vector<768x768xbf16>
    %cst = arith.constant dense<0.000000e+00> : vector<64x768xf32>
    %3 = tpu.matmul %1, %2, %cst {dimension_numbers = #tpu.dot_dimension_numbers<[1], [0], [0], [1], [0, 0, 1, 1], [], []>} : vector<64x768xbf16>, vector<768x768xbf16>, vector<64x768xf32> -> vector<64x768xf32>
    %c0_4 = arith.constant 0 : index
    %c0_5 = arith.constant 0 : index
    %4 = vector.load %arg3[%c0_4, %c0_5] : memref<1x768xf32, #tpu.memory_space<vmem>>, vector<1x768xf32>
    %5 = vector.broadcast %4 : vector<1x768xf32> to vector<64x768xf32>
    %6 = arith.addf %3, %5 : vector<64x768xf32>
    %7 = vector.extract_strided_slice %6 {offsets = [0, 0], sizes = [64, 384], strides = [1, 1]} : vector<64x768xf32> to vector<64x384xf32>
    %8 = vector.shape_cast %7 : vector<64x384xf32> to vector<8x8x384xf32>
    %9 = arith.truncf %8 : vector<8x8x384xf32> to vector<8x8x384xbf16>
    %c0_6 = arith.constant 0 : index
    %c0_7 = arith.constant 0 : index
    %c0_8 = arith.constant 0 : index
    %10 = vector.load %arg19[%c0_6, %c0_7, %c0_8] : memref<8x8x384xbf16, #tpu.memory_space<vmem>>, vector<8x8x384xbf16>
    tpu.vector_store %arg19[%c0_6, %c0_7, %c0_8], %9 {strides = array<i32>} : memref<8x8x384xbf16, #tpu.memory_space<vmem>>, vector<8x8x384xbf16>,
    %11 = vector.extract_strided_slice %6 {offsets = [0, 384], sizes = [64, 384], strides = [1, 1]} : vector<64x768xf32> to vector<64x384xf32>
    %12 = vector.shape_cast %11 : vector<64x384xf32> to vector<8x8x384xf32>
    %13 = arith.truncf %12 : vector<8x8x384xf32> to vector<8x8x384xbf16>
    %c0_9 = arith.constant 0 : index
    %c0_10 = arith.constant 0 : index
    %c0_11 = arith.constant 0 : index
    %14 = vector.load %arg20[%c0_9, %c0_10, %c0_11] : memref<8x8x384xbf16, #tpu.memory_space<vmem>>, vector<8x8x384xbf16>
    tpu.vector_store %arg20[%c0_9, %c0_10, %c0_11], %13 {strides = array<i32>} : memref<8x8x384xbf16, #tpu.memory_space<vmem>>, vector<8x8x384xbf16>,
    %c0_12 = arith.constant 0 : index
    %c0_13 = arith.constant 0 : index
    %c0_14 = arith.constant 0 : index
    %15 = vector.load %arg4[%c0_12, %c0_13, %c0_14] : memref<2x128x384xf32, #tpu.memory_space<vmem>>, vector<2x128x384xf32>
    %c0_15 = arith.constant 0 : index
    %c0_16 = arith.constant 0 : index
    %c0_17 = arith.constant 0 : index
    %16 = vector.load %arg5[%c0_15, %c0_16, %c0_17] : memref<2x1x384xf32, #tpu.memory_space<vmem>>, vector<2x1x384xf32>
    %cst_18 = arith.constant 0.000000e+00 : f32
    %17 = vector.broadcast %cst_18 : f32 to vector<2x8x128xf32>
    %c0_i32 = arith.constant 0 : i32
    %c8_i32 = arith.constant 8 : i32
    %18 = arith.addi %c0_i32, %c8_i32 : i32
    %c1_i32 = arith.constant 1 : i32
    %19 = scf.for %arg23 = %c0_i32 to %18 step %c1_i32 iter_args(%arg24 = %17) -> (vector<2x8x128xf32>)  : i32 {
      %c7_i32 = arith.constant 7 : i32
      %404 = arith.subi %c7_i32, %arg23 : i32
      %405 = arith.index_cast %arg23 : i32 to index
      %c0_136 = arith.constant 0 : index
      %c0_137 = arith.constant 0 : index
      %406 = vector.load %arg19[%405, %c0_136, %c0_137] : memref<8x8x384xbf16, #tpu.memory_space<vmem>>, vector<1x8x384xbf16>
      %407 = vector.shape_cast %406 : vector<1x8x384xbf16> to vector<8x384xbf16>
      %408 = arith.extf %407 : vector<8x384xbf16> to vector<8x384xf32>
      %409 = arith.index_cast %404 : i32 to index
      %c0_138 = arith.constant 0 : index
      %c0_139 = arith.constant 0 : index
      %410 = vector.load %arg20[%409, %c0_138, %c0_139] : memref<8x8x384xbf16, #tpu.memory_space<vmem>>, vector<1x8x384xbf16>
      %411 = vector.shape_cast %410 : vector<1x8x384xbf16> to vector<8x384xbf16>
      %412 = arith.extf %411 : vector<8x384xbf16> to vector<8x384xf32>
      %413 = vector.shape_cast %408 : vector<8x384xf32> to vector<1x8x384xf32>
      %414 = vector.shape_cast %412 : vector<8x384xf32> to vector<1x8x384xf32>
      %415 = tpu.concatenate %413, %414 in 0 : vector<1x8x384xf32>, vector<1x8x384xf32> -> vector<2x8x384xf32>
      %cst_140 = arith.constant dense<0.000000e+00> : vector<2x8x384xf32>
      %416 = tpu.matmul %arg24, %15, %cst_140 {dimension_numbers = #tpu.dot_dimension_numbers<[2], [1], [1], [2], [0, 0, 0, 1, 1, 2], [0], [0]>} : vector<2x8x128xf32>, vector<2x128x384xf32>, vector<2x8x384xf32> -> vector<2x8x384xf32>
      %417 = vector.broadcast %16 : vector<2x1x384xf32> to vector<2x8x384xf32>
      %418 = arith.addf %416, %417 : vector<2x8x384xf32>
      %419 = vector.extract_strided_slice %415 {offsets = [0, 0, 0], sizes = [2, 8, 128], strides = [1, 1, 1]} : vector<2x8x384xf32> to vector<2x8x128xf32>
      %420 = vector.extract_strided_slice %418 {offsets = [0, 0, 0], sizes = [2, 8, 128], strides = [1, 1, 1]} : vector<2x8x384xf32> to vector<2x8x128xf32>
      %421 = arith.addf %419, %420 : vector<2x8x128xf32>
      %cst_141 = arith.constant 0.000000e+00 : f32
      %422 = vector.broadcast %cst_141 : f32 to vector<2x8x128xf32>
      %423 = arith.subf %422, %421 : vector<2x8x128xf32>
      %424 = math.exp %423 : vector<2x8x128xf32>
      %cst_142 = arith.constant 1.000000e+00 : f32
      %425 = vector.broadcast %cst_142 : f32 to vector<2x8x128xf32>
      %426 = arith.addf %425, %424 : vector<2x8x128xf32>
      %cst_143 = arith.constant 1.000000e+00 : f32
      %427 = vector.broadcast %cst_143 : f32 to vector<2x8x128xf32>
      %428 = arith.divf %427, %426 : vector<2x8x128xf32>
      %429 = vector.extract_strided_slice %415 {offsets = [0, 0, 128], sizes = [2, 8, 128], strides = [1, 1, 1]} : vector<2x8x384xf32> to vector<2x8x128xf32>
      %430 = vector.extract_strided_slice %418 {offsets = [0, 0, 128], sizes = [2, 8, 128], strides = [1, 1, 1]} : vector<2x8x384xf32> to vector<2x8x128xf32>
      %431 = arith.addf %429, %430 : vector<2x8x128xf32>
      %cst_144 = arith.constant 0.000000e+00 : f32
      %432 = vector.broadcast %cst_144 : f32 to vector<2x8x128xf32>
      %433 = arith.subf %432, %431 : vector<2x8x128xf32>
      %434 = math.exp %433 : vector<2x8x128xf32>
      %cst_145 = arith.constant 1.000000e+00 : f32
      %435 = vector.broadcast %cst_145 : f32 to vector<2x8x128xf32>
      %436 = arith.addf %435, %434 : vector<2x8x128xf32>
      %cst_146 = arith.constant 1.000000e+00 : f32
      %437 = vector.broadcast %cst_146 : f32 to vector<2x8x128xf32>
      %438 = arith.divf %437, %436 : vector<2x8x128xf32>
      %439 = vector.extract_strided_slice %415 {offsets = [0, 0, 256], sizes = [2, 8, 128], strides = [1, 1, 1]} : vector<2x8x384xf32> to vector<2x8x128xf32>
      %440 = vector.extract_strided_slice %418 {offsets = [0, 0, 256], sizes = [2, 8, 128], strides = [1, 1, 1]} : vector<2x8x384xf32> to vector<2x8x128xf32>
      %441 = arith.mulf %428, %440 : vector<2x8x128xf32>
      %442 = arith.addf %439, %441 : vector<2x8x128xf32>
      %443 = math.tanh %442 : vector<2x8x128xf32>
      %cst_147 = arith.constant 1.000000e+00 : f32
      %444 = vector.broadcast %cst_147 : f32 to vector<2x8x128xf32>
      %445 = arith.subf %444, %438 : vector<2x8x128xf32>
      %446 = arith.mulf %445, %443 : vector<2x8x128xf32>
      %447 = arith.mulf %438, %arg24 : vector<2x8x128xf32>
      %448 = arith.addf %446, %447 : vector<2x8x128xf32>
      %449 = vector.extract_strided_slice %448 {offsets = [0, 0, 0], sizes = [1, 8, 128], strides = [1, 1, 1]} : vector<2x8x128xf32> to vector<1x8x128xf32>
      %450 = vector.shape_cast %449 : vector<1x8x128xf32> to vector<8x128xf32>
      %451 = arith.index_cast %arg23 : i32 to index
      %c0_148 = arith.constant 0 : index
      %c0_149 = arith.constant 0 : index
      %452 = vector.load %arg21[%451, %c0_148, %c0_149] : memref<8x8x128xf32, #tpu.memory_space<vmem>>, vector<1x8x128xf32>
      %453 = vector.shape_cast %452 : vector<1x8x128xf32> to vector<8x128xf32>
      %454 = vector.shape_cast %450 : vector<8x128xf32> to vector<1x8x128xf32>
      tpu.vector_store %arg21[%451, %c0_148, %c0_149], %454 {strides = array<i32>} : memref<8x8x128xf32, #tpu.memory_space<vmem>>, vector<1x8x128xf32>,
      %455 = vector.extract_strided_slice %448 {offsets = [1, 0, 0], sizes = [1, 8, 128], strides = [1, 1, 1]} : vector<2x8x128xf32> to vector<1x8x128xf32>
      %456 = vector.shape_cast %455 : vector<1x8x128xf32> to vector<8x128xf32>
      %457 = arith.index_cast %404 : i32 to index
      %c0_150 = arith.constant 0 : index
      %c0_151 = arith.constant 0 : index
      %458 = vector.load %arg22[%457, %c0_150, %c0_151] : memref<8x8x128xf32, #tpu.memory_space<vmem>>, vector<1x8x128xf32>
      %459 = vector.shape_cast %458 : vector<1x8x128xf32> to vector<8x128xf32>
      %460 = vector.shape_cast %456 : vector<8x128xf32> to vector<1x8x128xf32>
      tpu.vector_store %arg22[%457, %c0_150, %c0_151], %460 {strides = array<i32>} : memref<8x8x128xf32, #tpu.memory_space<vmem>>, vector<1x8x128xf32>,
      scf.yield %448 : vector<2x8x128xf32>
    }
    %c8_i32_19 = arith.constant 8 : i32
    %c0_20 = arith.constant 0 : index
    %c0_21 = arith.constant 0 : index
    %c0_22 = arith.constant 0 : index
    %20 = vector.load %arg21[%c0_20, %c0_21, %c0_22] : memref<8x8x128xf32, #tpu.memory_space<vmem>>, vector<8x8x128xf32>
    %21 = vector.shape_cast %20 : vector<8x8x128xf32> to vector<64x128xf32>
    %c0_23 = arith.constant 0 : index
    %c0_24 = arith.constant 0 : index
    %c0_25 = arith.constant 0 : index
    %22 = vector.load %arg22[%c0_23, %c0_24, %c0_25] : memref<8x8x128xf32, #tpu.memory_space<vmem>>, vector<8x8x128xf32>
    %23 = vector.shape_cast %22 : vector<8x8x128xf32> to vector<64x128xf32>
    %c0_26 = arith.constant 0 : index
    %c0_27 = arith.constant 0 : index
    %24 = vector.load %arg6[%c0_26, %c0_27] : memref<256x128xf32, #tpu.memory_space<vmem>>, vector<256x128xf32>
    %25 = vector.extract_strided_slice %24 {offsets = [0, 0], sizes = [128, 128], strides = [1, 1]} : vector<256x128xf32> to vector<128x128xf32>
    %cst_28 = arith.constant dense<0.000000e+00> : vector<64x128xf32>
    %26 = tpu.matmul %21, %25, %cst_28 {dimension_numbers = #tpu.dot_dimension_numbers<[1], [0], [0], [1], [0, 0, 1, 1], [], []>} : vector<64x128xf32>, vector<128x128xf32>, vector<64x128xf32> -> vector<64x128xf32>
    %27 = vector.extract_strided_slice %24 {offsets = [128, 0], sizes = [128, 128], strides = [1, 1]} : vector<256x128xf32> to vector<128x128xf32>
    %cst_29 = arith.constant dense<0.000000e+00> : vector<64x128xf32>
    %28 = tpu.matmul %23, %27, %cst_29 {dimension_numbers = #tpu.dot_dimension_numbers<[1], [0], [0], [1], [0, 0, 1, 1], [], []>} : vector<64x128xf32>, vector<128x128xf32>, vector<64x128xf32> -> vector<64x128xf32>
    %29 = arith.addf %26, %28 : vector<64x128xf32>
    %c0_30 = arith.constant 0 : index
    %c0_31 = arith.constant 0 : index
    %30 = vector.load %arg7[%c0_30, %c0_31] : memref<1x128xf32, #tpu.memory_space<vmem>>, vector<1x128xf32>
    %31 = vector.broadcast %30 : vector<1x128xf32> to vector<64x128xf32>
    %32 = arith.addf %29, %31 : vector<64x128xf32>
    %c0_32 = arith.constant 0 : index
    %c0_33 = arith.constant 0 : index
    %33 = vector.load %arg8[%c0_32, %c0_33] : memref<128x128xf32, #tpu.memory_space<vmem>>, vector<128x128xf32>
    %cst_34 = arith.constant dense<0.000000e+00> : vector<64x128xf32>
    %34 = tpu.matmul %32, %33, %cst_34 {dimension_numbers = #tpu.dot_dimension_numbers<[1], [0], [0], [1], [0, 0, 1, 1], [], []>} : vector<64x128xf32>, vector<128x128xf32>, vector<64x128xf32> -> vector<64x128xf32>
    %c0_35 = arith.constant 0 : index
    %c0_36 = arith.constant 0 : index
    %35 = vector.load %arg12[%c0_35, %c0_36] : memref<1x128xf32, #tpu.memory_space<vmem>>, vector<1x128xf32>
    %36 = vector.broadcast %35 : vector<1x128xf32> to vector<64x128xf32>
    %37 = arith.addf %34, %36 : vector<64x128xf32>
    %c0_37 = arith.constant 0 : index
    %c0_38 = arith.constant 0 : index
    %38 = vector.load %arg9[%c0_37, %c0_38] : memref<128x128xf32, #tpu.memory_space<vmem>>, vector<128x128xf32>
    %cst_39 = arith.constant dense<0.000000e+00> : vector<64x128xf32>
    %39 = tpu.matmul %32, %38, %cst_39 {dimension_numbers = #tpu.dot_dimension_numbers<[1], [0], [0], [1], [0, 0, 1, 1], [], []>} : vector<64x128xf32>, vector<128x128xf32>, vector<64x128xf32> -> vector<64x128xf32>
    %c0_40 = arith.constant 0 : index
    %c0_41 = arith.constant 0 : index
    %40 = vector.load %arg13[%c0_40, %c0_41] : memref<1x128xf32, #tpu.memory_space<vmem>>, vector<1x128xf32>
    %41 = vector.broadcast %40 : vector<1x128xf32> to vector<64x128xf32>
    %42 = arith.addf %39, %41 : vector<64x128xf32>
    %c0_42 = arith.constant 0 : index
    %c0_43 = arith.constant 0 : index
    %43 = vector.load %arg10[%c0_42, %c0_43] : memref<128x128xf32, #tpu.memory_space<vmem>>, vector<128x128xf32>
    %cst_44 = arith.constant dense<0.000000e+00> : vector<64x128xf32>
    %44 = tpu.matmul %32, %43, %cst_44 {dimension_numbers = #tpu.dot_dimension_numbers<[1], [0], [0], [1], [0, 0, 1, 1], [], []>} : vector<64x128xf32>, vector<128x128xf32>, vector<64x128xf32> -> vector<64x128xf32>
    %c0_45 = arith.constant 0 : index
    %c0_46 = arith.constant 0 : index
    %45 = vector.load %arg14[%c0_45, %c0_46] : memref<1x128xf32, #tpu.memory_space<vmem>>, vector<1x128xf32>
    %46 = vector.broadcast %45 : vector<1x128xf32> to vector<64x128xf32>
    %47 = arith.addf %44, %46 : vector<64x128xf32>
    %48 = vector.shape_cast %37 : vector<64x128xf32> to vector<8x8x128xf32>
    %49 = vector.shape_cast %42 : vector<64x128xf32> to vector<8x8x128xf32>
    %50 = vector.shape_cast %47 : vector<64x128xf32> to vector<8x8x128xf32>
    %51 = vector.extract_strided_slice %48 {offsets = [0, 0, 0], sizes = [8, 1, 128], strides = [1, 1, 1]} : vector<8x8x128xf32> to vector<8x1x128xf32>
    %52 = vector.shape_cast %51 : vector<8x1x128xf32> to vector<8x128xf32>
    %cst_47 = arith.constant 1.250000e-01 : f32
    %53 = vector.broadcast %cst_47 : f32 to vector<8x128xf32>
    %54 = arith.mulf %52, %53 : vector<8x128xf32>
    %55 = vector.extract_strided_slice %49 {offsets = [0, 0, 0], sizes = [8, 1, 128], strides = [1, 1, 1]} : vector<8x8x128xf32> to vector<8x1x128xf32>
    %56 = vector.shape_cast %55 : vector<8x1x128xf32> to vector<8x128xf32>
    %57 = vector.extract_strided_slice %50 {offsets = [0, 0, 0], sizes = [8, 1, 128], strides = [1, 1, 1]} : vector<8x8x128xf32> to vector<8x1x128xf32>
    %58 = vector.shape_cast %57 : vector<8x1x128xf32> to vector<8x128xf32>
    %59 = vector.extract_strided_slice %54 {offsets = [0, 0], sizes = [8, 64], strides = [1, 1]} : vector<8x128xf32> to vector<8x64xf32>
    %60 = vector.extract_strided_slice %56 {offsets = [0, 0], sizes = [8, 64], strides = [1, 1]} : vector<8x128xf32> to vector<8x64xf32>
    %cst_48 = arith.constant dense<0.000000e+00> : vector<8x8xf32>
    %61 = tpu.matmul %59, %60, %cst_48 {dimension_numbers = #tpu.dot_dimension_numbers<[1], [1], [0], [0], [0, 0, 1, 0], [], []>} : vector<8x64xf32>, vector<8x64xf32>, vector<8x8xf32> -> vector<8x8xf32>
    %cst_49 = arith.constant dense<0xFF800000> : vector<8xf32>
    %62 = vector.multi_reduction <maximumf>, %61, %cst_49 [1] : vector<8x8xf32> to vector<8xf32>
    %63 = vector.shape_cast %62 : vector<8xf32> to vector<8x1xf32>
    %64 = vector.broadcast %63 : vector<8x1xf32> to vector<8x8xf32>
    %65 = arith.subf %61, %64 : vector<8x8xf32>
    %66 = math.exp %65 : vector<8x8xf32>
    %cst_50 = arith.constant dense<0.000000e+00> : vector<8xf32>
    %67 = vector.multi_reduction <add>, %66, %cst_50 [1] : vector<8x8xf32> to vector<8xf32>
    %68 = vector.shape_cast %67 : vector<8xf32> to vector<8x1xf32>
    %69 = tpu.reciprocal %68 {approx = true} : vector<8x1xf32> -> vector<8x1xf32>
    %70 = vector.broadcast %69 : vector<8x1xf32> to vector<8x8xf32>
    %71 = arith.mulf %66, %70 : vector<8x8xf32>
    %72 = vector.extract_strided_slice %58 {offsets = [0, 0], sizes = [8, 64], strides = [1, 1]} : vector<8x128xf32> to vector<8x64xf32>
    %cst_51 = arith.constant dense<0.000000e+00> : vector<8x64xf32>
    %73 = tpu.matmul %71, %72, %cst_51 {dimension_numbers = #tpu.dot_dimension_numbers<[1], [0], [0], [1], [0, 0, 1, 1], [], []>} : vector<8x8xf32>, vector<8x64xf32>, vector<8x64xf32> -> vector<8x64xf32>
    %74 = vector.extract_strided_slice %54 {offsets = [0, 64], sizes = [8, 64], strides = [1, 1]} : vector<8x128xf32> to vector<8x64xf32>
    %75 = vector.extract_strided_slice %56 {offsets = [0, 64], sizes = [8, 64], strides = [1, 1]} : vector<8x128xf32> to vector<8x64xf32>
    %cst_52 = arith.constant dense<0.000000e+00> : vector<8x8xf32>
    %76 = tpu.matmul %74, %75, %cst_52 {dimension_numbers = #tpu.dot_dimension_numbers<[1], [1], [0], [0], [0, 0, 1, 0], [], []>} : vector<8x64xf32>, vector<8x64xf32>, vector<8x8xf32> -> vector<8x8xf32>
    %cst_53 = arith.constant dense<0xFF800000> : vector<8xf32>
    %77 = vector.multi_reduction <maximumf>, %76, %cst_53 [1] : vector<8x8xf32> to vector<8xf32>
    %78 = vector.shape_cast %77 : vector<8xf32> to vector<8x1xf32>
    %79 = vector.broadcast %78 : vector<8x1xf32> to vector<8x8xf32>
    %80 = arith.subf %76, %79 : vector<8x8xf32>
    %81 = math.exp %80 : vector<8x8xf32>
    %cst_54 = arith.constant dense<0.000000e+00> : vector<8xf32>
    %82 = vector.multi_reduction <add>, %81, %cst_54 [1] : vector<8x8xf32> to vector<8xf32>
    %83 = vector.shape_cast %82 : vector<8xf32> to vector<8x1xf32>
    %84 = tpu.reciprocal %83 {approx = true} : vector<8x1xf32> -> vector<8x1xf32>
    %85 = vector.broadcast %84 : vector<8x1xf32> to vector<8x8xf32>
    %86 = arith.mulf %81, %85 : vector<8x8xf32>
    %87 = vector.extract_strided_slice %58 {offsets = [0, 64], sizes = [8, 64], strides = [1, 1]} : vector<8x128xf32> to vector<8x64xf32>
    %cst_55 = arith.constant dense<0.000000e+00> : vector<8x64xf32>
    %88 = tpu.matmul %86, %87, %cst_55 {dimension_numbers = #tpu.dot_dimension_numbers<[1], [0], [0], [1], [0, 0, 1, 1], [], []>} : vector<8x8xf32>, vector<8x64xf32>, vector<8x64xf32> -> vector<8x64xf32>
    %89 = tpu.concatenate %73, %88 in 1 : vector<8x64xf32>, vector<8x64xf32> -> vector<8x128xf32>
    %90 = vector.extract_strided_slice %48 {offsets = [0, 1, 0], sizes = [8, 1, 128], strides = [1, 1, 1]} : vector<8x8x128xf32> to vector<8x1x128xf32>
    %91 = vector.shape_cast %90 : vector<8x1x128xf32> to vector<8x128xf32>
    %cst_56 = arith.constant 1.250000e-01 : f32
    %92 = vector.broadcast %cst_56 : f32 to vector<8x128xf32>
    %93 = arith.mulf %91, %92 : vector<8x128xf32>
    %94 = vector.extract_strided_slice %49 {offsets = [0, 1, 0], sizes = [8, 1, 128], strides = [1, 1, 1]} : vector<8x8x128xf32> to vector<8x1x128xf32>
    %95 = vector.shape_cast %94 : vector<8x1x128xf32> to vector<8x128xf32>
    %96 = vector.extract_strided_slice %50 {offsets = [0, 1, 0], sizes = [8, 1, 128], strides = [1, 1, 1]} : vector<8x8x128xf32> to vector<8x1x128xf32>
    %97 = vector.shape_cast %96 : vector<8x1x128xf32> to vector<8x128xf32>
    %98 = vector.extract_strided_slice %93 {offsets = [0, 0], sizes = [8, 64], strides = [1, 1]} : vector<8x128xf32> to vector<8x64xf32>
    %99 = vector.extract_strided_slice %95 {offsets = [0, 0], sizes = [8, 64], strides = [1, 1]} : vector<8x128xf32> to vector<8x64xf32>
    %cst_57 = arith.constant dense<0.000000e+00> : vector<8x8xf32>
    %100 = tpu.matmul %98, %99, %cst_57 {dimension_numbers = #tpu.dot_dimension_numbers<[1], [1], [0], [0], [0, 0, 1, 0], [], []>} : vector<8x64xf32>, vector<8x64xf32>, vector<8x8xf32> -> vector<8x8xf32>
    %cst_58 = arith.constant dense<0xFF800000> : vector<8xf32>
    %101 = vector.multi_reduction <maximumf>, %100, %cst_58 [1] : vector<8x8xf32> to vector<8xf32>
    %102 = vector.shape_cast %101 : vector<8xf32> to vector<8x1xf32>
    %103 = vector.broadcast %102 : vector<8x1xf32> to vector<8x8xf32>
    %104 = arith.subf %100, %103 : vector<8x8xf32>
    %105 = math.exp %104 : vector<8x8xf32>
    %cst_59 = arith.constant dense<0.000000e+00> : vector<8xf32>
    %106 = vector.multi_reduction <add>, %105, %cst_59 [1] : vector<8x8xf32> to vector<8xf32>
    %107 = vector.shape_cast %106 : vector<8xf32> to vector<8x1xf32>
    %108 = tpu.reciprocal %107 {approx = true} : vector<8x1xf32> -> vector<8x1xf32>
    %109 = vector.broadcast %108 : vector<8x1xf32> to vector<8x8xf32>
    %110 = arith.mulf %105, %109 : vector<8x8xf32>
    %111 = vector.extract_strided_slice %97 {offsets = [0, 0], sizes = [8, 64], strides = [1, 1]} : vector<8x128xf32> to vector<8x64xf32>
    %cst_60 = arith.constant dense<0.000000e+00> : vector<8x64xf32>
    %112 = tpu.matmul %110, %111, %cst_60 {dimension_numbers = #tpu.dot_dimension_numbers<[1], [0], [0], [1], [0, 0, 1, 1], [], []>} : vector<8x8xf32>, vector<8x64xf32>, vector<8x64xf32> -> vector<8x64xf32>
    %113 = vector.extract_strided_slice %93 {offsets = [0, 64], sizes = [8, 64], strides = [1, 1]} : vector<8x128xf32> to vector<8x64xf32>
    %114 = vector.extract_strided_slice %95 {offsets = [0, 64], sizes = [8, 64], strides = [1, 1]} : vector<8x128xf32> to vector<8x64xf32>
    %cst_61 = arith.constant dense<0.000000e+00> : vector<8x8xf32>
    %115 = tpu.matmul %113, %114, %cst_61 {dimension_numbers = #tpu.dot_dimension_numbers<[1], [1], [0], [0], [0, 0, 1, 0], [], []>} : vector<8x64xf32>, vector<8x64xf32>, vector<8x8xf32> -> vector<8x8xf32>
    %cst_62 = arith.constant dense<0xFF800000> : vector<8xf32>
    %116 = vector.multi_reduction <maximumf>, %115, %cst_62 [1] : vector<8x8xf32> to vector<8xf32>
    %117 = vector.shape_cast %116 : vector<8xf32> to vector<8x1xf32>
    %118 = vector.broadcast %117 : vector<8x1xf32> to vector<8x8xf32>
    %119 = arith.subf %115, %118 : vector<8x8xf32>
    %120 = math.exp %119 : vector<8x8xf32>
    %cst_63 = arith.constant dense<0.000000e+00> : vector<8xf32>
    %121 = vector.multi_reduction <add>, %120, %cst_63 [1] : vector<8x8xf32> to vector<8xf32>
    %122 = vector.shape_cast %121 : vector<8xf32> to vector<8x1xf32>
    %123 = tpu.reciprocal %122 {approx = true} : vector<8x1xf32> -> vector<8x1xf32>
    %124 = vector.broadcast %123 : vector<8x1xf32> to vector<8x8xf32>
    %125 = arith.mulf %120, %124 : vector<8x8xf32>
    %126 = vector.extract_strided_slice %97 {offsets = [0, 64], sizes = [8, 64], strides = [1, 1]} : vector<8x128xf32> to vector<8x64xf32>
    %cst_64 = arith.constant dense<0.000000e+00> : vector<8x64xf32>
    %127 = tpu.matmul %125, %126, %cst_64 {dimension_numbers = #tpu.dot_dimension_numbers<[1], [0], [0], [1], [0, 0, 1, 1], [], []>} : vector<8x8xf32>, vector<8x64xf32>, vector<8x64xf32> -> vector<8x64xf32>
    %128 = tpu.concatenate %112, %127 in 1 : vector<8x64xf32>, vector<8x64xf32> -> vector<8x128xf32>
    %129 = vector.extract_strided_slice %48 {offsets = [0, 2, 0], sizes = [8, 1, 128], strides = [1, 1, 1]} : vector<8x8x128xf32> to vector<8x1x128xf32>
    %130 = vector.shape_cast %129 : vector<8x1x128xf32> to vector<8x128xf32>
    %cst_65 = arith.constant 1.250000e-01 : f32
    %131 = vector.broadcast %cst_65 : f32 to vector<8x128xf32>
    %132 = arith.mulf %130, %131 : vector<8x128xf32>
    %133 = vector.extract_strided_slice %49 {offsets = [0, 2, 0], sizes = [8, 1, 128], strides = [1, 1, 1]} : vector<8x8x128xf32> to vector<8x1x128xf32>
    %134 = vector.shape_cast %133 : vector<8x1x128xf32> to vector<8x128xf32>
    %135 = vector.extract_strided_slice %50 {offsets = [0, 2, 0], sizes = [8, 1, 128], strides = [1, 1, 1]} : vector<8x8x128xf32> to vector<8x1x128xf32>
    %136 = vector.shape_cast %135 : vector<8x1x128xf32> to vector<8x128xf32>
    %137 = vector.extract_strided_slice %132 {offsets = [0, 0], sizes = [8, 64], strides = [1, 1]} : vector<8x128xf32> to vector<8x64xf32>
    %138 = vector.extract_strided_slice %134 {offsets = [0, 0], sizes = [8, 64], strides = [1, 1]} : vector<8x128xf32> to vector<8x64xf32>
    %cst_66 = arith.constant dense<0.000000e+00> : vector<8x8xf32>
    %139 = tpu.matmul %137, %138, %cst_66 {dimension_numbers = #tpu.dot_dimension_numbers<[1], [1], [0], [0], [0, 0, 1, 0], [], []>} : vector<8x64xf32>, vector<8x64xf32>, vector<8x8xf32> -> vector<8x8xf32>
    %cst_67 = arith.constant dense<0xFF800000> : vector<8xf32>
    %140 = vector.multi_reduction <maximumf>, %139, %cst_67 [1] : vector<8x8xf32> to vector<8xf32>
    %141 = vector.shape_cast %140 : vector<8xf32> to vector<8x1xf32>
    %142 = vector.broadcast %141 : vector<8x1xf32> to vector<8x8xf32>
    %143 = arith.subf %139, %142 : vector<8x8xf32>
    %144 = math.exp %143 : vector<8x8xf32>
    %cst_68 = arith.constant dense<0.000000e+00> : vector<8xf32>
    %145 = vector.multi_reduction <add>, %144, %cst_68 [1] : vector<8x8xf32> to vector<8xf32>
    %146 = vector.shape_cast %145 : vector<8xf32> to vector<8x1xf32>
    %147 = tpu.reciprocal %146 {approx = true} : vector<8x1xf32> -> vector<8x1xf32>
    %148 = vector.broadcast %147 : vector<8x1xf32> to vector<8x8xf32>
    %149 = arith.mulf %144, %148 : vector<8x8xf32>
    %150 = vector.extract_strided_slice %136 {offsets = [0, 0], sizes = [8, 64], strides = [1, 1]} : vector<8x128xf32> to vector<8x64xf32>
    %cst_69 = arith.constant dense<0.000000e+00> : vector<8x64xf32>
    %151 = tpu.matmul %149, %150, %cst_69 {dimension_numbers = #tpu.dot_dimension_numbers<[1], [0], [0], [1], [0, 0, 1, 1], [], []>} : vector<8x8xf32>, vector<8x64xf32>, vector<8x64xf32> -> vector<8x64xf32>
    %152 = vector.extract_strided_slice %132 {offsets = [0, 64], sizes = [8, 64], strides = [1, 1]} : vector<8x128xf32> to vector<8x64xf32>
    %153 = vector.extract_strided_slice %134 {offsets = [0, 64], sizes = [8, 64], strides = [1, 1]} : vector<8x128xf32> to vector<8x64xf32>
    %cst_70 = arith.constant dense<0.000000e+00> : vector<8x8xf32>
    %154 = tpu.matmul %152, %153, %cst_70 {dimension_numbers = #tpu.dot_dimension_numbers<[1], [1], [0], [0], [0, 0, 1, 0], [], []>} : vector<8x64xf32>, vector<8x64xf32>, vector<8x8xf32> -> vector<8x8xf32>
    %cst_71 = arith.constant dense<0xFF800000> : vector<8xf32>
    %155 = vector.multi_reduction <maximumf>, %154, %cst_71 [1] : vector<8x8xf32> to vector<8xf32>
    %156 = vector.shape_cast %155 : vector<8xf32> to vector<8x1xf32>
    %157 = vector.broadcast %156 : vector<8x1xf32> to vector<8x8xf32>
    %158 = arith.subf %154, %157 : vector<8x8xf32>
    %159 = math.exp %158 : vector<8x8xf32>
    %cst_72 = arith.constant dense<0.000000e+00> : vector<8xf32>
    %160 = vector.multi_reduction <add>, %159, %cst_72 [1] : vector<8x8xf32> to vector<8xf32>
    %161 = vector.shape_cast %160 : vector<8xf32> to vector<8x1xf32>
    %162 = tpu.reciprocal %161 {approx = true} : vector<8x1xf32> -> vector<8x1xf32>
    %163 = vector.broadcast %162 : vector<8x1xf32> to vector<8x8xf32>
    %164 = arith.mulf %159, %163 : vector<8x8xf32>
    %165 = vector.extract_strided_slice %136 {offsets = [0, 64], sizes = [8, 64], strides = [1, 1]} : vector<8x128xf32> to vector<8x64xf32>
    %cst_73 = arith.constant dense<0.000000e+00> : vector<8x64xf32>
    %166 = tpu.matmul %164, %165, %cst_73 {dimension_numbers = #tpu.dot_dimension_numbers<[1], [0], [0], [1], [0, 0, 1, 1], [], []>} : vector<8x8xf32>, vector<8x64xf32>, vector<8x64xf32> -> vector<8x64xf32>
    %167 = tpu.concatenate %151, %166 in 1 : vector<8x64xf32>, vector<8x64xf32> -> vector<8x128xf32>
    %168 = vector.extract_strided_slice %48 {offsets = [0, 3, 0], sizes = [8, 1, 128], strides = [1, 1, 1]} : vector<8x8x128xf32> to vector<8x1x128xf32>
    %169 = vector.shape_cast %168 : vector<8x1x128xf32> to vector<8x128xf32>
    %cst_74 = arith.constant 1.250000e-01 : f32
    %170 = vector.broadcast %cst_74 : f32 to vector<8x128xf32>
    %171 = arith.mulf %169, %170 : vector<8x128xf32>
    %172 = vector.extract_strided_slice %49 {offsets = [0, 3, 0], sizes = [8, 1, 128], strides = [1, 1, 1]} : vector<8x8x128xf32> to vector<8x1x128xf32>
    %173 = vector.shape_cast %172 : vector<8x1x128xf32> to vector<8x128xf32>
    %174 = vector.extract_strided_slice %50 {offsets = [0, 3, 0], sizes = [8, 1, 128], strides = [1, 1, 1]} : vector<8x8x128xf32> to vector<8x1x128xf32>
    %175 = vector.shape_cast %174 : vector<8x1x128xf32> to vector<8x128xf32>
    %176 = vector.extract_strided_slice %171 {offsets = [0, 0], sizes = [8, 64], strides = [1, 1]} : vector<8x128xf32> to vector<8x64xf32>
    %177 = vector.extract_strided_slice %173 {offsets = [0, 0], sizes = [8, 64], strides = [1, 1]} : vector<8x128xf32> to vector<8x64xf32>
    %cst_75 = arith.constant dense<0.000000e+00> : vector<8x8xf32>
    %178 = tpu.matmul %176, %177, %cst_75 {dimension_numbers = #tpu.dot_dimension_numbers<[1], [1], [0], [0], [0, 0, 1, 0], [], []>} : vector<8x64xf32>, vector<8x64xf32>, vector<8x8xf32> -> vector<8x8xf32>
    %cst_76 = arith.constant dense<0xFF800000> : vector<8xf32>
    %179 = vector.multi_reduction <maximumf>, %178, %cst_76 [1] : vector<8x8xf32> to vector<8xf32>
    %180 = vector.shape_cast %179 : vector<8xf32> to vector<8x1xf32>
    %181 = vector.broadcast %180 : vector<8x1xf32> to vector<8x8xf32>
    %182 = arith.subf %178, %181 : vector<8x8xf32>
    %183 = math.exp %182 : vector<8x8xf32>
    %cst_77 = arith.constant dense<0.000000e+00> : vector<8xf32>
    %184 = vector.multi_reduction <add>, %183, %cst_77 [1] : vector<8x8xf32> to vector<8xf32>
    %185 = vector.shape_cast %184 : vector<8xf32> to vector<8x1xf32>
    %186 = tpu.reciprocal %185 {approx = true} : vector<8x1xf32> -> vector<8x1xf32>
    %187 = vector.broadcast %186 : vector<8x1xf32> to vector<8x8xf32>
    %188 = arith.mulf %183, %187 : vector<8x8xf32>
    %189 = vector.extract_strided_slice %175 {offsets = [0, 0], sizes = [8, 64], strides = [1, 1]} : vector<8x128xf32> to vector<8x64xf32>
    %cst_78 = arith.constant dense<0.000000e+00> : vector<8x64xf32>
    %190 = tpu.matmul %188, %189, %cst_78 {dimension_numbers = #tpu.dot_dimension_numbers<[1], [0], [0], [1], [0, 0, 1, 1], [], []>} : vector<8x8xf32>, vector<8x64xf32>, vector<8x64xf32> -> vector<8x64xf32>
    %191 = vector.extract_strided_slice %171 {offsets = [0, 64], sizes = [8, 64], strides = [1, 1]} : vector<8x128xf32> to vector<8x64xf32>
    %192 = vector.extract_strided_slice %173 {offsets = [0, 64], sizes = [8, 64], strides = [1, 1]} : vector<8x128xf32> to vector<8x64xf32>
    %cst_79 = arith.constant dense<0.000000e+00> : vector<8x8xf32>
    %193 = tpu.matmul %191, %192, %cst_79 {dimension_numbers = #tpu.dot_dimension_numbers<[1], [1], [0], [0], [0, 0, 1, 0], [], []>} : vector<8x64xf32>, vector<8x64xf32>, vector<8x8xf32> -> vector<8x8xf32>
    %cst_80 = arith.constant dense<0xFF800000> : vector<8xf32>
    %194 = vector.multi_reduction <maximumf>, %193, %cst_80 [1] : vector<8x8xf32> to vector<8xf32>
    %195 = vector.shape_cast %194 : vector<8xf32> to vector<8x1xf32>
    %196 = vector.broadcast %195 : vector<8x1xf32> to vector<8x8xf32>
    %197 = arith.subf %193, %196 : vector<8x8xf32>
    %198 = math.exp %197 : vector<8x8xf32>
    %cst_81 = arith.constant dense<0.000000e+00> : vector<8xf32>
    %199 = vector.multi_reduction <add>, %198, %cst_81 [1] : vector<8x8xf32> to vector<8xf32>
    %200 = vector.shape_cast %199 : vector<8xf32> to vector<8x1xf32>
    %201 = tpu.reciprocal %200 {approx = true} : vector<8x1xf32> -> vector<8x1xf32>
    %202 = vector.broadcast %201 : vector<8x1xf32> to vector<8x8xf32>
    %203 = arith.mulf %198, %202 : vector<8x8xf32>
    %204 = vector.extract_strided_slice %175 {offsets = [0, 64], sizes = [8, 64], strides = [1, 1]} : vector<8x128xf32> to vector<8x64xf32>
    %cst_82 = arith.constant dense<0.000000e+00> : vector<8x64xf32>
    %205 = tpu.matmul %203, %204, %cst_82 {dimension_numbers = #tpu.dot_dimension_numbers<[1], [0], [0], [1], [0, 0, 1, 1], [], []>} : vector<8x8xf32>, vector<8x64xf32>, vector<8x64xf32> -> vector<8x64xf32>
    %206 = tpu.concatenate %190, %205 in 1 : vector<8x64xf32>, vector<8x64xf32> -> vector<8x128xf32>
    %207 = vector.extract_strided_slice %48 {offsets = [0, 4, 0], sizes = [8, 1, 128], strides = [1, 1, 1]} : vector<8x8x128xf32> to vector<8x1x128xf32>
    %208 = vector.shape_cast %207 : vector<8x1x128xf32> to vector<8x128xf32>
    %cst_83 = arith.constant 1.250000e-01 : f32
    %209 = vector.broadcast %cst_83 : f32 to vector<8x128xf32>
    %210 = arith.mulf %208, %209 : vector<8x128xf32>
    %211 = vector.extract_strided_slice %49 {offsets = [0, 4, 0], sizes = [8, 1, 128], strides = [1, 1, 1]} : vector<8x8x128xf32> to vector<8x1x128xf32>
    %212 = vector.shape_cast %211 : vector<8x1x128xf32> to vector<8x128xf32>
    %213 = vector.extract_strided_slice %50 {offsets = [0, 4, 0], sizes = [8, 1, 128], strides = [1, 1, 1]} : vector<8x8x128xf32> to vector<8x1x128xf32>
    %214 = vector.shape_cast %213 : vector<8x1x128xf32> to vector<8x128xf32>
    %215 = vector.extract_strided_slice %210 {offsets = [0, 0], sizes = [8, 64], strides = [1, 1]} : vector<8x128xf32> to vector<8x64xf32>
    %216 = vector.extract_strided_slice %212 {offsets = [0, 0], sizes = [8, 64], strides = [1, 1]} : vector<8x128xf32> to vector<8x64xf32>
    %cst_84 = arith.constant dense<0.000000e+00> : vector<8x8xf32>
    %217 = tpu.matmul %215, %216, %cst_84 {dimension_numbers = #tpu.dot_dimension_numbers<[1], [1], [0], [0], [0, 0, 1, 0], [], []>} : vector<8x64xf32>, vector<8x64xf32>, vector<8x8xf32> -> vector<8x8xf32>
    %cst_85 = arith.constant dense<0xFF800000> : vector<8xf32>
    %218 = vector.multi_reduction <maximumf>, %217, %cst_85 [1] : vector<8x8xf32> to vector<8xf32>
    %219 = vector.shape_cast %218 : vector<8xf32> to vector<8x1xf32>
    %220 = vector.broadcast %219 : vector<8x1xf32> to vector<8x8xf32>
    %221 = arith.subf %217, %220 : vector<8x8xf32>
    %222 = math.exp %221 : vector<8x8xf32>
    %cst_86 = arith.constant dense<0.000000e+00> : vector<8xf32>
    %223 = vector.multi_reduction <add>, %222, %cst_86 [1] : vector<8x8xf32> to vector<8xf32>
    %224 = vector.shape_cast %223 : vector<8xf32> to vector<8x1xf32>
    %225 = tpu.reciprocal %224 {approx = true} : vector<8x1xf32> -> vector<8x1xf32>
    %226 = vector.broadcast %225 : vector<8x1xf32> to vector<8x8xf32>
    %227 = arith.mulf %222, %226 : vector<8x8xf32>
    %228 = vector.extract_strided_slice %214 {offsets = [0, 0], sizes = [8, 64], strides = [1, 1]} : vector<8x128xf32> to vector<8x64xf32>
    %cst_87 = arith.constant dense<0.000000e+00> : vector<8x64xf32>
    %229 = tpu.matmul %227, %228, %cst_87 {dimension_numbers = #tpu.dot_dimension_numbers<[1], [0], [0], [1], [0, 0, 1, 1], [], []>} : vector<8x8xf32>, vector<8x64xf32>, vector<8x64xf32> -> vector<8x64xf32>
    %230 = vector.extract_strided_slice %210 {offsets = [0, 64], sizes = [8, 64], strides = [1, 1]} : vector<8x128xf32> to vector<8x64xf32>
    %231 = vector.extract_strided_slice %212 {offsets = [0, 64], sizes = [8, 64], strides = [1, 1]} : vector<8x128xf32> to vector<8x64xf32>
    %cst_88 = arith.constant dense<0.000000e+00> : vector<8x8xf32>
    %232 = tpu.matmul %230, %231, %cst_88 {dimension_numbers = #tpu.dot_dimension_numbers<[1], [1], [0], [0], [0, 0, 1, 0], [], []>} : vector<8x64xf32>, vector<8x64xf32>, vector<8x8xf32> -> vector<8x8xf32>
    %cst_89 = arith.constant dense<0xFF800000> : vector<8xf32>
    %233 = vector.multi_reduction <maximumf>, %232, %cst_89 [1] : vector<8x8xf32> to vector<8xf32>
    %234 = vector.shape_cast %233 : vector<8xf32> to vector<8x1xf32>
    %235 = vector.broadcast %234 : vector<8x1xf32> to vector<8x8xf32>
    %236 = arith.subf %232, %235 : vector<8x8xf32>
    %237 = math.exp %236 : vector<8x8xf32>
    %cst_90 = arith.constant dense<0.000000e+00> : vector<8xf32>
    %238 = vector.multi_reduction <add>, %237, %cst_90 [1] : vector<8x8xf32> to vector<8xf32>
    %239 = vector.shape_cast %238 : vector<8xf32> to vector<8x1xf32>
    %240 = tpu.reciprocal %239 {approx = true} : vector<8x1xf32> -> vector<8x1xf32>
    %241 = vector.broadcast %240 : vector<8x1xf32> to vector<8x8xf32>
    %242 = arith.mulf %237, %241 : vector<8x8xf32>
    %243 = vector.extract_strided_slice %214 {offsets = [0, 64], sizes = [8, 64], strides = [1, 1]} : vector<8x128xf32> to vector<8x64xf32>
    %cst_91 = arith.constant dense<0.000000e+00> : vector<8x64xf32>
    %244 = tpu.matmul %242, %243, %cst_91 {dimension_numbers = #tpu.dot_dimension_numbers<[1], [0], [0], [1], [0, 0, 1, 1], [], []>} : vector<8x8xf32>, vector<8x64xf32>, vector<8x64xf32> -> vector<8x64xf32>
    %245 = tpu.concatenate %229, %244 in 1 : vector<8x64xf32>, vector<8x64xf32> -> vector<8x128xf32>
    %246 = vector.extract_strided_slice %48 {offsets = [0, 5, 0], sizes = [8, 1, 128], strides = [1, 1, 1]} : vector<8x8x128xf32> to vector<8x1x128xf32>
    %247 = vector.shape_cast %246 : vector<8x1x128xf32> to vector<8x128xf32>
    %cst_92 = arith.constant 1.250000e-01 : f32
    %248 = vector.broadcast %cst_92 : f32 to vector<8x128xf32>
    %249 = arith.mulf %247, %248 : vector<8x128xf32>
    %250 = vector.extract_strided_slice %49 {offsets = [0, 5, 0], sizes = [8, 1, 128], strides = [1, 1, 1]} : vector<8x8x128xf32> to vector<8x1x128xf32>
    %251 = vector.shape_cast %250 : vector<8x1x128xf32> to vector<8x128xf32>
    %252 = vector.extract_strided_slice %50 {offsets = [0, 5, 0], sizes = [8, 1, 128], strides = [1, 1, 1]} : vector<8x8x128xf32> to vector<8x1x128xf32>
    %253 = vector.shape_cast %252 : vector<8x1x128xf32> to vector<8x128xf32>
    %254 = vector.extract_strided_slice %249 {offsets = [0, 0], sizes = [8, 64], strides = [1, 1]} : vector<8x128xf32> to vector<8x64xf32>
    %255 = vector.extract_strided_slice %251 {offsets = [0, 0], sizes = [8, 64], strides = [1, 1]} : vector<8x128xf32> to vector<8x64xf32>
    %cst_93 = arith.constant dense<0.000000e+00> : vector<8x8xf32>
    %256 = tpu.matmul %254, %255, %cst_93 {dimension_numbers = #tpu.dot_dimension_numbers<[1], [1], [0], [0], [0, 0, 1, 0], [], []>} : vector<8x64xf32>, vector<8x64xf32>, vector<8x8xf32> -> vector<8x8xf32>
    %cst_94 = arith.constant dense<0xFF800000> : vector<8xf32>
    %257 = vector.multi_reduction <maximumf>, %256, %cst_94 [1] : vector<8x8xf32> to vector<8xf32>
    %258 = vector.shape_cast %257 : vector<8xf32> to vector<8x1xf32>
    %259 = vector.broadcast %258 : vector<8x1xf32> to vector<8x8xf32>
    %260 = arith.subf %256, %259 : vector<8x8xf32>
    %261 = math.exp %260 : vector<8x8xf32>
    %cst_95 = arith.constant dense<0.000000e+00> : vector<8xf32>
    %262 = vector.multi_reduction <add>, %261, %cst_95 [1] : vector<8x8xf32> to vector<8xf32>
    %263 = vector.shape_cast %262 : vector<8xf32> to vector<8x1xf32>
    %264 = tpu.reciprocal %263 {approx = true} : vector<8x1xf32> -> vector<8x1xf32>
    %265 = vector.broadcast %264 : vector<8x1xf32> to vector<8x8xf32>
    %266 = arith.mulf %261, %265 : vector<8x8xf32>
    %267 = vector.extract_strided_slice %253 {offsets = [0, 0], sizes = [8, 64], strides = [1, 1]} : vector<8x128xf32> to vector<8x64xf32>
    %cst_96 = arith.constant dense<0.000000e+00> : vector<8x64xf32>
    %268 = tpu.matmul %266, %267, %cst_96 {dimension_numbers = #tpu.dot_dimension_numbers<[1], [0], [0], [1], [0, 0, 1, 1], [], []>} : vector<8x8xf32>, vector<8x64xf32>, vector<8x64xf32> -> vector<8x64xf32>
    %269 = vector.extract_strided_slice %249 {offsets = [0, 64], sizes = [8, 64], strides = [1, 1]} : vector<8x128xf32> to vector<8x64xf32>
    %270 = vector.extract_strided_slice %251 {offsets = [0, 64], sizes = [8, 64], strides = [1, 1]} : vector<8x128xf32> to vector<8x64xf32>
    %cst_97 = arith.constant dense<0.000000e+00> : vector<8x8xf32>
    %271 = tpu.matmul %269, %270, %cst_97 {dimension_numbers = #tpu.dot_dimension_numbers<[1], [1], [0], [0], [0, 0, 1, 0], [], []>} : vector<8x64xf32>, vector<8x64xf32>, vector<8x8xf32> -> vector<8x8xf32>
    %cst_98 = arith.constant dense<0xFF800000> : vector<8xf32>
    %272 = vector.multi_reduction <maximumf>, %271, %cst_98 [1] : vector<8x8xf32> to vector<8xf32>
    %273 = vector.shape_cast %272 : vector<8xf32> to vector<8x1xf32>
    %274 = vector.broadcast %273 : vector<8x1xf32> to vector<8x8xf32>
    %275 = arith.subf %271, %274 : vector<8x8xf32>
    %276 = math.exp %275 : vector<8x8xf32>
    %cst_99 = arith.constant dense<0.000000e+00> : vector<8xf32>
    %277 = vector.multi_reduction <add>, %276, %cst_99 [1] : vector<8x8xf32> to vector<8xf32>
    %278 = vector.shape_cast %277 : vector<8xf32> to vector<8x1xf32>
    %279 = tpu.reciprocal %278 {approx = true} : vector<8x1xf32> -> vector<8x1xf32>
    %280 = vector.broadcast %279 : vector<8x1xf32> to vector<8x8xf32>
    %281 = arith.mulf %276, %280 : vector<8x8xf32>
    %282 = vector.extract_strided_slice %253 {offsets = [0, 64], sizes = [8, 64], strides = [1, 1]} : vector<8x128xf32> to vector<8x64xf32>
    %cst_100 = arith.constant dense<0.000000e+00> : vector<8x64xf32>
    %283 = tpu.matmul %281, %282, %cst_100 {dimension_numbers = #tpu.dot_dimension_numbers<[1], [0], [0], [1], [0, 0, 1, 1], [], []>} : vector<8x8xf32>, vector<8x64xf32>, vector<8x64xf32> -> vector<8x64xf32>
    %284 = tpu.concatenate %268, %283 in 1 : vector<8x64xf32>, vector<8x64xf32> -> vector<8x128xf32>
    %285 = vector.extract_strided_slice %48 {offsets = [0, 6, 0], sizes = [8, 1, 128], strides = [1, 1, 1]} : vector<8x8x128xf32> to vector<8x1x128xf32>
    %286 = vector.shape_cast %285 : vector<8x1x128xf32> to vector<8x128xf32>
    %cst_101 = arith.constant 1.250000e-01 : f32
    %287 = vector.broadcast %cst_101 : f32 to vector<8x128xf32>
    %288 = arith.mulf %286, %287 : vector<8x128xf32>
    %289 = vector.extract_strided_slice %49 {offsets = [0, 6, 0], sizes = [8, 1, 128], strides = [1, 1, 1]} : vector<8x8x128xf32> to vector<8x1x128xf32>
    %290 = vector.shape_cast %289 : vector<8x1x128xf32> to vector<8x128xf32>
    %291 = vector.extract_strided_slice %50 {offsets = [0, 6, 0], sizes = [8, 1, 128], strides = [1, 1, 1]} : vector<8x8x128xf32> to vector<8x1x128xf32>
    %292 = vector.shape_cast %291 : vector<8x1x128xf32> to vector<8x128xf32>
    %293 = vector.extract_strided_slice %288 {offsets = [0, 0], sizes = [8, 64], strides = [1, 1]} : vector<8x128xf32> to vector<8x64xf32>
    %294 = vector.extract_strided_slice %290 {offsets = [0, 0], sizes = [8, 64], strides = [1, 1]} : vector<8x128xf32> to vector<8x64xf32>
    %cst_102 = arith.constant dense<0.000000e+00> : vector<8x8xf32>
    %295 = tpu.matmul %293, %294, %cst_102 {dimension_numbers = #tpu.dot_dimension_numbers<[1], [1], [0], [0], [0, 0, 1, 0], [], []>} : vector<8x64xf32>, vector<8x64xf32>, vector<8x8xf32> -> vector<8x8xf32>
    %cst_103 = arith.constant dense<0xFF800000> : vector<8xf32>
    %296 = vector.multi_reduction <maximumf>, %295, %cst_103 [1] : vector<8x8xf32> to vector<8xf32>
    %297 = vector.shape_cast %296 : vector<8xf32> to vector<8x1xf32>
    %298 = vector.broadcast %297 : vector<8x1xf32> to vector<8x8xf32>
    %299 = arith.subf %295, %298 : vector<8x8xf32>
    %300 = math.exp %299 : vector<8x8xf32>
    %cst_104 = arith.constant dense<0.000000e+00> : vector<8xf32>
    %301 = vector.multi_reduction <add>, %300, %cst_104 [1] : vector<8x8xf32> to vector<8xf32>
    %302 = vector.shape_cast %301 : vector<8xf32> to vector<8x1xf32>
    %303 = tpu.reciprocal %302 {approx = true} : vector<8x1xf32> -> vector<8x1xf32>
    %304 = vector.broadcast %303 : vector<8x1xf32> to vector<8x8xf32>
    %305 = arith.mulf %300, %304 : vector<8x8xf32>
    %306 = vector.extract_strided_slice %292 {offsets = [0, 0], sizes = [8, 64], strides = [1, 1]} : vector<8x128xf32> to vector<8x64xf32>
    %cst_105 = arith.constant dense<0.000000e+00> : vector<8x64xf32>
    %307 = tpu.matmul %305, %306, %cst_105 {dimension_numbers = #tpu.dot_dimension_numbers<[1], [0], [0], [1], [0, 0, 1, 1], [], []>} : vector<8x8xf32>, vector<8x64xf32>, vector<8x64xf32> -> vector<8x64xf32>
    %308 = vector.extract_strided_slice %288 {offsets = [0, 64], sizes = [8, 64], strides = [1, 1]} : vector<8x128xf32> to vector<8x64xf32>
    %309 = vector.extract_strided_slice %290 {offsets = [0, 64], sizes = [8, 64], strides = [1, 1]} : vector<8x128xf32> to vector<8x64xf32>
    %cst_106 = arith.constant dense<0.000000e+00> : vector<8x8xf32>
    %310 = tpu.matmul %308, %309, %cst_106 {dimension_numbers = #tpu.dot_dimension_numbers<[1], [1], [0], [0], [0, 0, 1, 0], [], []>} : vector<8x64xf32>, vector<8x64xf32>, vector<8x8xf32> -> vector<8x8xf32>
    %cst_107 = arith.constant dense<0xFF800000> : vector<8xf32>
    %311 = vector.multi_reduction <maximumf>, %310, %cst_107 [1] : vector<8x8xf32> to vector<8xf32>
    %312 = vector.shape_cast %311 : vector<8xf32> to vector<8x1xf32>
    %313 = vector.broadcast %312 : vector<8x1xf32> to vector<8x8xf32>
    %314 = arith.subf %310, %313 : vector<8x8xf32>
    %315 = math.exp %314 : vector<8x8xf32>
    %cst_108 = arith.constant dense<0.000000e+00> : vector<8xf32>
    %316 = vector.multi_reduction <add>, %315, %cst_108 [1] : vector<8x8xf32> to vector<8xf32>
    %317 = vector.shape_cast %316 : vector<8xf32> to vector<8x1xf32>
    %318 = tpu.reciprocal %317 {approx = true} : vector<8x1xf32> -> vector<8x1xf32>
    %319 = vector.broadcast %318 : vector<8x1xf32> to vector<8x8xf32>
    %320 = arith.mulf %315, %319 : vector<8x8xf32>
    %321 = vector.extract_strided_slice %292 {offsets = [0, 64], sizes = [8, 64], strides = [1, 1]} : vector<8x128xf32> to vector<8x64xf32>
    %cst_109 = arith.constant dense<0.000000e+00> : vector<8x64xf32>
    %322 = tpu.matmul %320, %321, %cst_109 {dimension_numbers = #tpu.dot_dimension_numbers<[1], [0], [0], [1], [0, 0, 1, 1], [], []>} : vector<8x8xf32>, vector<8x64xf32>, vector<8x64xf32> -> vector<8x64xf32>
    %323 = tpu.concatenate %307, %322 in 1 : vector<8x64xf32>, vector<8x64xf32> -> vector<8x128xf32>
    %324 = vector.extract_strided_slice %48 {offsets = [0, 7, 0], sizes = [8, 1, 128], strides = [1, 1, 1]} : vector<8x8x128xf32> to vector<8x1x128xf32>
    %325 = vector.shape_cast %324 : vector<8x1x128xf32> to vector<8x128xf32>
    %cst_110 = arith.constant 1.250000e-01 : f32
    %326 = vector.broadcast %cst_110 : f32 to vector<8x128xf32>
    %327 = arith.mulf %325, %326 : vector<8x128xf32>
    %328 = vector.extract_strided_slice %49 {offsets = [0, 7, 0], sizes = [8, 1, 128], strides = [1, 1, 1]} : vector<8x8x128xf32> to vector<8x1x128xf32>
    %329 = vector.shape_cast %328 : vector<8x1x128xf32> to vector<8x128xf32>
    %330 = vector.extract_strided_slice %50 {offsets = [0, 7, 0], sizes = [8, 1, 128], strides = [1, 1, 1]} : vector<8x8x128xf32> to vector<8x1x128xf32>
    %331 = vector.shape_cast %330 : vector<8x1x128xf32> to vector<8x128xf32>
    %332 = vector.extract_strided_slice %327 {offsets = [0, 0], sizes = [8, 64], strides = [1, 1]} : vector<8x128xf32> to vector<8x64xf32>
    %333 = vector.extract_strided_slice %329 {offsets = [0, 0], sizes = [8, 64], strides = [1, 1]} : vector<8x128xf32> to vector<8x64xf32>
    %cst_111 = arith.constant dense<0.000000e+00> : vector<8x8xf32>
    %334 = tpu.matmul %332, %333, %cst_111 {dimension_numbers = #tpu.dot_dimension_numbers<[1], [1], [0], [0], [0, 0, 1, 0], [], []>} : vector<8x64xf32>, vector<8x64xf32>, vector<8x8xf32> -> vector<8x8xf32>
    %cst_112 = arith.constant dense<0xFF800000> : vector<8xf32>
    %335 = vector.multi_reduction <maximumf>, %334, %cst_112 [1] : vector<8x8xf32> to vector<8xf32>
    %336 = vector.shape_cast %335 : vector<8xf32> to vector<8x1xf32>
    %337 = vector.broadcast %336 : vector<8x1xf32> to vector<8x8xf32>
    %338 = arith.subf %334, %337 : vector<8x8xf32>
    %339 = math.exp %338 : vector<8x8xf32>
    %cst_113 = arith.constant dense<0.000000e+00> : vector<8xf32>
    %340 = vector.multi_reduction <add>, %339, %cst_113 [1] : vector<8x8xf32> to vector<8xf32>
    %341 = vector.shape_cast %340 : vector<8xf32> to vector<8x1xf32>
    %342 = tpu.reciprocal %341 {approx = true} : vector<8x1xf32> -> vector<8x1xf32>
    %343 = vector.broadcast %342 : vector<8x1xf32> to vector<8x8xf32>
    %344 = arith.mulf %339, %343 : vector<8x8xf32>
    %345 = vector.extract_strided_slice %331 {offsets = [0, 0], sizes = [8, 64], strides = [1, 1]} : vector<8x128xf32> to vector<8x64xf32>
    %cst_114 = arith.constant dense<0.000000e+00> : vector<8x64xf32>
    %346 = tpu.matmul %344, %345, %cst_114 {dimension_numbers = #tpu.dot_dimension_numbers<[1], [0], [0], [1], [0, 0, 1, 1], [], []>} : vector<8x8xf32>, vector<8x64xf32>, vector<8x64xf32> -> vector<8x64xf32>
    %347 = vector.extract_strided_slice %327 {offsets = [0, 64], sizes = [8, 64], strides = [1, 1]} : vector<8x128xf32> to vector<8x64xf32>
    %348 = vector.extract_strided_slice %329 {offsets = [0, 64], sizes = [8, 64], strides = [1, 1]} : vector<8x128xf32> to vector<8x64xf32>
    %cst_115 = arith.constant dense<0.000000e+00> : vector<8x8xf32>
    %349 = tpu.matmul %347, %348, %cst_115 {dimension_numbers = #tpu.dot_dimension_numbers<[1], [1], [0], [0], [0, 0, 1, 0], [], []>} : vector<8x64xf32>, vector<8x64xf32>, vector<8x8xf32> -> vector<8x8xf32>
    %cst_116 = arith.constant dense<0xFF800000> : vector<8xf32>
    %350 = vector.multi_reduction <maximumf>, %349, %cst_116 [1] : vector<8x8xf32> to vector<8xf32>
    %351 = vector.shape_cast %350 : vector<8xf32> to vector<8x1xf32>
    %352 = vector.broadcast %351 : vector<8x1xf32> to vector<8x8xf32>
    %353 = arith.subf %349, %352 : vector<8x8xf32>
    %354 = math.exp %353 : vector<8x8xf32>
    %cst_117 = arith.constant dense<0.000000e+00> : vector<8xf32>
    %355 = vector.multi_reduction <add>, %354, %cst_117 [1] : vector<8x8xf32> to vector<8xf32>
    %356 = vector.shape_cast %355 : vector<8xf32> to vector<8x1xf32>
    %357 = tpu.reciprocal %356 {approx = true} : vector<8x1xf32> -> vector<8x1xf32>
    %358 = vector.broadcast %357 : vector<8x1xf32> to vector<8x8xf32>
    %359 = arith.mulf %354, %358 : vector<8x8xf32>
    %360 = vector.extract_strided_slice %331 {offsets = [0, 64], sizes = [8, 64], strides = [1, 1]} : vector<8x128xf32> to vector<8x64xf32>
    %cst_118 = arith.constant dense<0.000000e+00> : vector<8x64xf32>
    %361 = tpu.matmul %359, %360, %cst_118 {dimension_numbers = #tpu.dot_dimension_numbers<[1], [0], [0], [1], [0, 0, 1, 1], [], []>} : vector<8x8xf32>, vector<8x64xf32>, vector<8x64xf32> -> vector<8x64xf32>
    %362 = tpu.concatenate %346, %361 in 1 : vector<8x64xf32>, vector<8x64xf32> -> vector<8x128xf32>
    %363 = vector.shape_cast %89 : vector<8x128xf32> to vector<1x8x128xf32>
    %364 = vector.shape_cast %128 : vector<8x128xf32> to vector<1x8x128xf32>
    %365 = vector.shape_cast %167 : vector<8x128xf32> to vector<1x8x128xf32>
    %366 = vector.shape_cast %206 : vector<8x128xf32> to vector<1x8x128xf32>
    %367 = vector.shape_cast %245 : vector<8x128xf32> to vector<1x8x128xf32>
    %368 = vector.shape_cast %284 : vector<8x128xf32> to vector<1x8x128xf32>
    %369 = vector.shape_cast %323 : vector<8x128xf32> to vector<1x8x128xf32>
    %370 = vector.shape_cast %362 : vector<8x128xf32> to vector<1x8x128xf32>
    %371 = tpu.concatenate %363, %364, %365, %366, %367, %368, %369, %370 in 0 : vector<1x8x128xf32>, vector<1x8x128xf32>, vector<1x8x128xf32>, vector<1x8x128xf32>, vector<1x8x128xf32>, vector<1x8x128xf32>, vector<1x8x128xf32>, vector<1x8x128xf32> -> vector<8x8x128xf32>
    %372 = vector.shape_cast %371 : vector<8x8x128xf32> to vector<64x128xf32>
    %c0_119 = arith.constant 0 : index
    %c0_120 = arith.constant 0 : index
    %373 = vector.load %arg11[%c0_119, %c0_120] : memref<128x128xf32, #tpu.memory_space<vmem>>, vector<128x128xf32>
    %cst_121 = arith.constant dense<0.000000e+00> : vector<64x128xf32>
    %374 = tpu.matmul %372, %373, %cst_121 {dimension_numbers = #tpu.dot_dimension_numbers<[1], [0], [0], [1], [0, 0, 1, 1], [], []>} : vector<64x128xf32>, vector<128x128xf32>, vector<64x128xf32> -> vector<64x128xf32>
    %c0_122 = arith.constant 0 : index
    %c0_123 = arith.constant 0 : index
    %375 = vector.load %arg15[%c0_122, %c0_123] : memref<1x128xf32, #tpu.memory_space<vmem>>, vector<1x128xf32>
    %376 = vector.broadcast %375 : vector<1x128xf32> to vector<64x128xf32>
    %377 = arith.addf %374, %376 : vector<64x128xf32>
    %cst_124 = arith.constant dense<0.000000e+00> : vector<64xf32>
    %378 = vector.multi_reduction <add>, %377, %cst_124 [1] : vector<64x128xf32> to vector<64xf32>
    %379 = vector.shape_cast %378 : vector<64xf32> to vector<64x1xf32>
    %cst_125 = arith.constant 1.280000e+02 : f32
    %380 = vector.broadcast %cst_125 : f32 to vector<64x1xf32>
    %381 = arith.divf %379, %380 : vector<64x1xf32>
    %382 = vector.broadcast %381 : vector<64x1xf32> to vector<64x128xf32>
    %383 = arith.subf %377, %382 : vector<64x128xf32>
    %384 = arith.mulf %383, %383 : vector<64x128xf32>
    %cst_126 = arith.constant dense<0.000000e+00> : vector<64xf32>
    %385 = vector.multi_reduction <add>, %384, %cst_126 [1] : vector<64x128xf32> to vector<64xf32>
    %386 = vector.shape_cast %385 : vector<64xf32> to vector<64x1xf32>
    %cst_127 = arith.constant 1.280000e+02 : f32
    %387 = vector.broadcast %cst_127 : f32 to vector<64x1xf32>
    %388 = arith.divf %386, %387 : vector<64x1xf32>
    %389 = vector.broadcast %381 : vector<64x1xf32> to vector<64x128xf32>
    %390 = arith.subf %377, %389 : vector<64x128xf32>
    %cst_128 = arith.constant 9.99999974E-6 : f32
    %391 = vector.broadcast %cst_128 : f32 to vector<64x1xf32>
    %392 = arith.addf %388, %391 : vector<64x1xf32>
    %393 = math.rsqrt %392 : vector<64x1xf32>
    %394 = vector.broadcast %393 : vector<64x1xf32> to vector<64x128xf32>
    %395 = arith.mulf %390, %394 : vector<64x128xf32>
    %c0_129 = arith.constant 0 : index
    %c0_130 = arith.constant 0 : index
    %396 = vector.load %arg16[%c0_129, %c0_130] : memref<1x128xf32, #tpu.memory_space<vmem>>, vector<1x128xf32>
    %397 = vector.broadcast %396 : vector<1x128xf32> to vector<64x128xf32>
    %398 = arith.mulf %395, %397 : vector<64x128xf32>
    %c0_131 = arith.constant 0 : index
    %c0_132 = arith.constant 0 : index
    %399 = vector.load %arg17[%c0_131, %c0_132] : memref<1x128xf32, #tpu.memory_space<vmem>>, vector<1x128xf32>
    %400 = vector.broadcast %399 : vector<1x128xf32> to vector<64x128xf32>
    %401 = arith.addf %398, %400 : vector<64x128xf32>
    %402 = vector.shape_cast %401 : vector<64x128xf32> to vector<8x8x128xf32>
    %c0_133 = arith.constant 0 : index
    %c0_134 = arith.constant 0 : index
    %c0_135 = arith.constant 0 : index
    %403 = vector.load %arg18[%c0_133, %c0_134, %c0_135] : memref<8x8x128xf32, #tpu.memory_space<vmem>>, vector<8x8x128xf32>
    tpu.vector_store %arg18[%c0_133, %c0_134, %c0_135], %402 {strides = array<i32>} : memref<8x8x128xf32, #tpu.memory_space<vmem>>, vector<8x8x128xf32>,
    return
  }
  func.func @transform_0(%arg0: i32) -> (i32, i32, i32) {
    %c0_i32 = arith.constant 0 : i32
    %c0_i32_0 = arith.constant 0 : i32
    %c0_i32_1 = arith.constant 0 : i32
    return %c0_i32, %arg0, %c0_i32_0 : i32, i32, i32
  }
  func.func @transform_1(%arg0: i32) -> (i32, i32) {
    %c0_i32 = arith.constant 0 : i32
    %c0_i32_0 = arith.constant 0 : i32
    %c0_i32_1 = arith.constant 0 : i32
    return %c0_i32, %c0_i32_0 : i32, i32
  }
  func.func @transform_2(%arg0: i32) -> (i32, i32) {
    %c0_i32 = arith.constant 0 : i32
    %c0_i32_0 = arith.constant 0 : i32
    %c0_i32_1 = arith.constant 0 : i32
    return %c0_i32, %c0_i32_0 : i32, i32
  }
  func.func @transform_3(%arg0: i32) -> (i32, i32, i32) {
    %c0_i32 = arith.constant 0 : i32
    %c0_i32_0 = arith.constant 0 : i32
    %c0_i32_1 = arith.constant 0 : i32
    %c0_i32_2 = arith.constant 0 : i32
    return %c0_i32, %c0_i32_0, %c0_i32_1 : i32, i32, i32
  }
  func.func @transform_4(%arg0: i32) -> (i32, i32, i32) {
    %c0_i32 = arith.constant 0 : i32
    %c0_i32_0 = arith.constant 0 : i32
    %c0_i32_1 = arith.constant 0 : i32
    %c0_i32_2 = arith.constant 0 : i32
    return %c0_i32, %c0_i32_0, %c0_i32_1 : i32, i32, i32
  }
  func.func @transform_5(%arg0: i32) -> (i32, i32) {
    %c0_i32 = arith.constant 0 : i32
    %c0_i32_0 = arith.constant 0 : i32
    %c0_i32_1 = arith.constant 0 : i32
    return %c0_i32, %c0_i32_0 : i32, i32
  }
  func.func @transform_6(%arg0: i32) -> (i32, i32) {
    %c0_i32 = arith.constant 0 : i32
    %c0_i32_0 = arith.constant 0 : i32
    %c0_i32_1 = arith.constant 0 : i32
    return %c0_i32, %c0_i32_0 : i32, i32
  }
  func.func @transform_7(%arg0: i32) -> (i32, i32) {
    %c0_i32 = arith.constant 0 : i32
    %c0_i32_0 = arith.constant 0 : i32
    %c0_i32_1 = arith.constant 0 : i32
    return %c0_i32, %c0_i32_0 : i32, i32
  }
  func.func @transform_8(%arg0: i32) -> (i32, i32) {
    %c0_i32 = arith.constant 0 : i32
    %c0_i32_0 = arith.constant 0 : i32
    %c0_i32_1 = arith.constant 0 : i32
    return %c0_i32, %c0_i32_0 : i32, i32
  }
  func.func @transform_9(%arg0: i32) -> (i32, i32) {
    %c0_i32 = arith.constant 0 : i32
    %c0_i32_0 = arith.constant 0 : i32
    %c0_i32_1 = arith.constant 0 : i32
    return %c0_i32, %c0_i32_0 : i32, i32
  }
  func.func @transform_10(%arg0: i32) -> (i32, i32) {
    %c0_i32 = arith.constant 0 : i32
    %c0_i32_0 = arith.constant 0 : i32
    %c0_i32_1 = arith.constant 0 : i32
    return %c0_i32, %c0_i32_0 : i32, i32
  }
  func.func @transform_11(%arg0: i32) -> (i32, i32) {
    %c0_i32 = arith.constant 0 : i32
    %c0_i32_0 = arith.constant 0 : i32
    %c0_i32_1 = arith.constant 0 : i32
    return %c0_i32, %c0_i32_0 : i32, i32
  }
  func.func @transform_12(%arg0: i32) -> (i32, i32) {
    %c0_i32 = arith.constant 0 : i32
    %c0_i32_0 = arith.constant 0 : i32
    %c0_i32_1 = arith.constant 0 : i32
    return %c0_i32, %c0_i32_0 : i32, i32
  }
  func.func @transform_13(%arg0: i32) -> (i32, i32) {
    %c0_i32 = arith.constant 0 : i32
    %c0_i32_0 = arith.constant 0 : i32
    %c0_i32_1 = arith.constant 0 : i32
    return %c0_i32, %c0_i32_0 : i32, i32
  }
  func.func @transform_14(%arg0: i32) -> (i32, i32) {
    %c0_i32 = arith.constant 0 : i32
    %c0_i32_0 = arith.constant 0 : i32
    %c0_i32_1 = arith.constant 0 : i32
    return %c0_i32, %c0_i32_0 : i32, i32
  }
  func.func @transform_15(%arg0: i32) -> (i32, i32) {
    %c0_i32 = arith.constant 0 : i32
    %c0_i32_0 = arith.constant 0 : i32
    %c0_i32_1 = arith.constant 0 : i32
    return %c0_i32, %c0_i32_0 : i32, i32
  }
  func.func @transform_16(%arg0: i32) -> (i32, i32) {
    %c0_i32 = arith.constant 0 : i32
    %c0_i32_0 = arith.constant 0 : i32
    %c0_i32_1 = arith.constant 0 : i32
    return %c0_i32, %c0_i32_0 : i32, i32
  }
  func.func @transform_17(%arg0: i32) -> (i32, i32, i32) {
    %c0_i32 = arith.constant 0 : i32
    %c0_i32_0 = arith.constant 0 : i32
    %c0_i32_1 = arith.constant 0 : i32
    return %arg0, %c0_i32, %c0_i32_0 : i32, i32, i32
  }
}

module attributes {stable_mosaic.version = 11 : i64} {
  func.func @_conv_attn2_kernel(%arg0: i32, %arg1: memref<8x8x768xbf16, #tpu.memory_space<vmem>>, %arg2: memref<3x768x192xbf16, #tpu.memory_space<vmem>>, %arg3: memref<1x192xf32, #tpu.memory_space<vmem>>, %arg4: memref<192x64xf32, #tpu.memory_space<vmem>>, %arg5: memref<1x64xf32, #tpu.memory_space<vmem>>, %arg6: memref<64x64xf32, #tpu.memory_space<vmem>>, %arg7: memref<64x64xf32, #tpu.memory_space<vmem>>, %arg8: memref<64x64xf32, #tpu.memory_space<vmem>>, %arg9: memref<64x64xf32, #tpu.memory_space<vmem>>, %arg10: memref<1x64xf32, #tpu.memory_space<vmem>>, %arg11: memref<1x64xf32, #tpu.memory_space<vmem>>, %arg12: memref<1x64xf32, #tpu.memory_space<vmem>>, %arg13: memref<1x64xf32, #tpu.memory_space<vmem>>, %arg14: memref<1x64xf32, #tpu.memory_space<vmem>>, %arg15: memref<1x64xf32, #tpu.memory_space<vmem>>, %arg16: memref<8x8x128xf32, #tpu.memory_space<vmem>>) attributes {dimension_semantics = [#tpu.dimension_semantics<parallel>], iteration_bounds = array<i64: 1>, scalar_prefetch = 0 : i64, scratch_operands = 0 : i64, tpu.core_type = #tpu.core_type<tc>, window_params = [{transform_indices = @transform_0, window_bounds = array<i64: 8, 8, 768>}, {pipeline_mode = #tpu.pipeline_mode<synchronous>, transform_indices = @transform_1, window_bounds = array<i64: 3, 768, 192>}, {pipeline_mode = #tpu.pipeline_mode<synchronous>, transform_indices = @transform_2, window_bounds = array<i64: 1, 192>}, {pipeline_mode = #tpu.pipeline_mode<synchronous>, transform_indices = @transform_3, window_bounds = array<i64: 192, 64>}, {pipeline_mode = #tpu.pipeline_mode<synchronous>, transform_indices = @transform_4, window_bounds = array<i64: 1, 64>}, {pipeline_mode = #tpu.pipeline_mode<synchronous>, transform_indices = @transform_5, window_bounds = array<i64: 64, 64>}, {pipeline_mode = #tpu.pipeline_mode<synchronous>, transform_indices = @transform_6, window_bounds = array<i64: 64, 64>}, {pipeline_mode = #tpu.pipeline_mode<synchronous>, transform_indices = @transform_7, window_bounds = array<i64: 64, 64>}, {pipeline_mode = #tpu.pipeline_mode<synchronous>, transform_indices = @transform_8, window_bounds = array<i64: 64, 64>}, {pipeline_mode = #tpu.pipeline_mode<synchronous>, transform_indices = @transform_9, window_bounds = array<i64: 1, 64>}, {pipeline_mode = #tpu.pipeline_mode<synchronous>, transform_indices = @transform_10, window_bounds = array<i64: 1, 64>}, {pipeline_mode = #tpu.pipeline_mode<synchronous>, transform_indices = @transform_11, window_bounds = array<i64: 1, 64>}, {pipeline_mode = #tpu.pipeline_mode<synchronous>, transform_indices = @transform_12, window_bounds = array<i64: 1, 64>}, {pipeline_mode = #tpu.pipeline_mode<synchronous>, transform_indices = @transform_13, window_bounds = array<i64: 1, 64>}, {pipeline_mode = #tpu.pipeline_mode<synchronous>, transform_indices = @transform_14, window_bounds = array<i64: 1, 64>}, {transform_indices = @transform_15, window_bounds = array<i64: 8, 8, 128>}]} {
    %c0 = arith.constant 0 : index
    %c0_0 = arith.constant 0 : index
    %c0_1 = arith.constant 0 : index
    %0 = vector.load %arg1[%c0, %c0_0, %c0_1] : memref<8x8x768xbf16, #tpu.memory_space<vmem>>, vector<8x8x768xbf16>
    %1 = vector.shape_cast %0 : vector<8x8x768xbf16> to vector<64x768xbf16>
    %c0_2 = arith.constant 0 : index
    %c0_3 = arith.constant 0 : index
    %c0_4 = arith.constant 0 : index
    %2 = vector.load %arg2[%c0_2, %c0_3, %c0_4] : memref<3x768x192xbf16, #tpu.memory_space<vmem>>, vector<1x768x192xbf16>
    %3 = vector.shape_cast %2 : vector<1x768x192xbf16> to vector<768x192xbf16>
    %cst = arith.constant dense<0.000000e+00> : vector<64x192xf32>
    %4 = tpu.matmul %1, %3, %cst {dimension_numbers = #tpu.dot_dimension_numbers<[1], [0], [0], [1], [0, 0, 1, 1], [], []>} : vector<64x768xbf16>, vector<768x192xbf16>, vector<64x192xf32> -> vector<64x192xf32>
    %c1 = arith.constant 1 : index
    %c0_5 = arith.constant 0 : index
    %c0_6 = arith.constant 0 : index
    %5 = vector.load %arg2[%c1, %c0_5, %c0_6] : memref<3x768x192xbf16, #tpu.memory_space<vmem>>, vector<1x768x192xbf16>
    %6 = vector.shape_cast %5 : vector<1x768x192xbf16> to vector<768x192xbf16>
    %cst_7 = arith.constant dense<0.000000e+00> : vector<64x192xf32>
    %7 = tpu.matmul %1, %6, %cst_7 {dimension_numbers = #tpu.dot_dimension_numbers<[1], [0], [0], [1], [0, 0, 1, 1], [], []>} : vector<64x768xbf16>, vector<768x192xbf16>, vector<64x192xf32> -> vector<64x192xf32>
    %c2 = arith.constant 2 : index
    %c0_8 = arith.constant 0 : index
    %c0_9 = arith.constant 0 : index
    %8 = vector.load %arg2[%c2, %c0_8, %c0_9] : memref<3x768x192xbf16, #tpu.memory_space<vmem>>, vector<1x768x192xbf16>
    %9 = vector.shape_cast %8 : vector<1x768x192xbf16> to vector<768x192xbf16>
    %cst_10 = arith.constant dense<0.000000e+00> : vector<64x192xf32>
    %10 = tpu.matmul %1, %9, %cst_10 {dimension_numbers = #tpu.dot_dimension_numbers<[1], [0], [0], [1], [0, 0, 1, 1], [], []>} : vector<64x768xbf16>, vector<768x192xbf16>, vector<64x192xf32> -> vector<64x192xf32>
    %cst_11 = arith.constant 0.000000e+00 : f32
    %11 = vector.broadcast %cst_11 : f32 to vector<8x192xf32>
    %12 = vector.extract_strided_slice %4 {offsets = [0, 0], sizes = [56, 192], strides = [1, 1]} : vector<64x192xf32> to vector<56x192xf32>
    %13 = tpu.concatenate %11, %12 in 0 : vector<8x192xf32>, vector<56x192xf32> -> vector<64x192xf32>
    %14 = vector.extract_strided_slice %10 {offsets = [8, 0], sizes = [56, 192], strides = [1, 1]} : vector<64x192xf32> to vector<56x192xf32>
    %15 = tpu.concatenate %14, %11 in 0 : vector<56x192xf32>, vector<8x192xf32> -> vector<64x192xf32>
    %16 = arith.addf %7, %13 : vector<64x192xf32>
    %17 = arith.addf %16, %15 : vector<64x192xf32>
    %c0_12 = arith.constant 0 : index
    %c0_13 = arith.constant 0 : index
    %18 = vector.load %arg3[%c0_12, %c0_13] : memref<1x192xf32, #tpu.memory_space<vmem>>, vector<1x192xf32>
    %19 = vector.broadcast %18 : vector<1x192xf32> to vector<64x192xf32>
    %20 = arith.addf %17, %19 : vector<64x192xf32>
    %cst_14 = arith.constant 0.000000e+00 : f32
    %21 = vector.broadcast %cst_14 : f32 to vector<64x192xf32>
    %22 = arith.maximumf %20, %21 : vector<64x192xf32>
    %c0_15 = arith.constant 0 : index
    %c0_16 = arith.constant 0 : index
    %23 = vector.load %arg4[%c0_15, %c0_16] : memref<192x64xf32, #tpu.memory_space<vmem>>, vector<192x64xf32>
    %cst_17 = arith.constant dense<0.000000e+00> : vector<64x64xf32>
    %24 = tpu.matmul %22, %23, %cst_17 {dimension_numbers = #tpu.dot_dimension_numbers<[1], [0], [0], [1], [0, 0, 1, 1], [], []>} : vector<64x192xf32>, vector<192x64xf32>, vector<64x64xf32> -> vector<64x64xf32>
    %c0_18 = arith.constant 0 : index
    %c0_19 = arith.constant 0 : index
    %25 = vector.load %arg5[%c0_18, %c0_19] : memref<1x64xf32, #tpu.memory_space<vmem>>, vector<1x64xf32>
    %26 = vector.broadcast %25 : vector<1x64xf32> to vector<64x64xf32>
    %27 = arith.addf %24, %26 : vector<64x64xf32>
    %c0_20 = arith.constant 0 : index
    %c0_21 = arith.constant 0 : index
    %28 = vector.load %arg6[%c0_20, %c0_21] : memref<64x64xf32, #tpu.memory_space<vmem>>, vector<64x64xf32>
    %cst_22 = arith.constant dense<0.000000e+00> : vector<64x64xf32>
    %29 = tpu.matmul %27, %28, %cst_22 {dimension_numbers = #tpu.dot_dimension_numbers<[1], [0], [0], [1], [0, 0, 1, 1], [], []>} : vector<64x64xf32>, vector<64x64xf32>, vector<64x64xf32> -> vector<64x64xf32>
    %c0_23 = arith.constant 0 : index
    %c0_24 = arith.constant 0 : index
    %30 = vector.load %arg10[%c0_23, %c0_24] : memref<1x64xf32, #tpu.memory_space<vmem>>, vector<1x64xf32>
    %31 = vector.broadcast %30 : vector<1x64xf32> to vector<64x64xf32>
    %32 = arith.addf %29, %31 : vector<64x64xf32>
    %c0_25 = arith.constant 0 : index
    %c0_26 = arith.constant 0 : index
    %33 = vector.load %arg7[%c0_25, %c0_26] : memref<64x64xf32, #tpu.memory_space<vmem>>, vector<64x64xf32>
    %cst_27 = arith.constant dense<0.000000e+00> : vector<64x64xf32>
    %34 = tpu.matmul %27, %33, %cst_27 {dimension_numbers = #tpu.dot_dimension_numbers<[1], [0], [0], [1], [0, 0, 1, 1], [], []>} : vector<64x64xf32>, vector<64x64xf32>, vector<64x64xf32> -> vector<64x64xf32>
    %c0_28 = arith.constant 0 : index
    %c0_29 = arith.constant 0 : index
    %35 = vector.load %arg11[%c0_28, %c0_29] : memref<1x64xf32, #tpu.memory_space<vmem>>, vector<1x64xf32>
    %36 = vector.broadcast %35 : vector<1x64xf32> to vector<64x64xf32>
    %37 = arith.addf %34, %36 : vector<64x64xf32>
    %c0_30 = arith.constant 0 : index
    %c0_31 = arith.constant 0 : index
    %38 = vector.load %arg8[%c0_30, %c0_31] : memref<64x64xf32, #tpu.memory_space<vmem>>, vector<64x64xf32>
    %cst_32 = arith.constant dense<0.000000e+00> : vector<64x64xf32>
    %39 = tpu.matmul %27, %38, %cst_32 {dimension_numbers = #tpu.dot_dimension_numbers<[1], [0], [0], [1], [0, 0, 1, 1], [], []>} : vector<64x64xf32>, vector<64x64xf32>, vector<64x64xf32> -> vector<64x64xf32>
    %c0_33 = arith.constant 0 : index
    %c0_34 = arith.constant 0 : index
    %40 = vector.load %arg12[%c0_33, %c0_34] : memref<1x64xf32, #tpu.memory_space<vmem>>, vector<1x64xf32>
    %41 = vector.broadcast %40 : vector<1x64xf32> to vector<64x64xf32>
    %42 = arith.addf %39, %41 : vector<64x64xf32>
    %43 = vector.shape_cast %32 : vector<64x64xf32> to vector<8x8x64xf32>
    %44 = vector.shape_cast %37 : vector<64x64xf32> to vector<8x8x64xf32>
    %45 = vector.shape_cast %42 : vector<64x64xf32> to vector<8x8x64xf32>
    %46 = vector.extract_strided_slice %43 {offsets = [0, 0, 0], sizes = [8, 1, 64], strides = [1, 1, 1]} : vector<8x8x64xf32> to vector<8x1x64xf32>
    %47 = vector.shape_cast %46 : vector<8x1x64xf32> to vector<8x64xf32>
    %cst_35 = arith.constant 0.176776692 : f32
    %48 = vector.broadcast %cst_35 : f32 to vector<8x64xf32>
    %49 = arith.mulf %47, %48 : vector<8x64xf32>
    %50 = vector.extract_strided_slice %44 {offsets = [0, 0, 0], sizes = [8, 1, 64], strides = [1, 1, 1]} : vector<8x8x64xf32> to vector<8x1x64xf32>
    %51 = vector.shape_cast %50 : vector<8x1x64xf32> to vector<8x64xf32>
    %52 = vector.extract_strided_slice %45 {offsets = [0, 0, 0], sizes = [8, 1, 64], strides = [1, 1, 1]} : vector<8x8x64xf32> to vector<8x1x64xf32>
    %53 = vector.shape_cast %52 : vector<8x1x64xf32> to vector<8x64xf32>
    %54 = vector.extract_strided_slice %49 {offsets = [0, 0], sizes = [8, 32], strides = [1, 1]} : vector<8x64xf32> to vector<8x32xf32>
    %55 = vector.extract_strided_slice %51 {offsets = [0, 0], sizes = [8, 32], strides = [1, 1]} : vector<8x64xf32> to vector<8x32xf32>
    %cst_36 = arith.constant dense<0.000000e+00> : vector<8x8xf32>
    %56 = tpu.matmul %54, %55, %cst_36 {dimension_numbers = #tpu.dot_dimension_numbers<[1], [1], [0], [0], [0, 0, 1, 0], [], []>} : vector<8x32xf32>, vector<8x32xf32>, vector<8x8xf32> -> vector<8x8xf32>
    %cst_37 = arith.constant dense<0xFF800000> : vector<8xf32>
    %57 = vector.multi_reduction <maximumf>, %56, %cst_37 [1] : vector<8x8xf32> to vector<8xf32>
    %58 = vector.shape_cast %57 : vector<8xf32> to vector<8x1xf32>
    %59 = vector.broadcast %58 : vector<8x1xf32> to vector<8x8xf32>
    %60 = arith.subf %56, %59 : vector<8x8xf32>
    %61 = math.exp %60 : vector<8x8xf32>
    %cst_38 = arith.constant dense<0.000000e+00> : vector<8xf32>
    %62 = vector.multi_reduction <add>, %61, %cst_38 [1] : vector<8x8xf32> to vector<8xf32>
    %63 = vector.shape_cast %62 : vector<8xf32> to vector<8x1xf32>
    %64 = tpu.reciprocal %63 {approx = true} : vector<8x1xf32> -> vector<8x1xf32>
    %65 = vector.broadcast %64 : vector<8x1xf32> to vector<8x8xf32>
    %66 = arith.mulf %61, %65 : vector<8x8xf32>
    %67 = vector.extract_strided_slice %53 {offsets = [0, 0], sizes = [8, 32], strides = [1, 1]} : vector<8x64xf32> to vector<8x32xf32>
    %cst_39 = arith.constant dense<0.000000e+00> : vector<8x32xf32>
    %68 = tpu.matmul %66, %67, %cst_39 {dimension_numbers = #tpu.dot_dimension_numbers<[1], [0], [0], [1], [0, 0, 1, 1], [], []>} : vector<8x8xf32>, vector<8x32xf32>, vector<8x32xf32> -> vector<8x32xf32>
    %69 = vector.extract_strided_slice %49 {offsets = [0, 32], sizes = [8, 32], strides = [1, 1]} : vector<8x64xf32> to vector<8x32xf32>
    %70 = vector.extract_strided_slice %51 {offsets = [0, 32], sizes = [8, 32], strides = [1, 1]} : vector<8x64xf32> to vector<8x32xf32>
    %cst_40 = arith.constant dense<0.000000e+00> : vector<8x8xf32>
    %71 = tpu.matmul %69, %70, %cst_40 {dimension_numbers = #tpu.dot_dimension_numbers<[1], [1], [0], [0], [0, 0, 1, 0], [], []>} : vector<8x32xf32>, vector<8x32xf32>, vector<8x8xf32> -> vector<8x8xf32>
    %cst_41 = arith.constant dense<0xFF800000> : vector<8xf32>
    %72 = vector.multi_reduction <maximumf>, %71, %cst_41 [1] : vector<8x8xf32> to vector<8xf32>
    %73 = vector.shape_cast %72 : vector<8xf32> to vector<8x1xf32>
    %74 = vector.broadcast %73 : vector<8x1xf32> to vector<8x8xf32>
    %75 = arith.subf %71, %74 : vector<8x8xf32>
    %76 = math.exp %75 : vector<8x8xf32>
    %cst_42 = arith.constant dense<0.000000e+00> : vector<8xf32>
    %77 = vector.multi_reduction <add>, %76, %cst_42 [1] : vector<8x8xf32> to vector<8xf32>
    %78 = vector.shape_cast %77 : vector<8xf32> to vector<8x1xf32>
    %79 = tpu.reciprocal %78 {approx = true} : vector<8x1xf32> -> vector<8x1xf32>
    %80 = vector.broadcast %79 : vector<8x1xf32> to vector<8x8xf32>
    %81 = arith.mulf %76, %80 : vector<8x8xf32>
    %82 = vector.extract_strided_slice %53 {offsets = [0, 32], sizes = [8, 32], strides = [1, 1]} : vector<8x64xf32> to vector<8x32xf32>
    %cst_43 = arith.constant dense<0.000000e+00> : vector<8x32xf32>
    %83 = tpu.matmul %81, %82, %cst_43 {dimension_numbers = #tpu.dot_dimension_numbers<[1], [0], [0], [1], [0, 0, 1, 1], [], []>} : vector<8x8xf32>, vector<8x32xf32>, vector<8x32xf32> -> vector<8x32xf32>
    %84 = tpu.concatenate %68, %83 in 1 : vector<8x32xf32>, vector<8x32xf32> -> vector<8x64xf32>
    %85 = vector.extract_strided_slice %43 {offsets = [0, 1, 0], sizes = [8, 1, 64], strides = [1, 1, 1]} : vector<8x8x64xf32> to vector<8x1x64xf32>
    %86 = vector.shape_cast %85 : vector<8x1x64xf32> to vector<8x64xf32>
    %cst_44 = arith.constant 0.176776692 : f32
    %87 = vector.broadcast %cst_44 : f32 to vector<8x64xf32>
    %88 = arith.mulf %86, %87 : vector<8x64xf32>
    %89 = vector.extract_strided_slice %44 {offsets = [0, 1, 0], sizes = [8, 1, 64], strides = [1, 1, 1]} : vector<8x8x64xf32> to vector<8x1x64xf32>
    %90 = vector.shape_cast %89 : vector<8x1x64xf32> to vector<8x64xf32>
    %91 = vector.extract_strided_slice %45 {offsets = [0, 1, 0], sizes = [8, 1, 64], strides = [1, 1, 1]} : vector<8x8x64xf32> to vector<8x1x64xf32>
    %92 = vector.shape_cast %91 : vector<8x1x64xf32> to vector<8x64xf32>
    %93 = vector.extract_strided_slice %88 {offsets = [0, 0], sizes = [8, 32], strides = [1, 1]} : vector<8x64xf32> to vector<8x32xf32>
    %94 = vector.extract_strided_slice %90 {offsets = [0, 0], sizes = [8, 32], strides = [1, 1]} : vector<8x64xf32> to vector<8x32xf32>
    %cst_45 = arith.constant dense<0.000000e+00> : vector<8x8xf32>
    %95 = tpu.matmul %93, %94, %cst_45 {dimension_numbers = #tpu.dot_dimension_numbers<[1], [1], [0], [0], [0, 0, 1, 0], [], []>} : vector<8x32xf32>, vector<8x32xf32>, vector<8x8xf32> -> vector<8x8xf32>
    %cst_46 = arith.constant dense<0xFF800000> : vector<8xf32>
    %96 = vector.multi_reduction <maximumf>, %95, %cst_46 [1] : vector<8x8xf32> to vector<8xf32>
    %97 = vector.shape_cast %96 : vector<8xf32> to vector<8x1xf32>
    %98 = vector.broadcast %97 : vector<8x1xf32> to vector<8x8xf32>
    %99 = arith.subf %95, %98 : vector<8x8xf32>
    %100 = math.exp %99 : vector<8x8xf32>
    %cst_47 = arith.constant dense<0.000000e+00> : vector<8xf32>
    %101 = vector.multi_reduction <add>, %100, %cst_47 [1] : vector<8x8xf32> to vector<8xf32>
    %102 = vector.shape_cast %101 : vector<8xf32> to vector<8x1xf32>
    %103 = tpu.reciprocal %102 {approx = true} : vector<8x1xf32> -> vector<8x1xf32>
    %104 = vector.broadcast %103 : vector<8x1xf32> to vector<8x8xf32>
    %105 = arith.mulf %100, %104 : vector<8x8xf32>
    %106 = vector.extract_strided_slice %92 {offsets = [0, 0], sizes = [8, 32], strides = [1, 1]} : vector<8x64xf32> to vector<8x32xf32>
    %cst_48 = arith.constant dense<0.000000e+00> : vector<8x32xf32>
    %107 = tpu.matmul %105, %106, %cst_48 {dimension_numbers = #tpu.dot_dimension_numbers<[1], [0], [0], [1], [0, 0, 1, 1], [], []>} : vector<8x8xf32>, vector<8x32xf32>, vector<8x32xf32> -> vector<8x32xf32>
    %108 = vector.extract_strided_slice %88 {offsets = [0, 32], sizes = [8, 32], strides = [1, 1]} : vector<8x64xf32> to vector<8x32xf32>
    %109 = vector.extract_strided_slice %90 {offsets = [0, 32], sizes = [8, 32], strides = [1, 1]} : vector<8x64xf32> to vector<8x32xf32>
    %cst_49 = arith.constant dense<0.000000e+00> : vector<8x8xf32>
    %110 = tpu.matmul %108, %109, %cst_49 {dimension_numbers = #tpu.dot_dimension_numbers<[1], [1], [0], [0], [0, 0, 1, 0], [], []>} : vector<8x32xf32>, vector<8x32xf32>, vector<8x8xf32> -> vector<8x8xf32>
    %cst_50 = arith.constant dense<0xFF800000> : vector<8xf32>
    %111 = vector.multi_reduction <maximumf>, %110, %cst_50 [1] : vector<8x8xf32> to vector<8xf32>
    %112 = vector.shape_cast %111 : vector<8xf32> to vector<8x1xf32>
    %113 = vector.broadcast %112 : vector<8x1xf32> to vector<8x8xf32>
    %114 = arith.subf %110, %113 : vector<8x8xf32>
    %115 = math.exp %114 : vector<8x8xf32>
    %cst_51 = arith.constant dense<0.000000e+00> : vector<8xf32>
    %116 = vector.multi_reduction <add>, %115, %cst_51 [1] : vector<8x8xf32> to vector<8xf32>
    %117 = vector.shape_cast %116 : vector<8xf32> to vector<8x1xf32>
    %118 = tpu.reciprocal %117 {approx = true} : vector<8x1xf32> -> vector<8x1xf32>
    %119 = vector.broadcast %118 : vector<8x1xf32> to vector<8x8xf32>
    %120 = arith.mulf %115, %119 : vector<8x8xf32>
    %121 = vector.extract_strided_slice %92 {offsets = [0, 32], sizes = [8, 32], strides = [1, 1]} : vector<8x64xf32> to vector<8x32xf32>
    %cst_52 = arith.constant dense<0.000000e+00> : vector<8x32xf32>
    %122 = tpu.matmul %120, %121, %cst_52 {dimension_numbers = #tpu.dot_dimension_numbers<[1], [0], [0], [1], [0, 0, 1, 1], [], []>} : vector<8x8xf32>, vector<8x32xf32>, vector<8x32xf32> -> vector<8x32xf32>
    %123 = tpu.concatenate %107, %122 in 1 : vector<8x32xf32>, vector<8x32xf32> -> vector<8x64xf32>
    %124 = vector.extract_strided_slice %43 {offsets = [0, 2, 0], sizes = [8, 1, 64], strides = [1, 1, 1]} : vector<8x8x64xf32> to vector<8x1x64xf32>
    %125 = vector.shape_cast %124 : vector<8x1x64xf32> to vector<8x64xf32>
    %cst_53 = arith.constant 0.176776692 : f32
    %126 = vector.broadcast %cst_53 : f32 to vector<8x64xf32>
    %127 = arith.mulf %125, %126 : vector<8x64xf32>
    %128 = vector.extract_strided_slice %44 {offsets = [0, 2, 0], sizes = [8, 1, 64], strides = [1, 1, 1]} : vector<8x8x64xf32> to vector<8x1x64xf32>
    %129 = vector.shape_cast %128 : vector<8x1x64xf32> to vector<8x64xf32>
    %130 = vector.extract_strided_slice %45 {offsets = [0, 2, 0], sizes = [8, 1, 64], strides = [1, 1, 1]} : vector<8x8x64xf32> to vector<8x1x64xf32>
    %131 = vector.shape_cast %130 : vector<8x1x64xf32> to vector<8x64xf32>
    %132 = vector.extract_strided_slice %127 {offsets = [0, 0], sizes = [8, 32], strides = [1, 1]} : vector<8x64xf32> to vector<8x32xf32>
    %133 = vector.extract_strided_slice %129 {offsets = [0, 0], sizes = [8, 32], strides = [1, 1]} : vector<8x64xf32> to vector<8x32xf32>
    %cst_54 = arith.constant dense<0.000000e+00> : vector<8x8xf32>
    %134 = tpu.matmul %132, %133, %cst_54 {dimension_numbers = #tpu.dot_dimension_numbers<[1], [1], [0], [0], [0, 0, 1, 0], [], []>} : vector<8x32xf32>, vector<8x32xf32>, vector<8x8xf32> -> vector<8x8xf32>
    %cst_55 = arith.constant dense<0xFF800000> : vector<8xf32>
    %135 = vector.multi_reduction <maximumf>, %134, %cst_55 [1] : vector<8x8xf32> to vector<8xf32>
    %136 = vector.shape_cast %135 : vector<8xf32> to vector<8x1xf32>
    %137 = vector.broadcast %136 : vector<8x1xf32> to vector<8x8xf32>
    %138 = arith.subf %134, %137 : vector<8x8xf32>
    %139 = math.exp %138 : vector<8x8xf32>
    %cst_56 = arith.constant dense<0.000000e+00> : vector<8xf32>
    %140 = vector.multi_reduction <add>, %139, %cst_56 [1] : vector<8x8xf32> to vector<8xf32>
    %141 = vector.shape_cast %140 : vector<8xf32> to vector<8x1xf32>
    %142 = tpu.reciprocal %141 {approx = true} : vector<8x1xf32> -> vector<8x1xf32>
    %143 = vector.broadcast %142 : vector<8x1xf32> to vector<8x8xf32>
    %144 = arith.mulf %139, %143 : vector<8x8xf32>
    %145 = vector.extract_strided_slice %131 {offsets = [0, 0], sizes = [8, 32], strides = [1, 1]} : vector<8x64xf32> to vector<8x32xf32>
    %cst_57 = arith.constant dense<0.000000e+00> : vector<8x32xf32>
    %146 = tpu.matmul %144, %145, %cst_57 {dimension_numbers = #tpu.dot_dimension_numbers<[1], [0], [0], [1], [0, 0, 1, 1], [], []>} : vector<8x8xf32>, vector<8x32xf32>, vector<8x32xf32> -> vector<8x32xf32>
    %147 = vector.extract_strided_slice %127 {offsets = [0, 32], sizes = [8, 32], strides = [1, 1]} : vector<8x64xf32> to vector<8x32xf32>
    %148 = vector.extract_strided_slice %129 {offsets = [0, 32], sizes = [8, 32], strides = [1, 1]} : vector<8x64xf32> to vector<8x32xf32>
    %cst_58 = arith.constant dense<0.000000e+00> : vector<8x8xf32>
    %149 = tpu.matmul %147, %148, %cst_58 {dimension_numbers = #tpu.dot_dimension_numbers<[1], [1], [0], [0], [0, 0, 1, 0], [], []>} : vector<8x32xf32>, vector<8x32xf32>, vector<8x8xf32> -> vector<8x8xf32>
    %cst_59 = arith.constant dense<0xFF800000> : vector<8xf32>
    %150 = vector.multi_reduction <maximumf>, %149, %cst_59 [1] : vector<8x8xf32> to vector<8xf32>
    %151 = vector.shape_cast %150 : vector<8xf32> to vector<8x1xf32>
    %152 = vector.broadcast %151 : vector<8x1xf32> to vector<8x8xf32>
    %153 = arith.subf %149, %152 : vector<8x8xf32>
    %154 = math.exp %153 : vector<8x8xf32>
    %cst_60 = arith.constant dense<0.000000e+00> : vector<8xf32>
    %155 = vector.multi_reduction <add>, %154, %cst_60 [1] : vector<8x8xf32> to vector<8xf32>
    %156 = vector.shape_cast %155 : vector<8xf32> to vector<8x1xf32>
    %157 = tpu.reciprocal %156 {approx = true} : vector<8x1xf32> -> vector<8x1xf32>
    %158 = vector.broadcast %157 : vector<8x1xf32> to vector<8x8xf32>
    %159 = arith.mulf %154, %158 : vector<8x8xf32>
    %160 = vector.extract_strided_slice %131 {offsets = [0, 32], sizes = [8, 32], strides = [1, 1]} : vector<8x64xf32> to vector<8x32xf32>
    %cst_61 = arith.constant dense<0.000000e+00> : vector<8x32xf32>
    %161 = tpu.matmul %159, %160, %cst_61 {dimension_numbers = #tpu.dot_dimension_numbers<[1], [0], [0], [1], [0, 0, 1, 1], [], []>} : vector<8x8xf32>, vector<8x32xf32>, vector<8x32xf32> -> vector<8x32xf32>
    %162 = tpu.concatenate %146, %161 in 1 : vector<8x32xf32>, vector<8x32xf32> -> vector<8x64xf32>
    %163 = vector.extract_strided_slice %43 {offsets = [0, 3, 0], sizes = [8, 1, 64], strides = [1, 1, 1]} : vector<8x8x64xf32> to vector<8x1x64xf32>
    %164 = vector.shape_cast %163 : vector<8x1x64xf32> to vector<8x64xf32>
    %cst_62 = arith.constant 0.176776692 : f32
    %165 = vector.broadcast %cst_62 : f32 to vector<8x64xf32>
    %166 = arith.mulf %164, %165 : vector<8x64xf32>
    %167 = vector.extract_strided_slice %44 {offsets = [0, 3, 0], sizes = [8, 1, 64], strides = [1, 1, 1]} : vector<8x8x64xf32> to vector<8x1x64xf32>
    %168 = vector.shape_cast %167 : vector<8x1x64xf32> to vector<8x64xf32>
    %169 = vector.extract_strided_slice %45 {offsets = [0, 3, 0], sizes = [8, 1, 64], strides = [1, 1, 1]} : vector<8x8x64xf32> to vector<8x1x64xf32>
    %170 = vector.shape_cast %169 : vector<8x1x64xf32> to vector<8x64xf32>
    %171 = vector.extract_strided_slice %166 {offsets = [0, 0], sizes = [8, 32], strides = [1, 1]} : vector<8x64xf32> to vector<8x32xf32>
    %172 = vector.extract_strided_slice %168 {offsets = [0, 0], sizes = [8, 32], strides = [1, 1]} : vector<8x64xf32> to vector<8x32xf32>
    %cst_63 = arith.constant dense<0.000000e+00> : vector<8x8xf32>
    %173 = tpu.matmul %171, %172, %cst_63 {dimension_numbers = #tpu.dot_dimension_numbers<[1], [1], [0], [0], [0, 0, 1, 0], [], []>} : vector<8x32xf32>, vector<8x32xf32>, vector<8x8xf32> -> vector<8x8xf32>
    %cst_64 = arith.constant dense<0xFF800000> : vector<8xf32>
    %174 = vector.multi_reduction <maximumf>, %173, %cst_64 [1] : vector<8x8xf32> to vector<8xf32>
    %175 = vector.shape_cast %174 : vector<8xf32> to vector<8x1xf32>
    %176 = vector.broadcast %175 : vector<8x1xf32> to vector<8x8xf32>
    %177 = arith.subf %173, %176 : vector<8x8xf32>
    %178 = math.exp %177 : vector<8x8xf32>
    %cst_65 = arith.constant dense<0.000000e+00> : vector<8xf32>
    %179 = vector.multi_reduction <add>, %178, %cst_65 [1] : vector<8x8xf32> to vector<8xf32>
    %180 = vector.shape_cast %179 : vector<8xf32> to vector<8x1xf32>
    %181 = tpu.reciprocal %180 {approx = true} : vector<8x1xf32> -> vector<8x1xf32>
    %182 = vector.broadcast %181 : vector<8x1xf32> to vector<8x8xf32>
    %183 = arith.mulf %178, %182 : vector<8x8xf32>
    %184 = vector.extract_strided_slice %170 {offsets = [0, 0], sizes = [8, 32], strides = [1, 1]} : vector<8x64xf32> to vector<8x32xf32>
    %cst_66 = arith.constant dense<0.000000e+00> : vector<8x32xf32>
    %185 = tpu.matmul %183, %184, %cst_66 {dimension_numbers = #tpu.dot_dimension_numbers<[1], [0], [0], [1], [0, 0, 1, 1], [], []>} : vector<8x8xf32>, vector<8x32xf32>, vector<8x32xf32> -> vector<8x32xf32>
    %186 = vector.extract_strided_slice %166 {offsets = [0, 32], sizes = [8, 32], strides = [1, 1]} : vector<8x64xf32> to vector<8x32xf32>
    %187 = vector.extract_strided_slice %168 {offsets = [0, 32], sizes = [8, 32], strides = [1, 1]} : vector<8x64xf32> to vector<8x32xf32>
    %cst_67 = arith.constant dense<0.000000e+00> : vector<8x8xf32>
    %188 = tpu.matmul %186, %187, %cst_67 {dimension_numbers = #tpu.dot_dimension_numbers<[1], [1], [0], [0], [0, 0, 1, 0], [], []>} : vector<8x32xf32>, vector<8x32xf32>, vector<8x8xf32> -> vector<8x8xf32>
    %cst_68 = arith.constant dense<0xFF800000> : vector<8xf32>
    %189 = vector.multi_reduction <maximumf>, %188, %cst_68 [1] : vector<8x8xf32> to vector<8xf32>
    %190 = vector.shape_cast %189 : vector<8xf32> to vector<8x1xf32>
    %191 = vector.broadcast %190 : vector<8x1xf32> to vector<8x8xf32>
    %192 = arith.subf %188, %191 : vector<8x8xf32>
    %193 = math.exp %192 : vector<8x8xf32>
    %cst_69 = arith.constant dense<0.000000e+00> : vector<8xf32>
    %194 = vector.multi_reduction <add>, %193, %cst_69 [1] : vector<8x8xf32> to vector<8xf32>
    %195 = vector.shape_cast %194 : vector<8xf32> to vector<8x1xf32>
    %196 = tpu.reciprocal %195 {approx = true} : vector<8x1xf32> -> vector<8x1xf32>
    %197 = vector.broadcast %196 : vector<8x1xf32> to vector<8x8xf32>
    %198 = arith.mulf %193, %197 : vector<8x8xf32>
    %199 = vector.extract_strided_slice %170 {offsets = [0, 32], sizes = [8, 32], strides = [1, 1]} : vector<8x64xf32> to vector<8x32xf32>
    %cst_70 = arith.constant dense<0.000000e+00> : vector<8x32xf32>
    %200 = tpu.matmul %198, %199, %cst_70 {dimension_numbers = #tpu.dot_dimension_numbers<[1], [0], [0], [1], [0, 0, 1, 1], [], []>} : vector<8x8xf32>, vector<8x32xf32>, vector<8x32xf32> -> vector<8x32xf32>
    %201 = tpu.concatenate %185, %200 in 1 : vector<8x32xf32>, vector<8x32xf32> -> vector<8x64xf32>
    %202 = vector.extract_strided_slice %43 {offsets = [0, 4, 0], sizes = [8, 1, 64], strides = [1, 1, 1]} : vector<8x8x64xf32> to vector<8x1x64xf32>
    %203 = vector.shape_cast %202 : vector<8x1x64xf32> to vector<8x64xf32>
    %cst_71 = arith.constant 0.176776692 : f32
    %204 = vector.broadcast %cst_71 : f32 to vector<8x64xf32>
    %205 = arith.mulf %203, %204 : vector<8x64xf32>
    %206 = vector.extract_strided_slice %44 {offsets = [0, 4, 0], sizes = [8, 1, 64], strides = [1, 1, 1]} : vector<8x8x64xf32> to vector<8x1x64xf32>
    %207 = vector.shape_cast %206 : vector<8x1x64xf32> to vector<8x64xf32>
    %208 = vector.extract_strided_slice %45 {offsets = [0, 4, 0], sizes = [8, 1, 64], strides = [1, 1, 1]} : vector<8x8x64xf32> to vector<8x1x64xf32>
    %209 = vector.shape_cast %208 : vector<8x1x64xf32> to vector<8x64xf32>
    %210 = vector.extract_strided_slice %205 {offsets = [0, 0], sizes = [8, 32], strides = [1, 1]} : vector<8x64xf32> to vector<8x32xf32>
    %211 = vector.extract_strided_slice %207 {offsets = [0, 0], sizes = [8, 32], strides = [1, 1]} : vector<8x64xf32> to vector<8x32xf32>
    %cst_72 = arith.constant dense<0.000000e+00> : vector<8x8xf32>
    %212 = tpu.matmul %210, %211, %cst_72 {dimension_numbers = #tpu.dot_dimension_numbers<[1], [1], [0], [0], [0, 0, 1, 0], [], []>} : vector<8x32xf32>, vector<8x32xf32>, vector<8x8xf32> -> vector<8x8xf32>
    %cst_73 = arith.constant dense<0xFF800000> : vector<8xf32>
    %213 = vector.multi_reduction <maximumf>, %212, %cst_73 [1] : vector<8x8xf32> to vector<8xf32>
    %214 = vector.shape_cast %213 : vector<8xf32> to vector<8x1xf32>
    %215 = vector.broadcast %214 : vector<8x1xf32> to vector<8x8xf32>
    %216 = arith.subf %212, %215 : vector<8x8xf32>
    %217 = math.exp %216 : vector<8x8xf32>
    %cst_74 = arith.constant dense<0.000000e+00> : vector<8xf32>
    %218 = vector.multi_reduction <add>, %217, %cst_74 [1] : vector<8x8xf32> to vector<8xf32>
    %219 = vector.shape_cast %218 : vector<8xf32> to vector<8x1xf32>
    %220 = tpu.reciprocal %219 {approx = true} : vector<8x1xf32> -> vector<8x1xf32>
    %221 = vector.broadcast %220 : vector<8x1xf32> to vector<8x8xf32>
    %222 = arith.mulf %217, %221 : vector<8x8xf32>
    %223 = vector.extract_strided_slice %209 {offsets = [0, 0], sizes = [8, 32], strides = [1, 1]} : vector<8x64xf32> to vector<8x32xf32>
    %cst_75 = arith.constant dense<0.000000e+00> : vector<8x32xf32>
    %224 = tpu.matmul %222, %223, %cst_75 {dimension_numbers = #tpu.dot_dimension_numbers<[1], [0], [0], [1], [0, 0, 1, 1], [], []>} : vector<8x8xf32>, vector<8x32xf32>, vector<8x32xf32> -> vector<8x32xf32>
    %225 = vector.extract_strided_slice %205 {offsets = [0, 32], sizes = [8, 32], strides = [1, 1]} : vector<8x64xf32> to vector<8x32xf32>
    %226 = vector.extract_strided_slice %207 {offsets = [0, 32], sizes = [8, 32], strides = [1, 1]} : vector<8x64xf32> to vector<8x32xf32>
    %cst_76 = arith.constant dense<0.000000e+00> : vector<8x8xf32>
    %227 = tpu.matmul %225, %226, %cst_76 {dimension_numbers = #tpu.dot_dimension_numbers<[1], [1], [0], [0], [0, 0, 1, 0], [], []>} : vector<8x32xf32>, vector<8x32xf32>, vector<8x8xf32> -> vector<8x8xf32>
    %cst_77 = arith.constant dense<0xFF800000> : vector<8xf32>
    %228 = vector.multi_reduction <maximumf>, %227, %cst_77 [1] : vector<8x8xf32> to vector<8xf32>
    %229 = vector.shape_cast %228 : vector<8xf32> to vector<8x1xf32>
    %230 = vector.broadcast %229 : vector<8x1xf32> to vector<8x8xf32>
    %231 = arith.subf %227, %230 : vector<8x8xf32>
    %232 = math.exp %231 : vector<8x8xf32>
    %cst_78 = arith.constant dense<0.000000e+00> : vector<8xf32>
    %233 = vector.multi_reduction <add>, %232, %cst_78 [1] : vector<8x8xf32> to vector<8xf32>
    %234 = vector.shape_cast %233 : vector<8xf32> to vector<8x1xf32>
    %235 = tpu.reciprocal %234 {approx = true} : vector<8x1xf32> -> vector<8x1xf32>
    %236 = vector.broadcast %235 : vector<8x1xf32> to vector<8x8xf32>
    %237 = arith.mulf %232, %236 : vector<8x8xf32>
    %238 = vector.extract_strided_slice %209 {offsets = [0, 32], sizes = [8, 32], strides = [1, 1]} : vector<8x64xf32> to vector<8x32xf32>
    %cst_79 = arith.constant dense<0.000000e+00> : vector<8x32xf32>
    %239 = tpu.matmul %237, %238, %cst_79 {dimension_numbers = #tpu.dot_dimension_numbers<[1], [0], [0], [1], [0, 0, 1, 1], [], []>} : vector<8x8xf32>, vector<8x32xf32>, vector<8x32xf32> -> vector<8x32xf32>
    %240 = tpu.concatenate %224, %239 in 1 : vector<8x32xf32>, vector<8x32xf32> -> vector<8x64xf32>
    %241 = vector.extract_strided_slice %43 {offsets = [0, 5, 0], sizes = [8, 1, 64], strides = [1, 1, 1]} : vector<8x8x64xf32> to vector<8x1x64xf32>
    %242 = vector.shape_cast %241 : vector<8x1x64xf32> to vector<8x64xf32>
    %cst_80 = arith.constant 0.176776692 : f32
    %243 = vector.broadcast %cst_80 : f32 to vector<8x64xf32>
    %244 = arith.mulf %242, %243 : vector<8x64xf32>
    %245 = vector.extract_strided_slice %44 {offsets = [0, 5, 0], sizes = [8, 1, 64], strides = [1, 1, 1]} : vector<8x8x64xf32> to vector<8x1x64xf32>
    %246 = vector.shape_cast %245 : vector<8x1x64xf32> to vector<8x64xf32>
    %247 = vector.extract_strided_slice %45 {offsets = [0, 5, 0], sizes = [8, 1, 64], strides = [1, 1, 1]} : vector<8x8x64xf32> to vector<8x1x64xf32>
    %248 = vector.shape_cast %247 : vector<8x1x64xf32> to vector<8x64xf32>
    %249 = vector.extract_strided_slice %244 {offsets = [0, 0], sizes = [8, 32], strides = [1, 1]} : vector<8x64xf32> to vector<8x32xf32>
    %250 = vector.extract_strided_slice %246 {offsets = [0, 0], sizes = [8, 32], strides = [1, 1]} : vector<8x64xf32> to vector<8x32xf32>
    %cst_81 = arith.constant dense<0.000000e+00> : vector<8x8xf32>
    %251 = tpu.matmul %249, %250, %cst_81 {dimension_numbers = #tpu.dot_dimension_numbers<[1], [1], [0], [0], [0, 0, 1, 0], [], []>} : vector<8x32xf32>, vector<8x32xf32>, vector<8x8xf32> -> vector<8x8xf32>
    %cst_82 = arith.constant dense<0xFF800000> : vector<8xf32>
    %252 = vector.multi_reduction <maximumf>, %251, %cst_82 [1] : vector<8x8xf32> to vector<8xf32>
    %253 = vector.shape_cast %252 : vector<8xf32> to vector<8x1xf32>
    %254 = vector.broadcast %253 : vector<8x1xf32> to vector<8x8xf32>
    %255 = arith.subf %251, %254 : vector<8x8xf32>
    %256 = math.exp %255 : vector<8x8xf32>
    %cst_83 = arith.constant dense<0.000000e+00> : vector<8xf32>
    %257 = vector.multi_reduction <add>, %256, %cst_83 [1] : vector<8x8xf32> to vector<8xf32>
    %258 = vector.shape_cast %257 : vector<8xf32> to vector<8x1xf32>
    %259 = tpu.reciprocal %258 {approx = true} : vector<8x1xf32> -> vector<8x1xf32>
    %260 = vector.broadcast %259 : vector<8x1xf32> to vector<8x8xf32>
    %261 = arith.mulf %256, %260 : vector<8x8xf32>
    %262 = vector.extract_strided_slice %248 {offsets = [0, 0], sizes = [8, 32], strides = [1, 1]} : vector<8x64xf32> to vector<8x32xf32>
    %cst_84 = arith.constant dense<0.000000e+00> : vector<8x32xf32>
    %263 = tpu.matmul %261, %262, %cst_84 {dimension_numbers = #tpu.dot_dimension_numbers<[1], [0], [0], [1], [0, 0, 1, 1], [], []>} : vector<8x8xf32>, vector<8x32xf32>, vector<8x32xf32> -> vector<8x32xf32>
    %264 = vector.extract_strided_slice %244 {offsets = [0, 32], sizes = [8, 32], strides = [1, 1]} : vector<8x64xf32> to vector<8x32xf32>
    %265 = vector.extract_strided_slice %246 {offsets = [0, 32], sizes = [8, 32], strides = [1, 1]} : vector<8x64xf32> to vector<8x32xf32>
    %cst_85 = arith.constant dense<0.000000e+00> : vector<8x8xf32>
    %266 = tpu.matmul %264, %265, %cst_85 {dimension_numbers = #tpu.dot_dimension_numbers<[1], [1], [0], [0], [0, 0, 1, 0], [], []>} : vector<8x32xf32>, vector<8x32xf32>, vector<8x8xf32> -> vector<8x8xf32>
    %cst_86 = arith.constant dense<0xFF800000> : vector<8xf32>
    %267 = vector.multi_reduction <maximumf>, %266, %cst_86 [1] : vector<8x8xf32> to vector<8xf32>
    %268 = vector.shape_cast %267 : vector<8xf32> to vector<8x1xf32>
    %269 = vector.broadcast %268 : vector<8x1xf32> to vector<8x8xf32>
    %270 = arith.subf %266, %269 : vector<8x8xf32>
    %271 = math.exp %270 : vector<8x8xf32>
    %cst_87 = arith.constant dense<0.000000e+00> : vector<8xf32>
    %272 = vector.multi_reduction <add>, %271, %cst_87 [1] : vector<8x8xf32> to vector<8xf32>
    %273 = vector.shape_cast %272 : vector<8xf32> to vector<8x1xf32>
    %274 = tpu.reciprocal %273 {approx = true} : vector<8x1xf32> -> vector<8x1xf32>
    %275 = vector.broadcast %274 : vector<8x1xf32> to vector<8x8xf32>
    %276 = arith.mulf %271, %275 : vector<8x8xf32>
    %277 = vector.extract_strided_slice %248 {offsets = [0, 32], sizes = [8, 32], strides = [1, 1]} : vector<8x64xf32> to vector<8x32xf32>
    %cst_88 = arith.constant dense<0.000000e+00> : vector<8x32xf32>
    %278 = tpu.matmul %276, %277, %cst_88 {dimension_numbers = #tpu.dot_dimension_numbers<[1], [0], [0], [1], [0, 0, 1, 1], [], []>} : vector<8x8xf32>, vector<8x32xf32>, vector<8x32xf32> -> vector<8x32xf32>
    %279 = tpu.concatenate %263, %278 in 1 : vector<8x32xf32>, vector<8x32xf32> -> vector<8x64xf32>
    %280 = vector.extract_strided_slice %43 {offsets = [0, 6, 0], sizes = [8, 1, 64], strides = [1, 1, 1]} : vector<8x8x64xf32> to vector<8x1x64xf32>
    %281 = vector.shape_cast %280 : vector<8x1x64xf32> to vector<8x64xf32>
    %cst_89 = arith.constant 0.176776692 : f32
    %282 = vector.broadcast %cst_89 : f32 to vector<8x64xf32>
    %283 = arith.mulf %281, %282 : vector<8x64xf32>
    %284 = vector.extract_strided_slice %44 {offsets = [0, 6, 0], sizes = [8, 1, 64], strides = [1, 1, 1]} : vector<8x8x64xf32> to vector<8x1x64xf32>
    %285 = vector.shape_cast %284 : vector<8x1x64xf32> to vector<8x64xf32>
    %286 = vector.extract_strided_slice %45 {offsets = [0, 6, 0], sizes = [8, 1, 64], strides = [1, 1, 1]} : vector<8x8x64xf32> to vector<8x1x64xf32>
    %287 = vector.shape_cast %286 : vector<8x1x64xf32> to vector<8x64xf32>
    %288 = vector.extract_strided_slice %283 {offsets = [0, 0], sizes = [8, 32], strides = [1, 1]} : vector<8x64xf32> to vector<8x32xf32>
    %289 = vector.extract_strided_slice %285 {offsets = [0, 0], sizes = [8, 32], strides = [1, 1]} : vector<8x64xf32> to vector<8x32xf32>
    %cst_90 = arith.constant dense<0.000000e+00> : vector<8x8xf32>
    %290 = tpu.matmul %288, %289, %cst_90 {dimension_numbers = #tpu.dot_dimension_numbers<[1], [1], [0], [0], [0, 0, 1, 0], [], []>} : vector<8x32xf32>, vector<8x32xf32>, vector<8x8xf32> -> vector<8x8xf32>
    %cst_91 = arith.constant dense<0xFF800000> : vector<8xf32>
    %291 = vector.multi_reduction <maximumf>, %290, %cst_91 [1] : vector<8x8xf32> to vector<8xf32>
    %292 = vector.shape_cast %291 : vector<8xf32> to vector<8x1xf32>
    %293 = vector.broadcast %292 : vector<8x1xf32> to vector<8x8xf32>
    %294 = arith.subf %290, %293 : vector<8x8xf32>
    %295 = math.exp %294 : vector<8x8xf32>
    %cst_92 = arith.constant dense<0.000000e+00> : vector<8xf32>
    %296 = vector.multi_reduction <add>, %295, %cst_92 [1] : vector<8x8xf32> to vector<8xf32>
    %297 = vector.shape_cast %296 : vector<8xf32> to vector<8x1xf32>
    %298 = tpu.reciprocal %297 {approx = true} : vector<8x1xf32> -> vector<8x1xf32>
    %299 = vector.broadcast %298 : vector<8x1xf32> to vector<8x8xf32>
    %300 = arith.mulf %295, %299 : vector<8x8xf32>
    %301 = vector.extract_strided_slice %287 {offsets = [0, 0], sizes = [8, 32], strides = [1, 1]} : vector<8x64xf32> to vector<8x32xf32>
    %cst_93 = arith.constant dense<0.000000e+00> : vector<8x32xf32>
    %302 = tpu.matmul %300, %301, %cst_93 {dimension_numbers = #tpu.dot_dimension_numbers<[1], [0], [0], [1], [0, 0, 1, 1], [], []>} : vector<8x8xf32>, vector<8x32xf32>, vector<8x32xf32> -> vector<8x32xf32>
    %303 = vector.extract_strided_slice %283 {offsets = [0, 32], sizes = [8, 32], strides = [1, 1]} : vector<8x64xf32> to vector<8x32xf32>
    %304 = vector.extract_strided_slice %285 {offsets = [0, 32], sizes = [8, 32], strides = [1, 1]} : vector<8x64xf32> to vector<8x32xf32>
    %cst_94 = arith.constant dense<0.000000e+00> : vector<8x8xf32>
    %305 = tpu.matmul %303, %304, %cst_94 {dimension_numbers = #tpu.dot_dimension_numbers<[1], [1], [0], [0], [0, 0, 1, 0], [], []>} : vector<8x32xf32>, vector<8x32xf32>, vector<8x8xf32> -> vector<8x8xf32>
    %cst_95 = arith.constant dense<0xFF800000> : vector<8xf32>
    %306 = vector.multi_reduction <maximumf>, %305, %cst_95 [1] : vector<8x8xf32> to vector<8xf32>
    %307 = vector.shape_cast %306 : vector<8xf32> to vector<8x1xf32>
    %308 = vector.broadcast %307 : vector<8x1xf32> to vector<8x8xf32>
    %309 = arith.subf %305, %308 : vector<8x8xf32>
    %310 = math.exp %309 : vector<8x8xf32>
    %cst_96 = arith.constant dense<0.000000e+00> : vector<8xf32>
    %311 = vector.multi_reduction <add>, %310, %cst_96 [1] : vector<8x8xf32> to vector<8xf32>
    %312 = vector.shape_cast %311 : vector<8xf32> to vector<8x1xf32>
    %313 = tpu.reciprocal %312 {approx = true} : vector<8x1xf32> -> vector<8x1xf32>
    %314 = vector.broadcast %313 : vector<8x1xf32> to vector<8x8xf32>
    %315 = arith.mulf %310, %314 : vector<8x8xf32>
    %316 = vector.extract_strided_slice %287 {offsets = [0, 32], sizes = [8, 32], strides = [1, 1]} : vector<8x64xf32> to vector<8x32xf32>
    %cst_97 = arith.constant dense<0.000000e+00> : vector<8x32xf32>
    %317 = tpu.matmul %315, %316, %cst_97 {dimension_numbers = #tpu.dot_dimension_numbers<[1], [0], [0], [1], [0, 0, 1, 1], [], []>} : vector<8x8xf32>, vector<8x32xf32>, vector<8x32xf32> -> vector<8x32xf32>
    %318 = tpu.concatenate %302, %317 in 1 : vector<8x32xf32>, vector<8x32xf32> -> vector<8x64xf32>
    %319 = vector.extract_strided_slice %43 {offsets = [0, 7, 0], sizes = [8, 1, 64], strides = [1, 1, 1]} : vector<8x8x64xf32> to vector<8x1x64xf32>
    %320 = vector.shape_cast %319 : vector<8x1x64xf32> to vector<8x64xf32>
    %cst_98 = arith.constant 0.176776692 : f32
    %321 = vector.broadcast %cst_98 : f32 to vector<8x64xf32>
    %322 = arith.mulf %320, %321 : vector<8x64xf32>
    %323 = vector.extract_strided_slice %44 {offsets = [0, 7, 0], sizes = [8, 1, 64], strides = [1, 1, 1]} : vector<8x8x64xf32> to vector<8x1x64xf32>
    %324 = vector.shape_cast %323 : vector<8x1x64xf32> to vector<8x64xf32>
    %325 = vector.extract_strided_slice %45 {offsets = [0, 7, 0], sizes = [8, 1, 64], strides = [1, 1, 1]} : vector<8x8x64xf32> to vector<8x1x64xf32>
    %326 = vector.shape_cast %325 : vector<8x1x64xf32> to vector<8x64xf32>
    %327 = vector.extract_strided_slice %322 {offsets = [0, 0], sizes = [8, 32], strides = [1, 1]} : vector<8x64xf32> to vector<8x32xf32>
    %328 = vector.extract_strided_slice %324 {offsets = [0, 0], sizes = [8, 32], strides = [1, 1]} : vector<8x64xf32> to vector<8x32xf32>
    %cst_99 = arith.constant dense<0.000000e+00> : vector<8x8xf32>
    %329 = tpu.matmul %327, %328, %cst_99 {dimension_numbers = #tpu.dot_dimension_numbers<[1], [1], [0], [0], [0, 0, 1, 0], [], []>} : vector<8x32xf32>, vector<8x32xf32>, vector<8x8xf32> -> vector<8x8xf32>
    %cst_100 = arith.constant dense<0xFF800000> : vector<8xf32>
    %330 = vector.multi_reduction <maximumf>, %329, %cst_100 [1] : vector<8x8xf32> to vector<8xf32>
    %331 = vector.shape_cast %330 : vector<8xf32> to vector<8x1xf32>
    %332 = vector.broadcast %331 : vector<8x1xf32> to vector<8x8xf32>
    %333 = arith.subf %329, %332 : vector<8x8xf32>
    %334 = math.exp %333 : vector<8x8xf32>
    %cst_101 = arith.constant dense<0.000000e+00> : vector<8xf32>
    %335 = vector.multi_reduction <add>, %334, %cst_101 [1] : vector<8x8xf32> to vector<8xf32>
    %336 = vector.shape_cast %335 : vector<8xf32> to vector<8x1xf32>
    %337 = tpu.reciprocal %336 {approx = true} : vector<8x1xf32> -> vector<8x1xf32>
    %338 = vector.broadcast %337 : vector<8x1xf32> to vector<8x8xf32>
    %339 = arith.mulf %334, %338 : vector<8x8xf32>
    %340 = vector.extract_strided_slice %326 {offsets = [0, 0], sizes = [8, 32], strides = [1, 1]} : vector<8x64xf32> to vector<8x32xf32>
    %cst_102 = arith.constant dense<0.000000e+00> : vector<8x32xf32>
    %341 = tpu.matmul %339, %340, %cst_102 {dimension_numbers = #tpu.dot_dimension_numbers<[1], [0], [0], [1], [0, 0, 1, 1], [], []>} : vector<8x8xf32>, vector<8x32xf32>, vector<8x32xf32> -> vector<8x32xf32>
    %342 = vector.extract_strided_slice %322 {offsets = [0, 32], sizes = [8, 32], strides = [1, 1]} : vector<8x64xf32> to vector<8x32xf32>
    %343 = vector.extract_strided_slice %324 {offsets = [0, 32], sizes = [8, 32], strides = [1, 1]} : vector<8x64xf32> to vector<8x32xf32>
    %cst_103 = arith.constant dense<0.000000e+00> : vector<8x8xf32>
    %344 = tpu.matmul %342, %343, %cst_103 {dimension_numbers = #tpu.dot_dimension_numbers<[1], [1], [0], [0], [0, 0, 1, 0], [], []>} : vector<8x32xf32>, vector<8x32xf32>, vector<8x8xf32> -> vector<8x8xf32>
    %cst_104 = arith.constant dense<0xFF800000> : vector<8xf32>
    %345 = vector.multi_reduction <maximumf>, %344, %cst_104 [1] : vector<8x8xf32> to vector<8xf32>
    %346 = vector.shape_cast %345 : vector<8xf32> to vector<8x1xf32>
    %347 = vector.broadcast %346 : vector<8x1xf32> to vector<8x8xf32>
    %348 = arith.subf %344, %347 : vector<8x8xf32>
    %349 = math.exp %348 : vector<8x8xf32>
    %cst_105 = arith.constant dense<0.000000e+00> : vector<8xf32>
    %350 = vector.multi_reduction <add>, %349, %cst_105 [1] : vector<8x8xf32> to vector<8xf32>
    %351 = vector.shape_cast %350 : vector<8xf32> to vector<8x1xf32>
    %352 = tpu.reciprocal %351 {approx = true} : vector<8x1xf32> -> vector<8x1xf32>
    %353 = vector.broadcast %352 : vector<8x1xf32> to vector<8x8xf32>
    %354 = arith.mulf %349, %353 : vector<8x8xf32>
    %355 = vector.extract_strided_slice %326 {offsets = [0, 32], sizes = [8, 32], strides = [1, 1]} : vector<8x64xf32> to vector<8x32xf32>
    %cst_106 = arith.constant dense<0.000000e+00> : vector<8x32xf32>
    %356 = tpu.matmul %354, %355, %cst_106 {dimension_numbers = #tpu.dot_dimension_numbers<[1], [0], [0], [1], [0, 0, 1, 1], [], []>} : vector<8x8xf32>, vector<8x32xf32>, vector<8x32xf32> -> vector<8x32xf32>
    %357 = tpu.concatenate %341, %356 in 1 : vector<8x32xf32>, vector<8x32xf32> -> vector<8x64xf32>
    %358 = vector.shape_cast %84 : vector<8x64xf32> to vector<1x8x64xf32>
    %359 = vector.shape_cast %123 : vector<8x64xf32> to vector<1x8x64xf32>
    %360 = vector.shape_cast %162 : vector<8x64xf32> to vector<1x8x64xf32>
    %361 = vector.shape_cast %201 : vector<8x64xf32> to vector<1x8x64xf32>
    %362 = vector.shape_cast %240 : vector<8x64xf32> to vector<1x8x64xf32>
    %363 = vector.shape_cast %279 : vector<8x64xf32> to vector<1x8x64xf32>
    %364 = vector.shape_cast %318 : vector<8x64xf32> to vector<1x8x64xf32>
    %365 = vector.shape_cast %357 : vector<8x64xf32> to vector<1x8x64xf32>
    %366 = tpu.concatenate %358, %359, %360, %361, %362, %363, %364, %365 in 0 : vector<1x8x64xf32>, vector<1x8x64xf32>, vector<1x8x64xf32>, vector<1x8x64xf32>, vector<1x8x64xf32>, vector<1x8x64xf32>, vector<1x8x64xf32>, vector<1x8x64xf32> -> vector<8x8x64xf32>
    %367 = vector.shape_cast %366 : vector<8x8x64xf32> to vector<64x64xf32>
    %c0_107 = arith.constant 0 : index
    %c0_108 = arith.constant 0 : index
    %368 = vector.load %arg9[%c0_107, %c0_108] : memref<64x64xf32, #tpu.memory_space<vmem>>, vector<64x64xf32>
    %cst_109 = arith.constant dense<0.000000e+00> : vector<64x64xf32>
    %369 = tpu.matmul %367, %368, %cst_109 {dimension_numbers = #tpu.dot_dimension_numbers<[1], [0], [0], [1], [0, 0, 1, 1], [], []>} : vector<64x64xf32>, vector<64x64xf32>, vector<64x64xf32> -> vector<64x64xf32>
    %c0_110 = arith.constant 0 : index
    %c0_111 = arith.constant 0 : index
    %370 = vector.load %arg13[%c0_110, %c0_111] : memref<1x64xf32, #tpu.memory_space<vmem>>, vector<1x64xf32>
    %371 = vector.broadcast %370 : vector<1x64xf32> to vector<64x64xf32>
    %372 = arith.addf %369, %371 : vector<64x64xf32>
    %cst_112 = arith.constant dense<0.000000e+00> : vector<64xf32>
    %373 = vector.multi_reduction <add>, %372, %cst_112 [1] : vector<64x64xf32> to vector<64xf32>
    %374 = vector.shape_cast %373 : vector<64xf32> to vector<64x1xf32>
    %cst_113 = arith.constant 6.400000e+01 : f32
    %375 = vector.broadcast %cst_113 : f32 to vector<64x1xf32>
    %376 = arith.divf %374, %375 : vector<64x1xf32>
    %377 = vector.broadcast %376 : vector<64x1xf32> to vector<64x64xf32>
    %378 = arith.subf %372, %377 : vector<64x64xf32>
    %379 = arith.mulf %378, %378 : vector<64x64xf32>
    %cst_114 = arith.constant dense<0.000000e+00> : vector<64xf32>
    %380 = vector.multi_reduction <add>, %379, %cst_114 [1] : vector<64x64xf32> to vector<64xf32>
    %381 = vector.shape_cast %380 : vector<64xf32> to vector<64x1xf32>
    %cst_115 = arith.constant 6.400000e+01 : f32
    %382 = vector.broadcast %cst_115 : f32 to vector<64x1xf32>
    %383 = arith.divf %381, %382 : vector<64x1xf32>
    %384 = vector.broadcast %376 : vector<64x1xf32> to vector<64x64xf32>
    %385 = arith.subf %372, %384 : vector<64x64xf32>
    %cst_116 = arith.constant 9.99999974E-6 : f32
    %386 = vector.broadcast %cst_116 : f32 to vector<64x1xf32>
    %387 = arith.addf %383, %386 : vector<64x1xf32>
    %388 = math.rsqrt %387 : vector<64x1xf32>
    %389 = vector.broadcast %388 : vector<64x1xf32> to vector<64x64xf32>
    %390 = arith.mulf %385, %389 : vector<64x64xf32>
    %c0_117 = arith.constant 0 : index
    %c0_118 = arith.constant 0 : index
    %391 = vector.load %arg14[%c0_117, %c0_118] : memref<1x64xf32, #tpu.memory_space<vmem>>, vector<1x64xf32>
    %392 = vector.broadcast %391 : vector<1x64xf32> to vector<64x64xf32>
    %393 = arith.mulf %390, %392 : vector<64x64xf32>
    %c0_119 = arith.constant 0 : index
    %c0_120 = arith.constant 0 : index
    %394 = vector.load %arg15[%c0_119, %c0_120] : memref<1x64xf32, #tpu.memory_space<vmem>>, vector<1x64xf32>
    %395 = vector.broadcast %394 : vector<1x64xf32> to vector<64x64xf32>
    %396 = arith.addf %393, %395 : vector<64x64xf32>
    %397 = vector.shape_cast %396 : vector<64x64xf32> to vector<8x8x64xf32>
    %cst_121 = arith.constant 0.000000e+00 : f32
    %398 = vector.broadcast %cst_121 : f32 to vector<8x8x64xf32>
    %399 = tpu.concatenate %397, %398 in 2 : vector<8x8x64xf32>, vector<8x8x64xf32> -> vector<8x8x128xf32>
    %c0_122 = arith.constant 0 : index
    %c0_123 = arith.constant 0 : index
    %c0_124 = arith.constant 0 : index
    %400 = vector.load %arg16[%c0_122, %c0_123, %c0_124] : memref<8x8x128xf32, #tpu.memory_space<vmem>>, vector<8x8x128xf32>
    tpu.vector_store %arg16[%c0_122, %c0_123, %c0_124], %399 {strides = array<i32>} : memref<8x8x128xf32, #tpu.memory_space<vmem>>, vector<8x8x128xf32>,
    return
  }
  func.func @transform_0(%arg0: i32) -> (i32, i32, i32) {
    %c0_i32 = arith.constant 0 : i32
    %c0_i32_0 = arith.constant 0 : i32
    %c0_i32_1 = arith.constant 0 : i32
    return %c0_i32, %arg0, %c0_i32_0 : i32, i32, i32
  }
  func.func @transform_1(%arg0: i32) -> (i32, i32, i32) {
    %c0_i32 = arith.constant 0 : i32
    %c0_i32_0 = arith.constant 0 : i32
    %c0_i32_1 = arith.constant 0 : i32
    %c0_i32_2 = arith.constant 0 : i32
    return %c0_i32, %c0_i32_0, %c0_i32_1 : i32, i32, i32
  }
  func.func @transform_2(%arg0: i32) -> (i32, i32) {
    %c0_i32 = arith.constant 0 : i32
    %c0_i32_0 = arith.constant 0 : i32
    %c0_i32_1 = arith.constant 0 : i32
    return %c0_i32, %c0_i32_0 : i32, i32
  }
  func.func @transform_3(%arg0: i32) -> (i32, i32) {
    %c0_i32 = arith.constant 0 : i32
    %c0_i32_0 = arith.constant 0 : i32
    %c0_i32_1 = arith.constant 0 : i32
    return %c0_i32, %c0_i32_0 : i32, i32
  }
  func.func @transform_4(%arg0: i32) -> (i32, i32) {
    %c0_i32 = arith.constant 0 : i32
    %c0_i32_0 = arith.constant 0 : i32
    %c0_i32_1 = arith.constant 0 : i32
    return %c0_i32, %c0_i32_0 : i32, i32
  }
  func.func @transform_5(%arg0: i32) -> (i32, i32) {
    %c0_i32 = arith.constant 0 : i32
    %c0_i32_0 = arith.constant 0 : i32
    %c0_i32_1 = arith.constant 0 : i32
    return %c0_i32, %c0_i32_0 : i32, i32
  }
  func.func @transform_6(%arg0: i32) -> (i32, i32) {
    %c0_i32 = arith.constant 0 : i32
    %c0_i32_0 = arith.constant 0 : i32
    %c0_i32_1 = arith.constant 0 : i32
    return %c0_i32, %c0_i32_0 : i32, i32
  }
  func.func @transform_7(%arg0: i32) -> (i32, i32) {
    %c0_i32 = arith.constant 0 : i32
    %c0_i32_0 = arith.constant 0 : i32
    %c0_i32_1 = arith.constant 0 : i32
    return %c0_i32, %c0_i32_0 : i32, i32
  }
  func.func @transform_8(%arg0: i32) -> (i32, i32) {
    %c0_i32 = arith.constant 0 : i32
    %c0_i32_0 = arith.constant 0 : i32
    %c0_i32_1 = arith.constant 0 : i32
    return %c0_i32, %c0_i32_0 : i32, i32
  }
  func.func @transform_9(%arg0: i32) -> (i32, i32) {
    %c0_i32 = arith.constant 0 : i32
    %c0_i32_0 = arith.constant 0 : i32
    %c0_i32_1 = arith.constant 0 : i32
    return %c0_i32, %c0_i32_0 : i32, i32
  }
  func.func @transform_10(%arg0: i32) -> (i32, i32) {
    %c0_i32 = arith.constant 0 : i32
    %c0_i32_0 = arith.constant 0 : i32
    %c0_i32_1 = arith.constant 0 : i32
    return %c0_i32, %c0_i32_0 : i32, i32
  }
  func.func @transform_11(%arg0: i32) -> (i32, i32) {
    %c0_i32 = arith.constant 0 : i32
    %c0_i32_0 = arith.constant 0 : i32
    %c0_i32_1 = arith.constant 0 : i32
    return %c0_i32, %c0_i32_0 : i32, i32
  }
  func.func @transform_12(%arg0: i32) -> (i32, i32) {
    %c0_i32 = arith.constant 0 : i32
    %c0_i32_0 = arith.constant 0 : i32
    %c0_i32_1 = arith.constant 0 : i32
    return %c0_i32, %c0_i32_0 : i32, i32
  }
  func.func @transform_13(%arg0: i32) -> (i32, i32) {
    %c0_i32 = arith.constant 0 : i32
    %c0_i32_0 = arith.constant 0 : i32
    %c0_i32_1 = arith.constant 0 : i32
    return %c0_i32, %c0_i32_0 : i32, i32
  }
  func.func @transform_14(%arg0: i32) -> (i32, i32) {
    %c0_i32 = arith.constant 0 : i32
    %c0_i32_0 = arith.constant 0 : i32
    %c0_i32_1 = arith.constant 0 : i32
    return %c0_i32, %c0_i32_0 : i32, i32
  }
  func.func @transform_15(%arg0: i32) -> (i32, i32, i32) {
    %c0_i32 = arith.constant 0 : i32
    %c0_i32_0 = arith.constant 0 : i32
    %c0_i32_1 = arith.constant 0 : i32
    return %arg0, %c0_i32, %c0_i32_0 : i32, i32, i32
  }
}

module attributes {stable_mosaic.version = 11 : i64} {
  func.func @_fc_kernel(%arg0: i32, %arg1: memref<16x128xf32, #tpu.memory_space<vmem>>, %arg2: memref<16x128xf32, #tpu.memory_space<vmem>>, %arg3: memref<128x128xf32, #tpu.memory_space<vmem>>, %arg4: memref<128x128xf32, #tpu.memory_space<vmem>>, %arg5: memref<1x128xf32, #tpu.memory_space<vmem>>, %arg6: memref<16x128xf32, #tpu.memory_space<vmem>>) attributes {dimension_semantics = [#tpu.dimension_semantics<parallel>], iteration_bounds = array<i64: 1>, scalar_prefetch = 0 : i64, scratch_operands = 0 : i64, tpu.core_type = #tpu.core_type<tc>, window_params = [{transform_indices = @transform_0, window_bounds = array<i64: 16, 128>}, {transform_indices = @transform_1, window_bounds = array<i64: 16, 128>}, {pipeline_mode = #tpu.pipeline_mode<synchronous>, transform_indices = @transform_2, window_bounds = array<i64: 128, 128>}, {pipeline_mode = #tpu.pipeline_mode<synchronous>, transform_indices = @transform_3, window_bounds = array<i64: 128, 128>}, {pipeline_mode = #tpu.pipeline_mode<synchronous>, transform_indices = @transform_4, window_bounds = array<i64: 1, 128>}, {transform_indices = @transform_5, window_bounds = array<i64: 16, 128>}]} {
    %c0 = arith.constant 0 : index
    %c0_0 = arith.constant 0 : index
    %0 = vector.load %arg1[%c0, %c0_0] : memref<16x128xf32, #tpu.memory_space<vmem>>, vector<16x128xf32>
    %c0_1 = arith.constant 0 : index
    %c0_2 = arith.constant 0 : index
    %1 = vector.load %arg3[%c0_1, %c0_2] : memref<128x128xf32, #tpu.memory_space<vmem>>, vector<128x128xf32>
    %cst = arith.constant dense<0.000000e+00> : vector<16x128xf32>
    %2 = tpu.matmul %0, %1, %cst {dimension_numbers = #tpu.dot_dimension_numbers<[1], [0], [0], [1], [0, 0, 1, 1], [], []>} : vector<16x128xf32>, vector<128x128xf32>, vector<16x128xf32> -> vector<16x128xf32>
    %c0_3 = arith.constant 0 : index
    %c0_4 = arith.constant 0 : index
    %3 = vector.load %arg2[%c0_3, %c0_4] : memref<16x128xf32, #tpu.memory_space<vmem>>, vector<16x128xf32>
    %c0_5 = arith.constant 0 : index
    %c0_6 = arith.constant 0 : index
    %4 = vector.load %arg4[%c0_5, %c0_6] : memref<128x128xf32, #tpu.memory_space<vmem>>, vector<128x128xf32>
    %cst_7 = arith.constant dense<0.000000e+00> : vector<16x128xf32>
    %5 = tpu.matmul %3, %4, %cst_7 {dimension_numbers = #tpu.dot_dimension_numbers<[1], [0], [0], [1], [0, 0, 1, 1], [], []>} : vector<16x128xf32>, vector<128x128xf32>, vector<16x128xf32> -> vector<16x128xf32>
    %6 = arith.addf %2, %5 : vector<16x128xf32>
    %c0_8 = arith.constant 0 : index
    %c0_9 = arith.constant 0 : index
    %7 = vector.load %arg5[%c0_8, %c0_9] : memref<1x128xf32, #tpu.memory_space<vmem>>, vector<1x128xf32>
    %8 = vector.broadcast %7 : vector<1x128xf32> to vector<16x128xf32>
    %9 = arith.addf %6, %8 : vector<16x128xf32>
    %c0_10 = arith.constant 0 : index
    %c0_11 = arith.constant 0 : index
    %10 = vector.load %arg6[%c0_10, %c0_11] : memref<16x128xf32, #tpu.memory_space<vmem>>, vector<16x128xf32>
    tpu.vector_store %arg6[%c0_10, %c0_11], %9 {strides = array<i32>} : memref<16x128xf32, #tpu.memory_space<vmem>>, vector<16x128xf32>,
    return
  }
  func.func @transform_0(%arg0: i32) -> (i32, i32) {
    %c0_i32 = arith.constant 0 : i32
    %c0_i32_0 = arith.constant 0 : i32
    return %arg0, %c0_i32 : i32, i32
  }
  func.func @transform_1(%arg0: i32) -> (i32, i32) {
    %c0_i32 = arith.constant 0 : i32
    %c0_i32_0 = arith.constant 0 : i32
    return %arg0, %c0_i32 : i32, i32
  }
  func.func @transform_2(%arg0: i32) -> (i32, i32) {
    %c0_i32 = arith.constant 0 : i32
    %c0_i32_0 = arith.constant 0 : i32
    %c0_i32_1 = arith.constant 0 : i32
    return %c0_i32, %c0_i32_0 : i32, i32
  }
  func.func @transform_3(%arg0: i32) -> (i32, i32) {
    %c0_i32 = arith.constant 0 : i32
    %c0_i32_0 = arith.constant 0 : i32
    %c0_i32_1 = arith.constant 0 : i32
    return %c0_i32, %c0_i32_0 : i32, i32
  }
  func.func @transform_4(%arg0: i32) -> (i32, i32) {
    %c0_i32 = arith.constant 0 : i32
    %c0_i32_0 = arith.constant 0 : i32
    %c0_i32_1 = arith.constant 0 : i32
    return %c0_i32, %c0_i32_0 : i32, i32
  }
  func.func @transform_5(%arg0: i32) -> (i32, i32) {
    %c0_i32 = arith.constant 0 : i32
    %c0_i32_0 = arith.constant 0 : i32
    return %arg0, %c0_i32 : i32, i32
  }
}

</mosaic_0001>

<llo_original>
// kernel: bert_seq_tagger_forward.5
$region0: #{bert_seq_tagger_forward.5}
  #allocation0 [shape = 'u32[]', space=smem, size = 0x4, offset = 0x4, fixed_abs, tag = 'smem constant byte address 0x4 - core index']
  #allocation1 [shape = 'u32[72,128]{1,0:T(1,128)}', space=vmem, size = 0x9000, scoped, tag = 'internal scratch']
  %s0 = inlined_call_operand.vmem [shape: f32[16,128], index: 0, kind: input, shape index: {}]
  %s1 = inlined_call_operand.vmem [shape: f32[16,128], index: 1, kind: input, shape index: {}]
  %s2 = inlined_call_operand.vmem [shape: f32[128,128], index: 2, kind: input, shape index: {}]
  %s3 = inlined_call_operand.vmem [shape: f32[128,128], index: 3, kind: input, shape index: {}]
  %s4 = inlined_call_operand.vmem [shape: f32[1,128], index: 4, kind: input, shape index: {}]
  %s5 = inlined_call_operand.vmem [shape: f32[16,128], index: 5, kind: output, shape index: {}]
  %s6 = sld [smem:[#allocation0]]
  $region30: #{bert_seq_tagger_forward.5} parent=0
    _
  %s8 = ssub.s32 1, %s6
  %s9 = scalar_select 0, %s8, %s6
  // Predicated region
  $region2: #{bert_seq_tagger_forward.5} parent=0 // pred_check
    _
  $region3: #{bert_seq_tagger_forward.5} parent=0 // pred_check_branch
    %11 = sbr.rel (0) target = $region5
  $region4: #{bert_seq_tagger_forward.5} parent=0 // pred_region
    _
  $region5: #{bert_seq_tagger_forward.5} parent=0 // pred_fallthru
    _
  // Predicated region
  $region6: #{bert_seq_tagger_forward.5} parent=0 // pred_check
    _
  $region7: #{bert_seq_tagger_forward.5} parent=0 // pred_check_branch
    %13 = sbr.rel (0) target = $region9
  $region8: #{bert_seq_tagger_forward.5} parent=0 // pred_region
    _
  $region9: #{bert_seq_tagger_forward.5} parent=0 // pred_fallthru
    _
  // Predicated region
  $region10: #{bert_seq_tagger_forward.5} parent=0 // pred_check
    _
  $region11: #{bert_seq_tagger_forward.5} parent=0 // pred_check_branch
    %15 = sbr.rel (0) target = $region13
  $region12: #{bert_seq_tagger_forward.5} parent=0 // pred_region
    _
  $region13: #{bert_seq_tagger_forward.5} parent=0 // pred_fallthru
    _
  // Predicated region
  $region14: #{bert_seq_tagger_forward.5} parent=0 // pred_check
    _
  $region15: #{bert_seq_tagger_forward.5} parent=0 // pred_check_branch
    %17 = sbr.rel (0) target = $region17
  $region16: #{bert_seq_tagger_forward.5} parent=0 // pred_region
    _
  $region17: #{bert_seq_tagger_forward.5} parent=0 // pred_fallthru
    _
  // Predicated region
  $region18: #{bert_seq_tagger_forward.5} parent=0 // pred_check
    _
  $region19: #{bert_seq_tagger_forward.5} parent=0 // pred_check_branch
    %19 = sbr.rel (0) target = $region21
  $region20: #{bert_seq_tagger_forward.5} parent=0 // pred_region
    _
  $region21: #{bert_seq_tagger_forward.5} parent=0 // pred_fallthru
    _
  %v20 = vld [vmem:[%s0] sm:$0xff]
  %v21 = vld [vmem:[%s0 + $0x8] sm:$0xff]
  %v22 = vld [vmem:[%s2] sm:$0xff]
  %v23 = vld [vmem:[%s2 + $0x8] sm:$0xff]
  %v24 = vld [vmem:[%s2 + $0x10] sm:$0xff]
  %v25 = vld [vmem:[%s2 + $0x18] sm:$0xff]
  %v26 = vld [vmem:[%s2 + $0x20] sm:$0xff]
  %v27 = vld [vmem:[%s2 + $0x28] sm:$0xff]
  %v28 = vld [vmem:[%s2 + $0x30] sm:$0xff]
  %v29 = vld [vmem:[%s2 + $0x38] sm:$0xff]
  %v30 = vld [vmem:[%s2 + $0x40] sm:$0xff]
  %v31 = vld [vmem:[%s2 + $0x48] sm:$0xff]
  %v32 = vld [vmem:[%s2 + $0x50] sm:$0xff]
  %v33 = vld [vmem:[%s2 + $0x58] sm:$0xff]
  %v34 = vld [vmem:[%s2 + $0x60] sm:$0xff]
  %v35 = vld [vmem:[%s2 + $0x68] sm:$0xff]
  %v36 = vld [vmem:[%s2 + $0x70] sm:$0xff]
  %v37 = vld [vmem:[%s2 + $0x78] sm:$0xff]
  %v38 = vld [vmem:[%s1] sm:$0xff]
  %v39 = vld [vmem:[%s1 + $0x8] sm:$0xff]
  %v40 = vld [vmem:[%s3] sm:$0xff]
  %v41 = vld [vmem:[%s3 + $0x8] sm:$0xff]
  %v42 = vld [vmem:[%s3 + $0x10] sm:$0xff]
  %v43 = vld [vmem:[%s3 + $0x18] sm:$0xff]
  %v44 = vld [vmem:[%s3 + $0x20] sm:$0xff]
  %v45 = vld [vmem:[%s3 + $0x28] sm:$0xff]
  %v46 = vld [vmem:[%s3 + $0x30] sm:$0xff]
  %v47 = vld [vmem:[%s3 + $0x38] sm:$0xff]
  %v48 = vld [vmem:[%s3 + $0x40] sm:$0xff]
  %v49 = vld [vmem:[%s3 + $0x48] sm:$0xff]
  %v50 = vld [vmem:[%s3 + $0x50] sm:$0xff]
  %v51 = vld [vmem:[%s3 + $0x58] sm:$0xff]
  %v52 = vld [vmem:[%s3 + $0x60] sm:$0xff]
  %v53 = vld [vmem:[%s3 + $0x68] sm:$0xff]
  %v54 = vld [vmem:[%s3 + $0x70] sm:$0xff]
  %v55 = vld [vmem:[%s3 + $0x78] sm:$0xff]
  %56 = vmatpush.msra.mxu0 %v55
  %57 = vmatpush.msra.mxu0 %v54
  %58 = vmatpush.msra.mxu0 %v53
  %59 = vmatpush.msra.mxu0 %v52
  %60 = vmatpush.msra.mxu0 %v51
  %61 = vmatpush.msra.mxu0 %v50
  %62 = vmatpush.msra.mxu0 %v49
  %63 = vmatpush.msra.mxu0 %v48
  %64 = vmatpush.msra.mxu0 %v47
  %65 = vmatpush.msra.mxu0 %v46
  %66 = vmatpush.msra.mxu0 %v45
  %67 = vmatpush.msra.mxu0 %v44
  %68 = vmatpush.msra.mxu0 %v43
  %69 = vmatpush.msra.mxu0 %v42
  %70 = vmatpush.msra.mxu0 %v41
  %71 = vmatpush.msra.mxu0 %v40
  %72 = vmatmul.f32.gmra.mxu0 %v38
  %v73 = vpop.f32.mrf.mxu0
  %v74 = vadd.f32 0.0, %v73
  %75 = vmatmul.f32.gmra.mxu0 %v39
  %v76 = vpop.f32.mrf.mxu0
  %v77 = vadd.f32 0.0, %v76
  %78 = vdwg.mxu0
  %79 = vmatpush.msra.mxu0 %v37
  %80 = vmatpush.msra.mxu0 %v36
  %81 = vmatpush.msra.mxu0 %v35
  %82 = vmatpush.msra.mxu0 %v34
  %83 = vmatpush.msra.mxu0 %v33
  %84 = vmatpush.msra.mxu0 %v32
  %85 = vmatpush.msra.mxu0 %v31
  %86 = vmatpush.msra.mxu0 %v30
  %87 = vmatpush.msra.mxu0 %v29
  %88 = vmatpush.msra.mxu0 %v28
  %89 = vmatpush.msra.mxu0 %v27
  %90 = vmatpush.msra.mxu0 %v26
  %91 = vmatpush.msra.mxu0 %v25
  %92 = vmatpush.msra.mxu0 %v24
  %93 = vmatpush.msra.mxu0 %v23
  %94 = vmatpush.msra.mxu0 %v22
  %95 = vmatmul.f32.gmra.mxu0 %v20
  %v96 = vpop.f32.mrf.mxu0
  %v97 = vadd.f32 %v74, %v96
  %98 = vmatmul.f32.gmra.mxu0 %v21
  %v99 = vpop.f32.mrf.mxu0
  %v100 = vadd.f32 %v77, %v99
  %101 = vdwg.mxu0
  %v102 = vld [vmem:[%s4] sm:$0x1]
  %v104 = vperm.slane %v102, 0
  %v106 = vadd.f32 %v97, %v104
  %v107 = vadd.f32 %v100, %v104
  %108 = vst [vmem:[%s5] sm:$0xff] %v106
  %109 = vst [vmem:[%s5 + $0x8] sm:$0xff] %v107
  // Predicated region
  $region22: #{bert_seq_tagger_forward.5} parent=0 // pred_check
    _
  $region23: #{bert_seq_tagger_forward.5} parent=0 // pred_check_branch
    %111 = sbr.rel (0) target = $region25
  $region24: #{bert_seq_tagger_forward.5} parent=0 // pred_region
    _
  $region25: #{bert_seq_tagger_forward.5} parent=0 // pred_fallthru
    _
  // Predicated region
  $region26: #{bert_seq_tagger_forward.5} parent=0 // pred_check
    _
  $region27: #{bert_seq_tagger_forward.5} parent=0 // pred_check_branch
    %113 = sbr.rel (0) target = $region29
  $region28: #{bert_seq_tagger_forward.5} parent=0 // pred_region
    _
  $region29: #{bert_seq_tagger_forward.5} parent=0 // pred_fallthru
    _

// kernel: bert_seq_tagger_forward.4
$region0: #{bert_seq_tagger_forward.4}
  #allocation0 [shape = 'u32[]', space=smem, size = 0x4, offset = 0x4, fixed_abs, tag = 'smem constant byte address 0x4 - core index']
  #allocation1 [shape = 'u32[72,128]{1,0:T(1,128)}', space=vmem, size = 0x9000, scoped, tag = 'internal scratch']
  %s0 = inlined_call_operand.vmem [shape: bf16[8,8,768], index: 0, kind: input, shape index: {}]
  %s1 = inlined_call_operand.vmem [shape: bf16[3,768,192], index: 1, kind: input, shape index: {}]
  %s2 = inlined_call_operand.vmem [shape: f32[1,192], index: 2, kind: input, shape index: {}]
  %s3 = inlined_call_operand.vmem [shape: f32[192,64], index: 3, kind: input, shape index: {}]
  %s4 = inlined_call_operand.vmem [shape: f32[1,64], index: 4, kind: input, shape index: {}]
  %s5 = inlined_call_operand.vmem [shape: f32[64,64], index: 5, kind: input, shape index: {}]
  %s6 = inlined_call_operand.vmem [shape: f32[64,64], index: 6, kind: input, shape index: {}]
  %s7 = inlined_call_operand.vmem [shape: f32[64,64], index: 7, kind: input, shape index: {}]
  %s8 = inlined_call_operand.vmem [shape: f32[64,64], index: 8, kind: input, shape index: {}]
  %s9 = inlined_call_operand.vmem [shape: f32[1,64], index: 9, kind: input, shape index: {}]
  %s10 = inlined_call_operand.vmem [shape: f32[1,64], index: 10, kind: input, shape index: {}]
  %s11 = inlined_call_operand.vmem [shape: f32[1,64], index: 11, kind: input, shape index: {}]
  %s12 = inlined_call_operand.vmem [shape: f32[1,64], index: 12, kind: input, shape index: {}]
  %s13 = inlined_call_operand.vmem [shape: f32[1,64], index: 13, kind: input, shape index: {}]
  %s14 = inlined_call_operand.vmem [shape: f32[1,64], index: 14, kind: input, shape index: {}]
  %s15 = inlined_call_operand.vmem [shape: f32[8,8,128], index: 15, kind: output, shape index: {}]
  %s16 = sld [smem:[#allocation0]]
  $region70: #{bert_seq_tagger_forward.4} parent=0
    _
  %s18 = ssub.s32 1, %s16
  %s19 = scalar_select 0, %s18, %s16
  // Predicated region
  $region2: #{bert_seq_tagger_forward.4} parent=0 // pred_check
    _
  $region3: #{bert_seq_tagger_forward.4} parent=0 // pred_check_branch
    %21 = sbr.rel (0) target = $region5
  $region4: #{bert_seq_tagger_forward.4} parent=0 // pred_region
    _
  $region5: #{bert_seq_tagger_forward.4} parent=0 // pred_fallthru
    _
  // Predicated region
  $region6: #{bert_seq_tagger_forward.4} parent=0 // pred_check
    _
  $region7: #{bert_seq_tagger_forward.4} parent=0 // pred_check_branch
    %23 = sbr.rel (0) target = $region9
  $region8: #{bert_seq_tagger_forward.4} parent=0 // pred_region
    _
  $region9: #{bert_seq_tagger_forward.4} parent=0 // pred_fallthru
    _
  // Predicated region
  $region10: #{bert_seq_tagger_forward.4} parent=0 // pred_check
    _
  $region11: #{bert_seq_tagger_forward.4} parent=0 // pred_check_branch
    %25 = sbr.rel (0) target = $region13
  $region12: #{bert_seq_tagger_forward.4} parent=0 // pred_region
    _
  $region13: #{bert_seq_tagger_forward.4} parent=0 // pred_fallthru
    _
  // Predicated region
  $region14: #{bert_seq_tagger_forward.4} parent=0 // pred_check
    _
  $region15: #{bert_seq_tagger_forward.4} parent=0 // pred_check_branch
    %27 = sbr.rel (0) target = $region17
  $region16: #{bert_seq_tagger_forward.4} parent=0 // pred_region
    _
  $region17: #{bert_seq_tagger_forward.4} parent=0 // pred_fallthru
    _
  // Predicated region
  $region18: #{bert_seq_tagger_forward.4} parent=0 // pred_check
    _
  $region19: #{bert_seq_tagger_forward.4} parent=0 // pred_check_branch
    %29 = sbr.rel (0) target = $region21
  $region20: #{bert_seq_tagger_forward.4} parent=0 // pred_region
    _
  $region21: #{bert_seq_tagger_forward.4} parent=0 // pred_fallthru
    _
  // Predicated region
  $region22: #{bert_seq_tagger_forward.4} parent=0 // pred_check
    _
  $region23: #{bert_seq_tagger_forward.4} parent=0 // pred_check_branch
    %31 = sbr.rel (0) target = $region25
  $region24: #{bert_seq_tagger_forward.4} parent=0 // pred_region
    _
  $region25: #{bert_seq_tagger_forward.4} parent=0 // pred_fallthru
    _
  // Predicated region
  $region26: #{bert_seq_tagger_forward.4} parent=0 // pred_check
    _
  $region27: #{bert_seq_tagger_forward.4} parent=0 // pred_check_branch
    %33 = sbr.rel (0) target = $region29
  $region28: #{bert_seq_tagger_forward.4} parent=0 // pred_region
    _
  $region29: #{bert_seq_tagger_forward.4} parent=0 // pred_fallthru
    _
  // Predicated region
  $region30: #{bert_seq_tagger_forward.4} parent=0 // pred_check
    _
  $region31: #{bert_seq_tagger_forward.4} parent=0 // pred_check_branch
    %35 = sbr.rel (0) target = $region33
  $region32: #{bert_seq_tagger_forward.4} parent=0 // pred_region
    _
  $region33: #{bert_seq_tagger_forward.4} parent=0 // pred_fallthru
    _
  // Predicated region
  $region34: #{bert_seq_tagger_forward.4} parent=0 // pred_check
    _
  $region35: #{bert_seq_tagger_forward.4} parent=0 // pred_check_branch
    %37 = sbr.rel (0) target = $region37
  $region36: #{bert_seq_tagger_forward.4} parent=0 // pred_region
    _
  $region37: #{bert_seq_tagger_forward.4} parent=0 // pred_fallthru
    _
  // Predicated region
  $region38: #{bert_seq_tagger_forward.4} parent=0 // pred_check
    _
  $region39: #{bert_seq_tagger_forward.4} parent=0 // pred_check_branch
    %39 = sbr.rel (0) target = $region41
  $region40: #{bert_seq_tagger_forward.4} parent=0 // pred_region
    _
  $region41: #{bert_seq_tagger_forward.4} parent=0 // pred_fallthru
    _
  // Predicated region
  $region42: #{bert_seq_tagger_forward.4} parent=0 // pred_check
    _
  $region43: #{bert_seq_tagger_forward.4} parent=0 // pred_check_branch
    %41 = sbr.rel (0) target = $region45
  $region44: #{bert_seq_tagger_forward.4} parent=0 // pred_region
    _
  $region45: #{bert_seq_tagger_forward.4} parent=0 // pred_fallthru
    _
  // Predicated region
  $region46: #{bert_seq_tagger_forward.4} parent=0 // pred_check
    _
  $region47: #{bert_seq_tagger_forward.4} parent=0 // pred_check_branch
    %43 = sbr.rel (0) target = $region49
  $region48: #{bert_seq_tagger_forward.4} parent=0 // pred_region
    _
  $region49: #{bert_seq_tagger_forward.4} parent=0 // pred_fallthru
    _
  // Predicated region
  $region50: #{bert_seq_tagger_forward.4} parent=0 // pred_check
    _
  $region51: #{bert_seq_tagger_forward.4} parent=0 // pred_check_branch
    %45 = sbr.rel (0) target = $region53
  $region52: #{bert_seq_tagger_forward.4} parent=0 // pred_region
    _
  $region53: #{bert_seq_tagger_forward.4} parent=0 // pred_fallthru
    _
  // Predicated region
  $region54: #{bert_seq_tagger_forward.4} parent=0 // pred_check
    _
  $region55: #{bert_seq_tagger_forward.4} parent=0 // pred_check_branch
    %47 = sbr.rel (0) target = $region57
  $region56: #{bert_seq_tagger_forward.4} parent=0 // pred_region
    _
  $region57: #{bert_seq_tagger_forward.4} parent=0 // pred_fallthru
    _
  // Predicated region
  $region58: #{bert_seq_tagger_forward.4} parent=0 // pred_check
    _
  $region59: #{bert_seq_tagger_forward.4} parent=0 // pred_check_branch
    %49 = sbr.rel (0) target = $region61
  $region60: #{bert_seq_tagger_forward.4} parent=0 // pred_region
    _
  $region61: #{bert_seq_tagger_forward.4} parent=0 // pred_fallthru
    _
  %v50 = vld [vmem:[%s0] sm:$0xff]
  %v51 = vld [vmem:[%s0 + $0x8] sm:$0xff]
  %v52 = vld [vmem:[%s0 + $0x10] sm:$0xff]
  %v53 = vld [vmem:[%s0 + $0x18] sm:$0xff]
  %v54 = vld [vmem:[%s0 + $0x20] sm:$0xff]
  %v55 = vld [vmem:[%s0 + $0x28] sm:$0xff]
  %v56 = vld [vmem:[%s0 + $0x30] sm:$0xff]
  %v57 = vld [vmem:[%s0 + $0x38] sm:$0xff]
  %v58 = vld [vmem:[%s0 + $0x40] sm:$0xff]
  %v59 = vld [vmem:[%s0 + $0x48] sm:$0xff]
  %v60 = vld [vmem:[%s0 + $0x50] sm:$0xff]
  %v61 = vld [vmem:[%s0 + $0x58] sm:$0xff]
  %v62 = vld [vmem:[%s0 + $0x60] sm:$0xff]
  %v63 = vld [vmem:[%s0 + $0x68] sm:$0xff]
  %v64 = vld [vmem:[%s0 + $0x70] sm:$0xff]
  %v65 = vld [vmem:[%s0 + $0x78] sm:$0xff]
  %v66 = vld [vmem:[%s0 + $0x80] sm:$0xff]
  %v67 = vld [vmem:[%s0 + $0x88] sm:$0xff]
  %v68 = vld [vmem:[%s0 + $0x90] sm:$0xff]
  %v69 = vld [vmem:[%s0 + $0x98] sm:$0xff]
  %v70 = vld [vmem:[%s0 + $0xa0] sm:$0xff]
  %v71 = vld [vmem:[%s0 + $0xa8] sm:$0xff]
  %v72 = vld [vmem:[%s0 + $0xb0] sm:$0xff]
  %v73 = vld [vmem:[%s0 + $0xb8] sm:$0xff]
  %v74 = vld [vmem:[%s1] sm:$0xff]
  %v75 = vld [vmem:[%s1 + $0x8] sm:$0xff]
  %v76 = vld [vmem:[%s1 + $0x10] sm:$0xff]
  %v77 = vld [vmem:[%s1 + $0x18] sm:$0xff]
  %v78 = vld [vmem:[%s1 + $0x20] sm:$0xff]
  %v79 = vld [vmem:[%s1 + $0x28] sm:$0xff]
  %v80 = vld [vmem:[%s1 + $0x30] sm:$0xff]
  %v81 = vld [vmem:[%s1 + $0x38] sm:$0xff]
  %v82 = vld [vmem:[%s1 + $0x40] sm:$0xff]
  %v83 = vld [vmem:[%s1 + $0x48] sm:$0xff]
  %v84 = vld [vmem:[%s1 + $0x50] sm:$0xff]
  %v85 = vld [vmem:[%s1 + $0x58] sm:$0xff]
  %v86 = vld [vmem:[%s1 + $0x60] sm:$0xff]
  %v87 = vld [vmem:[%s1 + $0x68] sm:$0xff]
  %v88 = vld [vmem:[%s1 + $0x70] sm:$0xff]
  %v89 = vld [vmem:[%s1 + $0x78] sm:$0xff]
  %v90 = vld [vmem:[%s1 + $0x80] sm:$0xff]
  %v91 = vld [vmem:[%s1 + $0x88] sm:$0xff]
  %v92 = vld [vmem:[%s1 + $0x90] sm:$0xff]
  %v93 = vld [vmem:[%s1 + $0x98] sm:$0xff]
  %v94 = vld [vmem:[%s1 + $0xa0] sm:$0xff]
  %v95 = vld [vmem:[%s1 + $0xa8] sm:$0xff]
  %v96 = vld [vmem:[%s1 + $0xb0] sm:$0xff]
  %v97 = vld [vmem:[%s1 + $0xb8] sm:$0xff]
  %v98 = vld [vmem:[%s1 + $0xc0] sm:$0xff]
  %v99 = vld [vmem:[%s1 + $0xc8] sm:$0xff]
  %v100 = vld [vmem:[%s1 + $0xd0] sm:$0xff]
  %v101 = vld [vmem:[%s1 + $0xd8] sm:$0xff]
  %v102 = vld [vmem:[%s1 + $0xe0] sm:$0xff]
  %v103 = vld [vmem:[%s1 + $0xe8] sm:$0xff]
  %v104 = vld [vmem:[%s1 + $0xf0] sm:$0xff]
  %v105 = vld [vmem:[%s1 + $0xf8] sm:$0xff]
  %v106 = vld [vmem:[%s1 + $0x100] sm:$0xff]
  %v107 = vld [vmem:[%s1 + $0x108] sm:$0xff]
  %v108 = vld [vmem:[%s1 + $0x110] sm:$0xff]
  %v109 = vld [vmem:[%s1 + $0x118] sm:$0xff]
  %v110 = vld [vmem:[%s1 + $0x120] sm:$0xff]
  %v111 = vld [vmem:[%s1 + $0x128] sm:$0xff]
  %v112 = vld [vmem:[%s1 + $0x130] sm:$0xff]
  %v113 = vld [vmem:[%s1 + $0x138] sm:$0xff]
  %v114 = vld [vmem:[%s1 + $0x140] sm:$0xff]
  %v115 = vld [vmem:[%s1 + $0x148] sm:$0xff]
  %v116 = vld [vmem:[%s1 + $0x150] sm:$0xff]
  %v117 = vld [vmem:[%s1 + $0x158] sm:$0xff]
  %v118 = vld [vmem:[%s1 + $0x160] sm:$0xff]
  %v119 = vld [vmem:[%s1 + $0x168] sm:$0xff]
  %v120 = vld [vmem:[%s1 + $0x170] sm:$0xff]
  %v121 = vld [vmem:[%s1 + $0x178] sm:$0xff]
  %v122 = vld [vmem:[%s1 + $0x180] sm:$0xff]
  %v123 = vld [vmem:[%s1 + $0x188] sm:$0xff]
  %v124 = vld [vmem:[%s1 + $0x190] sm:$0xff]
  %v125 = vld [vmem:[%s1 + $0x198] sm:$0xff]
  %v126 = vld [vmem:[%s1 + $0x1a0] sm:$0xff]
  %v127 = vld [vmem:[%s1 + $0x1a8] sm:$0xff]
  %v128 = vld [vmem:[%s1 + $0x1b0] sm:$0xff]
  %v129 = vld [vmem:[%s1 + $0x1b8] sm:$0xff]
  %v130 = vld [vmem:[%s1 + $0x1c0] sm:$0xff]
  %v131 = vld [vmem:[%s1 + $0x1c8] sm:$0xff]
  %v132 = vld [vmem:[%s1 + $0x1d0] sm:$0xff]
  %v133 = vld [vmem:[%s1 + $0x1d8] sm:$0xff]
  %v134 = vld [vmem:[%s1 + $0x1e0] sm:$0xff]
  %v135 = vld [vmem:[%s1 + $0x1e8] sm:$0xff]
  %v136 = vld [vmem:[%s1 + $0x1f0] sm:$0xff]
  %v137 = vld [vmem:[%s1 + $0x1f8] sm:$0xff]
  %v138 = vld [vmem:[%s1 + $0x200] sm:$0xff]
  %v139 = vld [vmem:[%s1 + $0x208] sm:$0xff]
  %v140 = vld [vmem:[%s1 + $0x210] sm:$0xff]
  %v141 = vld [vmem:[%s1 + $0x218] sm:$0xff]
  %v142 = vld [vmem:[%s1 + $0x220] sm:$0xff]
  %v143 = vld [vmem:[%s1 + $0x228] sm:$0xff]
  %v144 = vld [vmem:[%s1 + $0x230] sm:$0xff]
  %v145 = vld [vmem:[%s1 + $0x238] sm:$0xff]
  %v146 = vld [vmem:[%s1 + $0x240] sm:$0xff]
  %v147 = vld [vmem:[%s1 + $0x248] sm:$0xff]
  %v148 = vld [vmem:[%s1 + $0x250] sm:$0xff]
  %v149 = vld [vmem:[%s1 + $0x258] sm:$0xff]
  %v150 = vld [vmem:[%s1 + $0x260] sm:$0xff]
  %v151 = vld [vmem:[%s1 + $0x268] sm:$0xff]
  %v152 = vld [vmem:[%s1 + $0x270] sm:$0xff]
  %v153 = vld [vmem:[%s1 + $0x278] sm:$0xff]
  %v154 = vld [vmem:[%s1 + $0x280] sm:$0xff]
  %v155 = vld [vmem:[%s1 + $0x288] sm:$0xff]
  %v156 = vld [vmem:[%s1 + $0x290] sm:$0xff]
  %v157 = vld [vmem:[%s1 + $0x298] sm:$0xff]
  %v158 = vld [vmem:[%s1 + $0x2a0] sm:$0xff]
  %v159 = vld [vmem:[%s1 + $0x2a8] sm:$0xff]
  %v160 = vld [vmem:[%s1 + $0x2b0] sm:$0xff]
  %v161 = vld [vmem:[%s1 + $0x2b8] sm:$0xff]
  %v162 = vld [vmem:[%s1 + $0x2c0] sm:$0xff]
  %v163 = vld [vmem:[%s1 + $0x2c8] sm:$0xff]
  %v164 = vld [vmem:[%s1 + $0x2d0] sm:$0xff]
  %v165 = vld [vmem:[%s1 + $0x2d8] sm:$0xff]
  %v166 = vld [vmem:[%s1 + $0x2e0] sm:$0xff]
  %v167 = vld [vmem:[%s1 + $0x2e8] sm:$0xff]
  %v168 = vld [vmem:[%s1 + $0x2f0] sm:$0xff]
  %v169 = vld [vmem:[%s1 + $0x2f8] sm:$0xff]
  %v194 = vunpack.c.l.b16 %v50
  %v195 = vunpack.c.h.b16 %v50
  %v196 = vunpack.c.l.b16 %v51
  %v197 = vunpack.c.h.b16 %v51
  %v198 = vunpack.c.l.b16 %v52
  %v199 = vunpack.c.h.b16 %v52
  %v200 = vunpack.c.l.b16 %v53
  %v201 = vunpack.c.h.b16 %v53
  %v202 = vunpack.c.l.b16 %v54
  %v203 = vunpack.c.h.b16 %v54
  %v204 = vunpack.c.l.b16 %v55
  %v205 = vunpack.c.h.b16 %v55
  %v206 = vunpack.c.l.b16 %v56
  %v207 = vunpack.c.h.b16 %v56
  %v208 = vunpack.c.l.b16 %v57
  %v209 = vunpack.c.h.b16 %v57
  %v210 = vunpack.c.l.b16 %v58
  %v211 = vunpack.c.h.b16 %v58
  %v212 = vunpack.c.l.b16 %v59
  %v213 = vunpack.c.h.b16 %v59
  %v214 = vunpack.c.l.b16 %v60
  %v215 = vunpack.c.h.b16 %v60
  %v216 = vunpack.c.l.b16 %v61
  %v217 = vunpack.c.h.b16 %v61
  %v218 = vunpack.c.l.b16 %v62
  %v219 = vunpack.c.h.b16 %v62
  %v220 = vunpack.c.l.b16 %v63
  %v221 = vunpack.c.h.b16 %v63
  %v222 = vunpack.c.l.b16 %v64
  %v223 = vunpack.c.h.b16 %v64
  %v224 = vunpack.c.l.b16 %v65
  %v225 = vunpack.c.h.b16 %v65
  %v226 = vunpack.c.l.b16 %v66
  %v227 = vunpack.c.h.b16 %v66
  %v228 = vunpack.c.l.b16 %v67
  %v229 = vunpack.c.h.b16 %v67
  %v230 = vunpack.c.l.b16 %v68
  %v231 = vunpack.c.h.b16 %v68
  %v232 = vunpack.c.l.b16 %v69
  %v233 = vunpack.c.h.b16 %v69
  %v234 = vunpack.c.l.b16 %v70
  %v235 = vunpack.c.h.b16 %v70
  %v236 = vunpack.c.l.b16 %v71
  %v237 = vunpack.c.h.b16 %v71
  %v238 = vunpack.c.l.b16 %v72
  %v239 = vunpack.c.h.b16 %v72
  %v240 = vunpack.c.l.b16 %v73
  %v241 = vunpack.c.h.b16 %v73
  %v242 = vpack.c.b16 %v200, %v194
  %v243 = vpack.c.b16 %v201, %v195
  %v244 = vpack.c.b16 %v202, %v196
  %v245 = vpack.c.b16 %v203, %v197
  %v246 = vpack.c.b16 %v204, %v198
  %v247 = vpack.c.b16 %v205, %v199
  %v248 = vpack.c.b16 %v212, %v206
  %v249 = vpack.c.b16 %v213, %v207
  %v250 = vpack.c.b16 %v214, %v208
  %v251 = vpack.c.b16 %v215, %v209
  %v252 = vpack.c.b16 %v216, %v210
  %v253 = vpack.c.b16 %v217, %v211
  %v254 = vpack.c.b16 %v224, %v218
  %v255 = vpack.c.b16 %v225, %v219
  %v256 = vpack.c.b16 %v226, %v220
  %v257 = vpack.c.b16 %v227, %v221
  %v258 = vpack.c.b16 %v228, %v222
  %v259 = vpack.c.b16 %v229, %v223
  %v260 = vpack.c.b16 %v236, %v230
  %v261 = vpack.c.b16 %v237, %v231
  %v262 = vpack.c.b16 %v238, %v232
  %v263 = vpack.c.b16 %v239, %v233
  %v264 = vpack.c.b16 %v240, %v234
  %v265 = vpack.c.b16 %v241, %v235
  %v386 = vunpack.c.l.b16 %v74
  %v387 = vunpack.c.h.b16 %v74
  %v388 = vunpack.c.l.b16 %v75
  %v389 = vunpack.c.h.b16 %v75
  %v390 = vunpack.c.l.b16 %v76
  %v391 = vunpack.c.h.b16 %v76
  %v392 = vunpack.c.l.b16 %v77
  %v393 = vunpack.c.h.b16 %v77
  %v394 = vunpack.c.l.b16 %v78
  %v395 = vunpack.c.h.b16 %v78
  %v396 = vunpack.c.l.b16 %v79
  %v397 = vunpack.c.h.b16 %v79
  %v398 = vunpack.c.l.b16 %v80
  %v399 = vunpack.c.h.b16 %v80
  %v400 = vunpack.c.l.b16 %v81
  %v401 = vunpack.c.h.b16 %v81
  %v402 = vunpack.c.l.b16 %v82
  %v403 = vunpack.c.h.b16 %v82
  %v404 = vunpack.c.l.b16 %v83
  %v405 = vunpack.c.h.b16 %v83
  %v406 = vunpack.c.l.b16 %v84
  %v407 = vunpack.c.h.b16 %v84
  %v408 = vunpack.c.l.b16 %v85
  %v409 = vunpack.c.h.b16 %v85
  %v410 = vunpack.c.l.b16 %v86
  %v411 = vunpack.c.h.b16 %v86
  %v412 = vunpack.c.l.b16 %v87
  %v413 = vunpack.c.h.b16 %v87
  %v414 = vunpack.c.l.b16 %v88
  %v415 = vunpack.c.h.b16 %v88
  %v416 = vunpack.c.l.b16 %v89
  %v417 = vunpack.c.h.b16 %v89
  %v418 = vunpack.c.l.b16 %v90
  %v419 = vunpack.c.h.b16 %v90
  %v420 = vunpack.c.l.b16 %v91
  %v421 = vunpack.c.h.b16 %v91
  %v422 = vunpack.c.l.b16 %v92
  %v423 = vunpack.c.h.b16 %v92
  %v424 = vunpack.c.l.b16 %v93
  %v425 = vunpack.c.h.b16 %v93
  %v426 = vunpack.c.l.b16 %v94
  %v427 = vunpack.c.h.b16 %v94
  %v428 = vunpack.c.l.b16 %v95
  %v429 = vunpack.c.h.b16 %v95
  %v430 = vunpack.c.l.b16 %v96
  %v431 = vunpack.c.h.b16 %v96
  %v432 = vunpack.c.l.b16 %v97
  %v433 = vunpack.c.h.b16 %v97
  %v434 = vunpack.c.l.b16 %v98
  %v435 = vunpack.c.h.b16 %v98
  %v436 = vunpack.c.l.b16 %v99
  %v437 = vunpack.c.h.b16 %v99
  %v438 = vunpack.c.l.b16 %v100
  %v439 = vunpack.c.h.b16 %v100
  %v440 = vunpack.c.l.b16 %v101
  %v441 = vunpack.c.h.b16 %v101
  %v442 = vunpack.c.l.b16 %v102
  %v443 = vunpack.c.h.b16 %v102
  %v444 = vunpack.c.l.b16 %v103
  %v445 = vunpack.c.h.b16 %v103
  %v446 = vunpack.c.l.b16 %v104
  %v447 = vunpack.c.h.b16 %v104
  %v448 = vunpack.c.l.b16 %v105
  %v449 = vunpack.c.h.b16 %v105
  %v450 = vunpack.c.l.b16 %v106
  %v451 = vunpack.c.h.b16 %v106
  %v452 = vunpack.c.l.b16 %v107
  %v453 = vunpack.c.h.b16 %v107
  %v454 = vunpack.c.l.b16 %v108
  %v455 = vunpack.c.h.b16 %v108
  %v456 = vunpack.c.l.b16 %v109
  %v457 = vunpack.c.h.b16 %v109
  %v458 = vunpack.c.l.b16 %v110
  %v459 = vunpack.c.h.b16 %v110
  %v460 = vunpack.c.l.b16 %v111
  %v461 = vunpack.c.h.b16 %v111
  %v462 = vunpack.c.l.b16 %v112
  %v463 = vunpack.c.h.b16 %v112
  %v464 = vunpack.c.l.b16 %v113
  %v465 = vunpack.c.h.b16 %v113
  %v466 = vunpack.c.l.b16 %v114
  %v467 = vunpack.c.h.b16 %v114
  %v468 = vunpack.c.l.b16 %v115
  %v469 = vunpack.c.h.b16 %v115
  %v470 = vunpack.c.l.b16 %v116
  %v471 = vunpack.c.h.b16 %v116
  %v472 = vunpack.c.l.b16 %v117
  %v473 = vunpack.c.h.b16 %v117
  %v474 = vunpack.c.l.b16 %v118
  %v475 = vunpack.c.h.b16 %v118
  %v476 = vunpack.c.l.b16 %v119
  %v477 = vunpack.c.h.b16 %v119
  %v478 = vunpack.c.l.b16 %v120
  %v479 = vunpack.c.h.b16 %v120
  %v480 = vunpack.c.l.b16 %v121
  %v481 = vunpack.c.h.b16 %v121
  %v482 = vunpack.c.l.b16 %v122
  %v483 = vunpack.c.h.b16 %v122
  %v484 = vunpack.c.l.b16 %v123
  %v485 = vunpack.c.h.b16 %v123
  %v486 = vunpack.c.l.b16 %v124
  %v487 = vunpack.c.h.b16 %v124
  %v488 = vunpack.c.l.b16 %v125
  %v489 = vunpack.c.h.b16 %v125
  %v490 = vunpack.c.l.b16 %v126
  %v491 = vunpack.c.h.b16 %v126
  %v492 = vunpack.c.l.b16 %v127
  %v493 = vunpack.c.h.b16 %v127
  %v494 = vunpack.c.l.b16 %v128
  %v495 = vunpack.c.h.b16 %v128
  %v496 = vunpack.c.l.b16 %v129
  %v497 = vunpack.c.h.b16 %v129
  %v498 = vunpack.c.l.b16 %v130
  %v499 = vunpack.c.h.b16 %v130
  %v500 = vunpack.c.l.b16 %v131
  %v501 = vunpack.c.h.b16 %v131
  %v502 = vunpack.c.l.b16 %v132
  %v503 = vunpack.c.h.b16 %v132
  %v504 = vunpack.c.l.b16 %v133
  %v505 = vunpack.c.h.b16 %v133
  %v506 = vunpack.c.l.b16 %v134
  %v507 = vunpack.c.h.b16 %v134
  %v508 = vunpack.c.l.b16 %v135
  %v509 = vunpack.c.h.b16 %v135
  %v510 = vunpack.c.l.b16 %v136
  %v511 = vunpack.c.h.b16 %v136
  %v512 = vunpack.c.l.b16 %v137
  %v513 = vunpack.c.h.b16 %v137
  %v514 = vunpack.c.l.b16 %v138
  %v515 = vunpack.c.h.b16 %v138
  %v516 = vunpack.c.l.b16 %v139
  %v517 = vunpack.c.h.b16 %v139
  %v518 = vunpack.c.l.b16 %v140
  %v519 = vunpack.c.h.b16 %v140
  %v520 = vunpack.c.l.b16 %v141
  %v521 = vunpack.c.h.b16 %v141
  %v522 = vunpack.c.l.b16 %v142
  %v523 = vunpack.c.h.b16 %v142
  %v524 = vunpack.c.l.b16 %v143
  %v525 = vunpack.c.h.b16 %v143
  %v526 = vunpack.c.l.b16 %v144
  %v527 = vunpack.c.h.b16 %v144
  %v528 = vunpack.c.l.b16 %v145
  %v529 = vunpack.c.h.b16 %v145
  %v530 = vunpack.c.l.b16 %v146
  %v531 = vunpack.c.h.b16 %v146
  %v532 = vunpack.c.l.b16 %v147
  %v533 = vunpack.c.h.b16 %v147
  %v534 = vunpack.c.l.b16 %v148
  %v535 = vunpack.c.h.b16 %v148
  %v536 = vunpack.c.l.b16 %v149
  %v537 = vunpack.c.h.b16 %v149
  %v538 = vunpack.c.l.b16 %v150
  %v539 = vunpack.c.h.b16 %v150
  %v540 = vunpack.c.l.b16 %v151
  %v541 = vunpack.c.h.b16 %v151
  %v542 = vunpack.c.l.b16 %v152
  %v543 = vunpack.c.h.b16 %v152
  %v544 = vunpack.c.l.b16 %v153
  %v545 = vunpack.c.h.b16 %v153
  %v546 = vunpack.c.l.b16 %v154
  %v547 = vunpack.c.h.b16 %v154
  %v548 = vunpack.c.l.b16 %v155
  %v549 = vunpack.c.h.b16 %v155
  %v550 = vunpack.c.l.b16 %v156
  %v551 = vunpack.c.h.b16 %v156
  %v552 = vunpack.c.l.b16 %v157
  %v553 = vunpack.c.h.b16 %v157
  %v554 = vunpack.c.l.b16 %v158
  %v555 = vunpack.c.h.b16 %v158
  %v556 = vunpack.c.l.b16 %v159
  %v557 = vunpack.c.h.b16 %v159
  %v558 = vunpack.c.l.b16 %v160
  %v559 = vunpack.c.h.b16 %v160
  %v560 = vunpack.c.l.b16 %v161
  %v561 = vunpack.c.h.b16 %v161
  %v562 = vunpack.c.l.b16 %v162
  %v563 = vunpack.c.h.b16 %v162
  %v564 = vunpack.c.l.b16 %v163
  %v565 = vunpack.c.h.b16 %v163
  %v566 = vunpack.c.l.b16 %v164
  %v567 = vunpack.c.h.b16 %v164
  %v568 = vunpack.c.l.b16 %v165
  %v569 = vunpack.c.h.b16 %v165
  %v570 = vunpack.c.l.b16 %v166
  %v571 = vunpack.c.h.b16 %v166
  %v572 = vunpack.c.l.b16 %v167
  %v573 = vunpack.c.h.b16 %v167
  %v574 = vunpack.c.l.b16 %v168
  %v575 = vunpack.c.h.b16 %v168
  %v576 = vunpack.c.l.b16 %v169
  %v577 = vunpack.c.h.b16 %v169
  %v578 = vpack.c.b16 %v388, %v386
  %v579 = vpack.c.b16 %v389, %v387
  %v580 = vpack.c.b16 %v392, %v390
  %v581 = vpack.c.b16 %v393, %v391
  %v582 = vpack.c.b16 %v396, %v394
  %v583 = vpack.c.b16 %v397, %v395
  %v584 = vpack.c.b16 %v400, %v398
  %v585 = vpack.c.b16 %v401, %v399
  %v586 = vpack.c.b16 %v404, %v402
  %v587 = vpack.c.b16 %v405, %v403
  %v588 = vpack.c.b16 %v408, %v406
  %v589 = vpack.c.b16 %v409, %v407
  %v590 = vpack.c.b16 %v412, %v410
  %v591 = vpack.c.b16 %v413, %v411
  %v592 = vpack.c.b16 %v416, %v414
  %v593 = vpack.c.b16 %v417, %v415
  %v594 = vpack.c.b16 %v420, %v418
  %v595 = vpack.c.b16 %v421, %v419
  %v596 = vpack.c.b16 %v424, %v422
  %v597 = vpack.c.b16 %v425, %v423
  %v598 = vpack.c.b16 %v428, %v426
  %v599 = vpack.c.b16 %v429, %v427
  %v600 = vpack.c.b16 %v432, %v430
  %v601 = vpack.c.b16 %v433, %v431
  %v602 = vpack.c.b16 %v436, %v434
  %v603 = vpack.c.b16 %v437, %v435
  %v604 = vpack.c.b16 %v440, %v438
  %v605 = vpack.c.b16 %v441, %v439
  %v606 = vpack.c.b16 %v444, %v442
  %v607 = vpack.c.b16 %v445, %v443
  %v608 = vpack.c.b16 %v448, %v446
  %v609 = vpack.c.b16 %v449, %v447
  %v610 = vpack.c.b16 %v452, %v450
  %v611 = vpack.c.b16 %v453, %v451
  %v612 = vpack.c.b16 %v456, %v454
  %v613 = vpack.c.b16 %v457, %v455
  %v614 = vpack.c.b16 %v460, %v458
  %v615 = vpack.c.b16 %v461, %v459
  %v616 = vpack.c.b16 %v464, %v462
  %v617 = vpack.c.b16 %v465, %v463
  %v618 = vpack.c.b16 %v468, %v466
  %v619 = vpack.c.b16 %v469, %v467
  %v620 = vpack.c.b16 %v472, %v470
  %v621 = vpack.c.b16 %v473, %v471
  %v622 = vpack.c.b16 %v476, %v474
  %v623 = vpack.c.b16 %v477, %v475
  %v624 = vpack.c.b16 %v480, %v478
  %v625 = vpack.c.b16 %v481, %v479
  %v626 = vpack.c.b16 %v484, %v482
  %v627 = vpack.c.b16 %v485, %v483
  %v628 = vpack.c.b16 %v488, %v486
  %v629 = vpack.c.b16 %v489, %v487
  %v630 = vpack.c.b16 %v492, %v490
  %v631 = vpack.c.b16 %v493, %v491
  %v632 = vpack.c.b16 %v496, %v494
  %v633 = vpack.c.b16 %v497, %v495
  %v634 = vpack.c.b16 %v500, %v498
  %v635 = vpack.c.b16 %v501, %v499
  %v636 = vpack.c.b16 %v504, %v502
  %v637 = vpack.c.b16 %v505, %v503
  %v638 = vpack.c.b16 %v508, %v506
  %v639 = vpack.c.b16 %v509, %v507
  %v640 = vpack.c.b16 %v512, %v510
  %v641 = vpack.c.b16 %v513, %v511
  %v642 = vpack.c.b16 %v516, %v514
  %v643 = vpack.c.b16 %v517, %v515
  %v644 = vpack.c.b16 %v520, %v518
  %v645 = vpack.c.b16 %v521, %v519
  %v646 = vpack.c.b16 %v524, %v522
  %v647 = vpack.c.b16 %v525, %v523
  %v648 = vpack.c.b16 %v528, %v526
  %v649 = vpack.c.b16 %v529, %v527
  %v650 = vpack.c.b16 %v532, %v530
  %v651 = vpack.c.b16 %v533, %v531
  %v652 = vpack.c.b16 %v536, %v534
  %v653 = vpack.c.b16 %v537, %v535
  %v654 = vpack.c.b16 %v540, %v538
  %v655 = vpack.c.b16 %v541, %v539
  %v656 = vpack.c.b16 %v544, %v542
  %v657 = vpack.c.b16 %v545, %v543
  %v658 = vpack.c.b16 %v548, %v546
  %v659 = vpack.c.b16 %v549, %v547
  %v660 = vpack.c.b16 %v552, %v550
  %v661 = vpack.c.b16 %v553, %v551
  %v662 = vpack.c.b16 %v556, %v554
  %v663 = vpack.c.b16 %v557, %v555
  %v664 = vpack.c.b16 %v560, %v558
  %v665 = vpack.c.b16 %v561, %v559
  %v666 = vpack.c.b16 %v564, %v562
  %v667 = vpack.c.b16 %v565, %v563
  %v668 = vpack.c.b16 %v568, %v566
  %v669 = vpack.c.b16 %v569, %v567
  %v670 = vpack.c.b16 %v572, %v570
  %v671 = vpack.c.b16 %v573, %v571
  %v672 = vpack.c.b16 %v576, %v574
  %v673 = vpack.c.b16 %v577, %v575
  %770 = vmatpush.bf16.msra.mxu0 %v592
  %771 = vmatpush.bf16.msra.mxu0 %v590
  %772 = vmatpush.bf16.msra.mxu0 %v588
  %773 = vmatpush.bf16.msra.mxu0 %v586
  %774 = vmatpush.bf16.msra.mxu0 %v584
  %775 = vmatpush.bf16.msra.mxu0 %v582
  %776 = vmatpush.bf16.msra.mxu0 %v580
  %777 = vmatpush.bf16.msra.mxu0 %v578
  %778 = vmatmul.bf16.gmra.mxu0 %v242
  %v779 = vpop.f32.mrf.mxu0
  %v780 = vadd.f32 0.0, %v779
  %v781 = vpop.f32.mrf.mxu0
  %v782 = vadd.f32 0.0, %v781
  %783 = vmatmul.bf16.gmra.mxu0 %v248
  %v784 = vpop.f32.mrf.mxu0
  %v785 = vadd.f32 0.0, %v784
  %v786 = vpop.f32.mrf.mxu0
  %v787 = vadd.f32 0.0, %v786
  %788 = vmatmul.bf16.gmra.mxu0 %v254
  %v789 = vpop.f32.mrf.mxu0
  %v790 = vadd.f32 0.0, %v789
  %v791 = vpop.f32.mrf.mxu0
  %v792 = vadd.f32 0.0, %v791
  %793 = vmatmul.bf16.gmra.mxu0 %v260
  %v794 = vpop.f32.mrf.mxu0
  %v795 = vadd.f32 0.0, %v794
  %v796 = vpop.f32.mrf.mxu0
  %797 = vdwg.mxu0
  %798 = vmatpush.bf16.msra.mxu0 %v608
  %799 = vmatpush.bf16.msra.mxu0 %v606
  %800 = vmatpush.bf16.msra.mxu0 %v604
  %801 = vmatpush.bf16.msra.mxu0 %v602
  %802 = vmatpush.bf16.msra.mxu0 %v600
  %803 = vmatpush.bf16.msra.mxu0 %v598
  %804 = vmatpush.bf16.msra.mxu0 %v596
  %805 = vmatpush.bf16.msra.mxu0 %v594
  %806 = vmatmul.bf16.gmra.mxu0 %v243
  %v807 = vpop.f32.mrf.mxu0
  %v808 = vadd.f32 %v780, %v807
  %v809 = vpop.f32.mrf.mxu0
  %v810 = vadd.f32 %v782, %v809
  %811 = vmatmul.bf16.gmra.mxu0 %v249
  %v812 = vpop.f32.mrf.mxu0
  %v813 = vadd.f32 %v785, %v812
  %v814 = vpop.f32.mrf.mxu0
  %v815 = vadd.f32 %v787, %v814
  %816 = vmatmul.bf16.gmra.mxu0 %v255
  %v817 = vpop.f32.mrf.mxu0
  %v818 = vadd.f32 %v790, %v817
  %v819 = vpop.f32.mrf.mxu0
  %v820 = vadd.f32 %v792, %v819
  %821 = vmatmul.bf16.gmra.mxu0 %v261
  %v822 = vpop.f32.mrf.mxu0
  %v823 = vadd.f32 %v795, %v822
  %v824 = vpop.f32.mrf.mxu0
  %825 = vdwg.mxu0
  %826 = vmatpush.bf16.msra.mxu0 %v624
  %827 = vmatpush.bf16.msra.mxu0 %v622
  %828 = vmatpush.bf16.msra.mxu0 %v620
  %829 = vmatpush.bf16.msra.mxu0 %v618
  %830 = vmatpush.bf16.msra.mxu0 %v616
  %831 = vmatpush.bf16.msra.mxu0 %v614
  %832 = vmatpush.bf16.msra.mxu0 %v612
  %833 = vmatpush.bf16.msra.mxu0 %v610
  %834 = vmatmul.bf16.gmra.mxu0 %v244
  %v835 = vpop.f32.mrf.mxu0
  %v836 = vadd.f32 %v808, %v835
  %v837 = vpop.f32.mrf.mxu0
  %v838 = vadd.f32 %v810, %v837
  %839 = vmatmul.bf16.gmra.mxu0 %v250
  %v840 = vpop.f32.mrf.mxu0
  %v841 = vadd.f32 %v813, %v840
  %v842 = vpop.f32.mrf.mxu0
  %v843 = vadd.f32 %v815, %v842
  %844 = vmatmul.bf16.gmra.mxu0 %v256
  %v845 = vpop.f32.mrf.mxu0
  %v846 = vadd.f32 %v818, %v845
  %v847 = vpop.f32.mrf.mxu0
  %v848 = vadd.f32 %v820, %v847
  %849 = vmatmul.bf16.gmra.mxu0 %v262
  %v850 = vpop.f32.mrf.mxu0
  %v851 = vadd.f32 %v823, %v850
  %v852 = vpop.f32.mrf.mxu0
  %853 = vdwg.mxu0
  %854 = vmatpush.bf16.msra.mxu0 %v640
  %855 = vmatpush.bf16.msra.mxu0 %v638
  %856 = vmatpush.bf16.msra.mxu0 %v636
  %857 = vmatpush.bf16.msra.mxu0 %v634
  %858 = vmatpush.bf16.msra.mxu0 %v632
  %859 = vmatpush.bf16.msra.mxu0 %v630
  %860 = vmatpush.bf16.msra.mxu0 %v628
  %861 = vmatpush.bf16.msra.mxu0 %v626
  %862 = vmatmul.bf16.gmra.mxu0 %v245
  %v863 = vpop.f32.mrf.mxu0
  %v864 = vadd.f32 %v836, %v863
  %v865 = vpop.f32.mrf.mxu0
  %v866 = vadd.f32 %v838, %v865
  %867 = vmatmul.bf16.gmra.mxu0 %v251
  %v868 = vpop.f32.mrf.mxu0
  %v869 = vadd.f32 %v841, %v868
  %v870 = vpop.f32.mrf.mxu0
  %v871 = vadd.f32 %v843, %v870
  %872 = vmatmul.bf16.gmra.mxu0 %v257
  %v873 = vpop.f32.mrf.mxu0
  %v874 = vadd.f32 %v846, %v873
  %v875 = vpop.f32.mrf.mxu0
  %v876 = vadd.f32 %v848, %v875
  %877 = vmatmul.bf16.gmra.mxu0 %v263
  %v878 = vpop.f32.mrf.mxu0
  %v879 = vadd.f32 %v851, %v878
  %v880 = vpop.f32.mrf.mxu0
  %881 = vdwg.mxu0
  %882 = vmatpush.bf16.msra.mxu0 %v656
  %883 = vmatpush.bf16.msra.mxu0 %v654
  %884 = vmatpush.bf16.msra.mxu0 %v652
  %885 = vmatpush.bf16.msra.mxu0 %v650
  %886 = vmatpush.bf16.msra.mxu0 %v648
  %887 = vmatpush.bf16.msra.mxu0 %v646
  %888 = vmatpush.bf16.msra.mxu0 %v644
  %889 = vmatpush.bf16.msra.mxu0 %v642
  %890 = vmatmul.bf16.gmra.mxu0 %v246
  %v891 = vpop.f32.mrf.mxu0
  %v892 = vadd.f32 %v864, %v891
  %v893 = vpop.f32.mrf.mxu0
  %v894 = vadd.f32 %v866, %v893
  %895 = vmatmul.bf16.gmra.mxu0 %v252
  %v896 = vpop.f32.mrf.mxu0
  %v897 = vadd.f32 %v869, %v896
  %v898 = vpop.f32.mrf.mxu0
  %v899 = vadd.f32 %v871, %v898
  %900 = vmatmul.bf16.gmra.mxu0 %v258
  %v901 = vpop.f32.mrf.mxu0
  %v902 = vadd.f32 %v874, %v901
  %v903 = vpop.f32.mrf.mxu0
  %v904 = vadd.f32 %v876, %v903
  %905 = vmatmul.bf16.gmra.mxu0 %v264
  %v906 = vpop.f32.mrf.mxu0
  %v907 = vadd.f32 %v879, %v906
  %v908 = vpop.f32.mrf.mxu0
  %909 = vdwg.mxu0
  %910 = vmatpush.bf16.msra.mxu0 %v672
  %911 = vmatpush.bf16.msra.mxu0 %v670
  %912 = vmatpush.bf16.msra.mxu0 %v668
  %913 = vmatpush.bf16.msra.mxu0 %v666
  %914 = vmatpush.bf16.msra.mxu0 %v664
  %915 = vmatpush.bf16.msra.mxu0 %v662
  %916 = vmatpush.bf16.msra.mxu0 %v660
  %917 = vmatpush.bf16.msra.mxu0 %v658
  %918 = vmatmul.bf16.gmra.mxu0 %v247
  %v919 = vpop.f32.mrf.mxu0
  %v920 = vadd.f32 %v892, %v919
  %v921 = vpop.f32.mrf.mxu0
  %v922 = vadd.f32 %v894, %v921
  %923 = vmatmul.bf16.gmra.mxu0 %v253
  %v924 = vpop.f32.mrf.mxu0
  %v925 = vadd.f32 %v897, %v924
  %v926 = vpop.f32.mrf.mxu0
  %v927 = vadd.f32 %v899, %v926
  %928 = vmatmul.bf16.gmra.mxu0 %v259
  %v929 = vpop.f32.mrf.mxu0
  %v930 = vadd.f32 %v902, %v929
  %v931 = vpop.f32.mrf.mxu0
  %v932 = vadd.f32 %v904, %v931
  %933 = vmatmul.bf16.gmra.mxu0 %v265
  %v934 = vpop.f32.mrf.mxu0
  %v935 = vadd.f32 %v907, %v934
  %v936 = vpop.f32.mrf.mxu0
  %937 = vdwg.mxu0
  %938 = vmatpush.bf16.msra.mxu0 %v593
  %939 = vmatpush.bf16.msra.mxu0 %v591
  %940 = vmatpush.bf16.msra.mxu0 %v589
  %941 = vmatpush.bf16.msra.mxu0 %v587
  %942 = vmatpush.bf16.msra.mxu0 %v585
  %943 = vmatpush.bf16.msra.mxu0 %v583
  %944 = vmatpush.bf16.msra.mxu0 %v581
  %945 = vmatpush.bf16.msra.mxu0 %v579
  %946 = vmatmul.bf16.gmra.mxu0 %v242
  %v947 = vpop.f32.mrf.mxu0
  %v948 = vadd.f32 0.0, %v947
  %v949 = vpop.f32.mrf.mxu0
  %v950 = vadd.f32 0.0, %v949
  %951 = vmatmul.bf16.gmra.mxu0 %v248
  %v952 = vpop.f32.mrf.mxu0
  %v953 = vadd.f32 0.0, %v952
  %v954 = vpop.f32.mrf.mxu0
  %v955 = vadd.f32 0.0, %v954
  %956 = vmatmul.bf16.gmra.mxu0 %v254
  %v957 = vpop.f32.mrf.mxu0
  %v958 = vadd.f32 0.0, %v957
  %v959 = vpop.f32.mrf.mxu0
  %v960 = vadd.f32 0.0, %v959
  %961 = vmatmul.bf16.gmra.mxu0 %v260
  %v962 = vpop.f32.mrf.mxu0
  %v963 = vadd.f32 0.0, %v962
  %v964 = vpop.f32.mrf.mxu0
  %965 = vdwg.mxu0
  %966 = vmatpush.bf16.msra.mxu0 %v609
  %967 = vmatpush.bf16.msra.mxu0 %v607
  %968 = vmatpush.bf16.msra.mxu0 %v605
  %969 = vmatpush.bf16.msra.mxu0 %v603
  %970 = vmatpush.bf16.msra.mxu0 %v601
  %971 = vmatpush.bf16.msra.mxu0 %v599
  %972 = vmatpush.bf16.msra.mxu0 %v597
  %973 = vmatpush.bf16.msra.mxu0 %v595
  %974 = vmatmul.bf16.gmra.mxu0 %v243
  %v975 = vpop.f32.mrf.mxu0
  %v976 = vadd.f32 %v948, %v975
  %v977 = vpop.f32.mrf.mxu0
  %v978 = vadd.f32 %v950, %v977
  %979 = vmatmul.bf16.gmra.mxu0 %v249
  %v980 = vpop.f32.mrf.mxu0
  %v981 = vadd.f32 %v953, %v980
  %v982 = vpop.f32.mrf.mxu0
  %v983 = vadd.f32 %v955, %v982
  %984 = vmatmul.bf16.gmra.mxu0 %v255
  %v985 = vpop.f32.mrf.mxu0
  %v986 = vadd.f32 %v958, %v985
  %v987 = vpop.f32.mrf.mxu0
  %v988 = vadd.f32 %v960, %v987
  %989 = vmatmul.bf16.gmra.mxu0 %v261
  %v990 = vpop.f32.mrf.mxu0
  %v991 = vadd.f32 %v963, %v990
  %v992 = vpop.f32.mrf.mxu0
  %993 = vdwg.mxu0
  %994 = vmatpush.bf16.msra.mxu0 %v625
  %995 = vmatpush.bf16.msra.mxu0 %v623
  %996 = vmatpush.bf16.msra.mxu0 %v621
  %997 = vmatpush.bf16.msra.mxu0 %v619
  %998 = vmatpush.bf16.msra.mxu0 %v617
  %999 = vmatpush.bf16.msra.mxu0 %v615
  %1000 = vmatpush.bf16.msra.mxu0 %v613
  %1001 = vmatpush.bf16.msra.mxu0 %v611
  %1002 = vmatmul.bf16.gmra.mxu0 %v244
  %v1003 = vpop.f32.mrf.mxu0
  %v1004 = vadd.f32 %v976, %v1003
  %v1005 = vpop.f32.mrf.mxu0
  %v1006 = vadd.f32 %v978, %v1005
  %1007 = vmatmul.bf16.gmra.mxu0 %v250
  %v1008 = vpop.f32.mrf.mxu0
  %v1009 = vadd.f32 %v981, %v1008
  %v1010 = vpop.f32.mrf.mxu0
  %v1011 = vadd.f32 %v983, %v1010
  %1012 = vmatmul.bf16.gmra.mxu0 %v256
  %v1013 = vpop.f32.mrf.mxu0
  %v1014 = vadd.f32 %v986, %v1013
  %v1015 = vpop.f32.mrf.mxu0
  %v1016 = vadd.f32 %v988, %v1015
  %1017 = vmatmul.bf16.gmra.mxu0 %v262
  %v1018 = vpop.f32.mrf.mxu0
  %v1019 = vadd.f32 %v991, %v1018
  %v1020 = vpop.f32.mrf.mxu0
  %1021 = vdwg.mxu0
  %1022 = vmatpush.bf16.msra.mxu0 %v641
  %1023 = vmatpush.bf16.msra.mxu0 %v639
  %1024 = vmatpush.bf16.msra.mxu0 %v637
  %1025 = vmatpush.bf16.msra.mxu0 %v635
  %1026 = vmatpush.bf16.msra.mxu0 %v633
  %1027 = vmatpush.bf16.msra.mxu0 %v631
  %1028 = vmatpush.bf16.msra.mxu0 %v629
  %1029 = vmatpush.bf16.msra.mxu0 %v627
  %1030 = vmatmul.bf16.gmra.mxu0 %v245
  %v1031 = vpop.f32.mrf.mxu0
  %v1032 = vadd.f32 %v1004, %v1031
  %v1033 = vpop.f32.mrf.mxu0
  %v1034 = vadd.f32 %v1006, %v1033
  %1035 = vmatmul.bf16.gmra.mxu0 %v251
  %v1036 = vpop.f32.mrf.mxu0
  %v1037 = vadd.f32 %v1009, %v1036
  %v1038 = vpop.f32.mrf.mxu0
  %v1039 = vadd.f32 %v1011, %v1038
  %1040 = vmatmul.bf16.gmra.mxu0 %v257
  %v1041 = vpop.f32.mrf.mxu0
  %v1042 = vadd.f32 %v1014, %v1041
  %v1043 = vpop.f32.mrf.mxu0
  %v1044 = vadd.f32 %v1016, %v1043
  %1045 = vmatmul.bf16.gmra.mxu0 %v263
  %v1046 = vpop.f32.mrf.mxu0
  %v1047 = vadd.f32 %v1019, %v1046
  %v1048 = vpop.f32.mrf.mxu0
  %1049 = vdwg.mxu0
  %1050 = vmatpush.bf16.msra.mxu0 %v657
  %1051 = vmatpush.bf16.msra.mxu0 %v655
  %1052 = vmatpush.bf16.msra.mxu0 %v653
  %1053 = vmatpush.bf16.msra.mxu0 %v651
  %1054 = vmatpush.bf16.msra.mxu0 %v649
  %1055 = vmatpush.bf16.msra.mxu0 %v647
  %1056 = vmatpush.bf16.msra.mxu0 %v645
  %1057 = vmatpush.bf16.msra.mxu0 %v643
  %1058 = vmatmul.bf16.gmra.mxu0 %v246
  %v1059 = vpop.f32.mrf.mxu0
  %v1060 = vadd.f32 %v1032, %v1059
  %v1061 = vpop.f32.mrf.mxu0
  %v1062 = vadd.f32 %v1034, %v1061
  %1063 = vmatmul.bf16.gmra.mxu0 %v252
  %v1064 = vpop.f32.mrf.mxu0
  %v1065 = vadd.f32 %v1037, %v1064
  %v1066 = vpop.f32.mrf.mxu0
  %v1067 = vadd.f32 %v1039, %v1066
  %1068 = vmatmul.bf16.gmra.mxu0 %v258
  %v1069 = vpop.f32.mrf.mxu0
  %v1070 = vadd.f32 %v1042, %v1069
  %v1071 = vpop.f32.mrf.mxu0
  %v1072 = vadd.f32 %v1044, %v1071
  %1073 = vmatmul.bf16.gmra.mxu0 %v264
  %v1074 = vpop.f32.mrf.mxu0
  %v1075 = vadd.f32 %v1047, %v1074
  %v1076 = vpop.f32.mrf.mxu0
  %1077 = vdwg.mxu0
  %1078 = vmatpush.bf16.msra.mxu0 %v673
  %1079 = vmatpush.bf16.msra.mxu0 %v671
  %1080 = vmatpush.bf16.msra.mxu0 %v669
  %1081 = vmatpush.bf16.msra.mxu0 %v667
  %1082 = vmatpush.bf16.msra.mxu0 %v665
  %1083 = vmatpush.bf16.msra.mxu0 %v663
  %1084 = vmatpush.bf16.msra.mxu0 %v661
  %1085 = vmatpush.bf16.msra.mxu0 %v659
  %1086 = vmatmul.bf16.gmra.mxu0 %v247
  %v1087 = vpop.f32.mrf.mxu0
  %v1088 = vadd.f32 %v1060, %v1087
  %v1089 = vpop.f32.mrf.mxu0
  %v1090 = vadd.f32 %v1062, %v1089
  %1091 = vmatmul.bf16.gmra.mxu0 %v253
  %v1092 = vpop.f32.mrf.mxu0
  %v1093 = vadd.f32 %v1065, %v1092
  %v1094 = vpop.f32.mrf.mxu0
  %v1095 = vadd.f32 %v1067, %v1094
  %1096 = vmatmul.bf16.gmra.mxu0 %v259
  %v1097 = vpop.f32.mrf.mxu0
  %v1098 = vadd.f32 %v1070, %v1097
  %v1099 = vpop.f32.mrf.mxu0
  %v1100 = vadd.f32 %v1072, %v1099
  %1101 = vmatmul.bf16.gmra.mxu0 %v265
  %v1102 = vpop.f32.mrf.mxu0
  %v1103 = vadd.f32 %v1075, %v1102
  %v1104 = vpop.f32.mrf.mxu0
  %1105 = vdwg.mxu0
  %s1106 = scalar_lea.vmem %s1, 768
  %v1107 = vld [vmem:[%s1106] sm:$0xff]
  %v1108 = vld [vmem:[%s1106 + $0x8] sm:$0xff]
  %v1109 = vld [vmem:[%s1106 + $0x10] sm:$0xff]
  %v1110 = vld [vmem:[%s1106 + $0x18] sm:$0xff]
  %v1111 = vld [vmem:[%s1106 + $0x20] sm:$0xff]
  %v1112 = vld [vmem:[%s1106 + $0x28] sm:$0xff]
  %v1113 = vld [vmem:[%s1106 + $0x30] sm:$0xff]
  %v1114 = vld [vmem:[%s1106 + $0x38] sm:$0xff]
  %v1115 = vld [vmem:[%s1106 + $0x40] sm:$0xff]
  %v1116 = vld [vmem:[%s1106 + $0x48] sm:$0xff]
  %v1117 = vld [vmem:[%s1106 + $0x50] sm:$0xff]
  %v1118 = vld [vmem:[%s1106 + $0x58] sm:$0xff]
  %v1119 = vld [vmem:[%s1106 + $0x60] sm:$0xff]
  %v1120 = vld [vmem:[%s1106 + $0x68] sm:$0xff]
  %v1121 = vld [vmem:[%s1106 + $0x70] sm:$0xff]
  %v1122 = vld [vmem:[%s1106 + $0x78] sm:$0xff]
  %v1123 = vld [vmem:[%s1106 + $0x80] sm:$0xff]
  %v1124 = vld [vmem:[%s1106 + $0x88] sm:$0xff]
  %v1125 = vld [vmem:[%s1106 + $0x90] sm:$0xff]
  %v1126 = vld [vmem:[%s1106 + $0x98] sm:$0xff]
  %v1127 = vld [vmem:[%s1106 + $0xa0] sm:$0xff]
  %v1128 = vld [vmem:[%s1106 + $0xa8] sm:$0xff]
  %v1129 = vld [vmem:[%s1106 + $0xb0] sm:$0xff]
  %v1130 = vld [vmem:[%s1106 + $0xb8] sm:$0xff]
  %v1131 = vld [vmem:[%s1106 + $0xc0] sm:$0xff]
  %v1132 = vld [vmem:[%s1106 + $0xc8] sm:$0xff]
  %v1133 = vld [vmem:[%s1106 + $0xd0] sm:$0xff]
  %v1134 = vld [vmem:[%s1106 + $0xd8] sm:$0xff]
  %v1135 = vld [vmem:[%s1106 + $0xe0] sm:$0xff]
  %v1136 = vld [vmem:[%s1106 + $0xe8] sm:$0xff]
  %v1137 = vld [vmem:[%s1106 + $0xf0] sm:$0xff]
  %v1138 = vld [vmem:[%s1106 + $0xf8] sm:$0xff]
  %v1139 = vld [vmem:[%s1106 + $0x100] sm:$0xff]
  %v1140 = vld [vmem:[%s1106 + $0x108] sm:$0xff]
  %v1141 = vld [vmem:[%s1106 + $0x110] sm:$0xff]
  %v1142 = vld [vmem:[%s1106 + $0x118] sm:$0xff]
  %v1143 = vld [vmem:[%s1106 + $0x120] sm:$0xff]
  %v1144 = vld [vmem:[%s1106 + $0x128] sm:$0xff]
  %v1145 = vld [vmem:[%s1106 + $0x130] sm:$0xff]
  %v1146 = vld [vmem:[%s1106 + $0x138] sm:$0xff]
  %v1147 = vld [vmem:[%s1106 + $0x140] sm:$0xff]
  %v1148 = vld [vmem:[%s1106 + $0x148] sm:$0xff]
  %v1149 = vld [vmem:[%s1106 + $0x150] sm:$0xff]
  %v1150 = vld [vmem:[%s1106 + $0x158] sm:$0xff]
  %v1151 = vld [vmem:[%s1106 + $0x160] sm:$0xff]
  %v1152 = vld [vmem:[%s1106 + $0x168] sm:$0xff]
  %v1153 = vld [vmem:[%s1106 + $0x170] sm:$0xff]
  %v1154 = vld [vmem:[%s1106 + $0x178] sm:$0xff]
  %v1155 = vld [vmem:[%s1106 + $0x180] sm:$0xff]
  %v1156 = vld [vmem:[%s1106 + $0x188] sm:$0xff]
  %v1157 = vld [vmem:[%s1106 + $0x190] sm:$0xff]
  %v1158 = vld [vmem:[%s1106 + $0x198] sm:$0xff]
  %v1159 = vld [vmem:[%s1106 + $0x1a0] sm:$0xff]
  %v1160 = vld [vmem:[%s1106 + $0x1a8] sm:$0xff]
  %v1161 = vld [vmem:[%s1106 + $0x1b0] sm:$0xff]
  %v1162 = vld [vmem:[%s1106 + $0x1b8] sm:$0xff]
  %v1163 = vld [vmem:[%s1106 + $0x1c0] sm:$0xff]
  %v1164 = vld [vmem:[%s1106 + $0x1c8] sm:$0xff]
  %v1165 = vld [vmem:[%s1106 + $0x1d0] sm:$0xff]
  %v1166 = vld [vmem:[%s1106 + $0x1d8] sm:$0xff]
  %v1167 = vld [vmem:[%s1106 + $0x1e0] sm:$0xff]
  %v1168 = vld [vmem:[%s1106 + $0x1e8] sm:$0xff]
  %v1169 = vld [vmem:[%s1106 + $0x1f0] sm:$0xff]
  %v1170 = vld [vmem:[%s1106 + $0x1f8] sm:$0xff]
  %v1171 = vld [vmem:[%s1106 + $0x200] sm:$0xff]
  %v1172 = vld [vmem:[%s1106 + $0x208] sm:$0xff]
  %v1173 = vld [vmem:[%s1106 + $0x210] sm:$0xff]
  %v1174 = vld [vmem:[%s1106 + $0x218] sm:$0xff]
  %v1175 = vld [vmem:[%s1106 + $0x220] sm:$0xff]
  %v1176 = vld [vmem:[%s1106 + $0x228] sm:$0xff]
  %v1177 = vld [vmem:[%s1106 + $0x230] sm:$0xff]
  %v1178 = vld [vmem:[%s1106 + $0x238] sm:$0xff]
  %v1179 = vld [vmem:[%s1106 + $0x240] sm:$0xff]
  %v1180 = vld [vmem:[%s1106 + $0x248] sm:$0xff]
  %v1181 = vld [vmem:[%s1106 + $0x250] sm:$0xff]
  %v1182 = vld [vmem:[%s1106 + $0x258] sm:$0xff]
  %v1183 = vld [vmem:[%s1106 + $0x260] sm:$0xff]
  %v1184 = vld [vmem:[%s1106 + $0x268] sm:$0xff]
  %v1185 = vld [vmem:[%s1106 + $0x270] sm:$0xff]
  %v1186 = vld [vmem:[%s1106 + $0x278] sm:$0xff]
  %v1187 = vld [vmem:[%s1106 + $0x280] sm:$0xff]
  %v1188 = vld [vmem:[%s1106 + $0x288] sm:$0xff]
  %v1189 = vld [vmem:[%s1106 + $0x290] sm:$0xff]
  %v1190 = vld [vmem:[%s1106 + $0x298] sm:$0xff]
  %v1191 = vld [vmem:[%s1106 + $0x2a0] sm:$0xff]
  %v1192 = vld [vmem:[%s1106 + $0x2a8] sm:$0xff]
  %v1193 = vld [vmem:[%s1106 + $0x2b0] sm:$0xff]
  %v1194 = vld [vmem:[%s1106 + $0x2b8] sm:$0xff]
  %v1195 = vld [vmem:[%s1106 + $0x2c0] sm:$0xff]
  %v1196 = vld [vmem:[%s1106 + $0x2c8] sm:$0xff]
  %v1197 = vld [vmem:[%s1106 + $0x2d0] sm:$0xff]
  %v1198 = vld [vmem:[%s1106 + $0x2d8] sm:$0xff]
  %v1199 = vld [vmem:[%s1106 + $0x2e0] sm:$0xff]
  %v1200 = vld [vmem:[%s1106 + $0x2e8] sm:$0xff]
  %v1201 = vld [vmem:[%s1106 + $0x2f0] sm:$0xff]
  %v1202 = vld [vmem:[%s1106 + $0x2f8] sm:$0xff]
  %s1203 = scalar_lea.vmem %s1, 1536
  %v1204 = vld [vmem:[%s1203] sm:$0xff]
  %v1205 = vld [vmem:[%s1203 + $0x8] sm:$0xff]
  %v1206 = vld [vmem:[%s1203 + $0x10] sm:$0xff]
  %v1207 = vld [vmem:[%s1203 + $0x18] sm:$0xff]
  %v1208 = vld [vmem:[%s1203 + $0x20] sm:$0xff]
  %v1209 = vld [vmem:[%s1203 + $0x28] sm:$0xff]
  %v1210 = vld [vmem:[%s1203 + $0x30] sm:$0xff]
  %v1211 = vld [vmem:[%s1203 + $0x38] sm:$0xff]
  %v1212 = vld [vmem:[%s1203 + $0x40] sm:$0xff]
  %v1213 = vld [vmem:[%s1203 + $0x48] sm:$0xff]
  %v1214 = vld [vmem:[%s1203 + $0x50] sm:$0xff]
  %v1215 = vld [vmem:[%s1203 + $0x58] sm:$0xff]
  %v1216 = vld [vmem:[%s1203 + $0x60] sm:$0xff]
  %v1217 = vld [vmem:[%s1203 + $0x68] sm:$0xff]
  %v1218 = vld [vmem:[%s1203 + $0x70] sm:$0xff]
  %v1219 = vld [vmem:[%s1203 + $0x78] sm:$0xff]
  %v1220 = vld [vmem:[%s1203 + $0x80] sm:$0xff]
  %v1221 = vld [vmem:[%s1203 + $0x88] sm:$0xff]
  %v1222 = vld [vmem:[%s1203 + $0x90] sm:$0xff]
  %v1223 = vld [vmem:[%s1203 + $0x98] sm:$0xff]
  %v1224 = vld [vmem:[%s1203 + $0xa0] sm:$0xff]
  %v1225 = vld [vmem:[%s1203 + $0xa8] sm:$0xff]
  %v1226 = vld [vmem:[%s1203 + $0xb0] sm:$0xff]
  %v1227 = vld [vmem:[%s1203 + $0xb8] sm:$0xff]
  %v1228 = vld [vmem:[%s1203 + $0xc0] sm:$0xff]
  %v1229 = vld [vmem:[%s1203 + $0xc8] sm:$0xff]
  %v1230 = vld [vmem:[%s1203 + $0xd0] sm:$0xff]
  %v1231 = vld [vmem:[%s1203 + $0xd8] sm:$0xff]
  %v1232 = vld [vmem:[%s1203 + $0xe0] sm:$0xff]
  %v1233 = vld [vmem:[%s1203 + $0xe8] sm:$0xff]
  %v1234 = vld [vmem:[%s1203 + $0xf0] sm:$0xff]
  %v1235 = vld [vmem:[%s1203 + $0xf8] sm:$0xff]
  %v1236 = vld [vmem:[%s1203 + $0x100] sm:$0xff]
  %v1237 = vld [vmem:[%s1203 + $0x108] sm:$0xff]
  %v1238 = vld [vmem:[%s1203 + $0x110] sm:$0xff]
  %v1239 = vld [vmem:[%s1203 + $0x118] sm:$0xff]
  %v1240 = vld [vmem:[%s1203 + $0x120] sm:$0xff]
  %v1241 = vld [vmem:[%s1203 + $0x128] sm:$0xff]
  %v1242 = vld [vmem:[%s1203 + $0x130] sm:$0xff]
  %v1243 = vld [vmem:[%s1203 + $0x138] sm:$0xff]
  %v1244 = vld [vmem:[%s1203 + $0x140] sm:$0xff]
  %v1245 = vld [vmem:[%s1203 + $0x148] sm:$0xff]
  %v1246 = vld [vmem:[%s1203 + $0x150] sm:$0xff]
  %v1247 = vld [vmem:[%s1203 + $0x158] sm:$0xff]
  %v1248 = vld [vmem:[%s1203 + $0x160] sm:$0xff]
  %v1249 = vld [vmem:[%s1203 + $0x168] sm:$0xff]
  %v1250 = vld [vmem:[%s1203 + $0x170] sm:$0xff]
  %v1251 = vld [vmem:[%s1203 + $0x178] sm:$0xff]
  %v1252 = vld [vmem:[%s1203 + $0x180] sm:$0xff]
  %v1253 = vld [vmem:[%s1203 + $0x188] sm:$0xff]
  %v1254 = vld [vmem:[%s1203 + $0x190] sm:$0xff]
  %v1255 = vld [vmem:[%s1203 + $0x198] sm:$0xff]
  %v1256 = vld [vmem:[%s1203 + $0x1a0] sm:$0xff]
  %v1257 = vld [vmem:[%s1203 + $0x1a8] sm:$0xff]
  %v1258 = vld [vmem:[%s1203 + $0x1b0] sm:$0xff]
  %v1259 = vld [vmem:[%s1203 + $0x1b8] sm:$0xff]
  %v1260 = vld [vmem:[%s1203 + $0x1c0] sm:$0xff]
  %v1261 = vld [vmem:[%s1203 + $0x1c8] sm:$0xff]
  %v1262 = vld [vmem:[%s1203 + $0x1d0] sm:$0xff]
  %v1263 = vld [vmem:[%s1203 + $0x1d8] sm:$0xff]
  %v1264 = vld [vmem:[%s1203 + $0x1e0] sm:$0xff]
  %v1265 = vld [vmem:[%s1203 + $0x1e8] sm:$0xff]
  %v1266 = vld [vmem:[%s1203 + $0x1f0] sm:$0xff]
  %v1267 = vld [vmem:[%s1203 + $0x1f8] sm:$0xff]
  %v1268 = vld [vmem:[%s1203 + $0x200] sm:$0xff]
  %v1269 = vld [vmem:[%s1203 + $0x208] sm:$0xff]
  %v1270 = vld [vmem:[%s1203 + $0x210] sm:$0xff]
  %v1271 = vld [vmem:[%s1203 + $0x218] sm:$0xff]
  %v1272 = vld [vmem:[%s1203 + $0x220] sm:$0xff]
  %v1273 = vld [vmem:[%s1203 + $0x228] sm:$0xff]
  %v1274 = vld [vmem:[%s1203 + $0x230] sm:$0xff]
  %v1275 = vld [vmem:[%s1203 + $0x238] sm:$0xff]
  %v1276 = vld [vmem:[%s1203 + $0x240] sm:$0xff]
  %v1277 = vld [vmem:[%s1203 + $0x248] sm:$0xff]
  %v1278 = vld [vmem:[%s1203 + $0x250] sm:$0xff]
  %v1279 = vld [vmem:[%s1203 + $0x258] sm:$0xff]
  %v1280 = vld [vmem:[%s1203 + $0x260] sm:$0xff]
  %v1281 = vld [vmem:[%s1203 + $0x268] sm:$0xff]
  %v1282 = vld [vmem:[%s1203 + $0x270] sm:$0xff]
  %v1283 = vld [vmem:[%s1203 + $0x278] sm:$0xff]
  %v1284 = vld [vmem:[%s1203 + $0x280] sm:$0xff]
  %v1285 = vld [vmem:[%s1203 + $0x288] sm:$0xff]
  %v1286 = vld [vmem:[%s1203 + $0x290] sm:$0xff]
  %v1287 = vld [vmem:[%s1203 + $0x298] sm:$0xff]
  %v1288 = vld [vmem:[%s1203 + $0x2a0] sm:$0xff]
  %v1289 = vld [vmem:[%s1203 + $0x2a8] sm:$0xff]
  %v1290 = vld [vmem:[%s1203 + $0x2b0] sm:$0xff]
  %v1291 = vld [vmem:[%s1203 + $0x2b8] sm:$0xff]
  %v1292 = vld [vmem:[%s1203 + $0x2c0] sm:$0xff]
  %v1293 = vld [vmem:[%s1203 + $0x2c8] sm:$0xff]
  %v1294 = vld [vmem:[%s1203 + $0x2d0] sm:$0xff]
  %v1295 = vld [vmem:[%s1203 + $0x2d8] sm:$0xff]
  %v1296 = vld [vmem:[%s1203 + $0x2e0] sm:$0xff]
  %v1297 = vld [vmem:[%s1203 + $0x2e8] sm:$0xff]
  %v1298 = vld [vmem:[%s1203 + $0x2f0] sm:$0xff]
  %v1299 = vld [vmem:[%s1203 + $0x2f8] sm:$0xff]
  %v1396 = vunpack.c.l.b16 %v1204
  %v1397 = vunpack.c.h.b16 %v1204
  %v1398 = vunpack.c.l.b16 %v1205
  %v1399 = vunpack.c.h.b16 %v1205
  %v1400 = vunpack.c.l.b16 %v1206
  %v1401 = vunpack.c.h.b16 %v1206
  %v1402 = vunpack.c.l.b16 %v1207
  %v1403 = vunpack.c.h.b16 %v1207
  %v1404 = vunpack.c.l.b16 %v1208
  %v1405 = vunpack.c.h.b16 %v1208
  %v1406 = vunpack.c.l.b16 %v1209
  %v1407 = vunpack.c.h.b16 %v1209
  %v1408 = vunpack.c.l.b16 %v1210
  %v1409 = vunpack.c.h.b16 %v1210
  %v1410 = vunpack.c.l.b16 %v1211
  %v1411 = vunpack.c.h.b16 %v1211
  %v1412 = vunpack.c.l.b16 %v1212
  %v1413 = vunpack.c.h.b16 %v1212
  %v1414 = vunpack.c.l.b16 %v1213
  %v1415 = vunpack.c.h.b16 %v1213
  %v1416 = vunpack.c.l.b16 %v1214
  %v1417 = vunpack.c.h.b16 %v1214
  %v1418 = vunpack.c.l.b16 %v1215
  %v1419 = vunpack.c.h.b16 %v1215
  %v1420 = vunpack.c.l.b16 %v1216
  %v1421 = vunpack.c.h.b16 %v1216
  %v1422 = vunpack.c.l.b16 %v1217
  %v1423 = vunpack.c.h.b16 %v1217
  %v1424 = vunpack.c.l.b16 %v1218
  %v1425 = vunpack.c.h.b16 %v1218
  %v1426 = vunpack.c.l.b16 %v1219
  %v1427 = vunpack.c.h.b16 %v1219
  %v1428 = vunpack.c.l.b16 %v1220
  %v1429 = vunpack.c.h.b16 %v1220
  %v1430 = vunpack.c.l.b16 %v1221
  %v1431 = vunpack.c.h.b16 %v1221
  %v1432 = vunpack.c.l.b16 %v1222
  %v1433 = vunpack.c.h.b16 %v1222
  %v1434 = vunpack.c.l.b16 %v1223
  %v1435 = vunpack.c.h.b16 %v1223
  %v1436 = vunpack.c.l.b16 %v1224
  %v1437 = vunpack.c.h.b16 %v1224
  %v1438 = vunpack.c.l.b16 %v1225
  %v1439 = vunpack.c.h.b16 %v1225
  %v1440 = vunpack.c.l.b16 %v1226
  %v1441 = vunpack.c.h.b16 %v1226
  %v1442 = vunpack.c.l.b16 %v1227
  %v1443 = vunpack.c.h.b16 %v1227
  %v1444 = vunpack.c.l.b16 %v1228
  %v1445 = vunpack.c.h.b16 %v1228
  %v1446 = vunpack.c.l.b16 %v1229
  %v1447 = vunpack.c.h.b16 %v1229
  %v1448 = vunpack.c.l.b16 %v1230
  %v1449 = vunpack.c.h.b16 %v1230
  %v1450 = vunpack.c.l.b16 %v1231
  %v1451 = vunpack.c.h.b16 %v1231
  %v1452 = vunpack.c.l.b16 %v1232
  %v1453 = vunpack.c.h.b16 %v1232
  %v1454 = vunpack.c.l.b16 %v1233
  %v1455 = vunpack.c.h.b16 %v1233
  %v1456 = vunpack.c.l.b16 %v1234
  %v1457 = vunpack.c.h.b16 %v1234
  %v1458 = vunpack.c.l.b16 %v1235
  %v1459 = vunpack.c.h.b16 %v1235
  %v1460 = vunpack.c.l.b16 %v1236
  %v1461 = vunpack.c.h.b16 %v1236
  %v1462 = vunpack.c.l.b16 %v1237
  %v1463 = vunpack.c.h.b16 %v1237
  %v1464 = vunpack.c.l.b16 %v1238
  %v1465 = vunpack.c.h.b16 %v1238
  %v1466 = vunpack.c.l.b16 %v1239
  %v1467 = vunpack.c.h.b16 %v1239
  %v1468 = vunpack.c.l.b16 %v1240
  %v1469 = vunpack.c.h.b16 %v1240
  %v1470 = vunpack.c.l.b16 %v1241
  %v1471 = vunpack.c.h.b16 %v1241
  %v1472 = vunpack.c.l.b16 %v1242
  %v1473 = vunpack.c.h.b16 %v1242
  %v1474 = vunpack.c.l.b16 %v1243
  %v1475 = vunpack.c.h.b16 %v1243
  %v1476 = vunpack.c.l.b16 %v1244
  %v1477 = vunpack.c.h.b16 %v1244
  %v1478 = vunpack.c.l.b16 %v1245
  %v1479 = vunpack.c.h.b16 %v1245
  %v1480 = vunpack.c.l.b16 %v1246
  %v1481 = vunpack.c.h.b16 %v1246
  %v1482 = vunpack.c.l.b16 %v1247
  %v1483 = vunpack.c.h.b16 %v1247
  %v1484 = vunpack.c.l.b16 %v1248
  %v1485 = vunpack.c.h.b16 %v1248
  %v1486 = vunpack.c.l.b16 %v1249
  %v1487 = vunpack.c.h.b16 %v1249
  %v1488 = vunpack.c.l.b16 %v1250
  %v1489 = vunpack.c.h.b16 %v1250
  %v1490 = vunpack.c.l.b16 %v1251
  %v1491 = vunpack.c.h.b16 %v1251
  %v1492 = vunpack.c.l.b16 %v1252
  %v1493 = vunpack.c.h.b16 %v1252
  %v1494 = vunpack.c.l.b16 %v1253
  %v1495 = vunpack.c.h.b16 %v1253
  %v1496 = vunpack.c.l.b16 %v1254
  %v1497 = vunpack.c.h.b16 %v1254
  %v1498 = vunpack.c.l.b16 %v1255
  %v1499 = vunpack.c.h.b16 %v1255
  %v1500 = vunpack.c.l.b16 %v1256
  %v1501 = vunpack.c.h.b16 %v1256
  %v1502 = vunpack.c.l.b16 %v1257
  %v1503 = vunpack.c.h.b16 %v1257
  %v1504 = vunpack.c.l.b16 %v1258
  %v1505 = vunpack.c.h.b16 %v1258
  %v1506 = vunpack.c.l.b16 %v1259
  %v1507 = vunpack.c.h.b16 %v1259
  %v1508 = vunpack.c.l.b16 %v1260
  %v1509 = vunpack.c.h.b16 %v1260
  %v1510 = vunpack.c.l.b16 %v1261
  %v1511 = vunpack.c.h.b16 %v1261
  %v1512 = vunpack.c.l.b16 %v1262
  %v1513 = vunpack.c.h.b16 %v1262
  %v1514 = vunpack.c.l.b16 %v1263
  %v1515 = vunpack.c.h.b16 %v1263
  %v1516 = vunpack.c.l.b16 %v1264
  %v1517 = vunpack.c.h.b16 %v1264
  %v1518 = vunpack.c.l.b16 %v1265
  %v1519 = vunpack.c.h.b16 %v1265
  %v1520 = vunpack.c.l.b16 %v1266
  %v1521 = vunpack.c.h.b16 %v1266
  %v1522 = vunpack.c.l.b16 %v1267
  %v1523 = vunpack.c.h.b16 %v1267
  %v1524 = vunpack.c.l.b16 %v1268
  %v1525 = vunpack.c.h.b16 %v1268
  %v1526 = vunpack.c.l.b16 %v1269
  %v1527 = vunpack.c.h.b16 %v1269
  %v1528 = vunpack.c.l.b16 %v1270
  %v1529 = vunpack.c.h.b16 %v1270
  %v1530 = vunpack.c.l.b16 %v1271
  %v1531 = vunpack.c.h.b16 %v1271
  %v1532 = vunpack.c.l.b16 %v1272
  %v1533 = vunpack.c.h.b16 %v1272
  %v1534 = vunpack.c.l.b16 %v1273
  %v1535 = vunpack.c.h.b16 %v1273
  %v1536 = vunpack.c.l.b16 %v1274
  %v1537 = vunpack.c.h.b16 %v1274
  %v1538 = vunpack.c.l.b16 %v1275
  %v1539 = vunpack.c.h.b16 %v1275
  %v1540 = vunpack.c.l.b16 %v1276
  %v1541 = vunpack.c.h.b16 %v1276
  %v1542 = vunpack.c.l.b16 %v1277
  %v1543 = vunpack.c.h.b16 %v1277
  %v1544 = vunpack.c.l.b16 %v1278
  %v1545 = vunpack.c.h.b16 %v1278
  %v1546 = vunpack.c.l.b16 %v1279
  %v1547 = vunpack.c.h.b16 %v1279
  %v1548 = vunpack.c.l.b16 %v1280
  %v1549 = vunpack.c.h.b16 %v1280
  %v1550 = vunpack.c.l.b16 %v1281
  %v1551 = vunpack.c.h.b16 %v1281
  %v1552 = vunpack.c.l.b16 %v1282
  %v1553 = vunpack.c.h.b16 %v1282
  %v1554 = vunpack.c.l.b16 %v1283
  %v1555 = vunpack.c.h.b16 %v1283
  %v1556 = vunpack.c.l.b16 %v1284
  %v1557 = vunpack.c.h.b16 %v1284
  %v1558 = vunpack.c.l.b16 %v1285
  %v1559 = vunpack.c.h.b16 %v1285
  %v1560 = vunpack.c.l.b16 %v1286
  %v1561 = vunpack.c.h.b16 %v1286
  %v1562 = vunpack.c.l.b16 %v1287
  %v1563 = vunpack.c.h.b16 %v1287
  %v1564 = vunpack.c.l.b16 %v1288
  %v1565 = vunpack.c.h.b16 %v1288
  %v1566 = vunpack.c.l.b16 %v1289
  %v1567 = vunpack.c.h.b16 %v1289
  %v1568 = vunpack.c.l.b16 %v1290
  %v1569 = vunpack.c.h.b16 %v1290
  %v1570 = vunpack.c.l.b16 %v1291
  %v1571 = vunpack.c.h.b16 %v1291
  %v1572 = vunpack.c.l.b16 %v1292
  %v1573 = vunpack.c.h.b16 %v1292
  %v1574 = vunpack.c.l.b16 %v1293
  %v1575 = vunpack.c.h.b16 %v1293
  %v1576 = vunpack.c.l.b16 %v1294
  %v1577 = vunpack.c.h.b16 %v1294
  %v1578 = vunpack.c.l.b16 %v1295
  %v1579 = vunpack.c.h.b16 %v1295
  %v1580 = vunpack.c.l.b16 %v1296
  %v1581 = vunpack.c.h.b16 %v1296
  %v1582 = vunpack.c.l.b16 %v1297
  %v1583 = vunpack.c.h.b16 %v1297
  %v1584 = vunpack.c.l.b16 %v1298
  %v1585 = vunpack.c.h.b16 %v1298
  %v1586 = vunpack.c.l.b16 %v1299
  %v1587 = vunpack.c.h.b16 %v1299
  %v1588 = vpack.c.b16 %v1398, %v1396
  %v1589 = vpack.c.b16 %v1399, %v1397
  %v1590 = vpack.c.b16 %v1402, %v1400
  %v1591 = vpack.c.b16 %v1403, %v1401
  %v1592 = vpack.c.b16 %v1406, %v1404
  %v1593 = vpack.c.b16 %v1407, %v1405
  %v1594 = vpack.c.b16 %v1410, %v1408
  %v1595 = vpack.c.b16 %v1411, %v1409
  %v1596 = vpack.c.b16 %v1414, %v1412
  %v1597 = vpack.c.b16 %v1415, %v1413
  %v1598 = vpack.c.b16 %v1418, %v1416
  %v1599 = vpack.c.b16 %v1419, %v1417
  %v1600 = vpack.c.b16 %v1422, %v1420
  %v1601 = vpack.c.b16 %v1423, %v1421
  %v1602 = vpack.c.b16 %v1426, %v1424
  %v1603 = vpack.c.b16 %v1427, %v1425
  %v1604 = vpack.c.b16 %v1430, %v1428
  %v1605 = vpack.c.b16 %v1431, %v1429
  %v1606 = vpack.c.b16 %v1434, %v1432
  %v1607 = vpack.c.b16 %v1435, %v1433
  %v1608 = vpack.c.b16 %v1438, %v1436
  %v1609 = vpack.c.b16 %v1439, %v1437
  %v1610 = vpack.c.b16 %v1442, %v1440
  %v1611 = vpack.c.b16 %v1443, %v1441
  %v1612 = vpack.c.b16 %v1446, %v1444
  %v1613 = vpack.c.b16 %v1447, %v1445
  %v1614 = vpack.c.b16 %v1450, %v1448
  %v1615 = vpack.c.b16 %v1451, %v1449
  %v1616 = vpack.c.b16 %v1454, %v1452
  %v1617 = vpack.c.b16 %v1455, %v1453
  %v1618 = vpack.c.b16 %v1458, %v1456
  %v1619 = vpack.c.b16 %v1459, %v1457
  %v1620 = vpack.c.b16 %v1462, %v1460
  %v1621 = vpack.c.b16 %v1463, %v1461
  %v1622 = vpack.c.b16 %v1466, %v1464
  %v1623 = vpack.c.b16 %v1467, %v1465
  %v1624 = vpack.c.b16 %v1470, %v1468
  %v1625 = vpack.c.b16 %v1471, %v1469
  %v1626 = vpack.c.b16 %v1474, %v1472
  %v1627 = vpack.c.b16 %v1475, %v1473
  %v1628 = vpack.c.b16 %v1478, %v1476
  %v1629 = vpack.c.b16 %v1479, %v1477
  %v1630 = vpack.c.b16 %v1482, %v1480
  %v1631 = vpack.c.b16 %v1483, %v1481
  %v1632 = vpack.c.b16 %v1486, %v1484
  %v1633 = vpack.c.b16 %v1487, %v1485
  %v1634 = vpack.c.b16 %v1490, %v1488
  %v1635 = vpack.c.b16 %v1491, %v1489
  %v1636 = vpack.c.b16 %v1494, %v1492
  %v1637 = vpack.c.b16 %v1495, %v1493
  %v1638 = vpack.c.b16 %v1498, %v1496
  %v1639 = vpack.c.b16 %v1499, %v1497
  %v1640 = vpack.c.b16 %v1502, %v1500
  %v1641 = vpack.c.b16 %v1503, %v1501
  %v1642 = vpack.c.b16 %v1506, %v1504
  %v1643 = vpack.c.b16 %v1507, %v1505
  %v1644 = vpack.c.b16 %v1510, %v1508
  %v1645 = vpack.c.b16 %v1511, %v1509
  %v1646 = vpack.c.b16 %v1514, %v1512
  %v1647 = vpack.c.b16 %v1515, %v1513
  %v1648 = vpack.c.b16 %v1518, %v1516
  %v1649 = vpack.c.b16 %v1519, %v1517
  %v1650 = vpack.c.b16 %v1522, %v1520
  %v1651 = vpack.c.b16 %v1523, %v1521
  %v1652 = vpack.c.b16 %v1526, %v1524
  %v1653 = vpack.c.b16 %v1527, %v1525
  %v1654 = vpack.c.b16 %v1530, %v1528
  %v1655 = vpack.c.b16 %v1531, %v1529
  %v1656 = vpack.c.b16 %v1534, %v1532
  %v1657 = vpack.c.b16 %v1535, %v1533
  %v1658 = vpack.c.b16 %v1538, %v1536
  %v1659 = vpack.c.b16 %v1539, %v1537
  %v1660 = vpack.c.b16 %v1542, %v1540
  %v1661 = vpack.c.b16 %v1543, %v1541
  %v1662 = vpack.c.b16 %v1546, %v1544
  %v1663 = vpack.c.b16 %v1547, %v1545
  %v1664 = vpack.c.b16 %v1550, %v1548
  %v1665 = vpack.c.b16 %v1551, %v1549
  %v1666 = vpack.c.b16 %v1554, %v1552
  %v1667 = vpack.c.b16 %v1555, %v1553
  %v1668 = vpack.c.b16 %v1558, %v1556
  %v1669 = vpack.c.b16 %v1559, %v1557
  %v1670 = vpack.c.b16 %v1562, %v1560
  %v1671 = vpack.c.b16 %v1563, %v1561
  %v1672 = vpack.c.b16 %v1566, %v1564
  %v1673 = vpack.c.b16 %v1567, %v1565
  %v1674 = vpack.c.b16 %v1570, %v1568
  %v1675 = vpack.c.b16 %v1571, %v1569
  %v1676 = vpack.c.b16 %v1574, %v1572
  %v1677 = vpack.c.b16 %v1575, %v1573
  %v1678 = vpack.c.b16 %v1578, %v1576
  %v1679 = vpack.c.b16 %v1579, %v1577
  %v1680 = vpack.c.b16 %v1582, %v1580
  %v1681 = vpack.c.b16 %v1583, %v1581
  %v1682 = vpack.c.b16 %v1586, %v1584
  %v1683 = vpack.c.b16 %v1587, %v1585
  %1780 = vmatpush.bf16.msra.mxu0 %v1602
  %1781 = vmatpush.bf16.msra.mxu0 %v1600
  %1782 = vmatpush.bf16.msra.mxu0 %v1598
  %1783 = vmatpush.bf16.msra.mxu0 %v1596
  %1784 = vmatpush.bf16.msra.mxu0 %v1594
  %1785 = vmatpush.bf16.msra.mxu0 %v1592
  %1786 = vmatpush.bf16.msra.mxu0 %v1590
  %1787 = vmatpush.bf16.msra.mxu0 %v1588
  %1788 = vmatmul.bf16.gmra.mxu0 %v242
  %v1789 = vpop.f32.mrf.mxu0
  %v1790 = vpop.f32.mrf.mxu0
  %v1791 = vadd.f32 0.0, %v1790
  %1792 = vmatmul.bf16.gmra.mxu0 %v248
  %v1793 = vpop.f32.mrf.mxu0
  %v1794 = vadd.f32 0.0, %v1793
  %v1795 = vpop.f32.mrf.mxu0
  %v1796 = vadd.f32 0.0, %v1795
  %1797 = vmatmul.bf16.gmra.mxu0 %v254
  %v1798 = vpop.f32.mrf.mxu0
  %v1799 = vadd.f32 0.0, %v1798
  %v1800 = vpop.f32.mrf.mxu0
  %v1801 = vadd.f32 0.0, %v1800
  %1802 = vmatmul.bf16.gmra.mxu0 %v260
  %v1803 = vpop.f32.mrf.mxu0
  %v1804 = vadd.f32 0.0, %v1803
  %v1805 = vpop.f32.mrf.mxu0
  %v1806 = vadd.f32 0.0, %v1805
  %1807 = vdwg.mxu0
  %1808 = vmatpush.bf16.msra.mxu0 %v1618
  %1809 = vmatpush.bf16.msra.mxu0 %v1616
  %1810 = vmatpush.bf16.msra.mxu0 %v1614
  %1811 = vmatpush.bf16.msra.mxu0 %v1612
  %1812 = vmatpush.bf16.msra.mxu0 %v1610
  %1813 = vmatpush.bf16.msra.mxu0 %v1608
  %1814 = vmatpush.bf16.msra.mxu0 %v1606
  %1815 = vmatpush.bf16.msra.mxu0 %v1604
  %1816 = vmatmul.bf16.gmra.mxu0 %v243
  %v1817 = vpop.f32.mrf.mxu0
  %v1818 = vpop.f32.mrf.mxu0
  %v1819 = vadd.f32 %v1791, %v1818
  %1820 = vmatmul.bf16.gmra.mxu0 %v249
  %v1821 = vpop.f32.mrf.mxu0
  %v1822 = vadd.f32 %v1794, %v1821
  %v1823 = vpop.f32.mrf.mxu0
  %v1824 = vadd.f32 %v1796, %v1823
  %1825 = vmatmul.bf16.gmra.mxu0 %v255
  %v1826 = vpop.f32.mrf.mxu0
  %v1827 = vadd.f32 %v1799, %v1826
  %v1828 = vpop.f32.mrf.mxu0
  %v1829 = vadd.f32 %v1801, %v1828
  %1830 = vmatmul.bf16.gmra.mxu0 %v261
  %v1831 = vpop.f32.mrf.mxu0
  %v1832 = vadd.f32 %v1804, %v1831
  %v1833 = vpop.f32.mrf.mxu0
  %v1834 = vadd.f32 %v1806, %v1833
  %1835 = vdwg.mxu0
  %1836 = vmatpush.bf16.msra.mxu0 %v1634
  %1837 = vmatpush.bf16.msra.mxu0 %v1632
  %1838 = vmatpush.bf16.msra.mxu0 %v1630
  %1839 = vmatpush.bf16.msra.mxu0 %v1628
  %1840 = vmatpush.bf16.msra.mxu0 %v1626
  %1841 = vmatpush.bf16.msra.mxu0 %v1624
  %1842 = vmatpush.bf16.msra.mxu0 %v1622
  %1843 = vmatpush.bf16.msra.mxu0 %v1620
  %1844 = vmatmul.bf16.gmra.mxu0 %v244
  %v1845 = vpop.f32.mrf.mxu0
  %v1846 = vpop.f32.mrf.mxu0
  %v1847 = vadd.f32 %v1819, %v1846
  %1848 = vmatmul.bf16.gmra.mxu0 %v250
  %v1849 = vpop.f32.mrf.mxu0
  %v1850 = vadd.f32 %v1822, %v1849
  %v1851 = vpop.f32.mrf.mxu0
  %v1852 = vadd.f32 %v1824, %v1851
  %1853 = vmatmul.bf16.gmra.mxu0 %v256
  %v1854 = vpop.f32.mrf.mxu0
  %v1855 = vadd.f32 %v1827, %v1854
  %v1856 = vpop.f32.mrf.mxu0
  %v1857 = vadd.f32 %v1829, %v1856
  %1858 = vmatmul.bf16.gmra.mxu0 %v262
  %v1859 = vpop.f32.mrf.mxu0
  %v1860 = vadd.f32 %v1832, %v1859
  %v1861 = vpop.f32.mrf.mxu0
  %v1862 = vadd.f32 %v1834, %v1861
  %1863 = vdwg.mxu0
  %1864 = vmatpush.bf16.msra.mxu0 %v1650
  %1865 = vmatpush.bf16.msra.mxu0 %v1648
  %1866 = vmatpush.bf16.msra.mxu0 %v1646
  %1867 = vmatpush.bf16.msra.mxu0 %v1644
  %1868 = vmatpush.bf16.msra.mxu0 %v1642
  %1869 = vmatpush.bf16.msra.mxu0 %v1640
  %1870 = vmatpush.bf16.msra.mxu0 %v1638
  %1871 = vmatpush.bf16.msra.mxu0 %v1636
  %1872 = vmatmul.bf16.gmra.mxu0 %v245
  %v1873 = vpop.f32.mrf.mxu0
  %v1874 = vpop.f32.mrf.mxu0
  %v1875 = vadd.f32 %v1847, %v1874
  %1876 = vmatmul.bf16.gmra.mxu0 %v251
  %v1877 = vpop.f32.mrf.mxu0
  %v1878 = vadd.f32 %v1850, %v1877
  %v1879 = vpop.f32.mrf.mxu0
  %v1880 = vadd.f32 %v1852, %v1879
  %1881 = vmatmul.bf16.gmra.mxu0 %v257
  %v1882 = vpop.f32.mrf.mxu0
  %v1883 = vadd.f32 %v1855, %v1882
  %v1884 = vpop.f32.mrf.mxu0
  %v1885 = vadd.f32 %v1857, %v1884
  %1886 = vmatmul.bf16.gmra.mxu0 %v263
  %v1887 = vpop.f32.mrf.mxu0
  %v1888 = vadd.f32 %v1860, %v1887
  %v1889 = vpop.f32.mrf.mxu0
  %v1890 = vadd.f32 %v1862, %v1889
  %1891 = vdwg.mxu0
  %1892 = vmatpush.bf16.msra.mxu0 %v1666
  %1893 = vmatpush.bf16.msra.mxu0 %v1664
  %1894 = vmatpush.bf16.msra.mxu0 %v1662
  %1895 = vmatpush.bf16.msra.mxu0 %v1660
  %1896 = vmatpush.bf16.msra.mxu0 %v1658
  %1897 = vmatpush.bf16.msra.mxu0 %v1656
  %1898 = vmatpush.bf16.msra.mxu0 %v1654
  %1899 = vmatpush.bf16.msra.mxu0 %v1652
  %1900 = vmatmul.bf16.gmra.mxu0 %v246
  %v1901 = vpop.f32.mrf.mxu0
  %v1902 = vpop.f32.mrf.mxu0
  %v1903 = vadd.f32 %v1875, %v1902
  %1904 = vmatmul.bf16.gmra.mxu0 %v252
  %v1905 = vpop.f32.mrf.mxu0
  %v1906 = vadd.f32 %v1878, %v1905
  %v1907 = vpop.f32.mrf.mxu0
  %v1908 = vadd.f32 %v1880, %v1907
  %1909 = vmatmul.bf16.gmra.mxu0 %v258
  %v1910 = vpop.f32.mrf.mxu0
  %v1911 = vadd.f32 %v1883, %v1910
  %v1912 = vpop.f32.mrf.mxu0
  %v1913 = vadd.f32 %v1885, %v1912
  %1914 = vmatmul.bf16.gmra.mxu0 %v264
  %v1915 = vpop.f32.mrf.mxu0
  %v1916 = vadd.f32 %v1888, %v1915
  %v1917 = vpop.f32.mrf.mxu0
  %v1918 = vadd.f32 %v1890, %v1917
  %1919 = vdwg.mxu0
  %1920 = vmatpush.bf16.msra.mxu0 %v1682
  %1921 = vmatpush.bf16.msra.mxu0 %v1680
  %1922 = vmatpush.bf16.msra.mxu0 %v1678
  %1923 = vmatpush.bf16.msra.mxu0 %v1676
  %1924 = vmatpush.bf16.msra.mxu0 %v1674
  %1925 = vmatpush.bf16.msra.mxu0 %v1672
  %1926 = vmatpush.bf16.msra.mxu0 %v1670
  %1927 = vmatpush.bf16.msra.mxu0 %v1668
  %1928 = vmatmul.bf16.gmra.mxu0 %v247
  %v1929 = vpop.f32.mrf.mxu0
  %v1930 = vpop.f32.mrf.mxu0
  %v1931 = vadd.f32 %v1903, %v1930
  %1932 = vmatmul.bf16.gmra.mxu0 %v253
  %v1933 = vpop.f32.mrf.mxu0
  %v1934 = vadd.f32 %v1906, %v1933
  %v1935 = vpop.f32.mrf.mxu0
  %v1936 = vadd.f32 %v1908, %v1935
  %1937 = vmatmul.bf16.gmra.mxu0 %v259
  %v1938 = vpop.f32.mrf.mxu0
  %v1939 = vadd.f32 %v1911, %v1938
  %v1940 = vpop.f32.mrf.mxu0
  %v1941 = vadd.f32 %v1913, %v1940
  %1942 = vmatmul.bf16.gmra.mxu0 %v265
  %v1943 = vpop.f32.mrf.mxu0
  %v1944 = vadd.f32 %v1916, %v1943
  %v1945 = vpop.f32.mrf.mxu0
  %v1946 = vadd.f32 %v1918, %v1945
  %1947 = vdwg.mxu0
  %1948 = vmatpush.bf16.msra.mxu0 %v1603
  %1949 = vmatpush.bf16.msra.mxu0 %v1601
  %1950 = vmatpush.bf16.msra.mxu0 %v1599
  %1951 = vmatpush.bf16.msra.mxu0 %v1597
  %1952 = vmatpush.bf16.msra.mxu0 %v1595
  %1953 = vmatpush.bf16.msra.mxu0 %v1593
  %1954 = vmatpush.bf16.msra.mxu0 %v1591
  %1955 = vmatpush.bf16.msra.mxu0 %v1589
  %1956 = vmatmul.bf16.gmra.mxu0 %v242
  %v1957 = vpop.f32.mrf.mxu0
  %v1958 = vpop.f32.mrf.mxu0
  %v1959 = vadd.f32 0.0, %v1958
  %1960 = vmatmul.bf16.gmra.mxu0 %v248
  %v1961 = vpop.f32.mrf.mxu0
  %v1962 = vadd.f32 0.0, %v1961
  %v1963 = vpop.f32.mrf.mxu0
  %v1964 = vadd.f32 0.0, %v1963
  %1965 = vmatmul.bf16.gmra.mxu0 %v254
  %v1966 = vpop.f32.mrf.mxu0
  %v1967 = vadd.f32 0.0, %v1966
  %v1968 = vpop.f32.mrf.mxu0
  %v1969 = vadd.f32 0.0, %v1968
  %1970 = vmatmul.bf16.gmra.mxu0 %v260
  %v1971 = vpop.f32.mrf.mxu0
  %v1972 = vadd.f32 0.0, %v1971
  %v1973 = vpop.f32.mrf.mxu0
  %v1974 = vadd.f32 0.0, %v1973
  %1975 = vdwg.mxu0
  %1976 = vmatpush.bf16.msra.mxu0 %v1619
  %1977 = vmatpush.bf16.msra.mxu0 %v1617
  %1978 = vmatpush.bf16.msra.mxu0 %v1615
  %1979 = vmatpush.bf16.msra.mxu0 %v1613
  %1980 = vmatpush.bf16.msra.mxu0 %v1611
  %1981 = vmatpush.bf16.msra.mxu0 %v1609
  %1982 = vmatpush.bf16.msra.mxu0 %v1607
  %1983 = vmatpush.bf16.msra.mxu0 %v1605
  %1984 = vmatmul.bf16.gmra.mxu0 %v243
  %v1985 = vpop.f32.mrf.mxu0
  %v1986 = vpop.f32.mrf.mxu0
  %v1987 = vadd.f32 %v1959, %v1986
  %1988 = vmatmul.bf16.gmra.mxu0 %v249
  %v1989 = vpop.f32.mrf.mxu0
  %v1990 = vadd.f32 %v1962, %v1989
  %v1991 = vpop.f32.mrf.mxu0
  %v1992 = vadd.f32 %v1964, %v1991
  %1993 = vmatmul.bf16.gmra.mxu0 %v255
  %v1994 = vpop.f32.mrf.mxu0
  %v1995 = vadd.f32 %v1967, %v1994
  %v1996 = vpop.f32.mrf.mxu0
  %v1997 = vadd.f32 %v1969, %v1996
  %1998 = vmatmul.bf16.gmra.mxu0 %v261
  %v1999 = vpop.f32.mrf.mxu0
  %v2000 = vadd.f32 %v1972, %v1999
  %v2001 = vpop.f32.mrf.mxu0
  %v2002 = vadd.f32 %v1974, %v2001
  %2003 = vdwg.mxu0
  %2004 = vmatpush.bf16.msra.mxu0 %v1635
  %2005 = vmatpush.bf16.msra.mxu0 %v1633
  %2006 = vmatpush.bf16.msra.mxu0 %v1631
  %2007 = vmatpush.bf16.msra.mxu0 %v1629
  %2008 = vmatpush.bf16.msra.mxu0 %v1627
  %2009 = vmatpush.bf16.msra.mxu0 %v1625
  %2010 = vmatpush.bf16.msra.mxu0 %v1623
  %2011 = vmatpush.bf16.msra.mxu0 %v1621
  %2012 = vmatmul.bf16.gmra.mxu0 %v244
  %v2013 = vpop.f32.mrf.mxu0
  %v2014 = vpop.f32.mrf.mxu0
  %v2015 = vadd.f32 %v1987, %v2014
  %2016 = vmatmul.bf16.gmra.mxu0 %v250
  %v2017 = vpop.f32.mrf.mxu0
  %v2018 = vadd.f32 %v1990, %v2017
  %v2019 = vpop.f32.mrf.mxu0
  %v2020 = vadd.f32 %v1992, %v2019
  %2021 = vmatmul.bf16.gmra.mxu0 %v256
  %v2022 = vpop.f32.mrf.mxu0
  %v2023 = vadd.f32 %v1995, %v2022
  %v2024 = vpop.f32.mrf.mxu0
  %v2025 = vadd.f32 %v1997, %v2024
  %2026 = vmatmul.bf16.gmra.mxu0 %v262
  %v2027 = vpop.f32.mrf.mxu0
  %v2028 = vadd.f32 %v2000, %v2027
  %v2029 = vpop.f32.mrf.mxu0
  %v2030 = vadd.f32 %v2002, %v2029
  %2031 = vdwg.mxu0
  %2032 = vmatpush.bf16.msra.mxu0 %v1651
  %2033 = vmatpush.bf16.msra.mxu0 %v1649
  %2034 = vmatpush.bf16.msra.mxu0 %v1647
  %2035 = vmatpush.bf16.msra.mxu0 %v1645
  %2036 = vmatpush.bf16.msra.mxu0 %v1643
  %2037 = vmatpush.bf16.msra.mxu0 %v1641
  %2038 = vmatpush.bf16.msra.mxu0 %v1639
  %2039 = vmatpush.bf16.msra.mxu0 %v1637
  %2040 = vmatmul.bf16.gmra.mxu0 %v245
  %v2041 = vpop.f32.mrf.mxu0
  %v2042 = vpop.f32.mrf.mxu0
  %v2043 = vadd.f32 %v2015, %v2042
  %2044 = vmatmul.bf16.gmra.mxu0 %v251
  %v2045 = vpop.f32.mrf.mxu0
  %v2046 = vadd.f32 %v2018, %v2045
  %v2047 = vpop.f32.mrf.mxu0
  %v2048 = vadd.f32 %v2020, %v2047
  %2049 = vmatmul.bf16.gmra.mxu0 %v257
  %v2050 = vpop.f32.mrf.mxu0
  %v2051 = vadd.f32 %v2023, %v2050
  %v2052 = vpop.f32.mrf.mxu0
  %v2053 = vadd.f32 %v2025, %v2052
  %2054 = vmatmul.bf16.gmra.mxu0 %v263
  %v2055 = vpop.f32.mrf.mxu0
  %v2056 = vadd.f32 %v2028, %v2055
  %v2057 = vpop.f32.mrf.mxu0
  %v2058 = vadd.f32 %v2030, %v2057
  %2059 = vdwg.mxu0
  %2060 = vmatpush.bf16.msra.mxu0 %v1667
  %2061 = vmatpush.bf16.msra.mxu0 %v1665
  %2062 = vmatpush.bf16.msra.mxu0 %v1663
  %2063 = vmatpush.bf16.msra.mxu0 %v1661
  %2064 = vmatpush.bf16.msra.mxu0 %v1659
  %2065 = vmatpush.bf16.msra.mxu0 %v1657
  %2066 = vmatpush.bf16.msra.mxu0 %v1655
  %2067 = vmatpush.bf16.msra.mxu0 %v1653
  %2068 = vmatmul.bf16.gmra.mxu0 %v246
  %v2069 = vpop.f32.mrf.mxu0
  %v2070 = vpop.f32.mrf.mxu0
  %v2071 = vadd.f32 %v2043, %v2070
  %2072 = vmatmul.bf16.gmra.mxu0 %v252
  %v2073 = vpop.f32.mrf.mxu0
  %v2074 = vadd.f32 %v2046, %v2073
  %v2075 = vpop.f32.mrf.mxu0
  %v2076 = vadd.f32 %v2048, %v2075
  %2077 = vmatmul.bf16.gmra.mxu0 %v258
  %v2078 = vpop.f32.mrf.mxu0
  %v2079 = vadd.f32 %v2051, %v2078
  %v2080 = vpop.f32.mrf.mxu0
  %v2081 = vadd.f32 %v2053, %v2080
  %2082 = vmatmul.bf16.gmra.mxu0 %v264
  %v2083 = vpop.f32.mrf.mxu0
  %v2084 = vadd.f32 %v2056, %v2083
  %v2085 = vpop.f32.mrf.mxu0
  %v2086 = vadd.f32 %v2058, %v2085
  %2087 = vdwg.mxu0
  %2088 = vmatpush.bf16.msra.mxu0 %v1683
  %2089 = vmatpush.bf16.msra.mxu0 %v1681
  %2090 = vmatpush.bf16.msra.mxu0 %v1679
  %2091 = vmatpush.bf16.msra.mxu0 %v1677
  %2092 = vmatpush.bf16.msra.mxu0 %v1675
  %2093 = vmatpush.bf16.msra.mxu0 %v1673
  %2094 = vmatpush.bf16.msra.mxu0 %v1671
  %2095 = vmatpush.bf16.msra.mxu0 %v1669
  %2096 = vmatmul.bf16.gmra.mxu0 %v247
  %v2097 = vpop.f32.mrf.mxu0
  %v2098 = vpop.f32.mrf.mxu0
  %v2099 = vadd.f32 %v2071, %v2098
  %2100 = vmatmul.bf16.gmra.mxu0 %v253
  %v2101 = vpop.f32.mrf.mxu0
  %v2102 = vadd.f32 %v2074, %v2101
  %v2103 = vpop.f32.mrf.mxu0
  %v2104 = vadd.f32 %v2076, %v2103
  %2105 = vmatmul.bf16.gmra.mxu0 %v259
  %v2106 = vpop.f32.mrf.mxu0
  %v2107 = vadd.f32 %v2079, %v2106
  %v2108 = vpop.f32.mrf.mxu0
  %v2109 = vadd.f32 %v2081, %v2108
  %2110 = vmatmul.bf16.gmra.mxu0 %v265
  %v2111 = vpop.f32.mrf.mxu0
  %v2112 = vadd.f32 %v2084, %v2111
  %v2113 = vpop.f32.mrf.mxu0
  %v2114 = vadd.f32 %v2086, %v2113
  %2115 = vdwg.mxu0
  %v2212 = vunpack.c.l.b16 %v1107
  %v2213 = vunpack.c.h.b16 %v1107
  %v2214 = vunpack.c.l.b16 %v1108
  %v2215 = vunpack.c.h.b16 %v1108
  %v2216 = vunpack.c.l.b16 %v1109
  %v2217 = vunpack.c.h.b16 %v1109
  %v2218 = vunpack.c.l.b16 %v1110
  %v2219 = vunpack.c.h.b16 %v1110
  %v2220 = vunpack.c.l.b16 %v1111
  %v2221 = vunpack.c.h.b16 %v1111
  %v2222 = vunpack.c.l.b16 %v1112
  %v2223 = vunpack.c.h.b16 %v1112
  %v2224 = vunpack.c.l.b16 %v1113
  %v2225 = vunpack.c.h.b16 %v1113
  %v2226 = vunpack.c.l.b16 %v1114
  %v2227 = vunpack.c.h.b16 %v1114
  %v2228 = vunpack.c.l.b16 %v1115
  %v2229 = vunpack.c.h.b16 %v1115
  %v2230 = vunpack.c.l.b16 %v1116
  %v2231 = vunpack.c.h.b16 %v1116
  %v2232 = vunpack.c.l.b16 %v1117
  %v2233 = vunpack.c.h.b16 %v1117
  %v2234 = vunpack.c.l.b16 %v1118
  %v2235 = vunpack.c.h.b16 %v1118
  %v2236 = vunpack.c.l.b16 %v1119
  %v2237 = vunpack.c.h.b16 %v1119
  %v2238 = vunpack.c.l.b16 %v1120
  %v2239 = vunpack.c.h.b16 %v1120
  %v2240 = vunpack.c.l.b16 %v1121
  %v2241 = vunpack.c.h.b16 %v1121
  %v2242 = vunpack.c.l.b16 %v1122
  %v2243 = vunpack.c.h.b16 %v1122
  %v2244 = vunpack.c.l.b16 %v1123
  %v2245 = vunpack.c.h.b16 %v1123
  %v2246 = vunpack.c.l.b16 %v1124
  %v2247 = vunpack.c.h.b16 %v1124
  %v2248 = vunpack.c.l.b16 %v1125
  %v2249 = vunpack.c.h.b16 %v1125
  %v2250 = vunpack.c.l.b16 %v1126
  %v2251 = vunpack.c.h.b16 %v1126
  %v2252 = vunpack.c.l.b16 %v1127
  %v2253 = vunpack.c.h.b16 %v1127
  %v2254 = vunpack.c.l.b16 %v1128
  %v2255 = vunpack.c.h.b16 %v1128
  %v2256 = vunpack.c.l.b16 %v1129
  %v2257 = vunpack.c.h.b16 %v1129
  %v2258 = vunpack.c.l.b16 %v1130
  %v2259 = vunpack.c.h.b16 %v1130
  %v2260 = vunpack.c.l.b16 %v1131
  %v2261 = vunpack.c.h.b16 %v1131
  %v2262 = vunpack.c.l.b16 %v1132
  %v2263 = vunpack.c.h.b16 %v1132
  %v2264 = vunpack.c.l.b16 %v1133
  %v2265 = vunpack.c.h.b16 %v1133
  %v2266 = vunpack.c.l.b16 %v1134
  %v2267 = vunpack.c.h.b16 %v1134
  %v2268 = vunpack.c.l.b16 %v1135
  %v2269 = vunpack.c.h.b16 %v1135
  %v2270 = vunpack.c.l.b16 %v1136
  %v2271 = vunpack.c.h.b16 %v1136
  %v2272 = vunpack.c.l.b16 %v1137
  %v2273 = vunpack.c.h.b16 %v1137
  %v2274 = vunpack.c.l.b16 %v1138
  %v2275 = vunpack.c.h.b16 %v1138
  %v2276 = vunpack.c.l.b16 %v1139
  %v2277 = vunpack.c.h.b16 %v1139
  %v2278 = vunpack.c.l.b16 %v1140
  %v2279 = vunpack.c.h.b16 %v1140
  %v2280 = vunpack.c.l.b16 %v1141
  %v2281 = vunpack.c.h.b16 %v1141
  %v2282 = vunpack.c.l.b16 %v1142
  %v2283 = vunpack.c.h.b16 %v1142
  %v2284 = vunpack.c.l.b16 %v1143
  %v2285 = vunpack.c.h.b16 %v1143
  %v2286 = vunpack.c.l.b16 %v1144
  %v2287 = vunpack.c.h.b16 %v1144
  %v2288 = vunpack.c.l.b16 %v1145
  %v2289 = vunpack.c.h.b16 %v1145
  %v2290 = vunpack.c.l.b16 %v1146
  %v2291 = vunpack.c.h.b16 %v1146
  %v2292 = vunpack.c.l.b16 %v1147
  %v2293 = vunpack.c.h.b16 %v1147
  %v2294 = vunpack.c.l.b16 %v1148
  %v2295 = vunpack.c.h.b16 %v1148
  %v2296 = vunpack.c.l.b16 %v1149
  %v2297 = vunpack.c.h.b16 %v1149
  %v2298 = vunpack.c.l.b16 %v1150
  %v2299 = vunpack.c.h.b16 %v1150
  %v2300 = vunpack.c.l.b16 %v1151
  %v2301 = vunpack.c.h.b16 %v1151
  %v2302 = vunpack.c.l.b16 %v1152
  %v2303 = vunpack.c.h.b16 %v1152
  %v2304 = vunpack.c.l.b16 %v1153
  %v2305 = vunpack.c.h.b16 %v1153
  %v2306 = vunpack.c.l.b16 %v1154
  %v2307 = vunpack.c.h.b16 %v1154
  %v2308 = vunpack.c.l.b16 %v1155
  %v2309 = vunpack.c.h.b16 %v1155
  %v2310 = vunpack.c.l.b16 %v1156
  %v2311 = vunpack.c.h.b16 %v1156
  %v2312 = vunpack.c.l.b16 %v1157
  %v2313 = vunpack.c.h.b16 %v1157
  %v2314 = vunpack.c.l.b16 %v1158
  %v2315 = vunpack.c.h.b16 %v1158
  %v2316 = vunpack.c.l.b16 %v1159
  %v2317 = vunpack.c.h.b16 %v1159
  %v2318 = vunpack.c.l.b16 %v1160
  %v2319 = vunpack.c.h.b16 %v1160
  %v2320 = vunpack.c.l.b16 %v1161
  %v2321 = vunpack.c.h.b16 %v1161
  %v2322 = vunpack.c.l.b16 %v1162
  %v2323 = vunpack.c.h.b16 %v1162
  %v2324 = vunpack.c.l.b16 %v1163
  %v2325 = vunpack.c.h.b16 %v1163
  %v2326 = vunpack.c.l.b16 %v1164
  %v2327 = vunpack.c.h.b16 %v1164
  %v2328 = vunpack.c.l.b16 %v1165
  %v2329 = vunpack.c.h.b16 %v1165
  %v2330 = vunpack.c.l.b16 %v1166
  %v2331 = vunpack.c.h.b16 %v1166
  %v2332 = vunpack.c.l.b16 %v1167
  %v2333 = vunpack.c.h.b16 %v1167
  %v2334 = vunpack.c.l.b16 %v1168
  %v2335 = vunpack.c.h.b16 %v1168
  %v2336 = vunpack.c.l.b16 %v1169
  %v2337 = vunpack.c.h.b16 %v1169
  %v2338 = vunpack.c.l.b16 %v1170
  %v2339 = vunpack.c.h.b16 %v1170
  %v2340 = vunpack.c.l.b16 %v1171
  %v2341 = vunpack.c.h.b16 %v1171
  %v2342 = vunpack.c.l.b16 %v1172
  %v2343 = vunpack.c.h.b16 %v1172
  %v2344 = vunpack.c.l.b16 %v1173
  %v2345 = vunpack.c.h.b16 %v1173
  %v2346 = vunpack.c.l.b16 %v1174
  %v2347 = vunpack.c.h.b16 %v1174
  %v2348 = vunpack.c.l.b16 %v1175
  %v2349 = vunpack.c.h.b16 %v1175
  %v2350 = vunpack.c.l.b16 %v1176
  %v2351 = vunpack.c.h.b16 %v1176
  %v2352 = vunpack.c.l.b16 %v1177
  %v2353 = vunpack.c.h.b16 %v1177
  %v2354 = vunpack.c.l.b16 %v1178
  %v2355 = vunpack.c.h.b16 %v1178
  %v2356 = vunpack.c.l.b16 %v1179
  %v2357 = vunpack.c.h.b16 %v1179
  %v2358 = vunpack.c.l.b16 %v1180
  %v2359 = vunpack.c.h.b16 %v1180
  %v2360 = vunpack.c.l.b16 %v1181
  %v2361 = vunpack.c.h.b16 %v1181
  %v2362 = vunpack.c.l.b16 %v1182
  %v2363 = vunpack.c.h.b16 %v1182
  %v2364 = vunpack.c.l.b16 %v1183
  %v2365 = vunpack.c.h.b16 %v1183
  %v2366 = vunpack.c.l.b16 %v1184
  %v2367 = vunpack.c.h.b16 %v1184
  %v2368 = vunpack.c.l.b16 %v1185
  %v2369 = vunpack.c.h.b16 %v1185
  %v2370 = vunpack.c.l.b16 %v1186
  %v2371 = vunpack.c.h.b16 %v1186
  %v2372 = vunpack.c.l.b16 %v1187
  %v2373 = vunpack.c.h.b16 %v1187
  %v2374 = vunpack.c.l.b16 %v1188
  %v2375 = vunpack.c.h.b16 %v1188
  %v2376 = vunpack.c.l.b16 %v1189
  %v2377 = vunpack.c.h.b16 %v1189
  %v2378 = vunpack.c.l.b16 %v1190
  %v2379 = vunpack.c.h.b16 %v1190
  %v2380 = vunpack.c.l.b16 %v1191
  %v2381 = vunpack.c.h.b16 %v1191
  %v2382 = vunpack.c.l.b16 %v1192
  %v2383 = vunpack.c.h.b16 %v1192
  %v2384 = vunpack.c.l.b16 %v1193
  %v2385 = vunpack.c.h.b16 %v1193
  %v2386 = vunpack.c.l.b16 %v1194
  %v2387 = vunpack.c.h.b16 %v1194
  %v2388 = vunpack.c.l.b16 %v1195
  %v2389 = vunpack.c.h.b16 %v1195
  %v2390 = vunpack.c.l.b16 %v1196
  %v2391 = vunpack.c.h.b16 %v1196
  %v2392 = vunpack.c.l.b16 %v1197
  %v2393 = vunpack.c.h.b16 %v1197
  %v2394 = vunpack.c.l.b16 %v1198
  %v2395 = vunpack.c.h.b16 %v1198
  %v2396 = vunpack.c.l.b16 %v1199
  %v2397 = vunpack.c.h.b16 %v1199
  %v2398 = vunpack.c.l.b16 %v1200
  %v2399 = vunpack.c.h.b16 %v1200
  %v2400 = vunpack.c.l.b16 %v1201
  %v2401 = vunpack.c.h.b16 %v1201
  %v2402 = vunpack.c.l.b16 %v1202
  %v2403 = vunpack.c.h.b16 %v1202
  %v2404 = vpack.c.b16 %v2214, %v2212
  %v2405 = vpack.c.b16 %v2215, %v2213
  %v2406 = vpack.c.b16 %v2218, %v2216
  %v2407 = vpack.c.b16 %v2219, %v2217
  %v2408 = vpack.c.b16 %v2222, %v2220
  %v2409 = vpack.c.b16 %v2223, %v2221
  %v2410 = vpack.c.b16 %v2226, %v2224
  %v2411 = vpack.c.b16 %v2227, %v2225
  %v2412 = vpack.c.b16 %v2230, %v2228
  %v2413 = vpack.c.b16 %v2231, %v2229
  %v2414 = vpack.c.b16 %v2234, %v2232
  %v2415 = vpack.c.b16 %v2235, %v2233
  %v2416 = vpack.c.b16 %v2238, %v2236
  %v2417 = vpack.c.b16 %v2239, %v2237
  %v2418 = vpack.c.b16 %v2242, %v2240
  %v2419 = vpack.c.b16 %v2243, %v2241
  %v2420 = vpack.c.b16 %v2246, %v2244
  %v2421 = vpack.c.b16 %v2247, %v2245
  %v2422 = vpack.c.b16 %v2250, %v2248
  %v2423 = vpack.c.b16 %v2251, %v2249
  %v2424 = vpack.c.b16 %v2254, %v2252
  %v2425 = vpack.c.b16 %v2255, %v2253
  %v2426 = vpack.c.b16 %v2258, %v2256
  %v2427 = vpack.c.b16 %v2259, %v2257
  %v2428 = vpack.c.b16 %v2262, %v2260
  %v2429 = vpack.c.b16 %v2263, %v2261
  %v2430 = vpack.c.b16 %v2266, %v2264
  %v2431 = vpack.c.b16 %v2267, %v2265
  %v2432 = vpack.c.b16 %v2270, %v2268
  %v2433 = vpack.c.b16 %v2271, %v2269
  %v2434 = vpack.c.b16 %v2274, %v2272
  %v2435 = vpack.c.b16 %v2275, %v2273
  %v2436 = vpack.c.b16 %v2278, %v2276
  %v2437 = vpack.c.b16 %v2279, %v2277
  %v2438 = vpack.c.b16 %v2282, %v2280
  %v2439 = vpack.c.b16 %v2283, %v2281
  %v2440 = vpack.c.b16 %v2286, %v2284
  %v2441 = vpack.c.b16 %v2287, %v2285
  %v2442 = vpack.c.b16 %v2290, %v2288
  %v2443 = vpack.c.b16 %v2291, %v2289
  %v2444 = vpack.c.b16 %v2294, %v2292
  %v2445 = vpack.c.b16 %v2295, %v2293
  %v2446 = vpack.c.b16 %v2298, %v2296
  %v2447 = vpack.c.b16 %v2299, %v2297
  %v2448 = vpack.c.b16 %v2302, %v2300
  %v2449 = vpack.c.b16 %v2303, %v2301
  %v2450 = vpack.c.b16 %v2306, %v2304
  %v2451 = vpack.c.b16 %v2307, %v2305
  %v2452 = vpack.c.b16 %v2310, %v2308
  %v2453 = vpack.c.b16 %v2311, %v2309
  %v2454 = vpack.c.b16 %v2314, %v2312
  %v2455 = vpack.c.b16 %v2315, %v2313
  %v2456 = vpack.c.b16 %v2318, %v2316
  %v2457 = vpack.c.b16 %v2319, %v2317
  %v2458 = vpack.c.b16 %v2322, %v2320
  %v2459 = vpack.c.b16 %v2323, %v2321
  %v2460 = vpack.c.b16 %v2326, %v2324
  %v2461 = vpack.c.b16 %v2327, %v2325
  %v2462 = vpack.c.b16 %v2330, %v2328
  %v2463 = vpack.c.b16 %v2331, %v2329
  %v2464 = vpack.c.b16 %v2334, %v2332
  %v2465 = vpack.c.b16 %v2335, %v2333
  %v2466 = vpack.c.b16 %v2338, %v2336
  %v2467 = vpack.c.b16 %v2339, %v2337
  %v2468 = vpack.c.b16 %v2342, %v2340
  %v2469 = vpack.c.b16 %v2343, %v2341
  %v2470 = vpack.c.b16 %v2346, %v2344
  %v2471 = vpack.c.b16 %v2347, %v2345
  %v2472 = vpack.c.b16 %v2350, %v2348
  %v2473 = vpack.c.b16 %v2351, %v2349
  %v2474 = vpack.c.b16 %v2354, %v2352
  %v2475 = vpack.c.b16 %v2355, %v2353
  %v2476 = vpack.c.b16 %v2358, %v2356
  %v2477 = vpack.c.b16 %v2359, %v2357
  %v2478 = vpack.c.b16 %v2362, %v2360
  %v2479 = vpack.c.b16 %v2363, %v2361
  %v2480 = vpack.c.b16 %v2366, %v2364
  %v2481 = vpack.c.b16 %v2367, %v2365
  %v2482 = vpack.c.b16 %v2370, %v2368
  %v2483 = vpack.c.b16 %v2371, %v2369
  %v2484 = vpack.c.b16 %v2374, %v2372
  %v2485 = vpack.c.b16 %v2375, %v2373
  %v2486 = vpack.c.b16 %v2378, %v2376
  %v2487 = vpack.c.b16 %v2379, %v2377
  %v2488 = vpack.c.b16 %v2382, %v2380
  %v2489 = vpack.c.b16 %v2383, %v2381
  %v2490 = vpack.c.b16 %v2386, %v2384
  %v2491 = vpack.c.b16 %v2387, %v2385
  %v2492 = vpack.c.b16 %v2390, %v2388
  %v2493 = vpack.c.b16 %v2391, %v2389
  %v2494 = vpack.c.b16 %v2394, %v2392
  %v2495 = vpack.c.b16 %v2395, %v2393
  %v2496 = vpack.c.b16 %v2398, %v2396
  %v2497 = vpack.c.b16 %v2399, %v2397
  %v2498 = vpack.c.b16 %v2402, %v2400
  %v2499 = vpack.c.b16 %v2403, %v2401
  %2596 = vmatpush.bf16.msra.mxu0 %v2418
  %2597 = vmatpush.bf16.msra.mxu0 %v2416
  %2598 = vmatpush.bf16.msra.mxu0 %v2414
  %2599 = vmatpush.bf16.msra.mxu0 %v2412
  %2600 = vmatpush.bf16.msra.mxu0 %v2410
  %2601 = vmatpush.bf16.msra.mxu0 %v2408
  %2602 = vmatpush.bf16.msra.mxu0 %v2406
  %2603 = vmatpush.bf16.msra.mxu0 %v2404
  %2604 = vmatmul.bf16.gmra.mxu0 %v242
  %v2605 = vpop.f32.mrf.mxu0
  %v2606 = vadd.f32 0.0, %v2605
  %v2607 = vpop.f32.mrf.mxu0
  %v2608 = vadd.f32 %v920, %v2607
  %2609 = vmatmul.bf16.gmra.mxu0 %v248
  %v2610 = vpop.f32.mrf.mxu0
  %v2611 = vadd.f32 %v922, %v2610
  %v2612 = vpop.f32.mrf.mxu0
  %v2613 = vadd.f32 %v925, %v2612
  %2614 = vmatmul.bf16.gmra.mxu0 %v254
  %v2615 = vpop.f32.mrf.mxu0
  %v2616 = vadd.f32 %v927, %v2615
  %v2617 = vpop.f32.mrf.mxu0
  %v2618 = vadd.f32 %v930, %v2617
  %2619 = vmatmul.bf16.gmra.mxu0 %v260
  %v2620 = vpop.f32.mrf.mxu0
  %v2621 = vadd.f32 %v932, %v2620
  %v2622 = vpop.f32.mrf.mxu0
  %v2623 = vadd.f32 %v935, %v2622
  %2624 = vdwg.mxu0
  %2625 = vmatpush.bf16.msra.mxu0 %v2434
  %2626 = vmatpush.bf16.msra.mxu0 %v2432
  %2627 = vmatpush.bf16.msra.mxu0 %v2430
  %2628 = vmatpush.bf16.msra.mxu0 %v2428
  %2629 = vmatpush.bf16.msra.mxu0 %v2426
  %2630 = vmatpush.bf16.msra.mxu0 %v2424
  %2631 = vmatpush.bf16.msra.mxu0 %v2422
  %2632 = vmatpush.bf16.msra.mxu0 %v2420
  %2633 = vmatmul.bf16.gmra.mxu0 %v243
  %v2634 = vpop.f32.mrf.mxu0
  %v2635 = vadd.f32 %v2606, %v2634
  %v2636 = vpop.f32.mrf.mxu0
  %v2637 = vadd.f32 %v2608, %v2636
  %2638 = vmatmul.bf16.gmra.mxu0 %v249
  %v2639 = vpop.f32.mrf.mxu0
  %v2640 = vadd.f32 %v2611, %v2639
  %v2641 = vpop.f32.mrf.mxu0
  %v2642 = vadd.f32 %v2613, %v2641
  %2643 = vmatmul.bf16.gmra.mxu0 %v255
  %v2644 = vpop.f32.mrf.mxu0
  %v2645 = vadd.f32 %v2616, %v2644
  %v2646 = vpop.f32.mrf.mxu0
  %v2647 = vadd.f32 %v2618, %v2646
  %2648 = vmatmul.bf16.gmra.mxu0 %v261
  %v2649 = vpop.f32.mrf.mxu0
  %v2650 = vadd.f32 %v2621, %v2649
  %v2651 = vpop.f32.mrf.mxu0
  %v2652 = vadd.f32 %v2623, %v2651
  %2653 = vdwg.mxu0
  %2654 = vmatpush.bf16.msra.mxu0 %v2450
  %2655 = vmatpush.bf16.msra.mxu0 %v2448
  %2656 = vmatpush.bf16.msra.mxu0 %v2446
  %2657 = vmatpush.bf16.msra.mxu0 %v2444
  %2658 = vmatpush.bf16.msra.mxu0 %v2442
  %2659 = vmatpush.bf16.msra.mxu0 %v2440
  %2660 = vmatpush.bf16.msra.mxu0 %v2438
  %2661 = vmatpush.bf16.msra.mxu0 %v2436
  %2662 = vmatmul.bf16.gmra.mxu0 %v244
  %v2663 = vpop.f32.mrf.mxu0
  %v2664 = vadd.f32 %v2635, %v2663
  %v2665 = vpop.f32.mrf.mxu0
  %v2666 = vadd.f32 %v2637, %v2665
  %2667 = vmatmul.bf16.gmra.mxu0 %v250
  %v2668 = vpop.f32.mrf.mxu0
  %v2669 = vadd.f32 %v2640, %v2668
  %v2670 = vpop.f32.mrf.mxu0
  %v2671 = vadd.f32 %v2642, %v2670
  %2672 = vmatmul.bf16.gmra.mxu0 %v256
  %v2673 = vpop.f32.mrf.mxu0
  %v2674 = vadd.f32 %v2645, %v2673
  %v2675 = vpop.f32.mrf.mxu0
  %v2676 = vadd.f32 %v2647, %v2675
  %2677 = vmatmul.bf16.gmra.mxu0 %v262
  %v2678 = vpop.f32.mrf.mxu0
  %v2679 = vadd.f32 %v2650, %v2678
  %v2680 = vpop.f32.mrf.mxu0
  %v2681 = vadd.f32 %v2652, %v2680
  %2682 = vdwg.mxu0
  %2683 = vmatpush.bf16.msra.mxu0 %v2466
  %2684 = vmatpush.bf16.msra.mxu0 %v2464
  %2685 = vmatpush.bf16.msra.mxu0 %v2462
  %2686 = vmatpush.bf16.msra.mxu0 %v2460
  %2687 = vmatpush.bf16.msra.mxu0 %v2458
  %2688 = vmatpush.bf16.msra.mxu0 %v2456
  %2689 = vmatpush.bf16.msra.mxu0 %v2454
  %2690 = vmatpush.bf16.msra.mxu0 %v2452
  %2691 = vmatmul.bf16.gmra.mxu0 %v245
  %v2692 = vpop.f32.mrf.mxu0
  %v2693 = vadd.f32 %v2664, %v2692
  %v2694 = vpop.f32.mrf.mxu0
  %v2695 = vadd.f32 %v2666, %v2694
  %2696 = vmatmul.bf16.gmra.mxu0 %v251
  %v2697 = vpop.f32.mrf.mxu0
  %v2698 = vadd.f32 %v2669, %v2697
  %v2699 = vpop.f32.mrf.mxu0
  %v2700 = vadd.f32 %v2671, %v2699
  %2701 = vmatmul.bf16.gmra.mxu0 %v257
  %v2702 = vpop.f32.mrf.mxu0
  %v2703 = vadd.f32 %v2674, %v2702
  %v2704 = vpop.f32.mrf.mxu0
  %v2705 = vadd.f32 %v2676, %v2704
  %2706 = vmatmul.bf16.gmra.mxu0 %v263
  %v2707 = vpop.f32.mrf.mxu0
  %v2708 = vadd.f32 %v2679, %v2707
  %v2709 = vpop.f32.mrf.mxu0
  %v2710 = vadd.f32 %v2681, %v2709
  %2711 = vdwg.mxu0
  %2712 = vmatpush.bf16.msra.mxu0 %v2482
  %2713 = vmatpush.bf16.msra.mxu0 %v2480
  %2714 = vmatpush.bf16.msra.mxu0 %v2478
  %2715 = vmatpush.bf16.msra.mxu0 %v2476
  %2716 = vmatpush.bf16.msra.mxu0 %v2474
  %2717 = vmatpush.bf16.msra.mxu0 %v2472
  %2718 = vmatpush.bf16.msra.mxu0 %v2470
  %2719 = vmatpush.bf16.msra.mxu0 %v2468
  %2720 = vmatmul.bf16.gmra.mxu0 %v246
  %v2721 = vpop.f32.mrf.mxu0
  %v2722 = vadd.f32 %v2693, %v2721
  %v2723 = vpop.f32.mrf.mxu0
  %v2724 = vadd.f32 %v2695, %v2723
  %2725 = vmatmul.bf16.gmra.mxu0 %v252
  %v2726 = vpop.f32.mrf.mxu0
  %v2727 = vadd.f32 %v2698, %v2726
  %v2728 = vpop.f32.mrf.mxu0
  %v2729 = vadd.f32 %v2700, %v2728
  %2730 = vmatmul.bf16.gmra.mxu0 %v258
  %v2731 = vpop.f32.mrf.mxu0
  %v2732 = vadd.f32 %v2703, %v2731
  %v2733 = vpop.f32.mrf.mxu0
  %v2734 = vadd.f32 %v2705, %v2733
  %2735 = vmatmul.bf16.gmra.mxu0 %v264
  %v2736 = vpop.f32.mrf.mxu0
  %v2737 = vadd.f32 %v2708, %v2736
  %v2738 = vpop.f32.mrf.mxu0
  %v2739 = vadd.f32 %v2710, %v2738
  %2740 = vdwg.mxu0
  %2741 = vmatpush.bf16.msra.mxu0 %v2498
  %2742 = vmatpush.bf16.msra.mxu0 %v2496
  %2743 = vmatpush.bf16.msra.mxu0 %v2494
  %2744 = vmatpush.bf16.msra.mxu0 %v2492
  %2745 = vmatpush.bf16.msra.mxu0 %v2490
  %2746 = vmatpush.bf16.msra.mxu0 %v2488
  %2747 = vmatpush.bf16.msra.mxu0 %v2486
  %2748 = vmatpush.bf16.msra.mxu0 %v2484
  %2749 = vmatmul.bf16.gmra.mxu0 %v247
  %v2750 = vpop.f32.mrf.mxu0
  %v2751 = vadd.f32 %v2722, %v2750
  %v2752 = vpop.f32.mrf.mxu0
  %v2753 = vadd.f32 %v2724, %v2752
  %2754 = vmatmul.bf16.gmra.mxu0 %v253
  %v2755 = vpop.f32.mrf.mxu0
  %v2756 = vadd.f32 %v2727, %v2755
  %v2757 = vpop.f32.mrf.mxu0
  %v2758 = vadd.f32 %v2729, %v2757
  %2759 = vmatmul.bf16.gmra.mxu0 %v259
  %v2760 = vpop.f32.mrf.mxu0
  %v2761 = vadd.f32 %v2732, %v2760
  %v2762 = vpop.f32.mrf.mxu0
  %v2763 = vadd.f32 %v2734, %v2762
  %2764 = vmatmul.bf16.gmra.mxu0 %v265
  %v2765 = vpop.f32.mrf.mxu0
  %v2766 = vadd.f32 %v2737, %v2765
  %v2767 = vpop.f32.mrf.mxu0
  %v2768 = vadd.f32 %v2739, %v2767
  %2769 = vdwg.mxu0
  %2770 = vmatpush.bf16.msra.mxu0 %v2419
  %2771 = vmatpush.bf16.msra.mxu0 %v2417
  %2772 = vmatpush.bf16.msra.mxu0 %v2415
  %2773 = vmatpush.bf16.msra.mxu0 %v2413
  %2774 = vmatpush.bf16.msra.mxu0 %v2411
  %2775 = vmatpush.bf16.msra.mxu0 %v2409
  %2776 = vmatpush.bf16.msra.mxu0 %v2407
  %2777 = vmatpush.bf16.msra.mxu0 %v2405
  %2778 = vmatmul.bf16.gmra.mxu0 %v242
  %v2779 = vpop.f32.mrf.mxu0
  %v2780 = vadd.f32 0.0, %v2779
  %v2781 = vpop.f32.mrf.mxu0
  %v2782 = vadd.f32 %v1088, %v2781
  %2783 = vmatmul.bf16.gmra.mxu0 %v248
  %v2784 = vpop.f32.mrf.mxu0
  %v2785 = vadd.f32 %v1090, %v2784
  %v2786 = vpop.f32.mrf.mxu0
  %v2787 = vadd.f32 %v1093, %v2786
  %2788 = vmatmul.bf16.gmra.mxu0 %v254
  %v2789 = vpop.f32.mrf.mxu0
  %v2790 = vadd.f32 %v1095, %v2789
  %v2791 = vpop.f32.mrf.mxu0
  %v2792 = vadd.f32 %v1098, %v2791
  %2793 = vmatmul.bf16.gmra.mxu0 %v260
  %v2794 = vpop.f32.mrf.mxu0
  %v2795 = vadd.f32 %v1100, %v2794
  %v2796 = vpop.f32.mrf.mxu0
  %v2797 = vadd.f32 %v1103, %v2796
  %2798 = vdwg.mxu0
  %2799 = vmatpush.bf16.msra.mxu0 %v2435
  %2800 = vmatpush.bf16.msra.mxu0 %v2433
  %2801 = vmatpush.bf16.msra.mxu0 %v2431
  %2802 = vmatpush.bf16.msra.mxu0 %v2429
  %2803 = vmatpush.bf16.msra.mxu0 %v2427
  %2804 = vmatpush.bf16.msra.mxu0 %v2425
  %2805 = vmatpush.bf16.msra.mxu0 %v2423
  %2806 = vmatpush.bf16.msra.mxu0 %v2421
  %2807 = vmatmul.bf16.gmra.mxu0 %v243
  %v2808 = vpop.f32.mrf.mxu0
  %v2809 = vadd.f32 %v2780, %v2808
  %v2810 = vpop.f32.mrf.mxu0
  %v2811 = vadd.f32 %v2782, %v2810
  %2812 = vmatmul.bf16.gmra.mxu0 %v249
  %v2813 = vpop.f32.mrf.mxu0
  %v2814 = vadd.f32 %v2785, %v2813
  %v2815 = vpop.f32.mrf.mxu0
  %v2816 = vadd.f32 %v2787, %v2815
  %2817 = vmatmul.bf16.gmra.mxu0 %v255
  %v2818 = vpop.f32.mrf.mxu0
  %v2819 = vadd.f32 %v2790, %v2818
  %v2820 = vpop.f32.mrf.mxu0
  %v2821 = vadd.f32 %v2792, %v2820
  %2822 = vmatmul.bf16.gmra.mxu0 %v261
  %v2823 = vpop.f32.mrf.mxu0
  %v2824 = vadd.f32 %v2795, %v2823
  %v2825 = vpop.f32.mrf.mxu0
  %v2826 = vadd.f32 %v2797, %v2825
  %2827 = vdwg.mxu0
  %2828 = vmatpush.bf16.msra.mxu0 %v2451
  %2829 = vmatpush.bf16.msra.mxu0 %v2449
  %2830 = vmatpush.bf16.msra.mxu0 %v2447
  %2831 = vmatpush.bf16.msra.mxu0 %v2445
  %2832 = vmatpush.bf16.msra.mxu0 %v2443
  %2833 = vmatpush.bf16.msra.mxu0 %v2441
  %2834 = vmatpush.bf16.msra.mxu0 %v2439
  %2835 = vmatpush.bf16.msra.mxu0 %v2437
  %2836 = vmatmul.bf16.gmra.mxu0 %v244
  %v2837 = vpop.f32.mrf.mxu0
  %v2838 = vadd.f32 %v2809, %v2837
  %v2839 = vpop.f32.mrf.mxu0
  %v2840 = vadd.f32 %v2811, %v2839
  %2841 = vmatmul.bf16.gmra.mxu0 %v250
  %v2842 = vpop.f32.mrf.mxu0
  %v2843 = vadd.f32 %v2814, %v2842
  %v2844 = vpop.f32.mrf.mxu0
  %v2845 = vadd.f32 %v2816, %v2844
  %2846 = vmatmul.bf16.gmra.mxu0 %v256
  %v2847 = vpop.f32.mrf.mxu0
  %v2848 = vadd.f32 %v2819, %v2847
  %v2849 = vpop.f32.mrf.mxu0
  %v2850 = vadd.f32 %v2821, %v2849
  %2851 = vmatmul.bf16.gmra.mxu0 %v262
  %v2852 = vpop.f32.mrf.mxu0
  %v2853 = vadd.f32 %v2824, %v2852
  %v2854 = vpop.f32.mrf.mxu0
  %v2855 = vadd.f32 %v2826, %v2854
  %2856 = vdwg.mxu0
  %2857 = vmatpush.bf16.msra.mxu0 %v2467
  %2858 = vmatpush.bf16.msra.mxu0 %v2465
  %2859 = vmatpush.bf16.msra.mxu0 %v2463
  %2860 = vmatpush.bf16.msra.mxu0 %v2461
  %2861 = vmatpush.bf16.msra.mxu0 %v2459
  %2862 = vmatpush.bf16.msra.mxu0 %v2457
  %2863 = vmatpush.bf16.msra.mxu0 %v2455
  %2864 = vmatpush.bf16.msra.mxu0 %v2453
  %2865 = vmatmul.bf16.gmra.mxu0 %v245
  %v2866 = vpop.f32.mrf.mxu0
  %v2867 = vadd.f32 %v2838, %v2866
  %v2868 = vpop.f32.mrf.mxu0
  %v2869 = vadd.f32 %v2840, %v2868
  %2870 = vmatmul.bf16.gmra.mxu0 %v251
  %v2871 = vpop.f32.mrf.mxu0
  %v2872 = vadd.f32 %v2843, %v2871
  %v2873 = vpop.f32.mrf.mxu0
  %v2874 = vadd.f32 %v2845, %v2873
  %2875 = vmatmul.bf16.gmra.mxu0 %v257
  %v2876 = vpop.f32.mrf.mxu0
  %v2877 = vadd.f32 %v2848, %v2876
  %v2878 = vpop.f32.mrf.mxu0
  %v2879 = vadd.f32 %v2850, %v2878
  %2880 = vmatmul.bf16.gmra.mxu0 %v263
  %v2881 = vpop.f32.mrf.mxu0
  %v2882 = vadd.f32 %v2853, %v2881
  %v2883 = vpop.f32.mrf.mxu0
  %v2884 = vadd.f32 %v2855, %v2883
  %2885 = vdwg.mxu0
  %2886 = vmatpush.bf16.msra.mxu0 %v2483
  %2887 = vmatpush.bf16.msra.mxu0 %v2481
  %2888 = vmatpush.bf16.msra.mxu0 %v2479
  %2889 = vmatpush.bf16.msra.mxu0 %v2477
  %2890 = vmatpush.bf16.msra.mxu0 %v2475
  %2891 = vmatpush.bf16.msra.mxu0 %v2473
  %2892 = vmatpush.bf16.msra.mxu0 %v2471
  %2893 = vmatpush.bf16.msra.mxu0 %v2469
  %2894 = vmatmul.bf16.gmra.mxu0 %v246
  %v2895 = vpop.f32.mrf.mxu0
  %v2896 = vadd.f32 %v2867, %v2895
  %v2897 = vpop.f32.mrf.mxu0
  %v2898 = vadd.f32 %v2869, %v2897
  %2899 = vmatmul.bf16.gmra.mxu0 %v252
  %v2900 = vpop.f32.mrf.mxu0
  %v2901 = vadd.f32 %v2872, %v2900
  %v2902 = vpop.f32.mrf.mxu0
  %v2903 = vadd.f32 %v2874, %v2902
  %2904 = vmatmul.bf16.gmra.mxu0 %v258
  %v2905 = vpop.f32.mrf.mxu0
  %v2906 = vadd.f32 %v2877, %v2905
  %v2907 = vpop.f32.mrf.mxu0
  %v2908 = vadd.f32 %v2879, %v2907
  %2909 = vmatmul.bf16.gmra.mxu0 %v264
  %v2910 = vpop.f32.mrf.mxu0
  %v2911 = vadd.f32 %v2882, %v2910
  %v2912 = vpop.f32.mrf.mxu0
  %v2913 = vadd.f32 %v2884, %v2912
  %2914 = vdwg.mxu0
  %2915 = vmatpush.bf16.msra.mxu0 %v2499
  %2916 = vmatpush.bf16.msra.mxu0 %v2497
  %2917 = vmatpush.bf16.msra.mxu0 %v2495
  %2918 = vmatpush.bf16.msra.mxu0 %v2493
  %2919 = vmatpush.bf16.msra.mxu0 %v2491
  %2920 = vmatpush.bf16.msra.mxu0 %v2489
  %2921 = vmatpush.bf16.msra.mxu0 %v2487
  %2922 = vmatpush.bf16.msra.mxu0 %v2485
  %2923 = vmatmul.bf16.gmra.mxu0 %v247
  %v2924 = vpop.f32.mrf.mxu0
  %v2925 = vadd.f32 %v2896, %v2924
  %v2926 = vpop.f32.mrf.mxu0
  %v2927 = vadd.f32 %v2898, %v2926
  %2928 = vmatmul.bf16.gmra.mxu0 %v253
  %v2929 = vpop.f32.mrf.mxu0
  %v2930 = vadd.f32 %v2901, %v2929
  %v2931 = vpop.f32.mrf.mxu0
  %v2932 = vadd.f32 %v2903, %v2931
  %2933 = vmatmul.bf16.gmra.mxu0 %v259
  %v2934 = vpop.f32.mrf.mxu0
  %v2935 = vadd.f32 %v2906, %v2934
  %v2936 = vpop.f32.mrf.mxu0
  %v2937 = vadd.f32 %v2908, %v2936
  %2938 = vmatmul.bf16.gmra.mxu0 %v265
  %v2939 = vpop.f32.mrf.mxu0
  %v2940 = vadd.f32 %v2911, %v2939
  %v2941 = vpop.f32.mrf.mxu0
  %v2942 = vadd.f32 %v2913, %v2941
  %2943 = vdwg.mxu0
  %v2944 = vadd.f32 %v2751, %v1931
  %v2945 = vadd.f32 %v2925, %v2099
  %v2946 = vadd.f32 %v2753, %v1934
  %v2947 = vadd.f32 %v2927, %v2102
  %v2948 = vadd.f32 %v2756, %v1936
  %v2949 = vadd.f32 %v2930, %v2104
  %v2950 = vadd.f32 %v2758, %v1939
  %v2951 = vadd.f32 %v2932, %v2107
  %v2952 = vadd.f32 %v2761, %v1941
  %v2953 = vadd.f32 %v2935, %v2109
  %v2954 = vadd.f32 %v2763, %v1944
  %v2955 = vadd.f32 %v2937, %v2112
  %v2956 = vadd.f32 %v2766, %v1946
  %v2957 = vadd.f32 %v2940, %v2114
  %v2958 = vadd.f32 %v2768, 0.0
  %v2959 = vadd.f32 %v2942, 0.0
  %v2960 = vld [vmem:[%s2] sm:$0x3]
  %v2962 = vperm.slane %v2960, 0
  %v2963 = vperm.slane %v2960, 1
  %v2966 = vadd.f32 %v2944, %v2962
  %v2967 = vadd.f32 %v2945, %v2963
  %v2968 = vadd.f32 %v2946, %v2962
  %v2969 = vadd.f32 %v2947, %v2963
  %v2970 = vadd.f32 %v2948, %v2962
  %v2971 = vadd.f32 %v2949, %v2963
  %v2972 = vadd.f32 %v2950, %v2962
  %v2973 = vadd.f32 %v2951, %v2963
  %v2974 = vadd.f32 %v2952, %v2962
  %v2975 = vadd.f32 %v2953, %v2963
  %v2976 = vadd.f32 %v2954, %v2962
  %v2977 = vadd.f32 %v2955, %v2963
  %v2978 = vadd.f32 %v2956, %v2962
  %v2979 = vadd.f32 %v2957, %v2963
  %v2980 = vadd.f32 %v2958, %v2962
  %v2981 = vadd.f32 %v2959, %v2963
  %v2982 = vmax.f32 %v2966, 0.0
  %v2983 = vmax.f32 %v2967, 0.0
  %v2984 = vmax.f32 %v2968, 0.0
  %v2985 = vmax.f32 %v2969, 0.0
  %v2986 = vmax.f32 %v2970, 0.0
  %v2987 = vmax.f32 %v2971, 0.0
  %v2988 = vmax.f32 %v2972, 0.0
  %v2989 = vmax.f32 %v2973, 0.0
  %v2990 = vmax.f32 %v2974, 0.0
  %v2991 = vmax.f32 %v2975, 0.0
  %v2992 = vmax.f32 %v2976, 0.0
  %v2993 = vmax.f32 %v2977, 0.0
  %v2994 = vmax.f32 %v2978, 0.0
  %v2995 = vmax.f32 %v2979, 0.0
  %v2996 = vmax.f32 %v2980, 0.0
  %v2997 = vmax.f32 %v2981, 0.0
  %v2998 = vld [vmem:[%s3] sm:$0xff]
  %v2999 = vld [vmem:[%s3 + $0x8] sm:$0xff]
  %v3000 = vld [vmem:[%s3 + $0x10] sm:$0xff]
  %v3001 = vld [vmem:[%s3 + $0x18] sm:$0xff]
  %v3002 = vld [vmem:[%s3 + $0x20] sm:$0xff]
  %v3003 = vld [vmem:[%s3 + $0x28] sm:$0xff]
  %v3004 = vld [vmem:[%s3 + $0x30] sm:$0xff]
  %v3005 = vld [vmem:[%s3 + $0x38] sm:$0xff]
  %v3006 = vld [vmem:[%s3 + $0x40] sm:$0xff]
  %v3007 = vld [vmem:[%s3 + $0x48] sm:$0xff]
  %v3008 = vld [vmem:[%s3 + $0x50] sm:$0xff]
  %v3009 = vld [vmem:[%s3 + $0x58] sm:$0xff]
  %v3010 = vld [vmem:[%s3 + $0x60] sm:$0xff]
  %v3011 = vld [vmem:[%s3 + $0x68] sm:$0xff]
  %v3012 = vld [vmem:[%s3 + $0x70] sm:$0xff]
  %v3013 = vld [vmem:[%s3 + $0x78] sm:$0xff]
  %v3014 = vld [vmem:[%s3 + $0x80] sm:$0xff]
  %v3015 = vld [vmem:[%s3 + $0x88] sm:$0xff]
  %v3016 = vld [vmem:[%s3 + $0x90] sm:$0xff]
  %v3017 = vld [vmem:[%s3 + $0x98] sm:$0xff]
  %v3018 = vld [vmem:[%s3 + $0xa0] sm:$0xff]
  %v3019 = vld [vmem:[%s3 + $0xa8] sm:$0xff]
  %v3020 = vld [vmem:[%s3 + $0xb0] sm:$0xff]
  %v3021 = vld [vmem:[%s3 + $0xb8] sm:$0xff]
  %v3022 = vld [vmem:[%s4] sm:$0x1]
  %v3024 = vperm.slane %v3022, 0
  %vm3026 = vcmask 523264
  %v3028 = vsel %vm3026, %v2983, 0
  %v3031 = vsel %vm3026, %v2985, 0
  %v3034 = vsel %vm3026, %v2987, 0
  %v3037 = vsel %vm3026, %v2989, 0
  %v3040 = vsel %vm3026, %v2991, 0
  %v3043 = vsel %vm3026, %v2993, 0
  %v3046 = vsel %vm3026, %v2995, 0
  %v3049 = vsel %vm3026, %v2997, 0
  %3051 = vmatpush.msra.mxu0 %v3013
  %3052 = vmatpush.msra.mxu0 %v3012
  %3053 = vmatpush.msra.mxu0 %v3011
  %3054 = vmatpush.msra.mxu0 %v3010
  %3055 = vmatpush.msra.mxu0 %v3009
  %3056 = vmatpush.msra.mxu0 %v3008
  %3057 = vmatpush.msra.mxu0 %v3007
  %3058 = vmatpush.msra.mxu0 %v3006
  %3059 = vmatpush.msra.mxu0 %v3005
  %3060 = vmatpush.msra.mxu0 %v3004
  %3061 = vmatpush.msra.mxu0 %v3003
  %3062 = vmatpush.msra.mxu0 %v3002
  %3063 = vmatpush.msra.mxu0 %v3001
  %3064 = vmatpush.msra.mxu0 %v3000
  %3065 = vmatpush.msra.mxu0 %v2999
  %3066 = vmatpush.msra.mxu0 %v2998
  %3067 = vmatmul.f32.gmra.mxu0 %v2982
  %v3068 = vpop.f32.mrf.mxu0
  %v3069 = vadd.f32 %v3024, %v3068
  %3070 = vmatmul.f32.gmra.mxu0 %v2984
  %v3071 = vpop.f32.mrf.mxu0
  %v3072 = vadd.f32 %v3024, %v3071
  %3073 = vmatmul.f32.gmra.mxu0 %v2986
  %v3074 = vpop.f32.mrf.mxu0
  %v3075 = vadd.f32 %v3024, %v3074
  %3076 = vmatmul.f32.gmra.mxu0 %v2988
  %v3077 = vpop.f32.mrf.mxu0
  %v3078 = vadd.f32 %v3024, %v3077
  %3079 = vmatmul.f32.gmra.mxu0 %v2990
  %v3080 = vpop.f32.mrf.mxu0
  %v3081 = vadd.f32 %v3024, %v3080
  %3082 = vmatmul.f32.gmra.mxu0 %v2992
  %v3083 = vpop.f32.mrf.mxu0
  %v3084 = vadd.f32 %v3024, %v3083
  %3085 = vmatmul.f32.gmra.mxu0 %v2994
  %v3086 = vpop.f32.mrf.mxu0
  %v3087 = vadd.f32 %v3024, %v3086
  %3088 = vmatmul.f32.gmra.mxu0 %v2996
  %v3089 = vpop.f32.mrf.mxu0
  %v3090 = vadd.f32 %v3024, %v3089
  %3091 = vdwg.mxu0
  %3092 = vmatpush.msra.mxu0 0.0
  %3093 = vmatpush.msra.mxu0 0.0
  %3094 = vmatpush.msra.mxu0 0.0
  %3095 = vmatpush.msra.mxu0 0.0
  %3096 = vmatpush.msra.mxu0 0.0
  %3097 = vmatpush.msra.mxu0 0.0
  %3098 = vmatpush.msra.mxu0 0.0
  %3099 = vmatpush.msra.mxu0 0.0
  %3100 = vmatpush.msra.mxu0 %v3021
  %3101 = vmatpush.msra.mxu0 %v3020
  %3102 = vmatpush.msra.mxu0 %v3019
  %3103 = vmatpush.msra.mxu0 %v3018
  %3104 = vmatpush.msra.mxu0 %v3017
  %3105 = vmatpush.msra.mxu0 %v3016
  %3106 = vmatpush.msra.mxu0 %v3015
  %3107 = vmatpush.msra.mxu0 %v3014
  %3108 = vmatmul.f32.gmra.mxu0 %v3028
  %v3109 = vpop.f32.mrf.mxu0
  %v3110 = vadd.f32 %v3069, %v3109
  %3111 = vmatmul.f32.gmra.mxu0 %v3031
  %v3112 = vpop.f32.mrf.mxu0
  %v3113 = vadd.f32 %v3072, %v3112
  %3114 = vmatmul.f32.gmra.mxu0 %v3034
  %v3115 = vpop.f32.mrf.mxu0
  %v3116 = vadd.f32 %v3075, %v3115
  %3117 = vmatmul.f32.gmra.mxu0 %v3037
  %v3118 = vpop.f32.mrf.mxu0
  %v3119 = vadd.f32 %v3078, %v3118
  %3120 = vmatmul.f32.gmra.mxu0 %v3040
  %v3121 = vpop.f32.mrf.mxu0
  %v3122 = vadd.f32 %v3081, %v3121
  %3123 = vmatmul.f32.gmra.mxu0 %v3043
  %v3124 = vpop.f32.mrf.mxu0
  %v3125 = vadd.f32 %v3084, %v3124
  %3126 = vmatmul.f32.gmra.mxu0 %v3046
  %v3127 = vpop.f32.mrf.mxu0
  %v3128 = vadd.f32 %v3087, %v3127
  %3129 = vmatmul.f32.gmra.mxu0 %v3049
  %v3130 = vpop.f32.mrf.mxu0
  %v3131 = vadd.f32 %v3090, %v3130
  %3132 = vdwg.mxu0
  %v3133 = vld [vmem:[%s5] sm:$0xff]
  %v3134 = vld [vmem:[%s5 + $0x8] sm:$0xff]
  %v3135 = vld [vmem:[%s5 + $0x10] sm:$0xff]
  %v3136 = vld [vmem:[%s5 + $0x18] sm:$0xff]
  %v3137 = vld [vmem:[%s5 + $0x20] sm:$0xff]
  %v3138 = vld [vmem:[%s5 + $0x28] sm:$0xff]
  %v3139 = vld [vmem:[%s5 + $0x30] sm:$0xff]
  %v3140 = vld [vmem:[%s5 + $0x38] sm:$0xff]
  %v3141 = vld [vmem:[%s9] sm:$0x1]
  %v3143 = vperm.slane %v3141, 0
  %v3146 = vsel %vm3026, %v3110, 0
  %v3149 = vsel %vm3026, %v3113, 0
  %v3152 = vsel %vm3026, %v3116, 0
  %v3155 = vsel %vm3026, %v3119, 0
  %v3158 = vsel %vm3026, %v3122, 0
  %v3161 = vsel %vm3026, %v3125, 0
  %v3164 = vsel %vm3026, %v3128, 0
  %v3167 = vsel %vm3026, %v3131, 0
  %3169 = vmatpush.msra.mxu0 0.0
  %3170 = vmatpush.msra.mxu0 0.0
  %3171 = vmatpush.msra.mxu0 0.0
  %3172 = vmatpush.msra.mxu0 0.0
  %3173 = vmatpush.msra.mxu0 0.0
  %3174 = vmatpush.msra.mxu0 0.0
  %3175 = vmatpush.msra.mxu0 0.0
  %3176 = vmatpush.msra.mxu0 0.0
  %3177 = vmatpush.msra.mxu0 %v3140
  %3178 = vmatpush.msra.mxu0 %v3139
  %3179 = vmatpush.msra.mxu0 %v3138
  %3180 = vmatpush.msra.mxu0 %v3137
  %3181 = vmatpush.msra.mxu0 %v3136
  %3182 = vmatpush.msra.mxu0 %v3135
  %3183 = vmatpush.msra.mxu0 %v3134
  %3184 = vmatpush.msra.mxu0 %v3133
  %3185 = vmatmul.f32.gmra.mxu0 %v3146
  %v3186 = vpop.f32.mrf.mxu0
  %v3187 = vadd.f32 %v3143, %v3186
  %3188 = vmatmul.f32.gmra.mxu0 %v3149
  %v3189 = vpop.f32.mrf.mxu0
  %v3190 = vadd.f32 %v3143, %v3189
  %3191 = vmatmul.f32.gmra.mxu0 %v3152
  %v3192 = vpop.f32.mrf.mxu0
  %v3193 = vadd.f32 %v3143, %v3192
  %3194 = vmatmul.f32.gmra.mxu0 %v3155
  %v3195 = vpop.f32.mrf.mxu0
  %v3196 = vadd.f32 %v3143, %v3195
  %3197 = vmatmul.f32.gmra.mxu0 %v3158
  %v3198 = vpop.f32.mrf.mxu0
  %v3199 = vadd.f32 %v3143, %v3198
  %3200 = vmatmul.f32.gmra.mxu0 %v3161
  %v3201 = vpop.f32.mrf.mxu0
  %v3202 = vadd.f32 %v3143, %v3201
  %3203 = vmatmul.f32.gmra.mxu0 %v3164
  %v3204 = vpop.f32.mrf.mxu0
  %v3205 = vadd.f32 %v3143, %v3204
  %3206 = vmatmul.f32.gmra.mxu0 %v3167
  %v3207 = vpop.f32.mrf.mxu0
  %v3208 = vadd.f32 %v3143, %v3207
  %3209 = vdwg.mxu0
  %v3210 = vld [vmem:[%s6] sm:$0xff]
  %v3211 = vld [vmem:[%s6 + $0x8] sm:$0xff]
  %v3212 = vld [vmem:[%s6 + $0x10] sm:$0xff]
  %v3213 = vld [vmem:[%s6 + $0x18] sm:$0xff]
  %v3214 = vld [vmem:[%s6 + $0x20] sm:$0xff]
  %v3215 = vld [vmem:[%s6 + $0x28] sm:$0xff]
  %v3216 = vld [vmem:[%s6 + $0x30] sm:$0xff]
  %v3217 = vld [vmem:[%s6 + $0x38] sm:$0xff]
  %v3218 = vld [vmem:[%s10] sm:$0x1]
  %v3220 = vperm.slane %v3218, 0
  %3222 = vmatpush.msra.mxu0 0.0
  %3223 = vmatpush.msra.mxu0 0.0
  %3224 = vmatpush.msra.mxu0 0.0
  %3225 = vmatpush.msra.mxu0 0.0
  %3226 = vmatpush.msra.mxu0 0.0
  %3227 = vmatpush.msra.mxu0 0.0
  %3228 = vmatpush.msra.mxu0 0.0
  %3229 = vmatpush.msra.mxu0 0.0
  %3230 = vmatpush.msra.mxu0 %v3217
  %3231 = vmatpush.msra.mxu0 %v3216
  %3232 = vmatpush.msra.mxu0 %v3215
  %3233 = vmatpush.msra.mxu0 %v3214
  %3234 = vmatpush.msra.mxu0 %v3213
  %3235 = vmatpush.msra.mxu0 %v3212
  %3236 = vmatpush.msra.mxu0 %v3211
  %3237 = vmatpush.msra.mxu0 %v3210
  %3238 = vmatmul.f32.gmra.mxu0 %v3146
  %v3239 = vpop.f32.mrf.mxu0
  %v3240 = vadd.f32 %v3220, %v3239
  %3241 = vmatmul.f32.gmra.mxu0 %v3149
  %v3242 = vpop.f32.mrf.mxu0
  %v3243 = vadd.f32 %v3220, %v3242
  %3244 = vmatmul.f32.gmra.mxu0 %v3152
  %v3245 = vpop.f32.mrf.mxu0
  %v3246 = vadd.f32 %v3220, %v3245
  %3247 = vmatmul.f32.gmra.mxu0 %v3155
  %v3248 = vpop.f32.mrf.mxu0
  %v3249 = vadd.f32 %v3220, %v3248
  %3250 = vmatmul.f32.gmra.mxu0 %v3158
  %v3251 = vpop.f32.mrf.mxu0
  %v3252 = vadd.f32 %v3220, %v3251
  %3253 = vmatmul.f32.gmra.mxu0 %v3161
  %v3254 = vpop.f32.mrf.mxu0
  %v3255 = vadd.f32 %v3220, %v3254
  %3256 = vmatmul.f32.gmra.mxu0 %v3164
  %v3257 = vpop.f32.mrf.mxu0
  %v3258 = vadd.f32 %v3220, %v3257
  %3259 = vmatmul.f32.gmra.mxu0 %v3167
  %v3260 = vpop.f32.mrf.mxu0
  %v3261 = vadd.f32 %v3220, %v3260
  %3262 = vdwg.mxu0
  %v3263 = vld [vmem:[%s7] sm:$0xff]
  %v3264 = vld [vmem:[%s7 + $0x8] sm:$0xff]
  %v3265 = vld [vmem:[%s7 + $0x10] sm:$0xff]
  %v3266 = vld [vmem:[%s7 + $0x18] sm:$0xff]
  %v3267 = vld [vmem:[%s7 + $0x20] sm:$0xff]
  %v3268 = vld [vmem:[%s7 + $0x28] sm:$0xff]
  %v3269 = vld [vmem:[%s7 + $0x30] sm:$0xff]
  %v3270 = vld [vmem:[%s7 + $0x38] sm:$0xff]
  %v3271 = vld [vmem:[%s11] sm:$0x1]
  %v3273 = vperm.slane %v3271, 0
  %3275 = vmatpush.msra.mxu0 0.0
  %3276 = vmatpush.msra.mxu0 0.0
  %3277 = vmatpush.msra.mxu0 0.0
  %3278 = vmatpush.msra.mxu0 0.0
  %3279 = vmatpush.msra.mxu0 0.0
  %3280 = vmatpush.msra.mxu0 0.0
  %3281 = vmatpush.msra.mxu0 0.0
  %3282 = vmatpush.msra.mxu0 0.0
  %3283 = vmatpush.msra.mxu0 %v3270
  %3284 = vmatpush.msra.mxu0 %v3269
  %3285 = vmatpush.msra.mxu0 %v3268
  %3286 = vmatpush.msra.mxu0 %v3267
  %3287 = vmatpush.msra.mxu0 %v3266
  %3288 = vmatpush.msra.mxu0 %v3265
  %3289 = vmatpush.msra.mxu0 %v3264
  %3290 = vmatpush.msra.mxu0 %v3263
  %3291 = vmatmul.f32.gmra.mxu0 %v3146
  %v3292 = vpop.f32.mrf.mxu0
  %v3293 = vadd.f32 %v3273, %v3292
  %3294 = vmatmul.f32.gmra.mxu0 %v3149
  %v3295 = vpop.f32.mrf.mxu0
  %v3296 = vadd.f32 %v3273, %v3295
  %3297 = vmatmul.f32.gmra.mxu0 %v3152
  %v3298 = vpop.f32.mrf.mxu0
  %v3299 = vadd.f32 %v3273, %v3298
  %3300 = vmatmul.f32.gmra.mxu0 %v3155
  %v3301 = vpop.f32.mrf.mxu0
  %v3302 = vadd.f32 %v3273, %v3301
  %3303 = vmatmul.f32.gmra.mxu0 %v3158
  %v3304 = vpop.f32.mrf.mxu0
  %v3305 = vadd.f32 %v3273, %v3304
  %3306 = vmatmul.f32.gmra.mxu0 %v3161
  %v3307 = vpop.f32.mrf.mxu0
  %v3308 = vadd.f32 %v3273, %v3307
  %3309 = vmatmul.f32.gmra.mxu0 %v3164
  %v3310 = vpop.f32.mrf.mxu0
  %v3311 = vadd.f32 %v3273, %v3310
  %3312 = vmatmul.f32.gmra.mxu0 %v3167
  %v3313 = vpop.f32.mrf.mxu0
  %v3314 = vadd.f32 %v3273, %v3313
  %3315 = vdwg.mxu0
  %v3316 = vmul.f32 %v3187, 0.17677669
  %v3317 = vmul.f32 %v3190, 0.17677669
  %v3318 = vmul.f32 %v3193, 0.17677669
  %v3319 = vmul.f32 %v3196, 0.17677669
  %v3320 = vmul.f32 %v3199, 0.17677669
  %v3321 = vmul.f32 %v3202, 0.17677669
  %v3322 = vmul.f32 %v3205, 0.17677669
  %v3323 = vmul.f32 %v3208, 0.17677669
  %v3332 = vrot.slane %v3317, 7
  %vm3333 = vcmask 1041409
  %v3334 = vsel %vm3333, %v3332, %v3316
  %v3335 = vrot.slane %v3318, 6
  %vm3336 = vcmask 1042434
  %v3337 = vsel %vm3336, %v3335, %v3334
  %v3338 = vrot.slane %v3319, 5
  %vm3339 = vcmask 1043459
  %v3340 = vsel %vm3339, %v3338, %v3337
  %v3341 = vrot.slane %v3320, 4
  %vm3342 = vcmask 1044484
  %v3343 = vsel %vm3342, %v3341, %v3340
  %v3344 = vrot.slane %v3321, 3
  %vm3345 = vcmask 1045509
  %v3346 = vsel %vm3345, %v3344, %v3343
  %v3347 = vrot.slane %v3322, 2
  %vm3348 = vcmask 1046534
  %v3349 = vsel %vm3348, %v3347, %v3346
  %v3350 = vrot.slane %v3323, 1
  %vm3351 = vcmask 1047559
  %v3352 = vsel %vm3351, %v3350, %v3349
  %v3361 = vrot.slane %v3243, 7
  %v3362 = vsel %vm3333, %v3361, %v3240
  %v3363 = vrot.slane %v3246, 6
  %v3364 = vsel %vm3336, %v3363, %v3362
  %v3365 = vrot.slane %v3249, 5
  %v3366 = vsel %vm3339, %v3365, %v3364
  %v3367 = vrot.slane %v3252, 4
  %v3368 = vsel %vm3342, %v3367, %v3366
  %v3369 = vrot.slane %v3255, 3
  %v3370 = vsel %vm3345, %v3369, %v3368
  %v3371 = vrot.slane %v3258, 2
  %v3372 = vsel %vm3348, %v3371, %v3370
  %v3373 = vrot.slane %v3261, 1
  %v3374 = vsel %vm3351, %v3373, %v3372
  %vm3375 = vcmask 261120
  %v3376 = vsel %vm3375, %v3352, 0
  %v3378 = vsel %vm3375, %v3374, 0
  %3380 = vmatpush.xpose.msra.mxu0 0.0
  %3381 = vmatpush.xpose.msra.mxu0 0.0
  %3382 = vmatpush.xpose.msra.mxu0 0.0
  %3383 = vmatpush.xpose.msra.mxu0 0.0
  %3384 = vmatpush.xpose.msra.mxu0 0.0
  %3385 = vmatpush.xpose.msra.mxu0 0.0
  %3386 = vmatpush.xpose.msra.mxu0 0.0
  %3387 = vmatpush.xpose.msra.mxu0 0.0
  %3388 = vmatpush.xpose.msra.mxu0 0.0
  %3389 = vmatpush.xpose.msra.mxu0 0.0
  %3390 = vmatpush.xpose.msra.mxu0 0.0
  %3391 = vmatpush.xpose.msra.mxu0 0.0
  %3392 = vmatpush.xpose.msra.mxu0 0.0
  %3393 = vmatpush.xpose.msra.mxu0 0.0
  %3394 = vmatpush.xpose.msra.mxu0 0.0
  %3395 = vmatpush.xpose.msra.mxu0 %v3378
  %3396 = vmatmul.f32.gmra.mxu0 %v3376
  %v3397 = vpop.f32.mrf.mxu0
  %v3398 = vadd.f32 0.0, %v3397
  %3399 = vdwg.mxu0
  %vm3400 = vcmask 64512
  %v3401 = vsel %vm3400, %v3398, -inf
  %3402 = vmax.xlane.f32.xlu0 %v3401
  %v3403 = vpop.xlane.xlu0 %3402
  %v3404 = vsub.f32 %v3398, %v3403
  %v3405 = vmul.f32 %v3404, 1.442695
  %v3406 = vpow.pop %v3405
  %v3407 = vsel %vm3400, %v3406, 0.0
  %3408 = vadd.xlane.f32.xlu0 %v3407
  %v3409 = vpop.xlane.xlu0 %3408
  %v3410 = vrcp.pop %v3409
  %v3411 = vmul.f32 %v3406, %v3410
  %v3420 = vrot.slane %v3296, 7
  %v3421 = vsel %vm3333, %v3420, %v3293
  %v3422 = vrot.slane %v3299, 6
  %v3423 = vsel %vm3336, %v3422, %v3421
  %v3424 = vrot.slane %v3302, 5
  %v3425 = vsel %vm3339, %v3424, %v3423
  %v3426 = vrot.slane %v3305, 4
  %v3427 = vsel %vm3342, %v3426, %v3425
  %v3428 = vrot.slane %v3308, 3
  %v3429 = vsel %vm3345, %v3428, %v3427
  %v3430 = vrot.slane %v3311, 2
  %v3431 = vsel %vm3348, %v3430, %v3429
  %v3432 = vrot.slane %v3314, 1
  %v3433 = vsel %vm3351, %v3432, %v3431
  %v3436 = vsel %vm3400, %v3411, 0
  %3438 = vmatpush.msra.mxu0 0.0
  %3439 = vmatpush.msra.mxu0 0.0
  %3440 = vmatpush.msra.mxu0 0.0
  %3441 = vmatpush.msra.mxu0 0.0
  %3442 = vmatpush.msra.mxu0 0.0
  %3443 = vmatpush.msra.mxu0 0.0
  %3444 = vmatpush.msra.mxu0 0.0
  %3445 = vmatpush.msra.mxu0 0.0
  %3446 = vmatpush.msra.mxu0 0.0
  %3447 = vmatpush.msra.mxu0 0.0
  %3448 = vmatpush.msra.mxu0 0.0
  %3449 = vmatpush.msra.mxu0 0.0
  %3450 = vmatpush.msra.mxu0 0.0
  %3451 = vmatpush.msra.mxu0 0.0
  %3452 = vmatpush.msra.mxu0 0.0
  %3453 = vmatpush.msra.mxu0 %v3433
  %3454 = vmatmul.f32.gmra.mxu0 %v3436
  %v3455 = vpop.f32.mrf.mxu0
  %v3456 = vadd.f32 0.0, %v3455
  %3457 = vdwg.mxu0
  %3458 = vrot.lane.b32.xlu0 %v3352, 96
  %v3459 = vpop.permute.xlu0 %3458
  %3460 = vrot.lane.b32.xlu0 %v3374, 96
  %v3461 = vpop.permute.xlu0 %3460
  %v3462 = vsel %vm3375, %v3459, 0
  %v3464 = vsel %vm3375, %v3461, 0
  %3466 = vmatpush.xpose.msra.mxu0 0.0
  %3467 = vmatpush.xpose.msra.mxu0 0.0
  %3468 = vmatpush.xpose.msra.mxu0 0.0
  %3469 = vmatpush.xpose.msra.mxu0 0.0
  %3470 = vmatpush.xpose.msra.mxu0 0.0
  %3471 = vmatpush.xpose.msra.mxu0 0.0
  %3472 = vmatpush.xpose.msra.mxu0 0.0
  %3473 = vmatpush.xpose.msra.mxu0 0.0
  %3474 = vmatpush.xpose.msra.mxu0 0.0
  %3475 = vmatpush.xpose.msra.mxu0 0.0
  %3476 = vmatpush.xpose.msra.mxu0 0.0
  %3477 = vmatpush.xpose.msra.mxu0 0.0
  %3478 = vmatpush.xpose.msra.mxu0 0.0
  %3479 = vmatpush.xpose.msra.mxu0 0.0
  %3480 = vmatpush.xpose.msra.mxu0 0.0
  %3481 = vmatpush.xpose.msra.mxu0 %v3464
  %3482 = vmatmul.f32.gmra.mxu0 %v3462
  %v3483 = vpop.f32.mrf.mxu0
  %v3484 = vadd.f32 0.0, %v3483
  %3485 = vdwg.mxu0
  %v3486 = vsel %vm3400, %v3484, -inf
  %3487 = vmax.xlane.f32.xlu0 %v3486
  %v3488 = vpop.xlane.xlu0 %3487
  %v3489 = vsub.f32 %v3484, %v3488
  %v3490 = vmul.f32 %v3489, 1.442695
  %v3491 = vpow.pop %v3490
  %v3492 = vsel %vm3400, %v3491, 0.0
  %3493 = vadd.xlane.f32.xlu0 %v3492
  %v3494 = vpop.xlane.xlu0 %3493
  %v3495 = vrcp.pop %v3494
  %v3496 = vmul.f32 %v3491, %v3495
  %3497 = vrot.lane.b32.xlu0 %v3433, 96
  %v3498 = vpop.permute.xlu0 %3497
  %v3501 = vsel %vm3400, %v3496, 0
  %3503 = vmatpush.msra.mxu0 0.0
  %3504 = vmatpush.msra.mxu0 0.0
  %3505 = vmatpush.msra.mxu0 0.0
  %3506 = vmatpush.msra.mxu0 0.0
  %3507 = vmatpush.msra.mxu0 0.0
  %3508 = vmatpush.msra.mxu0 0.0
  %3509 = vmatpush.msra.mxu0 0.0
  %3510 = vmatpush.msra.mxu0 0.0
  %3511 = vmatpush.msra.mxu0 0.0
  %3512 = vmatpush.msra.mxu0 0.0
  %3513 = vmatpush.msra.mxu0 0.0
  %3514 = vmatpush.msra.mxu0 0.0
  %3515 = vmatpush.msra.mxu0 0.0
  %3516 = vmatpush.msra.mxu0 0.0
  %3517 = vmatpush.msra.mxu0 0.0
  %3518 = vmatpush.msra.mxu0 %v3498
  %3519 = vmatmul.f32.gmra.mxu0 %v3501
  %v3520 = vpop.f32.mrf.mxu0
  %v3521 = vadd.f32 0.0, %v3520
  %3522 = vdwg.mxu0
  %3524 = vrot.lane.b32.xlu0 %v3521, 32
  %v3525 = vpop.permute.xlu0 %3524
  %v3527 = vsel %vm3375, %v3456, %v3525
  %v3528 = vrot.slane %v3316, 1
  %v3529 = vsel %vm3333, %v3317, %v3528
  %v3530 = vrot.slane %v3318, 7
  %v3531 = vsel %vm3336, %v3530, %v3529
  %v3532 = vrot.slane %v3319, 6
  %v3533 = vsel %vm3339, %v3532, %v3531
  %v3534 = vrot.slane %v3320, 5
  %v3535 = vsel %vm3342, %v3534, %v3533
  %v3536 = vrot.slane %v3321, 4
  %v3537 = vsel %vm3345, %v3536, %v3535
  %v3538 = vrot.slane %v3322, 3
  %v3539 = vsel %vm3348, %v3538, %v3537
  %v3540 = vrot.slane %v3323, 2
  %v3541 = vsel %vm3351, %v3540, %v3539
  %v3542 = vrot.slane %v3240, 1
  %v3543 = vsel %vm3333, %v3243, %v3542
  %v3544 = vrot.slane %v3246, 7
  %v3545 = vsel %vm3336, %v3544, %v3543
  %v3546 = vrot.slane %v3249, 6
  %v3547 = vsel %vm3339, %v3546, %v3545
  %v3548 = vrot.slane %v3252, 5
  %v3549 = vsel %vm3342, %v3548, %v3547
  %v3550 = vrot.slane %v3255, 4
  %v3551 = vsel %vm3345, %v3550, %v3549
  %v3552 = vrot.slane %v3258, 3
  %v3553 = vsel %vm3348, %v3552, %v3551
  %v3554 = vrot.slane %v3261, 2
  %v3555 = vsel %vm3351, %v3554, %v3553
  %v3556 = vsel %vm3375, %v3541, 0
  %v3558 = vsel %vm3375, %v3555, 0
  %3560 = vmatpush.xpose.msra.mxu0 0.0
  %3561 = vmatpush.xpose.msra.mxu0 0.0
  %3562 = vmatpush.xpose.msra.mxu0 0.0
  %3563 = vmatpush.xpose.msra.mxu0 0.0
  %3564 = vmatpush.xpose.msra.mxu0 0.0
  %3565 = vmatpush.xpose.msra.mxu0 0.0
  %3566 = vmatpush.xpose.msra.mxu0 0.0
  %3567 = vmatpush.xpose.msra.mxu0 0.0
  %3568 = vmatpush.xpose.msra.mxu0 0.0
  %3569 = vmatpush.xpose.msra.mxu0 0.0
  %3570 = vmatpush.xpose.msra.mxu0 0.0
  %3571 = vmatpush.xpose.msra.mxu0 0.0
  %3572 = vmatpush.xpose.msra.mxu0 0.0
  %3573 = vmatpush.xpose.msra.mxu0 0.0
  %3574 = vmatpush.xpose.msra.mxu0 0.0
  %3575 = vmatpush.xpose.msra.mxu0 %v3558
  %3576 = vmatmul.f32.gmra.mxu0 %v3556
  %v3577 = vpop.f32.mrf.mxu0
  %v3578 = vadd.f32 0.0, %v3577
  %3579 = vdwg.mxu0
  %v3580 = vsel %vm3400, %v3578, -inf
  %3581 = vmax.xlane.f32.xlu0 %v3580
  %v3582 = vpop.xlane.xlu0 %3581
  %v3583 = vsub.f32 %v3578, %v3582
  %v3584 = vmul.f32 %v3583, 1.442695
  %v3585 = vpow.pop %v3584
  %v3586 = vsel %vm3400, %v3585, 0.0
  %3587 = vadd.xlane.f32.xlu0 %v3586
  %v3588 = vpop.xlane.xlu0 %3587
  %v3589 = vrcp.pop %v3588
  %v3590 = vmul.f32 %v3585, %v3589
  %v3591 = vrot.slane %v3293, 1
  %v3592 = vsel %vm3333, %v3296, %v3591
  %v3593 = vrot.slane %v3299, 7
  %v3594 = vsel %vm3336, %v3593, %v3592
  %v3595 = vrot.slane %v3302, 6
  %v3596 = vsel %vm3339, %v3595, %v3594
  %v3597 = vrot.slane %v3305, 5
  %v3598 = vsel %vm3342, %v3597, %v3596
  %v3599 = vrot.slane %v3308, 4
  %v3600 = vsel %vm3345, %v3599, %v3598
  %v3601 = vrot.slane %v3311, 3
  %v3602 = vsel %vm3348, %v3601, %v3600
  %v3603 = vrot.slane %v3314, 2
  %v3604 = vsel %vm3351, %v3603, %v3602
  %v3607 = vsel %vm3400, %v3590, 0
  %3609 = vmatpush.msra.mxu0 0.0
  %3610 = vmatpush.msra.mxu0 0.0
  %3611 = vmatpush.msra.mxu0 0.0
  %3612 = vmatpush.msra.mxu0 0.0
  %3613 = vmatpush.msra.mxu0 0.0
  %3614 = vmatpush.msra.mxu0 0.0
  %3615 = vmatpush.msra.mxu0 0.0
  %3616 = vmatpush.msra.mxu0 0.0
  %3617 = vmatpush.msra.mxu0 0.0
  %3618 = vmatpush.msra.mxu0 0.0
  %3619 = vmatpush.msra.mxu0 0.0
  %3620 = vmatpush.msra.mxu0 0.0
  %3621 = vmatpush.msra.mxu0 0.0
  %3622 = vmatpush.msra.mxu0 0.0
  %3623 = vmatpush.msra.mxu0 0.0
  %3624 = vmatpush.msra.mxu0 %v3604
  %3625 = vmatmul.f32.gmra.mxu0 %v3607
  %v3626 = vpop.f32.mrf.mxu0
  %v3627 = vadd.f32 0.0, %v3626
  %3628 = vdwg.mxu0
  %3629 = vrot.lane.b32.xlu0 %v3541, 96
  %v3630 = vpop.permute.xlu0 %3629
  %3631 = vrot.lane.b32.xlu0 %v3555, 96
  %v3632 = vpop.permute.xlu0 %3631
  %v3633 = vsel %vm3375, %v3630, 0
  %v3635 = vsel %vm3375, %v3632, 0
  %3637 = vmatpush.xpose.msra.mxu0 0.0
  %3638 = vmatpush.xpose.msra.mxu0 0.0
  %3639 = vmatpush.xpose.msra.mxu0 0.0
  %3640 = vmatpush.xpose.msra.mxu0 0.0
  %3641 = vmatpush.xpose.msra.mxu0 0.0
  %3642 = vmatpush.xpose.msra.mxu0 0.0
  %3643 = vmatpush.xpose.msra.mxu0 0.0
  %3644 = vmatpush.xpose.msra.mxu0 0.0
  %3645 = vmatpush.xpose.msra.mxu0 0.0
  %3646 = vmatpush.xpose.msra.mxu0 0.0
  %3647 = vmatpush.xpose.msra.mxu0 0.0
  %3648 = vmatpush.xpose.msra.mxu0 0.0
  %3649 = vmatpush.xpose.msra.mxu0 0.0
  %3650 = vmatpush.xpose.msra.mxu0 0.0
  %3651 = vmatpush.xpose.msra.mxu0 0.0
  %3652 = vmatpush.xpose.msra.mxu0 %v3635
  %3653 = vmatmul.f32.gmra.mxu0 %v3633
  %v3654 = vpop.f32.mrf.mxu0
  %v3655 = vadd.f32 0.0, %v3654
  %3656 = vdwg.mxu0
  %v3657 = vsel %vm3400, %v3655, -inf
  %3658 = vmax.xlane.f32.xlu0 %v3657
  %v3659 = vpop.xlane.xlu0 %3658
  %v3660 = vsub.f32 %v3655, %v3659
  %v3661 = vmul.f32 %v3660, 1.442695
  %v3662 = vpow.pop %v3661
  %v3663 = vsel %vm3400, %v3662, 0.0
  %3664 = vadd.xlane.f32.xlu0 %v3663
  %v3665 = vpop.xlane.xlu0 %3664
  %v3666 = vrcp.pop %v3665
  %v3667 = vmul.f32 %v3662, %v3666
  %3668 = vrot.lane.b32.xlu0 %v3604, 96
  %v3669 = vpop.permute.xlu0 %3668
  %v3672 = vsel %vm3400, %v3667, 0
  %3674 = vmatpush.msra.mxu0 0.0
  %3675 = vmatpush.msra.mxu0 0.0
  %3676 = vmatpush.msra.mxu0 0.0
  %3677 = vmatpush.msra.mxu0 0.0
  %3678 = vmatpush.msra.mxu0 0.0
  %3679 = vmatpush.msra.mxu0 0.0
  %3680 = vmatpush.msra.mxu0 0.0
  %3681 = vmatpush.msra.mxu0 0.0
  %3682 = vmatpush.msra.mxu0 0.0
  %3683 = vmatpush.msra.mxu0 0.0
  %3684 = vmatpush.msra.mxu0 0.0
  %3685 = vmatpush.msra.mxu0 0.0
  %3686 = vmatpush.msra.mxu0 0.0
  %3687 = vmatpush.msra.mxu0 0.0
  %3688 = vmatpush.msra.mxu0 0.0
  %3689 = vmatpush.msra.mxu0 %v3669
  %3690 = vmatmul.f32.gmra.mxu0 %v3672
  %v3691 = vpop.f32.mrf.mxu0
  %v3692 = vadd.f32 0.0, %v3691
  %3693 = vdwg.mxu0
  %3695 = vrot.lane.b32.xlu0 %v3692, 32
  %v3696 = vpop.permute.xlu0 %3695
  %v3698 = vsel %vm3375, %v3627, %v3696
  %v3699 = vrot.slane %v3316, 2
  %v3700 = vrot.slane %v3317, 1
  %v3701 = vsel %vm3333, %v3700, %v3699
  %v3702 = vsel %vm3336, %v3318, %v3701
  %v3703 = vrot.slane %v3319, 7
  %v3704 = vsel %vm3339, %v3703, %v3702
  %v3705 = vrot.slane %v3320, 6
  %v3706 = vsel %vm3342, %v3705, %v3704
  %v3707 = vrot.slane %v3321, 5
  %v3708 = vsel %vm3345, %v3707, %v3706
  %v3709 = vrot.slane %v3322, 4
  %v3710 = vsel %vm3348, %v3709, %v3708
  %v3711 = vrot.slane %v3323, 3
  %v3712 = vsel %vm3351, %v3711, %v3710
  %v3713 = vrot.slane %v3240, 2
  %v3714 = vrot.slane %v3243, 1
  %v3715 = vsel %vm3333, %v3714, %v3713
  %v3716 = vsel %vm3336, %v3246, %v3715
  %v3717 = vrot.slane %v3249, 7
  %v3718 = vsel %vm3339, %v3717, %v3716
  %v3719 = vrot.slane %v3252, 6
  %v3720 = vsel %vm3342, %v3719, %v3718
  %v3721 = vrot.slane %v3255, 5
  %v3722 = vsel %vm3345, %v3721, %v3720
  %v3723 = vrot.slane %v3258, 4
  %v3724 = vsel %vm3348, %v3723, %v3722
  %v3725 = vrot.slane %v3261, 3
  %v3726 = vsel %vm3351, %v3725, %v3724
  %v3727 = vsel %vm3375, %v3712, 0
  %v3729 = vsel %vm3375, %v3726, 0
  %3731 = vmatpush.xpose.msra.mxu0 0.0
  %3732 = vmatpush.xpose.msra.mxu0 0.0
  %3733 = vmatpush.xpose.msra.mxu0 0.0
  %3734 = vmatpush.xpose.msra.mxu0 0.0
  %3735 = vmatpush.xpose.msra.mxu0 0.0
  %3736 = vmatpush.xpose.msra.mxu0 0.0
  %3737 = vmatpush.xpose.msra.mxu0 0.0
  %3738 = vmatpush.xpose.msra.mxu0 0.0
  %3739 = vmatpush.xpose.msra.mxu0 0.0
  %3740 = vmatpush.xpose.msra.mxu0 0.0
  %3741 = vmatpush.xpose.msra.mxu0 0.0
  %3742 = vmatpush.xpose.msra.mxu0 0.0
  %3743 = vmatpush.xpose.msra.mxu0 0.0
  %3744 = vmatpush.xpose.msra.mxu0 0.0
  %3745 = vmatpush.xpose.msra.mxu0 0.0
  %3746 = vmatpush.xpose.msra.mxu0 %v3729
  %3747 = vmatmul.f32.gmra.mxu0 %v3727
  %v3748 = vpop.f32.mrf.mxu0
  %v3749 = vadd.f32 0.0, %v3748
  %3750 = vdwg.mxu0
  %v3751 = vsel %vm3400, %v3749, -inf
  %3752 = vmax.xlane.f32.xlu0 %v3751
  %v3753 = vpop.xlane.xlu0 %3752
  %v3754 = vsub.f32 %v3749, %v3753
  %v3755 = vmul.f32 %v3754, 1.442695
  %v3756 = vpow.pop %v3755
  %v3757 = vsel %vm3400, %v3756, 0.0
  %3758 = vadd.xlane.f32.xlu0 %v3757
  %v3759 = vpop.xlane.xlu0 %3758
  %v3760 = vrcp.pop %v3759
  %v3761 = vmul.f32 %v3756, %v3760
  %v3762 = vrot.slane %v3293, 2
  %v3763 = vrot.slane %v3296, 1
  %v3764 = vsel %vm3333, %v3763, %v3762
  %v3765 = vsel %vm3336, %v3299, %v3764
  %v3766 = vrot.slane %v3302, 7
  %v3767 = vsel %vm3339, %v3766, %v3765
  %v3768 = vrot.slane %v3305, 6
  %v3769 = vsel %vm3342, %v3768, %v3767
  %v3770 = vrot.slane %v3308, 5
  %v3771 = vsel %vm3345, %v3770, %v3769
  %v3772 = vrot.slane %v3311, 4
  %v3773 = vsel %vm3348, %v3772, %v3771
  %v3774 = vrot.slane %v3314, 3
  %v3775 = vsel %vm3351, %v3774, %v3773
  %v3778 = vsel %vm3400, %v3761, 0
  %3780 = vmatpush.msra.mxu0 0.0
  %3781 = vmatpush.msra.mxu0 0.0
  %3782 = vmatpush.msra.mxu0 0.0
  %3783 = vmatpush.msra.mxu0 0.0
  %3784 = vmatpush.msra.mxu0 0.0
  %3785 = vmatpush.msra.mxu0 0.0
  %3786 = vmatpush.msra.mxu0 0.0
  %3787 = vmatpush.msra.mxu0 0.0
  %3788 = vmatpush.msra.mxu0 0.0
  %3789 = vmatpush.msra.mxu0 0.0
  %3790 = vmatpush.msra.mxu0 0.0
  %3791 = vmatpush.msra.mxu0 0.0
  %3792 = vmatpush.msra.mxu0 0.0
  %3793 = vmatpush.msra.mxu0 0.0
  %3794 = vmatpush.msra.mxu0 0.0
  %3795 = vmatpush.msra.mxu0 %v3775
  %3796 = vmatmul.f32.gmra.mxu0 %v3778
  %v3797 = vpop.f32.mrf.mxu0
  %v3798 = vadd.f32 0.0, %v3797
  %3799 = vdwg.mxu0
  %3800 = vrot.lane.b32.xlu0 %v3712, 96
  %v3801 = vpop.permute.xlu0 %3800
  %3802 = vrot.lane.b32.xlu0 %v3726, 96
  %v3803 = vpop.permute.xlu0 %3802
  %v3804 = vsel %vm3375, %v3801, 0
  %v3806 = vsel %vm3375, %v3803, 0
  %3808 = vmatpush.xpose.msra.mxu0 0.0
  %3809 = vmatpush.xpose.msra.mxu0 0.0
  %3810 = vmatpush.xpose.msra.mxu0 0.0
  %3811 = vmatpush.xpose.msra.mxu0 0.0
  %3812 = vmatpush.xpose.msra.mxu0 0.0
  %3813 = vmatpush.xpose.msra.mxu0 0.0
  %3814 = vmatpush.xpose.msra.mxu0 0.0
  %3815 = vmatpush.xpose.msra.mxu0 0.0
  %3816 = vmatpush.xpose.msra.mxu0 0.0
  %3817 = vmatpush.xpose.msra.mxu0 0.0
  %3818 = vmatpush.xpose.msra.mxu0 0.0
  %3819 = vmatpush.xpose.msra.mxu0 0.0
  %3820 = vmatpush.xpose.msra.mxu0 0.0
  %3821 = vmatpush.xpose.msra.mxu0 0.0
  %3822 = vmatpush.xpose.msra.mxu0 0.0
  %3823 = vmatpush.xpose.msra.mxu0 %v3806
  %3824 = vmatmul.f32.gmra.mxu0 %v3804
  %v3825 = vpop.f32.mrf.mxu0
  %v3826 = vadd.f32 0.0, %v3825
  %3827 = vdwg.mxu0
  %v3828 = vsel %vm3400, %v3826, -inf
  %3829 = vmax.xlane.f32.xlu0 %v3828
  %v3830 = vpop.xlane.xlu0 %3829
  %v3831 = vsub.f32 %v3826, %v3830
  %v3832 = vmul.f32 %v3831, 1.442695
  %v3833 = vpow.pop %v3832
  %v3834 = vsel %vm3400, %v3833, 0.0
  %3835 = vadd.xlane.f32.xlu0 %v3834
  %v3836 = vpop.xlane.xlu0 %3835
  %v3837 = vrcp.pop %v3836
  %v3838 = vmul.f32 %v3833, %v3837
  %3839 = vrot.lane.b32.xlu0 %v3775, 96
  %v3840 = vpop.permute.xlu0 %3839
  %v3843 = vsel %vm3400, %v3838, 0
  %3845 = vmatpush.msra.mxu0 0.0
  %3846 = vmatpush.msra.mxu0 0.0
  %3847 = vmatpush.msra.mxu0 0.0
  %3848 = vmatpush.msra.mxu0 0.0
  %3849 = vmatpush.msra.mxu0 0.0
  %3850 = vmatpush.msra.mxu0 0.0
  %3851 = vmatpush.msra.mxu0 0.0
  %3852 = vmatpush.msra.mxu0 0.0
  %3853 = vmatpush.msra.mxu0 0.0
  %3854 = vmatpush.msra.mxu0 0.0
  %3855 = vmatpush.msra.mxu0 0.0
  %3856 = vmatpush.msra.mxu0 0.0
  %3857 = vmatpush.msra.mxu0 0.0
  %3858 = vmatpush.msra.mxu0 0.0
  %3859 = vmatpush.msra.mxu0 0.0
  %3860 = vmatpush.msra.mxu0 %v3840
  %3861 = vmatmul.f32.gmra.mxu0 %v3843
  %v3862 = vpop.f32.mrf.mxu0
  %v3863 = vadd.f32 0.0, %v3862
  %3864 = vdwg.mxu0
  %3866 = vrot.lane.b32.xlu0 %v3863, 32
  %v3867 = vpop.permute.xlu0 %3866
  %v3869 = vsel %vm3375, %v3798, %v3867
  %v3870 = vrot.slane %v3316, 3
  %v3871 = vrot.slane %v3317, 2
  %v3872 = vsel %vm3333, %v3871, %v3870
  %v3873 = vrot.slane %v3318, 1
  %v3874 = vsel %vm3336, %v3873, %v3872
  %v3875 = vsel %vm3339, %v3319, %v3874
  %v3876 = vrot.slane %v3320, 7
  %v3877 = vsel %vm3342, %v3876, %v3875
  %v3878 = vrot.slane %v3321, 6
  %v3879 = vsel %vm3345, %v3878, %v3877
  %v3880 = vrot.slane %v3322, 5
  %v3881 = vsel %vm3348, %v3880, %v3879
  %v3882 = vrot.slane %v3323, 4
  %v3883 = vsel %vm3351, %v3882, %v3881
  %v3884 = vrot.slane %v3240, 3
  %v3885 = vrot.slane %v3243, 2
  %v3886 = vsel %vm3333, %v3885, %v3884
  %v3887 = vrot.slane %v3246, 1
  %v3888 = vsel %vm3336, %v3887, %v3886
  %v3889 = vsel %vm3339, %v3249, %v3888
  %v3890 = vrot.slane %v3252, 7
  %v3891 = vsel %vm3342, %v3890, %v3889
  %v3892 = vrot.slane %v3255, 6
  %v3893 = vsel %vm3345, %v3892, %v3891
  %v3894 = vrot.slane %v3258, 5
  %v3895 = vsel %vm3348, %v3894, %v3893
  %v3896 = vrot.slane %v3261, 4
  %v3897 = vsel %vm3351, %v3896, %v3895
  %v3898 = vsel %vm3375, %v3883, 0
  %v3900 = vsel %vm3375, %v3897, 0
  %3902 = vmatpush.xpose.msra.mxu0 0.0
  %3903 = vmatpush.xpose.msra.mxu0 0.0
  %3904 = vmatpush.xpose.msra.mxu0 0.0
  %3905 = vmatpush.xpose.msra.mxu0 0.0
  %3906 = vmatpush.xpose.msra.mxu0 0.0
  %3907 = vmatpush.xpose.msra.mxu0 0.0
  %3908 = vmatpush.xpose.msra.mxu0 0.0
  %3909 = vmatpush.xpose.msra.mxu0 0.0
  %3910 = vmatpush.xpose.msra.mxu0 0.0
  %3911 = vmatpush.xpose.msra.mxu0 0.0
  %3912 = vmatpush.xpose.msra.mxu0 0.0
  %3913 = vmatpush.xpose.msra.mxu0 0.0
  %3914 = vmatpush.xpose.msra.mxu0 0.0
  %3915 = vmatpush.xpose.msra.mxu0 0.0
  %3916 = vmatpush.xpose.msra.mxu0 0.0
  %3917 = vmatpush.xpose.msra.mxu0 %v3900
  %3918 = vmatmul.f32.gmra.mxu0 %v3898
  %v3919 = vpop.f32.mrf.mxu0
  %v3920 = vadd.f32 0.0, %v3919
  %3921 = vdwg.mxu0
  %v3922 = vsel %vm3400, %v3920, -inf
  %3923 = vmax.xlane.f32.xlu0 %v3922
  %v3924 = vpop.xlane.xlu0 %3923
  %v3925 = vsub.f32 %v3920, %v3924
  %v3926 = vmul.f32 %v3925, 1.442695
  %v3927 = vpow.pop %v3926
  %v3928 = vsel %vm3400, %v3927, 0.0
  %3929 = vadd.xlane.f32.xlu0 %v3928
  %v3930 = vpop.xlane.xlu0 %3929
  %v3931 = vrcp.pop %v3930
  %v3932 = vmul.f32 %v3927, %v3931
  %v3933 = vrot.slane %v3293, 3
  %v3934 = vrot.slane %v3296, 2
  %v3935 = vsel %vm3333, %v3934, %v3933
  %v3936 = vrot.slane %v3299, 1
  %v3937 = vsel %vm3336, %v3936, %v3935
  %v3938 = vsel %vm3339, %v3302, %v3937
  %v3939 = vrot.slane %v3305, 7
  %v3940 = vsel %vm3342, %v3939, %v3938
  %v3941 = vrot.slane %v3308, 6
  %v3942 = vsel %vm3345, %v3941, %v3940
  %v3943 = vrot.slane %v3311, 5
  %v3944 = vsel %vm3348, %v3943, %v3942
  %v3945 = vrot.slane %v3314, 4
  %v3946 = vsel %vm3351, %v3945, %v3944
  %v3949 = vsel %vm3400, %v3932, 0
  %3951 = vmatpush.msra.mxu0 0.0
  %3952 = vmatpush.msra.mxu0 0.0
  %3953 = vmatpush.msra.mxu0 0.0
  %3954 = vmatpush.msra.mxu0 0.0
  %3955 = vmatpush.msra.mxu0 0.0
  %3956 = vmatpush.msra.mxu0 0.0
  %3957 = vmatpush.msra.mxu0 0.0
  %3958 = vmatpush.msra.mxu0 0.0
  %3959 = vmatpush.msra.mxu0 0.0
  %3960 = vmatpush.msra.mxu0 0.0
  %3961 = vmatpush.msra.mxu0 0.0
  %3962 = vmatpush.msra.mxu0 0.0
  %3963 = vmatpush.msra.mxu0 0.0
  %3964 = vmatpush.msra.mxu0 0.0
  %3965 = vmatpush.msra.mxu0 0.0
  %3966 = vmatpush.msra.mxu0 %v3946
  %3967 = vmatmul.f32.gmra.mxu0 %v3949
  %v3968 = vpop.f32.mrf.mxu0
  %v3969 = vadd.f32 0.0, %v3968
  %3970 = vdwg.mxu0
  %3971 = vrot.lane.b32.xlu0 %v3883, 96
  %v3972 = vpop.permute.xlu0 %3971
  %3973 = vrot.lane.b32.xlu0 %v3897, 96
  %v3974 = vpop.permute.xlu0 %3973
  %v3975 = vsel %vm3375, %v3972, 0
  %v3977 = vsel %vm3375, %v3974, 0
  %3979 = vmatpush.xpose.msra.mxu0 0.0
  %3980 = vmatpush.xpose.msra.mxu0 0.0
  %3981 = vmatpush.xpose.msra.mxu0 0.0
  %3982 = vmatpush.xpose.msra.mxu0 0.0
  %3983 = vmatpush.xpose.msra.mxu0 0.0
  %3984 = vmatpush.xpose.msra.mxu0 0.0
  %3985 = vmatpush.xpose.msra.mxu0 0.0
  %3986 = vmatpush.xpose.msra.mxu0 0.0
  %3987 = vmatpush.xpose.msra.mxu0 0.0
  %3988 = vmatpush.xpose.msra.mxu0 0.0
  %3989 = vmatpush.xpose.msra.mxu0 0.0
  %3990 = vmatpush.xpose.msra.mxu0 0.0
  %3991 = vmatpush.xpose.msra.mxu0 0.0
  %3992 = vmatpush.xpose.msra.mxu0 0.0
  %3993 = vmatpush.xpose.msra.mxu0 0.0
  %3994 = vmatpush.xpose.msra.mxu0 %v3977
  %3995 = vmatmul.f32.gmra.mxu0 %v3975
  %v3996 = vpop.f32.mrf.mxu0
  %v3997 = vadd.f32 0.0, %v3996
  %3998 = vdwg.mxu0
  %v3999 = vsel %vm3400, %v3997, -inf
  %4000 = vmax.xlane.f32.xlu0 %v3999
  %v4001 = vpop.xlane.xlu0 %4000
  %v4002 = vsub.f32 %v3997, %v4001
  %v4003 = vmul.f32 %v4002, 1.442695
  %v4004 = vpow.pop %v4003
  %v4005 = vsel %vm3400, %v4004, 0.0
  %4006 = vadd.xlane.f32.xlu0 %v4005
  %v4007 = vpop.xlane.xlu0 %4006
  %v4008 = vrcp.pop %v4007
  %v4009 = vmul.f32 %v4004, %v4008
  %4010 = vrot.lane.b32.xlu0 %v3946, 96
  %v4011 = vpop.permute.xlu0 %4010
  %v4014 = vsel %vm3400, %v4009, 0
  %4016 = vmatpush.msra.mxu0 0.0
  %4017 = vmatpush.msra.mxu0 0.0
  %4018 = vmatpush.msra.mxu0 0.0
  %4019 = vmatpush.msra.mxu0 0.0
  %4020 = vmatpush.msra.mxu0 0.0
  %4021 = vmatpush.msra.mxu0 0.0
  %4022 = vmatpush.msra.mxu0 0.0
  %4023 = vmatpush.msra.mxu0 0.0
  %4024 = vmatpush.msra.mxu0 0.0
  %4025 = vmatpush.msra.mxu0 0.0
  %4026 = vmatpush.msra.mxu0 0.0
  %4027 = vmatpush.msra.mxu0 0.0
  %4028 = vmatpush.msra.mxu0 0.0
  %4029 = vmatpush.msra.mxu0 0.0
  %4030 = vmatpush.msra.mxu0 0.0
  %4031 = vmatpush.msra.mxu0 %v4011
  %4032 = vmatmul.f32.gmra.mxu0 %v4014
  %v4033 = vpop.f32.mrf.mxu0
  %v4034 = vadd.f32 0.0, %v4033
  %4035 = vdwg.mxu0
  %4037 = vrot.lane.b32.xlu0 %v4034, 32
  %v4038 = vpop.permute.xlu0 %4037
  %v4040 = vsel %vm3375, %v3969, %v4038
  %v4041 = vrot.slane %v3316, 4
  %v4042 = vrot.slane %v3317, 3
  %v4043 = vsel %vm3333, %v4042, %v4041
  %v4044 = vrot.slane %v3318, 2
  %v4045 = vsel %vm3336, %v4044, %v4043
  %v4046 = vrot.slane %v3319, 1
  %v4047 = vsel %vm3339, %v4046, %v4045
  %v4048 = vsel %vm3342, %v3320, %v4047
  %v4049 = vrot.slane %v3321, 7
  %v4050 = vsel %vm3345, %v4049, %v4048
  %v4051 = vrot.slane %v3322, 6
  %v4052 = vsel %vm3348, %v4051, %v4050
  %v4053 = vrot.slane %v3323, 5
  %v4054 = vsel %vm3351, %v4053, %v4052
  %v4055 = vrot.slane %v3240, 4
  %v4056 = vrot.slane %v3243, 3
  %v4057 = vsel %vm3333, %v4056, %v4055
  %v4058 = vrot.slane %v3246, 2
  %v4059 = vsel %vm3336, %v4058, %v4057
  %v4060 = vrot.slane %v3249, 1
  %v4061 = vsel %vm3339, %v4060, %v4059
  %v4062 = vsel %vm3342, %v3252, %v4061
  %v4063 = vrot.slane %v3255, 7
  %v4064 = vsel %vm3345, %v4063, %v4062
  %v4065 = vrot.slane %v3258, 6
  %v4066 = vsel %vm3348, %v4065, %v4064
  %v4067 = vrot.slane %v3261, 5
  %v4068 = vsel %vm3351, %v4067, %v4066
  %v4069 = vsel %vm3375, %v4054, 0
  %v4071 = vsel %vm3375, %v4068, 0
  %4073 = vmatpush.xpose.msra.mxu0 0.0
  %4074 = vmatpush.xpose.msra.mxu0 0.0
  %4075 = vmatpush.xpose.msra.mxu0 0.0
  %4076 = vmatpush.xpose.msra.mxu0 0.0
  %4077 = vmatpush.xpose.msra.mxu0 0.0
  %4078 = vmatpush.xpose.msra.mxu0 0.0
  %4079 = vmatpush.xpose.msra.mxu0 0.0
  %4080 = vmatpush.xpose.msra.mxu0 0.0
  %4081 = vmatpush.xpose.msra.mxu0 0.0
  %4082 = vmatpush.xpose.msra.mxu0 0.0
  %4083 = vmatpush.xpose.msra.mxu0 0.0
  %4084 = vmatpush.xpose.msra.mxu0 0.0
  %4085 = vmatpush.xpose.msra.mxu0 0.0
  %4086 = vmatpush.xpose.msra.mxu0 0.0
  %4087 = vmatpush.xpose.msra.mxu0 0.0
  %4088 = vmatpush.xpose.msra.mxu0 %v4071
  %4089 = vmatmul.f32.gmra.mxu0 %v4069
  %v4090 = vpop.f32.mrf.mxu0
  %v4091 = vadd.f32 0.0, %v4090
  %4092 = vdwg.mxu0
  %v4093 = vsel %vm3400, %v4091, -inf
  %4094 = vmax.xlane.f32.xlu0 %v4093
  %v4095 = vpop.xlane.xlu0 %4094
  %v4096 = vsub.f32 %v4091, %v4095
  %v4097 = vmul.f32 %v4096, 1.442695
  %v4098 = vpow.pop %v4097
  %v4099 = vsel %vm3400, %v4098, 0.0
  %4100 = vadd.xlane.f32.xlu0 %v4099
  %v4101 = vpop.xlane.xlu0 %4100
  %v4102 = vrcp.pop %v4101
  %v4103 = vmul.f32 %v4098, %v4102
  %v4104 = vrot.slane %v3293, 4
  %v4105 = vrot.slane %v3296, 3
  %v4106 = vsel %vm3333, %v4105, %v4104
  %v4107 = vrot.slane %v3299, 2
  %v4108 = vsel %vm3336, %v4107, %v4106
  %v4109 = vrot.slane %v3302, 1
  %v4110 = vsel %vm3339, %v4109, %v4108
  %v4111 = vsel %vm3342, %v3305, %v4110
  %v4112 = vrot.slane %v3308, 7
  %v4113 = vsel %vm3345, %v4112, %v4111
  %v4114 = vrot.slane %v3311, 6
  %v4115 = vsel %vm3348, %v4114, %v4113
  %v4116 = vrot.slane %v3314, 5
  %v4117 = vsel %vm3351, %v4116, %v4115
  %v4120 = vsel %vm3400, %v4103, 0
  %4122 = vmatpush.msra.mxu0 0.0
  %4123 = vmatpush.msra.mxu0 0.0
  %4124 = vmatpush.msra.mxu0 0.0
  %4125 = vmatpush.msra.mxu0 0.0
  %4126 = vmatpush.msra.mxu0 0.0
  %4127 = vmatpush.msra.mxu0 0.0
  %4128 = vmatpush.msra.mxu0 0.0
  %4129 = vmatpush.msra.mxu0 0.0
  %4130 = vmatpush.msra.mxu0 0.0
  %4131 = vmatpush.msra.mxu0 0.0
  %4132 = vmatpush.msra.mxu0 0.0
  %4133 = vmatpush.msra.mxu0 0.0
  %4134 = vmatpush.msra.mxu0 0.0
  %4135 = vmatpush.msra.mxu0 0.0
  %4136 = vmatpush.msra.mxu0 0.0
  %4137 = vmatpush.msra.mxu0 %v4117
  %4138 = vmatmul.f32.gmra.mxu0 %v4120
  %v4139 = vpop.f32.mrf.mxu0
  %v4140 = vadd.f32 0.0, %v4139
  %4141 = vdwg.mxu0
  %4142 = vrot.lane.b32.xlu0 %v4054, 96
  %v4143 = vpop.permute.xlu0 %4142
  %4144 = vrot.lane.b32.xlu0 %v4068, 96
  %v4145 = vpop.permute.xlu0 %4144
  %v4146 = vsel %vm3375, %v4143, 0
  %v4148 = vsel %vm3375, %v4145, 0
  %4150 = vmatpush.xpose.msra.mxu0 0.0
  %4151 = vmatpush.xpose.msra.mxu0 0.0
  %4152 = vmatpush.xpose.msra.mxu0 0.0
  %4153 = vmatpush.xpose.msra.mxu0 0.0
  %4154 = vmatpush.xpose.msra.mxu0 0.0
  %4155 = vmatpush.xpose.msra.mxu0 0.0
  %4156 = vmatpush.xpose.msra.mxu0 0.0
  %4157 = vmatpush.xpose.msra.mxu0 0.0
  %4158 = vmatpush.xpose.msra.mxu0 0.0
  %4159 = vmatpush.xpose.msra.mxu0 0.0
  %4160 = vmatpush.xpose.msra.mxu0 0.0
  %4161 = vmatpush.xpose.msra.mxu0 0.0
  %4162 = vmatpush.xpose.msra.mxu0 0.0
  %4163 = vmatpush.xpose.msra.mxu0 0.0
  %4164 = vmatpush.xpose.msra.mxu0 0.0
  %4165 = vmatpush.xpose.msra.mxu0 %v4148
  %4166 = vmatmul.f32.gmra.mxu0 %v4146
  %v4167 = vpop.f32.mrf.mxu0
  %v4168 = vadd.f32 0.0, %v4167
  %4169 = vdwg.mxu0
  %v4170 = vsel %vm3400, %v4168, -inf
  %4171 = vmax.xlane.f32.xlu0 %v4170
  %v4172 = vpop.xlane.xlu0 %4171
  %v4173 = vsub.f32 %v4168, %v4172
  %v4174 = vmul.f32 %v4173, 1.442695
  %v4175 = vpow.pop %v4174
  %v4176 = vsel %vm3400, %v4175, 0.0
  %4177 = vadd.xlane.f32.xlu0 %v4176
  %v4178 = vpop.xlane.xlu0 %4177
  %v4179 = vrcp.pop %v4178
  %v4180 = vmul.f32 %v4175, %v4179
  %4181 = vrot.lane.b32.xlu0 %v4117, 96
  %v4182 = vpop.permute.xlu0 %4181
  %v4185 = vsel %vm3400, %v4180, 0
  %4187 = vmatpush.msra.mxu0 0.0
  %4188 = vmatpush.msra.mxu0 0.0
  %4189 = vmatpush.msra.mxu0 0.0
  %4190 = vmatpush.msra.mxu0 0.0
  %4191 = vmatpush.msra.mxu0 0.0
  %4192 = vmatpush.msra.mxu0 0.0
  %4193 = vmatpush.msra.mxu0 0.0
  %4194 = vmatpush.msra.mxu0 0.0
  %4195 = vmatpush.msra.mxu0 0.0
  %4196 = vmatpush.msra.mxu0 0.0
  %4197 = vmatpush.msra.mxu0 0.0
  %4198 = vmatpush.msra.mxu0 0.0
  %4199 = vmatpush.msra.mxu0 0.0
  %4200 = vmatpush.msra.mxu0 0.0
  %4201 = vmatpush.msra.mxu0 0.0
  %4202 = vmatpush.msra.mxu0 %v4182
  %4203 = vmatmul.f32.gmra.mxu0 %v4185
  %v4204 = vpop.f32.mrf.mxu0
  %v4205 = vadd.f32 0.0, %v4204
  %4206 = vdwg.mxu0
  %4208 = vrot.lane.b32.xlu0 %v4205, 32
  %v4209 = vpop.permute.xlu0 %4208
  %v4211 = vsel %vm3375, %v4140, %v4209
  %v4212 = vrot.slane %v3316, 5
  %v4213 = vrot.slane %v3317, 4
  %v4214 = vsel %vm3333, %v4213, %v4212
  %v4215 = vrot.slane %v3318, 3
  %v4216 = vsel %vm3336, %v4215, %v4214
  %v4217 = vrot.slane %v3319, 2
  %v4218 = vsel %vm3339, %v4217, %v4216
  %v4219 = vrot.slane %v3320, 1
  %v4220 = vsel %vm3342, %v4219, %v4218
  %v4221 = vsel %vm3345, %v3321, %v4220
  %v4222 = vrot.slane %v3322, 7
  %v4223 = vsel %vm3348, %v4222, %v4221
  %v4224 = vrot.slane %v3323, 6
  %v4225 = vsel %vm3351, %v4224, %v4223
  %v4226 = vrot.slane %v3240, 5
  %v4227 = vrot.slane %v3243, 4
  %v4228 = vsel %vm3333, %v4227, %v4226
  %v4229 = vrot.slane %v3246, 3
  %v4230 = vsel %vm3336, %v4229, %v4228
  %v4231 = vrot.slane %v3249, 2
  %v4232 = vsel %vm3339, %v4231, %v4230
  %v4233 = vrot.slane %v3252, 1
  %v4234 = vsel %vm3342, %v4233, %v4232
  %v4235 = vsel %vm3345, %v3255, %v4234
  %v4236 = vrot.slane %v3258, 7
  %v4237 = vsel %vm3348, %v4236, %v4235
  %v4238 = vrot.slane %v3261, 6
  %v4239 = vsel %vm3351, %v4238, %v4237
  %v4240 = vsel %vm3375, %v4225, 0
  %v4242 = vsel %vm3375, %v4239, 0
  %4244 = vmatpush.xpose.msra.mxu0 0.0
  %4245 = vmatpush.xpose.msra.mxu0 0.0
  %4246 = vmatpush.xpose.msra.mxu0 0.0
  %4247 = vmatpush.xpose.msra.mxu0 0.0
  %4248 = vmatpush.xpose.msra.mxu0 0.0
  %4249 = vmatpush.xpose.msra.mxu0 0.0
  %4250 = vmatpush.xpose.msra.mxu0 0.0
  %4251 = vmatpush.xpose.msra.mxu0 0.0
  %4252 = vmatpush.xpose.msra.mxu0 0.0
  %4253 = vmatpush.xpose.msra.mxu0 0.0
  %4254 = vmatpush.xpose.msra.mxu0 0.0
  %4255 = vmatpush.xpose.msra.mxu0 0.0
  %4256 = vmatpush.xpose.msra.mxu0 0.0
  %4257 = vmatpush.xpose.msra.mxu0 0.0
  %4258 = vmatpush.xpose.msra.mxu0 0.0
  %4259 = vmatpush.xpose.msra.mxu0 %v4242
  %4260 = vmatmul.f32.gmra.mxu0 %v4240
  %v4261 = vpop.f32.mrf.mxu0
  %v4262 = vadd.f32 0.0, %v4261
  %4263 = vdwg.mxu0
  %v4264 = vsel %vm3400, %v4262, -inf
  %4265 = vmax.xlane.f32.xlu0 %v4264
  %v4266 = vpop.xlane.xlu0 %4265
  %v4267 = vsub.f32 %v4262, %v4266
  %v4268 = vmul.f32 %v4267, 1.442695
  %v4269 = vpow.pop %v4268
  %v4270 = vsel %vm3400, %v4269, 0.0
  %4271 = vadd.xlane.f32.xlu0 %v4270
  %v4272 = vpop.xlane.xlu0 %4271
  %v4273 = vrcp.pop %v4272
  %v4274 = vmul.f32 %v4269, %v4273
  %v4275 = vrot.slane %v3293, 5
  %v4276 = vrot.slane %v3296, 4
  %v4277 = vsel %vm3333, %v4276, %v4275
  %v4278 = vrot.slane %v3299, 3
  %v4279 = vsel %vm3336, %v4278, %v4277
  %v4280 = vrot.slane %v3302, 2
  %v4281 = vsel %vm3339, %v4280, %v4279
  %v4282 = vrot.slane %v3305, 1
  %v4283 = vsel %vm3342, %v4282, %v4281
  %v4284 = vsel %vm3345, %v3308, %v4283
  %v4285 = vrot.slane %v3311, 7
  %v4286 = vsel %vm3348, %v4285, %v4284
  %v4287 = vrot.slane %v3314, 6
  %v4288 = vsel %vm3351, %v4287, %v4286
  %v4291 = vsel %vm3400, %v4274, 0
  %4293 = vmatpush.msra.mxu0 0.0
  %4294 = vmatpush.msra.mxu0 0.0
  %4295 = vmatpush.msra.mxu0 0.0
  %4296 = vmatpush.msra.mxu0 0.0
  %4297 = vmatpush.msra.mxu0 0.0
  %4298 = vmatpush.msra.mxu0 0.0
  %4299 = vmatpush.msra.mxu0 0.0
  %4300 = vmatpush.msra.mxu0 0.0
  %4301 = vmatpush.msra.mxu0 0.0
  %4302 = vmatpush.msra.mxu0 0.0
  %4303 = vmatpush.msra.mxu0 0.0
  %4304 = vmatpush.msra.mxu0 0.0
  %4305 = vmatpush.msra.mxu0 0.0
  %4306 = vmatpush.msra.mxu0 0.0
  %4307 = vmatpush.msra.mxu0 0.0
  %4308 = vmatpush.msra.mxu0 %v4288
  %4309 = vmatmul.f32.gmra.mxu0 %v4291
  %v4310 = vpop.f32.mrf.mxu0
  %v4311 = vadd.f32 0.0, %v4310
  %4312 = vdwg.mxu0
  %4313 = vrot.lane.b32.xlu0 %v4225, 96
  %v4314 = vpop.permute.xlu0 %4313
  %4315 = vrot.lane.b32.xlu0 %v4239, 96
  %v4316 = vpop.permute.xlu0 %4315
  %v4317 = vsel %vm3375, %v4314, 0
  %v4319 = vsel %vm3375, %v4316, 0
  %4321 = vmatpush.xpose.msra.mxu0 0.0
  %4322 = vmatpush.xpose.msra.mxu0 0.0
  %4323 = vmatpush.xpose.msra.mxu0 0.0
  %4324 = vmatpush.xpose.msra.mxu0 0.0
  %4325 = vmatpush.xpose.msra.mxu0 0.0
  %4326 = vmatpush.xpose.msra.mxu0 0.0
  %4327 = vmatpush.xpose.msra.mxu0 0.0
  %4328 = vmatpush.xpose.msra.mxu0 0.0
  %4329 = vmatpush.xpose.msra.mxu0 0.0
  %4330 = vmatpush.xpose.msra.mxu0 0.0
  %4331 = vmatpush.xpose.msra.mxu0 0.0
  %4332 = vmatpush.xpose.msra.mxu0 0.0
  %4333 = vmatpush.xpose.msra.mxu0 0.0
  %4334 = vmatpush.xpose.msra.mxu0 0.0
  %4335 = vmatpush.xpose.msra.mxu0 0.0
  %4336 = vmatpush.xpose.msra.mxu0 %v4319
  %4337 = vmatmul.f32.gmra.mxu0 %v4317
  %v4338 = vpop.f32.mrf.mxu0
  %v4339 = vadd.f32 0.0, %v4338
  %4340 = vdwg.mxu0
  %v4341 = vsel %vm3400, %v4339, -inf
  %4342 = vmax.xlane.f32.xlu0 %v4341
  %v4343 = vpop.xlane.xlu0 %4342
  %v4344 = vsub.f32 %v4339, %v4343
  %v4345 = vmul.f32 %v4344, 1.442695
  %v4346 = vpow.pop %v4345
  %v4347 = vsel %vm3400, %v4346, 0.0
  %4348 = vadd.xlane.f32.xlu0 %v4347
  %v4349 = vpop.xlane.xlu0 %4348
  %v4350 = vrcp.pop %v4349
  %v4351 = vmul.f32 %v4346, %v4350
  %4352 = vrot.lane.b32.xlu0 %v4288, 96
  %v4353 = vpop.permute.xlu0 %4352
  %v4356 = vsel %vm3400, %v4351, 0
  %4358 = vmatpush.msra.mxu0 0.0
  %4359 = vmatpush.msra.mxu0 0.0
  %4360 = vmatpush.msra.mxu0 0.0
  %4361 = vmatpush.msra.mxu0 0.0
  %4362 = vmatpush.msra.mxu0 0.0
  %4363 = vmatpush.msra.mxu0 0.0
  %4364 = vmatpush.msra.mxu0 0.0
  %4365 = vmatpush.msra.mxu0 0.0
  %4366 = vmatpush.msra.mxu0 0.0
  %4367 = vmatpush.msra.mxu0 0.0
  %4368 = vmatpush.msra.mxu0 0.0
  %4369 = vmatpush.msra.mxu0 0.0
  %4370 = vmatpush.msra.mxu0 0.0
  %4371 = vmatpush.msra.mxu0 0.0
  %4372 = vmatpush.msra.mxu0 0.0
  %4373 = vmatpush.msra.mxu0 %v4353
  %4374 = vmatmul.f32.gmra.mxu0 %v4356
  %v4375 = vpop.f32.mrf.mxu0
  %v4376 = vadd.f32 0.0, %v4375
  %4377 = vdwg.mxu0
  %4379 = vrot.lane.b32.xlu0 %v4376, 32
  %v4380 = vpop.permute.xlu0 %4379
  %v4382 = vsel %vm3375, %v4311, %v4380
  %v4383 = vrot.slane %v3316, 6
  %v4384 = vrot.slane %v3317, 5
  %v4385 = vsel %vm3333, %v4384, %v4383
  %v4386 = vrot.slane %v3318, 4
  %v4387 = vsel %vm3336, %v4386, %v4385
  %v4388 = vrot.slane %v3319, 3
  %v4389 = vsel %vm3339, %v4388, %v4387
  %v4390 = vrot.slane %v3320, 2
  %v4391 = vsel %vm3342, %v4390, %v4389
  %v4392 = vrot.slane %v3321, 1
  %v4393 = vsel %vm3345, %v4392, %v4391
  %v4394 = vsel %vm3348, %v3322, %v4393
  %v4395 = vrot.slane %v3323, 7
  %v4396 = vsel %vm3351, %v4395, %v4394
  %v4397 = vrot.slane %v3240, 6
  %v4398 = vrot.slane %v3243, 5
  %v4399 = vsel %vm3333, %v4398, %v4397
  %v4400 = vrot.slane %v3246, 4
  %v4401 = vsel %vm3336, %v4400, %v4399
  %v4402 = vrot.slane %v3249, 3
  %v4403 = vsel %vm3339, %v4402, %v4401
  %v4404 = vrot.slane %v3252, 2
  %v4405 = vsel %vm3342, %v4404, %v4403
  %v4406 = vrot.slane %v3255, 1
  %v4407 = vsel %vm3345, %v4406, %v4405
  %v4408 = vsel %vm3348, %v3258, %v4407
  %v4409 = vrot.slane %v3261, 7
  %v4410 = vsel %vm3351, %v4409, %v4408
  %v4411 = vsel %vm3375, %v4396, 0
  %v4413 = vsel %vm3375, %v4410, 0
  %4415 = vmatpush.xpose.msra.mxu0 0.0
  %4416 = vmatpush.xpose.msra.mxu0 0.0
  %4417 = vmatpush.xpose.msra.mxu0 0.0
  %4418 = vmatpush.xpose.msra.mxu0 0.0
  %4419 = vmatpush.xpose.msra.mxu0 0.0
  %4420 = vmatpush.xpose.msra.mxu0 0.0
  %4421 = vmatpush.xpose.msra.mxu0 0.0
  %4422 = vmatpush.xpose.msra.mxu0 0.0
  %4423 = vmatpush.xpose.msra.mxu0 0.0
  %4424 = vmatpush.xpose.msra.mxu0 0.0
  %4425 = vmatpush.xpose.msra.mxu0 0.0
  %4426 = vmatpush.xpose.msra.mxu0 0.0
  %4427 = vmatpush.xpose.msra.mxu0 0.0
  %4428 = vmatpush.xpose.msra.mxu0 0.0
  %4429 = vmatpush.xpose.msra.mxu0 0.0
  %4430 = vmatpush.xpose.msra.mxu0 %v4413
  %4431 = vmatmul.f32.gmra.mxu0 %v4411
  %v4432 = vpop.f32.mrf.mxu0
  %v4433 = vadd.f32 0.0, %v4432
  %4434 = vdwg.mxu0
  %v4435 = vsel %vm3400, %v4433, -inf
  %4436 = vmax.xlane.f32.xlu0 %v4435
  %v4437 = vpop.xlane.xlu0 %4436
  %v4438 = vsub.f32 %v4433, %v4437
  %v4439 = vmul.f32 %v4438, 1.442695
  %v4440 = vpow.pop %v4439
  %v4441 = vsel %vm3400, %v4440, 0.0
  %4442 = vadd.xlane.f32.xlu0 %v4441
  %v4443 = vpop.xlane.xlu0 %4442
  %v4444 = vrcp.pop %v4443
  %v4445 = vmul.f32 %v4440, %v4444
  %v4446 = vrot.slane %v3293, 6
  %v4447 = vrot.slane %v3296, 5
  %v4448 = vsel %vm3333, %v4447, %v4446
  %v4449 = vrot.slane %v3299, 4
  %v4450 = vsel %vm3336, %v4449, %v4448
  %v4451 = vrot.slane %v3302, 3
  %v4452 = vsel %vm3339, %v4451, %v4450
  %v4453 = vrot.slane %v3305, 2
  %v4454 = vsel %vm3342, %v4453, %v4452
  %v4455 = vrot.slane %v3308, 1
  %v4456 = vsel %vm3345, %v4455, %v4454
  %v4457 = vsel %vm3348, %v3311, %v4456
  %v4458 = vrot.slane %v3314, 7
  %v4459 = vsel %vm3351, %v4458, %v4457
  %v4462 = vsel %vm3400, %v4445, 0
  %4464 = vmatpush.msra.mxu0 0.0
  %4465 = vmatpush.msra.mxu0 0.0
  %4466 = vmatpush.msra.mxu0 0.0
  %4467 = vmatpush.msra.mxu0 0.0
  %4468 = vmatpush.msra.mxu0 0.0
  %4469 = vmatpush.msra.mxu0 0.0
  %4470 = vmatpush.msra.mxu0 0.0
  %4471 = vmatpush.msra.mxu0 0.0
  %4472 = vmatpush.msra.mxu0 0.0
  %4473 = vmatpush.msra.mxu0 0.0
  %4474 = vmatpush.msra.mxu0 0.0
  %4475 = vmatpush.msra.mxu0 0.0
  %4476 = vmatpush.msra.mxu0 0.0
  %4477 = vmatpush.msra.mxu0 0.0
  %4478 = vmatpush.msra.mxu0 0.0
  %4479 = vmatpush.msra.mxu0 %v4459
  %4480 = vmatmul.f32.gmra.mxu0 %v4462
  %v4481 = vpop.f32.mrf.mxu0
  %v4482 = vadd.f32 0.0, %v4481
  %4483 = vdwg.mxu0
  %4484 = vrot.lane.b32.xlu0 %v4396, 96
  %v4485 = vpop.permute.xlu0 %4484
  %4486 = vrot.lane.b32.xlu0 %v4410, 96
  %v4487 = vpop.permute.xlu0 %4486
  %v4488 = vsel %vm3375, %v4485, 0
  %v4490 = vsel %vm3375, %v4487, 0
  %4492 = vmatpush.xpose.msra.mxu0 0.0
  %4493 = vmatpush.xpose.msra.mxu0 0.0
  %4494 = vmatpush.xpose.msra.mxu0 0.0
  %4495 = vmatpush.xpose.msra.mxu0 0.0
  %4496 = vmatpush.xpose.msra.mxu0 0.0
  %4497 = vmatpush.xpose.msra.mxu0 0.0
  %4498 = vmatpush.xpose.msra.mxu0 0.0
  %4499 = vmatpush.xpose.msra.mxu0 0.0
  %4500 = vmatpush.xpose.msra.mxu0 0.0
  %4501 = vmatpush.xpose.msra.mxu0 0.0
  %4502 = vmatpush.xpose.msra.mxu0 0.0
  %4503 = vmatpush.xpose.msra.mxu0 0.0
  %4504 = vmatpush.xpose.msra.mxu0 0.0
  %4505 = vmatpush.xpose.msra.mxu0 0.0
  %4506 = vmatpush.xpose.msra.mxu0 0.0
  %4507 = vmatpush.xpose.msra.mxu0 %v4490
  %4508 = vmatmul.f32.gmra.mxu0 %v4488
  %v4509 = vpop.f32.mrf.mxu0
  %v4510 = vadd.f32 0.0, %v4509
  %4511 = vdwg.mxu0
  %v4512 = vsel %vm3400, %v4510, -inf
  %4513 = vmax.xlane.f32.xlu0 %v4512
  %v4514 = vpop.xlane.xlu0 %4513
  %v4515 = vsub.f32 %v4510, %v4514
  %v4516 = vmul.f32 %v4515, 1.442695
  %v4517 = vpow.pop %v4516
  %v4518 = vsel %vm3400, %v4517, 0.0
  %4519 = vadd.xlane.f32.xlu0 %v4518
  %v4520 = vpop.xlane.xlu0 %4519
  %v4521 = vrcp.pop %v4520
  %v4522 = vmul.f32 %v4517, %v4521
  %4523 = vrot.lane.b32.xlu0 %v4459, 96
  %v4524 = vpop.permute.xlu0 %4523
  %v4527 = vsel %vm3400, %v4522, 0
  %4529 = vmatpush.msra.mxu0 0.0
  %4530 = vmatpush.msra.mxu0 0.0
  %4531 = vmatpush.msra.mxu0 0.0
  %4532 = vmatpush.msra.mxu0 0.0
  %4533 = vmatpush.msra.mxu0 0.0
  %4534 = vmatpush.msra.mxu0 0.0
  %4535 = vmatpush.msra.mxu0 0.0
  %4536 = vmatpush.msra.mxu0 0.0
  %4537 = vmatpush.msra.mxu0 0.0
  %4538 = vmatpush.msra.mxu0 0.0
  %4539 = vmatpush.msra.mxu0 0.0
  %4540 = vmatpush.msra.mxu0 0.0
  %4541 = vmatpush.msra.mxu0 0.0
  %4542 = vmatpush.msra.mxu0 0.0
  %4543 = vmatpush.msra.mxu0 0.0
  %4544 = vmatpush.msra.mxu0 %v4524
  %4545 = vmatmul.f32.gmra.mxu0 %v4527
  %v4546 = vpop.f32.mrf.mxu0
  %v4547 = vadd.f32 0.0, %v4546
  %4548 = vdwg.mxu0
  %4550 = vrot.lane.b32.xlu0 %v4547, 32
  %v4551 = vpop.permute.xlu0 %4550
  %v4553 = vsel %vm3375, %v4482, %v4551
  %v4554 = vrot.slane %v3316, 7
  %v4555 = vrot.slane %v3317, 6
  %v4556 = vsel %vm3333, %v4555, %v4554
  %v4557 = vrot.slane %v3318, 5
  %v4558 = vsel %vm3336, %v4557, %v4556
  %v4559 = vrot.slane %v3319, 4
  %v4560 = vsel %vm3339, %v4559, %v4558
  %v4561 = vrot.slane %v3320, 3
  %v4562 = vsel %vm3342, %v4561, %v4560
  %v4563 = vrot.slane %v3321, 2
  %v4564 = vsel %vm3345, %v4563, %v4562
  %v4565 = vrot.slane %v3322, 1
  %v4566 = vsel %vm3348, %v4565, %v4564
  %v4567 = vsel %vm3351, %v3323, %v4566
  %v4568 = vrot.slane %v3240, 7
  %v4569 = vrot.slane %v3243, 6
  %v4570 = vsel %vm3333, %v4569, %v4568
  %v4571 = vrot.slane %v3246, 5
  %v4572 = vsel %vm3336, %v4571, %v4570
  %v4573 = vrot.slane %v3249, 4
  %v4574 = vsel %vm3339, %v4573, %v4572
  %v4575 = vrot.slane %v3252, 3
  %v4576 = vsel %vm3342, %v4575, %v4574
  %v4577 = vrot.slane %v3255, 2
  %v4578 = vsel %vm3345, %v4577, %v4576
  %v4579 = vrot.slane %v3258, 1
  %v4580 = vsel %vm3348, %v4579, %v4578
  %v4581 = vsel %vm3351, %v3261, %v4580
  %v4582 = vsel %vm3375, %v4567, 0
  %v4584 = vsel %vm3375, %v4581, 0
  %4586 = vmatpush.xpose.msra.mxu0 0.0
  %4587 = vmatpush.xpose.msra.mxu0 0.0
  %4588 = vmatpush.xpose.msra.mxu0 0.0
  %4589 = vmatpush.xpose.msra.mxu0 0.0
  %4590 = vmatpush.xpose.msra.mxu0 0.0
  %4591 = vmatpush.xpose.msra.mxu0 0.0
  %4592 = vmatpush.xpose.msra.mxu0 0.0
  %4593 = vmatpush.xpose.msra.mxu0 0.0
  %4594 = vmatpush.xpose.msra.mxu0 0.0
  %4595 = vmatpush.xpose.msra.mxu0 0.0
  %4596 = vmatpush.xpose.msra.mxu0 0.0
  %4597 = vmatpush.xpose.msra.mxu0 0.0
  %4598 = vmatpush.xpose.msra.mxu0 0.0
  %4599 = vmatpush.xpose.msra.mxu0 0.0
  %4600 = vmatpush.xpose.msra.mxu0 0.0
  %4601 = vmatpush.xpose.msra.mxu0 %v4584
  %4602 = vmatmul.f32.gmra.mxu0 %v4582
  %v4603 = vpop.f32.mrf.mxu0
  %v4604 = vadd.f32 0.0, %v4603
  %4605 = vdwg.mxu0
  %v4606 = vsel %vm3400, %v4604, -inf
  %4607 = vmax.xlane.f32.xlu0 %v4606
  %v4608 = vpop.xlane.xlu0 %4607
  %v4609 = vsub.f32 %v4604, %v4608
  %v4610 = vmul.f32 %v4609, 1.442695
  %v4611 = vpow.pop %v4610
  %v4612 = vsel %vm3400, %v4611, 0.0
  %4613 = vadd.xlane.f32.xlu0 %v4612
  %v4614 = vpop.xlane.xlu0 %4613
  %v4615 = vrcp.pop %v4614
  %v4616 = vmul.f32 %v4611, %v4615
  %v4617 = vrot.slane %v3293, 7
  %v4618 = vrot.slane %v3296, 6
  %v4619 = vsel %vm3333, %v4618, %v4617
  %v4620 = vrot.slane %v3299, 5
  %v4621 = vsel %vm3336, %v4620, %v4619
  %v4622 = vrot.slane %v3302, 4
  %v4623 = vsel %vm3339, %v4622, %v4621
  %v4624 = vrot.slane %v3305, 3
  %v4625 = vsel %vm3342, %v4624, %v4623
  %v4626 = vrot.slane %v3308, 2
  %v4627 = vsel %vm3345, %v4626, %v4625
  %v4628 = vrot.slane %v3311, 1
  %v4629 = vsel %vm3348, %v4628, %v4627
  %v4630 = vsel %vm3351, %v3314, %v4629
  %v4633 = vsel %vm3400, %v4616, 0
  %4635 = vmatpush.msra.mxu0 0.0
  %4636 = vmatpush.msra.mxu0 0.0
  %4637 = vmatpush.msra.mxu0 0.0
  %4638 = vmatpush.msra.mxu0 0.0
  %4639 = vmatpush.msra.mxu0 0.0
  %4640 = vmatpush.msra.mxu0 0.0
  %4641 = vmatpush.msra.mxu0 0.0
  %4642 = vmatpush.msra.mxu0 0.0
  %4643 = vmatpush.msra.mxu0 0.0
  %4644 = vmatpush.msra.mxu0 0.0
  %4645 = vmatpush.msra.mxu0 0.0
  %4646 = vmatpush.msra.mxu0 0.0
  %4647 = vmatpush.msra.mxu0 0.0
  %4648 = vmatpush.msra.mxu0 0.0
  %4649 = vmatpush.msra.mxu0 0.0
  %4650 = vmatpush.msra.mxu0 %v4630
  %4651 = vmatmul.f32.gmra.mxu0 %v4633
  %v4652 = vpop.f32.mrf.mxu0
  %v4653 = vadd.f32 0.0, %v4652
  %4654 = vdwg.mxu0
  %4655 = vrot.lane.b32.xlu0 %v4567, 96
  %v4656 = vpop.permute.xlu0 %4655
  %4657 = vrot.lane.b32.xlu0 %v4581, 96
  %v4658 = vpop.permute.xlu0 %4657
  %v4659 = vsel %vm3375, %v4656, 0
  %v4661 = vsel %vm3375, %v4658, 0
  %4663 = vmatpush.xpose.msra.mxu0 0.0
  %4664 = vmatpush.xpose.msra.mxu0 0.0
  %4665 = vmatpush.xpose.msra.mxu0 0.0
  %4666 = vmatpush.xpose.msra.mxu0 0.0
  %4667 = vmatpush.xpose.msra.mxu0 0.0
  %4668 = vmatpush.xpose.msra.mxu0 0.0
  %4669 = vmatpush.xpose.msra.mxu0 0.0
  %4670 = vmatpush.xpose.msra.mxu0 0.0
  %4671 = vmatpush.xpose.msra.mxu0 0.0
  %4672 = vmatpush.xpose.msra.mxu0 0.0
  %4673 = vmatpush.xpose.msra.mxu0 0.0
  %4674 = vmatpush.xpose.msra.mxu0 0.0
  %4675 = vmatpush.xpose.msra.mxu0 0.0
  %4676 = vmatpush.xpose.msra.mxu0 0.0
  %4677 = vmatpush.xpose.msra.mxu0 0.0
  %4678 = vmatpush.xpose.msra.mxu0 %v4661
  %4679 = vmatmul.f32.gmra.mxu0 %v4659
  %v4680 = vpop.f32.mrf.mxu0
  %v4681 = vadd.f32 0.0, %v4680
  %4682 = vdwg.mxu0
  %v4683 = vsel %vm3400, %v4681, -inf
  %4684 = vmax.xlane.f32.xlu0 %v4683
  %v4685 = vpop.xlane.xlu0 %4684
  %v4686 = vsub.f32 %v4681, %v4685
  %v4687 = vmul.f32 %v4686, 1.442695
  %v4688 = vpow.pop %v4687
  %v4689 = vsel %vm3400, %v4688, 0.0
  %4690 = vadd.xlane.f32.xlu0 %v4689
  %v4691 = vpop.xlane.xlu0 %4690
  %v4692 = vrcp.pop %v4691
  %v4693 = vmul.f32 %v4688, %v4692
  %4694 = vrot.lane.b32.xlu0 %v4630, 96
  %v4695 = vpop.permute.xlu0 %4694
  %v4698 = vsel %vm3400, %v4693, 0
  %4700 = vmatpush.msra.mxu0 0.0
  %4701 = vmatpush.msra.mxu0 0.0
  %4702 = vmatpush.msra.mxu0 0.0
  %4703 = vmatpush.msra.mxu0 0.0
  %4704 = vmatpush.msra.mxu0 0.0
  %4705 = vmatpush.msra.mxu0 0.0
  %4706 = vmatpush.msra.mxu0 0.0
  %4707 = vmatpush.msra.mxu0 0.0
  %4708 = vmatpush.msra.mxu0 0.0
  %4709 = vmatpush.msra.mxu0 0.0
  %4710 = vmatpush.msra.mxu0 0.0
  %4711 = vmatpush.msra.mxu0 0.0
  %4712 = vmatpush.msra.mxu0 0.0
  %4713 = vmatpush.msra.mxu0 0.0
  %4714 = vmatpush.msra.mxu0 0.0
  %4715 = vmatpush.msra.mxu0 %v4695
  %4716 = vmatmul.f32.gmra.mxu0 %v4698
  %v4717 = vpop.f32.mrf.mxu0
  %v4718 = vadd.f32 0.0, %v4717
  %4719 = vdwg.mxu0
  %4721 = vrot.lane.b32.xlu0 %v4718, 32
  %v4722 = vpop.permute.xlu0 %4721
  %v4724 = vsel %vm3375, %v4653, %v4722
  %v4725 = vld [vmem:[%s8] sm:$0xff]
  %v4726 = vld [vmem:[%s8 + $0x8] sm:$0xff]
  %v4727 = vld [vmem:[%s8 + $0x10] sm:$0xff]
  %v4728 = vld [vmem:[%s8 + $0x18] sm:$0xff]
  %v4729 = vld [vmem:[%s8 + $0x20] sm:$0xff]
  %v4730 = vld [vmem:[%s8 + $0x28] sm:$0xff]
  %v4731 = vld [vmem:[%s8 + $0x30] sm:$0xff]
  %v4732 = vld [vmem:[%s8 + $0x38] sm:$0xff]
  %v4733 = vld [vmem:[%s12] sm:$0x1]
  %v4735 = vperm.slane %v4733, 0
  %v4738 = vsel %vm3026, %v3527, 0
  %v4741 = vsel %vm3026, %v3698, 0
  %v4744 = vsel %vm3026, %v3869, 0
  %v4747 = vsel %vm3026, %v4040, 0
  %v4750 = vsel %vm3026, %v4211, 0
  %v4753 = vsel %vm3026, %v4382, 0
  %v4756 = vsel %vm3026, %v4553, 0
  %v4759 = vsel %vm3026, %v4724, 0
  %4761 = vmatpush.msra.mxu0 0.0
  %4762 = vmatpush.msra.mxu0 0.0
  %4763 = vmatpush.msra.mxu0 0.0
  %4764 = vmatpush.msra.mxu0 0.0
  %4765 = vmatpush.msra.mxu0 0.0
  %4766 = vmatpush.msra.mxu0 0.0
  %4767 = vmatpush.msra.mxu0 0.0
  %4768 = vmatpush.msra.mxu0 0.0
  %4769 = vmatpush.msra.mxu0 %v4732
  %4770 = vmatpush.msra.mxu0 %v4731
  %4771 = vmatpush.msra.mxu0 %v4730
  %4772 = vmatpush.msra.mxu0 %v4729
  %4773 = vmatpush.msra.mxu0 %v4728
  %4774 = vmatpush.msra.mxu0 %v4727
  %4775 = vmatpush.msra.mxu0 %v4726
  %4776 = vmatpush.msra.mxu0 %v4725
  %4777 = vmatmul.f32.gmra.mxu0 %v4738
  %v4778 = vpop.f32.mrf.mxu0
  %v4779 = vadd.f32 %v4735, %v4778
  %4780 = vmatmul.f32.gmra.mxu0 %v4741
  %v4781 = vpop.f32.mrf.mxu0
  %v4782 = vadd.f32 %v4735, %v4781
  %4783 = vmatmul.f32.gmra.mxu0 %v4744
  %v4784 = vpop.f32.mrf.mxu0
  %v4785 = vadd.f32 %v4735, %v4784
  %4786 = vmatmul.f32.gmra.mxu0 %v4747
  %v4787 = vpop.f32.mrf.mxu0
  %v4788 = vadd.f32 %v4735, %v4787
  %4789 = vmatmul.f32.gmra.mxu0 %v4750
  %v4790 = vpop.f32.mrf.mxu0
  %v4791 = vadd.f32 %v4735, %v4790
  %4792 = vmatmul.f32.gmra.mxu0 %v4753
  %v4793 = vpop.f32.mrf.mxu0
  %v4794 = vadd.f32 %v4735, %v4793
  %4795 = vmatmul.f32.gmra.mxu0 %v4756
  %v4796 = vpop.f32.mrf.mxu0
  %v4797 = vadd.f32 %v4735, %v4796
  %4798 = vmatmul.f32.gmra.mxu0 %v4759
  %v4799 = vpop.f32.mrf.mxu0
  %v4800 = vadd.f32 %v4735, %v4799
  %4801 = vdwg.mxu0
  %v4802 = vsel %vm3026, %v4779, 0.0
  %4803 = vadd.xlane.f32.xlu0 %v4802
  %v4804 = vpop.xlane.xlu0 %4803
  %v4805 = vsel %vm3026, %v4782, 0.0
  %4806 = vadd.xlane.f32.xlu0 %v4805
  %v4807 = vpop.xlane.xlu0 %4806
  %v4808 = vsel %vm3026, %v4785, 0.0
  %4809 = vadd.xlane.f32.xlu0 %v4808
  %v4810 = vpop.xlane.xlu0 %4809
  %v4811 = vsel %vm3026, %v4788, 0.0
  %4812 = vadd.xlane.f32.xlu0 %v4811
  %v4813 = vpop.xlane.xlu0 %4812
  %v4814 = vsel %vm3026, %v4791, 0.0
  %4815 = vadd.xlane.f32.xlu0 %v4814
  %v4816 = vpop.xlane.xlu0 %4815
  %v4817 = vsel %vm3026, %v4794, 0.0
  %4818 = vadd.xlane.f32.xlu0 %v4817
  %v4819 = vpop.xlane.xlu0 %4818
  %v4820 = vsel %vm3026, %v4797, 0.0
  %4821 = vadd.xlane.f32.xlu0 %v4820
  %v4822 = vpop.xlane.xlu0 %4821
  %v4823 = vsel %vm3026, %v4800, 0.0
  %4824 = vadd.xlane.f32.xlu0 %v4823
  %v4825 = vpop.xlane.xlu0 %4824
  %v4826 = vrcp.pop 64.0
  %v4827 = vmul.f32 64.0, %v4826
  %v4828 = vsub.f32 1.0, %v4827
  %v4829 = vmul.f32 %v4826, %v4828
  %v4830 = vadd.f32 %v4826, %v4829
  %vm4831 = vweird.f32 %v4826
  %v4832 = vsel %vm4831, %v4826, %v4830
  %v4833 = vmul.f32 %v4804, %v4832
  %v4834 = vmul.f32 %v4807, %v4832
  %v4835 = vmul.f32 %v4810, %v4832
  %v4836 = vmul.f32 %v4813, %v4832
  %v4837 = vmul.f32 %v4816, %v4832
  %v4838 = vmul.f32 %v4819, %v4832
  %v4839 = vmul.f32 %v4822, %v4832
  %v4840 = vmul.f32 %v4825, %v4832
  %v4841 = vsub.f32 %v4779, %v4833
  %v4842 = vsub.f32 %v4782, %v4834
  %v4843 = vsub.f32 %v4785, %v4835
  %v4844 = vsub.f32 %v4788, %v4836
  %v4845 = vsub.f32 %v4791, %v4837
  %v4846 = vsub.f32 %v4794, %v4838
  %v4847 = vsub.f32 %v4797, %v4839
  %v4848 = vsub.f32 %v4800, %v4840
  %v4849 = vmul.f32 %v4841, %v4841
  %v4850 = vmul.f32 %v4842, %v4842
  %v4851 = vmul.f32 %v4843, %v4843
  %v4852 = vmul.f32 %v4844, %v4844
  %v4853 = vmul.f32 %v4845, %v4845
  %v4854 = vmul.f32 %v4846, %v4846
  %v4855 = vmul.f32 %v4847, %v4847
  %v4856 = vmul.f32 %v4848, %v4848
  %v4857 = vsel %vm3026, %v4849, 0.0
  %4858 = vadd.xlane.f32.xlu0 %v4857
  %v4859 = vpop.xlane.xlu0 %4858
  %v4860 = vsel %vm3026, %v4850, 0.0
  %4861 = vadd.xlane.f32.xlu0 %v4860
  %v4862 = vpop.xlane.xlu0 %4861
  %v4863 = vsel %vm3026, %v4851, 0.0
  %4864 = vadd.xlane.f32.xlu0 %v4863
  %v4865 = vpop.xlane.xlu0 %4864
  %v4866 = vsel %vm3026, %v4852, 0.0
  %4867 = vadd.xlane.f32.xlu0 %v4866
  %v4868 = vpop.xlane.xlu0 %4867
  %v4869 = vsel %vm3026, %v4853, 0.0
  %4870 = vadd.xlane.f32.xlu0 %v4869
  %v4871 = vpop.xlane.xlu0 %4870
  %v4872 = vsel %vm3026, %v4854, 0.0
  %4873 = vadd.xlane.f32.xlu0 %v4872
  %v4874 = vpop.xlane.xlu0 %4873
  %v4875 = vsel %vm3026, %v4855, 0.0
  %4876 = vadd.xlane.f32.xlu0 %v4875
  %v4877 = vpop.xlane.xlu0 %4876
  %v4878 = vsel %vm3026, %v4856, 0.0
  %4879 = vadd.xlane.f32.xlu0 %v4878
  %v4880 = vpop.xlane.xlu0 %4879
  %v4881 = vmul.f32 %v4859, %v4832
  %v4882 = vmul.f32 %v4862, %v4832
  %v4883 = vmul.f32 %v4865, %v4832
  %v4884 = vmul.f32 %v4868, %v4832
  %v4885 = vmul.f32 %v4871, %v4832
  %v4886 = vmul.f32 %v4874, %v4832
  %v4887 = vmul.f32 %v4877, %v4832
  %v4888 = vmul.f32 %v4880, %v4832
  %v4889 = vadd.f32 %v4881, 1e-05
  %v4890 = vadd.f32 %v4882, 1e-05
  %v4891 = vadd.f32 %v4883, 1e-05
  %v4892 = vadd.f32 %v4884, 1e-05
  %v4893 = vadd.f32 %v4885, 1e-05
  %v4894 = vadd.f32 %v4886, 1e-05
  %v4895 = vadd.f32 %v4887, 1e-05
  %v4896 = vadd.f32 %v4888, 1e-05
  %v4897 = vrsqrt.pop %v4889
  %v4898 = vmul.f32 %v4897, %v4889
  %v4899 = vmul.f32 %v4898, %v4897
  %v4900 = vmul.f32 0.5, %v4899
  %v4901 = vsub.f32 1.5, %v4900
  %v4902 = vmul.f32 %v4897, %v4901
  %vm4903 = vweird.f32 %v4889
  %vm4904 = vweird.f32 %v4897
  %vm4905 = vmor %vm4903, %vm4904
  %v4906 = vsel %vm4905, %v4897, %v4902
  %v4907 = vrsqrt.pop %v4890
  %v4908 = vmul.f32 %v4907, %v4890
  %v4909 = vmul.f32 %v4908, %v4907
  %v4910 = vmul.f32 0.5, %v4909
  %v4911 = vsub.f32 1.5, %v4910
  %v4912 = vmul.f32 %v4907, %v4911
  %vm4913 = vweird.f32 %v4890
  %vm4914 = vweird.f32 %v4907
  %vm4915 = vmor %vm4913, %vm4914
  %v4916 = vsel %vm4915, %v4907, %v4912
  %v4917 = vrsqrt.pop %v4891
  %v4918 = vmul.f32 %v4917, %v4891
  %v4919 = vmul.f32 %v4918, %v4917
  %v4920 = vmul.f32 0.5, %v4919
  %v4921 = vsub.f32 1.5, %v4920
  %v4922 = vmul.f32 %v4917, %v4921
  %vm4923 = vweird.f32 %v4891
  %vm4924 = vweird.f32 %v4917
  %vm4925 = vmor %vm4923, %vm4924
  %v4926 = vsel %vm4925, %v4917, %v4922
  %v4927 = vrsqrt.pop %v4892
  %v4928 = vmul.f32 %v4927, %v4892
  %v4929 = vmul.f32 %v4928, %v4927
  %v4930 = vmul.f32 0.5, %v4929
  %v4931 = vsub.f32 1.5, %v4930
  %v4932 = vmul.f32 %v4927, %v4931
  %vm4933 = vweird.f32 %v4892
  %vm4934 = vweird.f32 %v4927
  %vm4935 = vmor %vm4933, %vm4934
  %v4936 = vsel %vm4935, %v4927, %v4932
  %v4937 = vrsqrt.pop %v4893
  %v4938 = vmul.f32 %v4937, %v4893
  %v4939 = vmul.f32 %v4938, %v4937
  %v4940 = vmul.f32 0.5, %v4939
  %v4941 = vsub.f32 1.5, %v4940
  %v4942 = vmul.f32 %v4937, %v4941
  %vm4943 = vweird.f32 %v4893
  %vm4944 = vweird.f32 %v4937
  %vm4945 = vmor %vm4943, %vm4944
  %v4946 = vsel %vm4945, %v4937, %v4942
  %v4947 = vrsqrt.pop %v4894
  %v4948 = vmul.f32 %v4947, %v4894
  %v4949 = vmul.f32 %v4948, %v4947
  %v4950 = vmul.f32 0.5, %v4949
  %v4951 = vsub.f32 1.5, %v4950
  %v4952 = vmul.f32 %v4947, %v4951
  %vm4953 = vweird.f32 %v4894
  %vm4954 = vweird.f32 %v4947
  %vm4955 = vmor %vm4953, %vm4954
  %v4956 = vsel %vm4955, %v4947, %v4952
  %v4957 = vrsqrt.pop %v4895
  %v4958 = vmul.f32 %v4957, %v4895
  %v4959 = vmul.f32 %v4958, %v4957
  %v4960 = vmul.f32 0.5, %v4959
  %v4961 = vsub.f32 1.5, %v4960
  %v4962 = vmul.f32 %v4957, %v4961
  %vm4963 = vweird.f32 %v4895
  %vm4964 = vweird.f32 %v4957
  %vm4965 = vmor %vm4963, %vm4964
  %v4966 = vsel %vm4965, %v4957, %v4962
  %v4967 = vrsqrt.pop %v4896
  %v4968 = vmul.f32 %v4967, %v4896
  %v4969 = vmul.f32 %v4968, %v4967
  %v4970 = vmul.f32 0.5, %v4969
  %v4971 = vsub.f32 1.5, %v4970
  %v4972 = vmul.f32 %v4967, %v4971
  %vm4973 = vweird.f32 %v4896
  %vm4974 = vweird.f32 %v4967
  %vm4975 = vmor %vm4973, %vm4974
  %v4976 = vsel %vm4975, %v4967, %v4972
  %v4977 = vmul.f32 %v4841, %v4906
  %v4978 = vmul.f32 %v4842, %v4916
  %v4979 = vmul.f32 %v4843, %v4926
  %v4980 = vmul.f32 %v4844, %v4936
  %v4981 = vmul.f32 %v4845, %v4946
  %v4982 = vmul.f32 %v4846, %v4956
  %v4983 = vmul.f32 %v4847, %v4966
  %v4984 = vmul.f32 %v4848, %v4976
  %v4985 = vld [vmem:[%s13] sm:$0x1]
  %v4987 = vperm.slane %v4985, 0
  %v4989 = vmul.f32 %v4977, %v4987
  %v4990 = vmul.f32 %v4978, %v4987
  %v4991 = vmul.f32 %v4979, %v4987
  %v4992 = vmul.f32 %v4980, %v4987
  %v4993 = vmul.f32 %v4981, %v4987
  %v4994 = vmul.f32 %v4982, %v4987
  %v4995 = vmul.f32 %v4983, %v4987
  %v4996 = vmul.f32 %v4984, %v4987
  %v4997 = vld [vmem:[%s14] sm:$0x1]
  %v4999 = vperm.slane %v4997, 0
  %v5001 = vadd.f32 %v4989, %v4999
  %v5002 = vadd.f32 %v4990, %v4999
  %v5003 = vadd.f32 %v4991, %v4999
  %v5004 = vadd.f32 %v4992, %v4999
  %v5005 = vadd.f32 %v4993, %v4999
  %v5006 = vadd.f32 %v4994, %v4999
  %v5007 = vadd.f32 %v4995, %v4999
  %v5008 = vadd.f32 %v4996, %v4999
  %v5009 = vsel %vm3026, %v5001, 0.0
  %v5010 = vsel %vm3026, %v5002, 0.0
  %v5011 = vsel %vm3026, %v5003, 0.0
  %v5012 = vsel %vm3026, %v5004, 0.0
  %v5013 = vsel %vm3026, %v5005, 0.0
  %v5014 = vsel %vm3026, %v5006, 0.0
  %v5015 = vsel %vm3026, %v5007, 0.0
  %v5016 = vsel %vm3026, %v5008, 0.0
  %5017 = vst [vmem:[%s15] sm:$0xff] %v5009
  %5018 = vst [vmem:[%s15 + $0x8] sm:$0xff] %v5010
  %5019 = vst [vmem:[%s15 + $0x10] sm:$0xff] %v5011
  %5020 = vst [vmem:[%s15 + $0x18] sm:$0xff] %v5012
  %5021 = vst [vmem:[%s15 + $0x20] sm:$0xff] %v5013
  %5022 = vst [vmem:[%s15 + $0x28] sm:$0xff] %v5014
  %5023 = vst [vmem:[%s15 + $0x30] sm:$0xff] %v5015
  %5024 = vst [vmem:[%s15 + $0x38] sm:$0xff] %v5016
  // Predicated region
  $region62: #{bert_seq_tagger_forward.4} parent=0 // pred_check
    _
  $region63: #{bert_seq_tagger_forward.4} parent=0 // pred_check_branch
    %5026 = sbr.rel (0) target = $region65
  $region64: #{bert_seq_tagger_forward.4} parent=0 // pred_region
    _
  $region65: #{bert_seq_tagger_forward.4} parent=0 // pred_fallthru
    _
  // Predicated region
  $region66: #{bert_seq_tagger_forward.4} parent=0 // pred_check
    _
  $region67: #{bert_seq_tagger_forward.4} parent=0 // pred_check_branch
    %5028 = sbr.rel (0) target = $region69
  $region68: #{bert_seq_tagger_forward.4} parent=0 // pred_region
    _
  $region69: #{bert_seq_tagger_forward.4} parent=0 // pred_fallthru
    _

// kernel: bert_seq_tagger_forward.3
$region0: #{bert_seq_tagger_forward.3}
  #allocation0 [shape = 'u32[]', space=smem, size = 0x4, offset = 0x4, fixed_abs, tag = 'smem constant byte address 0x4 - core index']
  #allocation1 [shape = 'u32[72,128]{1,0:T(1,128)}', space=vmem, size = 0x9000, scoped, tag = 'internal scratch']
  #allocation2 [shape = 'bf16[8,8,384]{2,1,0:T(8,128)(2,1)}', space=vmem, size = 0xc000, scoped, tag = 'scratch operand']
  #allocation3 [shape = 'bf16[8,8,384]{2,1,0:T(8,128)(2,1)}', space=vmem, size = 0xc000, scoped, tag = 'scratch operand']
  #allocation4 [shape = 'f32[8,8,128]{2,1,0:T(8,128)}', space=vmem, size = 0x8000, scoped, tag = 'scratch operand']
  #allocation5 [shape = 'f32[8,8,128]{2,1,0:T(8,128)}', space=vmem, size = 0x8000, scoped, tag = 'scratch operand']
  %s0 = inlined_call_operand.vmem [shape: bf16[8,8,768], index: 0, kind: input, shape index: {}]
  %s1 = inlined_call_operand.vmem [shape: bf16[768,768], index: 1, kind: input, shape index: {}]
  %s2 = inlined_call_operand.vmem [shape: f32[1,768], index: 2, kind: input, shape index: {}]
  %s3 = inlined_call_operand.vmem [shape: f32[2,128,384], index: 3, kind: input, shape index: {}]
  %s4 = inlined_call_operand.vmem [shape: f32[2,1,384], index: 4, kind: input, shape index: {}]
  %s5 = inlined_call_operand.vmem [shape: f32[256,128], index: 5, kind: input, shape index: {}]
  %s6 = inlined_call_operand.vmem [shape: f32[1,128], index: 6, kind: input, shape index: {}]
  %s7 = inlined_call_operand.vmem [shape: f32[128,128], index: 7, kind: input, shape index: {}]
  %s8 = inlined_call_operand.vmem [shape: f32[128,128], index: 8, kind: input, shape index: {}]
  %s9 = inlined_call_operand.vmem [shape: f32[128,128], index: 9, kind: input, shape index: {}]
  %s10 = inlined_call_operand.vmem [shape: f32[128,128], index: 10, kind: input, shape index: {}]
  %s11 = inlined_call_operand.vmem [shape: f32[1,128], index: 11, kind: input, shape index: {}]
  %s12 = inlined_call_operand.vmem [shape: f32[1,128], index: 12, kind: input, shape index: {}]
  %s13 = inlined_call_operand.vmem [shape: f32[1,128], index: 13, kind: input, shape index: {}]
  %s14 = inlined_call_operand.vmem [shape: f32[1,128], index: 14, kind: input, shape index: {}]
  %s15 = inlined_call_operand.vmem [shape: f32[1,128], index: 15, kind: input, shape index: {}]
  %s16 = inlined_call_operand.vmem [shape: f32[1,128], index: 16, kind: input, shape index: {}]
  %s17 = inlined_call_operand.vmem [shape: f32[8,8,128], index: 17, kind: output, shape index: {}]
  %s18 = sld [smem:[#allocation0]]
  $region85: #{bert_seq_tagger_forward.3} parent=0
    _
  %s20 = ssub.s32 1, %s18
  %s21 = scalar_select 0, %s20, %s18
  // Predicated region
  $region2: #{bert_seq_tagger_forward.3} parent=0 // pred_check
    _
  $region3: #{bert_seq_tagger_forward.3} parent=0 // pred_check_branch
    %23 = sbr.rel (0) target = $region5
  $region4: #{bert_seq_tagger_forward.3} parent=0 // pred_region
    _
  $region5: #{bert_seq_tagger_forward.3} parent=0 // pred_fallthru
    _
  // Predicated region
  $region6: #{bert_seq_tagger_forward.3} parent=0 // pred_check
    _
  $region7: #{bert_seq_tagger_forward.3} parent=0 // pred_check_branch
    %25 = sbr.rel (0) target = $region9
  $region8: #{bert_seq_tagger_forward.3} parent=0 // pred_region
    _
  $region9: #{bert_seq_tagger_forward.3} parent=0 // pred_fallthru
    _
  // Predicated region
  $region10: #{bert_seq_tagger_forward.3} parent=0 // pred_check
    _
  $region11: #{bert_seq_tagger_forward.3} parent=0 // pred_check_branch
    %27 = sbr.rel (0) target = $region13
  $region12: #{bert_seq_tagger_forward.3} parent=0 // pred_region
    _
  $region13: #{bert_seq_tagger_forward.3} parent=0 // pred_fallthru
    _
  // Predicated region
  $region14: #{bert_seq_tagger_forward.3} parent=0 // pred_check
    _
  $region15: #{bert_seq_tagger_forward.3} parent=0 // pred_check_branch
    %29 = sbr.rel (0) target = $region17
  $region16: #{bert_seq_tagger_forward.3} parent=0 // pred_region
    _
  $region17: #{bert_seq_tagger_forward.3} parent=0 // pred_fallthru
    _
  // Predicated region
  $region18: #{bert_seq_tagger_forward.3} parent=0 // pred_check
    _
  $region19: #{bert_seq_tagger_forward.3} parent=0 // pred_check_branch
    %31 = sbr.rel (0) target = $region21
  $region20: #{bert_seq_tagger_forward.3} parent=0 // pred_region
    _
  $region21: #{bert_seq_tagger_forward.3} parent=0 // pred_fallthru
    _
  // Predicated region
  $region22: #{bert_seq_tagger_forward.3} parent=0 // pred_check
    _
  $region23: #{bert_seq_tagger_forward.3} parent=0 // pred_check_branch
    %33 = sbr.rel (0) target = $region25
  $region24: #{bert_seq_tagger_forward.3} parent=0 // pred_region
    _
  $region25: #{bert_seq_tagger_forward.3} parent=0 // pred_fallthru
    _
  // Predicated region
  $region26: #{bert_seq_tagger_forward.3} parent=0 // pred_check
    _
  $region27: #{bert_seq_tagger_forward.3} parent=0 // pred_check_branch
    %35 = sbr.rel (0) target = $region29
  $region28: #{bert_seq_tagger_forward.3} parent=0 // pred_region
    _
  $region29: #{bert_seq_tagger_forward.3} parent=0 // pred_fallthru
    _
  // Predicated region
  $region30: #{bert_seq_tagger_forward.3} parent=0 // pred_check
    _
  $region31: #{bert_seq_tagger_forward.3} parent=0 // pred_check_branch
    %37 = sbr.rel (0) target = $region33
  $region32: #{bert_seq_tagger_forward.3} parent=0 // pred_region
    _
  $region33: #{bert_seq_tagger_forward.3} parent=0 // pred_fallthru
    _
  // Predicated region
  $region34: #{bert_seq_tagger_forward.3} parent=0 // pred_check
    _
  $region35: #{bert_seq_tagger_forward.3} parent=0 // pred_check_branch
    %39 = sbr.rel (0) target = $region37
  $region36: #{bert_seq_tagger_forward.3} parent=0 // pred_region
    _
  $region37: #{bert_seq_tagger_forward.3} parent=0 // pred_fallthru
    _
  // Predicated region
  $region38: #{bert_seq_tagger_forward.3} parent=0 // pred_check
    _
  $region39: #{bert_seq_tagger_forward.3} parent=0 // pred_check_branch
    %41 = sbr.rel (0) target = $region41
  $region40: #{bert_seq_tagger_forward.3} parent=0 // pred_region
    _
  $region41: #{bert_seq_tagger_forward.3} parent=0 // pred_fallthru
    _
  // Predicated region
  $region42: #{bert_seq_tagger_forward.3} parent=0 // pred_check
    _
  $region43: #{bert_seq_tagger_forward.3} parent=0 // pred_check_branch
    %43 = sbr.rel (0) target = $region45
  $region44: #{bert_seq_tagger_forward.3} parent=0 // pred_region
    _
  $region45: #{bert_seq_tagger_forward.3} parent=0 // pred_fallthru
    _
  // Predicated region
  $region46: #{bert_seq_tagger_forward.3} parent=0 // pred_check
    _
  $region47: #{bert_seq_tagger_forward.3} parent=0 // pred_check_branch
    %45 = sbr.rel (0) target = $region49
  $region48: #{bert_seq_tagger_forward.3} parent=0 // pred_region
    _
  $region49: #{bert_seq_tagger_forward.3} parent=0 // pred_fallthru
    _
  // Predicated region
  $region50: #{bert_seq_tagger_forward.3} parent=0 // pred_check
    _
  $region51: #{bert_seq_tagger_forward.3} parent=0 // pred_check_branch
    %47 = sbr.rel (0) target = $region53
  $region52: #{bert_seq_tagger_forward.3} parent=0 // pred_region
    _
  $region53: #{bert_seq_tagger_forward.3} parent=0 // pred_fallthru
    _
  // Predicated region
  $region54: #{bert_seq_tagger_forward.3} parent=0 // pred_check
    _
  $region55: #{bert_seq_tagger_forward.3} parent=0 // pred_check_branch
    %49 = sbr.rel (0) target = $region57
  $region56: #{bert_seq_tagger_forward.3} parent=0 // pred_region
    _
  $region57: #{bert_seq_tagger_forward.3} parent=0 // pred_fallthru
    _
  // Predicated region
  $region58: #{bert_seq_tagger_forward.3} parent=0 // pred_check
    _
  $region59: #{bert_seq_tagger_forward.3} parent=0 // pred_check_branch
    %51 = sbr.rel (0) target = $region61
  $region60: #{bert_seq_tagger_forward.3} parent=0 // pred_region
    _
  $region61: #{bert_seq_tagger_forward.3} parent=0 // pred_fallthru
    _
  // Predicated region
  $region62: #{bert_seq_tagger_forward.3} parent=0 // pred_check
    _
  $region63: #{bert_seq_tagger_forward.3} parent=0 // pred_check_branch
    %53 = sbr.rel (0) target = $region65
  $region64: #{bert_seq_tagger_forward.3} parent=0 // pred_region
    _
  $region65: #{bert_seq_tagger_forward.3} parent=0 // pred_fallthru
    _
  // Predicated region
  $region66: #{bert_seq_tagger_forward.3} parent=0 // pred_check
    _
  $region67: #{bert_seq_tagger_forward.3} parent=0 // pred_check_branch
    %55 = sbr.rel (0) target = $region69
  $region68: #{bert_seq_tagger_forward.3} parent=0 // pred_region
    _
  $region69: #{bert_seq_tagger_forward.3} parent=0 // pred_fallthru
    _
  %v56 = vld [vmem:[%s0] sm:$0xff]
  %v57 = vld [vmem:[%s0 + $0x8] sm:$0xff]
  %v58 = vld [vmem:[%s0 + $0x10] sm:$0xff]
  %v59 = vld [vmem:[%s0 + $0x18] sm:$0xff]
  %v60 = vld [vmem:[%s0 + $0x20] sm:$0xff]
  %v61 = vld [vmem:[%s0 + $0x28] sm:$0xff]
  %v62 = vld [vmem:[%s0 + $0x30] sm:$0xff]
  %v63 = vld [vmem:[%s0 + $0x38] sm:$0xff]
  %v64 = vld [vmem:[%s0 + $0x40] sm:$0xff]
  %v65 = vld [vmem:[%s0 + $0x48] sm:$0xff]
  %v66 = vld [vmem:[%s0 + $0x50] sm:$0xff]
  %v67 = vld [vmem:[%s0 + $0x58] sm:$0xff]
  %v68 = vld [vmem:[%s0 + $0x60] sm:$0xff]
  %v69 = vld [vmem:[%s0 + $0x68] sm:$0xff]
  %v70 = vld [vmem:[%s0 + $0x70] sm:$0xff]
  %v71 = vld [vmem:[%s0 + $0x78] sm:$0xff]
  %v72 = vld [vmem:[%s0 + $0x80] sm:$0xff]
  %v73 = vld [vmem:[%s0 + $0x88] sm:$0xff]
  %v74 = vld [vmem:[%s0 + $0x90] sm:$0xff]
  %v75 = vld [vmem:[%s0 + $0x98] sm:$0xff]
  %v76 = vld [vmem:[%s0 + $0xa0] sm:$0xff]
  %v77 = vld [vmem:[%s0 + $0xa8] sm:$0xff]
  %v78 = vld [vmem:[%s0 + $0xb0] sm:$0xff]
  %v79 = vld [vmem:[%s0 + $0xb8] sm:$0xff]
  %v80 = vld [vmem:[%s1] sm:$0xff]
  %v81 = vld [vmem:[%s1 + $0x8] sm:$0xff]
  %v82 = vld [vmem:[%s1 + $0x10] sm:$0xff]
  %v83 = vld [vmem:[%s1 + $0x18] sm:$0xff]
  %v84 = vld [vmem:[%s1 + $0x20] sm:$0xff]
  %v85 = vld [vmem:[%s1 + $0x28] sm:$0xff]
  %v86 = vld [vmem:[%s1 + $0x30] sm:$0xff]
  %v87 = vld [vmem:[%s1 + $0x38] sm:$0xff]
  %v88 = vld [vmem:[%s1 + $0x40] sm:$0xff]
  %v89 = vld [vmem:[%s1 + $0x48] sm:$0xff]
  %v90 = vld [vmem:[%s1 + $0x50] sm:$0xff]
  %v91 = vld [vmem:[%s1 + $0x58] sm:$0xff]
  %v92 = vld [vmem:[%s1 + $0x60] sm:$0xff]
  %v93 = vld [vmem:[%s1 + $0x68] sm:$0xff]
  %v94 = vld [vmem:[%s1 + $0x70] sm:$0xff]
  %v95 = vld [vmem:[%s1 + $0x78] sm:$0xff]
  %v96 = vld [vmem:[%s1 + $0x80] sm:$0xff]
  %v97 = vld [vmem:[%s1 + $0x88] sm:$0xff]
  %v98 = vld [vmem:[%s1 + $0x90] sm:$0xff]
  %v99 = vld [vmem:[%s1 + $0x98] sm:$0xff]
  %v100 = vld [vmem:[%s1 + $0xa0] sm:$0xff]
  %v101 = vld [vmem:[%s1 + $0xa8] sm:$0xff]
  %v102 = vld [vmem:[%s1 + $0xb0] sm:$0xff]
  %v103 = vld [vmem:[%s1 + $0xb8] sm:$0xff]
  %v104 = vld [vmem:[%s1 + $0xc0] sm:$0xff]
  %v105 = vld [vmem:[%s1 + $0xc8] sm:$0xff]
  %v106 = vld [vmem:[%s1 + $0xd0] sm:$0xff]
  %v107 = vld [vmem:[%s1 + $0xd8] sm:$0xff]
  %v108 = vld [vmem:[%s1 + $0xe0] sm:$0xff]
  %v109 = vld [vmem:[%s1 + $0xe8] sm:$0xff]
  %v110 = vld [vmem:[%s1 + $0xf0] sm:$0xff]
  %v111 = vld [vmem:[%s1 + $0xf8] sm:$0xff]
  %v112 = vld [vmem:[%s1 + $0x100] sm:$0xff]
  %v113 = vld [vmem:[%s1 + $0x108] sm:$0xff]
  %v114 = vld [vmem:[%s1 + $0x110] sm:$0xff]
  %v115 = vld [vmem:[%s1 + $0x118] sm:$0xff]
  %v116 = vld [vmem:[%s1 + $0x120] sm:$0xff]
  %v117 = vld [vmem:[%s1 + $0x128] sm:$0xff]
  %v118 = vld [vmem:[%s1 + $0x130] sm:$0xff]
  %v119 = vld [vmem:[%s1 + $0x138] sm:$0xff]
  %v120 = vld [vmem:[%s1 + $0x140] sm:$0xff]
  %v121 = vld [vmem:[%s1 + $0x148] sm:$0xff]
  %v122 = vld [vmem:[%s1 + $0x150] sm:$0xff]
  %v123 = vld [vmem:[%s1 + $0x158] sm:$0xff]
  %v124 = vld [vmem:[%s1 + $0x160] sm:$0xff]
  %v125 = vld [vmem:[%s1 + $0x168] sm:$0xff]
  %v126 = vld [vmem:[%s1 + $0x170] sm:$0xff]
  %v127 = vld [vmem:[%s1 + $0x178] sm:$0xff]
  %v128 = vld [vmem:[%s1 + $0x180] sm:$0xff]
  %v129 = vld [vmem:[%s1 + $0x188] sm:$0xff]
  %v130 = vld [vmem:[%s1 + $0x190] sm:$0xff]
  %v131 = vld [vmem:[%s1 + $0x198] sm:$0xff]
  %v132 = vld [vmem:[%s1 + $0x1a0] sm:$0xff]
  %v133 = vld [vmem:[%s1 + $0x1a8] sm:$0xff]
  %v134 = vld [vmem:[%s1 + $0x1b0] sm:$0xff]
  %v135 = vld [vmem:[%s1 + $0x1b8] sm:$0xff]
  %v136 = vld [vmem:[%s1 + $0x1c0] sm:$0xff]
  %v137 = vld [vmem:[%s1 + $0x1c8] sm:$0xff]
  %v138 = vld [vmem:[%s1 + $0x1d0] sm:$0xff]
  %v139 = vld [vmem:[%s1 + $0x1d8] sm:$0xff]
  %v140 = vld [vmem:[%s1 + $0x1e0] sm:$0xff]
  %v141 = vld [vmem:[%s1 + $0x1e8] sm:$0xff]
  %v142 = vld [vmem:[%s1 + $0x1f0] sm:$0xff]
  %v143 = vld [vmem:[%s1 + $0x1f8] sm:$0xff]
  %v144 = vld [vmem:[%s1 + $0x200] sm:$0xff]
  %v145 = vld [vmem:[%s1 + $0x208] sm:$0xff]
  %v146 = vld [vmem:[%s1 + $0x210] sm:$0xff]
  %v147 = vld [vmem:[%s1 + $0x218] sm:$0xff]
  %v148 = vld [vmem:[%s1 + $0x220] sm:$0xff]
  %v149 = vld [vmem:[%s1 + $0x228] sm:$0xff]
  %v150 = vld [vmem:[%s1 + $0x230] sm:$0xff]
  %v151 = vld [vmem:[%s1 + $0x238] sm:$0xff]
  %v152 = vld [vmem:[%s1 + $0x240] sm:$0xff]
  %v153 = vld [vmem:[%s1 + $0x248] sm:$0xff]
  %v154 = vld [vmem:[%s1 + $0x250] sm:$0xff]
  %v155 = vld [vmem:[%s1 + $0x258] sm:$0xff]
  %v156 = vld [vmem:[%s1 + $0x260] sm:$0xff]
  %v157 = vld [vmem:[%s1 + $0x268] sm:$0xff]
  %v158 = vld [vmem:[%s1 + $0x270] sm:$0xff]
  %v159 = vld [vmem:[%s1 + $0x278] sm:$0xff]
  %v160 = vld [vmem:[%s1 + $0x280] sm:$0xff]
  %v161 = vld [vmem:[%s1 + $0x288] sm:$0xff]
  %v162 = vld [vmem:[%s1 + $0x290] sm:$0xff]
  %v163 = vld [vmem:[%s1 + $0x298] sm:$0xff]
  %v164 = vld [vmem:[%s1 + $0x2a0] sm:$0xff]
  %v165 = vld [vmem:[%s1 + $0x2a8] sm:$0xff]
  %v166 = vld [vmem:[%s1 + $0x2b0] sm:$0xff]
  %v167 = vld [vmem:[%s1 + $0x2b8] sm:$0xff]
  %v168 = vld [vmem:[%s1 + $0x2c0] sm:$0xff]
  %v169 = vld [vmem:[%s1 + $0x2c8] sm:$0xff]
  %v170 = vld [vmem:[%s1 + $0x2d0] sm:$0xff]
  %v171 = vld [vmem:[%s1 + $0x2d8] sm:$0xff]
  %v172 = vld [vmem:[%s1 + $0x2e0] sm:$0xff]
  %v173 = vld [vmem:[%s1 + $0x2e8] sm:$0xff]
  %v174 = vld [vmem:[%s1 + $0x2f0] sm:$0xff]
  %v175 = vld [vmem:[%s1 + $0x2f8] sm:$0xff]
  %v176 = vld [vmem:[%s1 + $0x300] sm:$0xff]
  %v177 = vld [vmem:[%s1 + $0x308] sm:$0xff]
  %v178 = vld [vmem:[%s1 + $0x310] sm:$0xff]
  %v179 = vld [vmem:[%s1 + $0x318] sm:$0xff]
  %v180 = vld [vmem:[%s1 + $0x320] sm:$0xff]
  %v181 = vld [vmem:[%s1 + $0x328] sm:$0xff]
  %v182 = vld [vmem:[%s1 + $0x330] sm:$0xff]
  %v183 = vld [vmem:[%s1 + $0x338] sm:$0xff]
  %v184 = vld [vmem:[%s1 + $0x340] sm:$0xff]
  %v185 = vld [vmem:[%s1 + $0x348] sm:$0xff]
  %v186 = vld [vmem:[%s1 + $0x350] sm:$0xff]
  %v187 = vld [vmem:[%s1 + $0x358] sm:$0xff]
  %v188 = vld [vmem:[%s1 + $0x360] sm:$0xff]
  %v189 = vld [vmem:[%s1 + $0x368] sm:$0xff]
  %v190 = vld [vmem:[%s1 + $0x370] sm:$0xff]
  %v191 = vld [vmem:[%s1 + $0x378] sm:$0xff]
  %v192 = vld [vmem:[%s1 + $0x380] sm:$0xff]
  %v193 = vld [vmem:[%s1 + $0x388] sm:$0xff]
  %v194 = vld [vmem:[%s1 + $0x390] sm:$0xff]
  %v195 = vld [vmem:[%s1 + $0x398] sm:$0xff]
  %v196 = vld [vmem:[%s1 + $0x3a0] sm:$0xff]
  %v197 = vld [vmem:[%s1 + $0x3a8] sm:$0xff]
  %v198 = vld [vmem:[%s1 + $0x3b0] sm:$0xff]
  %v199 = vld [vmem:[%s1 + $0x3b8] sm:$0xff]
  %v200 = vld [vmem:[%s1 + $0x3c0] sm:$0xff]
  %v201 = vld [vmem:[%s1 + $0x3c8] sm:$0xff]
  %v202 = vld [vmem:[%s1 + $0x3d0] sm:$0xff]
  %v203 = vld [vmem:[%s1 + $0x3d8] sm:$0xff]
  %v204 = vld [vmem:[%s1 + $0x3e0] sm:$0xff]
  %v205 = vld [vmem:[%s1 + $0x3e8] sm:$0xff]
  %v206 = vld [vmem:[%s1 + $0x3f0] sm:$0xff]
  %v207 = vld [vmem:[%s1 + $0x3f8] sm:$0xff]
  %v208 = vld [vmem:[%s1 + $0x400] sm:$0xff]
  %v209 = vld [vmem:[%s1 + $0x408] sm:$0xff]
  %v210 = vld [vmem:[%s1 + $0x410] sm:$0xff]
  %v211 = vld [vmem:[%s1 + $0x418] sm:$0xff]
  %v212 = vld [vmem:[%s1 + $0x420] sm:$0xff]
  %v213 = vld [vmem:[%s1 + $0x428] sm:$0xff]
  %v214 = vld [vmem:[%s1 + $0x430] sm:$0xff]
  %v215 = vld [vmem:[%s1 + $0x438] sm:$0xff]
  %v216 = vld [vmem:[%s1 + $0x440] sm:$0xff]
  %v217 = vld [vmem:[%s1 + $0x448] sm:$0xff]
  %v218 = vld [vmem:[%s1 + $0x450] sm:$0xff]
  %v219 = vld [vmem:[%s1 + $0x458] sm:$0xff]
  %v220 = vld [vmem:[%s1 + $0x460] sm:$0xff]
  %v221 = vld [vmem:[%s1 + $0x468] sm:$0xff]
  %v222 = vld [vmem:[%s1 + $0x470] sm:$0xff]
  %v223 = vld [vmem:[%s1 + $0x478] sm:$0xff]
  %v224 = vld [vmem:[%s1 + $0x480] sm:$0xff]
  %v225 = vld [vmem:[%s1 + $0x488] sm:$0xff]
  %v226 = vld [vmem:[%s1 + $0x490] sm:$0xff]
  %v227 = vld [vmem:[%s1 + $0x498] sm:$0xff]
  %v228 = vld [vmem:[%s1 + $0x4a0] sm:$0xff]
  %v229 = vld [vmem:[%s1 + $0x4a8] sm:$0xff]
  %v230 = vld [vmem:[%s1 + $0x4b0] sm:$0xff]
  %v231 = vld [vmem:[%s1 + $0x4b8] sm:$0xff]
  %v232 = vld [vmem:[%s1 + $0x4c0] sm:$0xff]
  %v233 = vld [vmem:[%s1 + $0x4c8] sm:$0xff]
  %v234 = vld [vmem:[%s1 + $0x4d0] sm:$0xff]
  %v235 = vld [vmem:[%s1 + $0x4d8] sm:$0xff]
  %v236 = vld [vmem:[%s1 + $0x4e0] sm:$0xff]
  %v237 = vld [vmem:[%s1 + $0x4e8] sm:$0xff]
  %v238 = vld [vmem:[%s1 + $0x4f0] sm:$0xff]
  %v239 = vld [vmem:[%s1 + $0x4f8] sm:$0xff]
  %v240 = vld [vmem:[%s1 + $0x500] sm:$0xff]
  %v241 = vld [vmem:[%s1 + $0x508] sm:$0xff]
  %v242 = vld [vmem:[%s1 + $0x510] sm:$0xff]
  %v243 = vld [vmem:[%s1 + $0x518] sm:$0xff]
  %v244 = vld [vmem:[%s1 + $0x520] sm:$0xff]
  %v245 = vld [vmem:[%s1 + $0x528] sm:$0xff]
  %v246 = vld [vmem:[%s1 + $0x530] sm:$0xff]
  %v247 = vld [vmem:[%s1 + $0x538] sm:$0xff]
  %v248 = vld [vmem:[%s1 + $0x540] sm:$0xff]
  %v249 = vld [vmem:[%s1 + $0x548] sm:$0xff]
  %v250 = vld [vmem:[%s1 + $0x550] sm:$0xff]
  %v251 = vld [vmem:[%s1 + $0x558] sm:$0xff]
  %v252 = vld [vmem:[%s1 + $0x560] sm:$0xff]
  %v253 = vld [vmem:[%s1 + $0x568] sm:$0xff]
  %v254 = vld [vmem:[%s1 + $0x570] sm:$0xff]
  %v255 = vld [vmem:[%s1 + $0x578] sm:$0xff]
  %v256 = vld [vmem:[%s1 + $0x580] sm:$0xff]
  %v257 = vld [vmem:[%s1 + $0x588] sm:$0xff]
  %v258 = vld [vmem:[%s1 + $0x590] sm:$0xff]
  %v259 = vld [vmem:[%s1 + $0x598] sm:$0xff]
  %v260 = vld [vmem:[%s1 + $0x5a0] sm:$0xff]
  %v261 = vld [vmem:[%s1 + $0x5a8] sm:$0xff]
  %v262 = vld [vmem:[%s1 + $0x5b0] sm:$0xff]
  %v263 = vld [vmem:[%s1 + $0x5b8] sm:$0xff]
  %v264 = vld [vmem:[%s1 + $0x5c0] sm:$0xff]
  %v265 = vld [vmem:[%s1 + $0x5c8] sm:$0xff]
  %v266 = vld [vmem:[%s1 + $0x5d0] sm:$0xff]
  %v267 = vld [vmem:[%s1 + $0x5d8] sm:$0xff]
  %v268 = vld [vmem:[%s1 + $0x5e0] sm:$0xff]
  %v269 = vld [vmem:[%s1 + $0x5e8] sm:$0xff]
  %v270 = vld [vmem:[%s1 + $0x5f0] sm:$0xff]
  %v271 = vld [vmem:[%s1 + $0x5f8] sm:$0xff]
  %v272 = vld [vmem:[%s1 + $0x600] sm:$0xff]
  %v273 = vld [vmem:[%s1 + $0x608] sm:$0xff]
  %v274 = vld [vmem:[%s1 + $0x610] sm:$0xff]
  %v275 = vld [vmem:[%s1 + $0x618] sm:$0xff]
  %v276 = vld [vmem:[%s1 + $0x620] sm:$0xff]
  %v277 = vld [vmem:[%s1 + $0x628] sm:$0xff]
  %v278 = vld [vmem:[%s1 + $0x630] sm:$0xff]
  %v279 = vld [vmem:[%s1 + $0x638] sm:$0xff]
  %v280 = vld [vmem:[%s1 + $0x640] sm:$0xff]
  %v281 = vld [vmem:[%s1 + $0x648] sm:$0xff]
  %v282 = vld [vmem:[%s1 + $0x650] sm:$0xff]
  %v283 = vld [vmem:[%s1 + $0x658] sm:$0xff]
  %v284 = vld [vmem:[%s1 + $0x660] sm:$0xff]
  %v285 = vld [vmem:[%s1 + $0x668] sm:$0xff]
  %v286 = vld [vmem:[%s1 + $0x670] sm:$0xff]
  %v287 = vld [vmem:[%s1 + $0x678] sm:$0xff]
  %v288 = vld [vmem:[%s1 + $0x680] sm:$0xff]
  %v289 = vld [vmem:[%s1 + $0x688] sm:$0xff]
  %v290 = vld [vmem:[%s1 + $0x690] sm:$0xff]
  %v291 = vld [vmem:[%s1 + $0x698] sm:$0xff]
  %v292 = vld [vmem:[%s1 + $0x6a0] sm:$0xff]
  %v293 = vld [vmem:[%s1 + $0x6a8] sm:$0xff]
  %v294 = vld [vmem:[%s1 + $0x6b0] sm:$0xff]
  %v295 = vld [vmem:[%s1 + $0x6b8] sm:$0xff]
  %v296 = vld [vmem:[%s1 + $0x6c0] sm:$0xff]
  %v297 = vld [vmem:[%s1 + $0x6c8] sm:$0xff]
  %v298 = vld [vmem:[%s1 + $0x6d0] sm:$0xff]
  %v299 = vld [vmem:[%s1 + $0x6d8] sm:$0xff]
  %v300 = vld [vmem:[%s1 + $0x6e0] sm:$0xff]
  %v301 = vld [vmem:[%s1 + $0x6e8] sm:$0xff]
  %v302 = vld [vmem:[%s1 + $0x6f0] sm:$0xff]
  %v303 = vld [vmem:[%s1 + $0x6f8] sm:$0xff]
  %v304 = vld [vmem:[%s1 + $0x700] sm:$0xff]
  %v305 = vld [vmem:[%s1 + $0x708] sm:$0xff]
  %v306 = vld [vmem:[%s1 + $0x710] sm:$0xff]
  %v307 = vld [vmem:[%s1 + $0x718] sm:$0xff]
  %v308 = vld [vmem:[%s1 + $0x720] sm:$0xff]
  %v309 = vld [vmem:[%s1 + $0x728] sm:$0xff]
  %v310 = vld [vmem:[%s1 + $0x730] sm:$0xff]
  %v311 = vld [vmem:[%s1 + $0x738] sm:$0xff]
  %v312 = vld [vmem:[%s1 + $0x740] sm:$0xff]
  %v313 = vld [vmem:[%s1 + $0x748] sm:$0xff]
  %v314 = vld [vmem:[%s1 + $0x750] sm:$0xff]
  %v315 = vld [vmem:[%s1 + $0x758] sm:$0xff]
  %v316 = vld [vmem:[%s1 + $0x760] sm:$0xff]
  %v317 = vld [vmem:[%s1 + $0x768] sm:$0xff]
  %v318 = vld [vmem:[%s1 + $0x770] sm:$0xff]
  %v319 = vld [vmem:[%s1 + $0x778] sm:$0xff]
  %v320 = vld [vmem:[%s1 + $0x780] sm:$0xff]
  %v321 = vld [vmem:[%s1 + $0x788] sm:$0xff]
  %v322 = vld [vmem:[%s1 + $0x790] sm:$0xff]
  %v323 = vld [vmem:[%s1 + $0x798] sm:$0xff]
  %v324 = vld [vmem:[%s1 + $0x7a0] sm:$0xff]
  %v325 = vld [vmem:[%s1 + $0x7a8] sm:$0xff]
  %v326 = vld [vmem:[%s1 + $0x7b0] sm:$0xff]
  %v327 = vld [vmem:[%s1 + $0x7b8] sm:$0xff]
  %v328 = vld [vmem:[%s1 + $0x7c0] sm:$0xff]
  %v329 = vld [vmem:[%s1 + $0x7c8] sm:$0xff]
  %v330 = vld [vmem:[%s1 + $0x7d0] sm:$0xff]
  %v331 = vld [vmem:[%s1 + $0x7d8] sm:$0xff]
  %v332 = vld [vmem:[%s1 + $0x7e0] sm:$0xff]
  %v333 = vld [vmem:[%s1 + $0x7e8] sm:$0xff]
  %v334 = vld [vmem:[%s1 + $0x7f0] sm:$0xff]
  %v335 = vld [vmem:[%s1 + $0x7f8] sm:$0xff]
  %v336 = vld [vmem:[%s1 + $0x800] sm:$0xff]
  %v337 = vld [vmem:[%s1 + $0x808] sm:$0xff]
  %v338 = vld [vmem:[%s1 + $0x810] sm:$0xff]
  %v339 = vld [vmem:[%s1 + $0x818] sm:$0xff]
  %v340 = vld [vmem:[%s1 + $0x820] sm:$0xff]
  %v341 = vld [vmem:[%s1 + $0x828] sm:$0xff]
  %v342 = vld [vmem:[%s1 + $0x830] sm:$0xff]
  %v343 = vld [vmem:[%s1 + $0x838] sm:$0xff]
  %v344 = vld [vmem:[%s1 + $0x840] sm:$0xff]
  %v345 = vld [vmem:[%s1 + $0x848] sm:$0xff]
  %v346 = vld [vmem:[%s1 + $0x850] sm:$0xff]
  %v347 = vld [vmem:[%s1 + $0x858] sm:$0xff]
  %v348 = vld [vmem:[%s1 + $0x860] sm:$0xff]
  %v349 = vld [vmem:[%s1 + $0x868] sm:$0xff]
  %v350 = vld [vmem:[%s1 + $0x870] sm:$0xff]
  %v351 = vld [vmem:[%s1 + $0x878] sm:$0xff]
  %v352 = vld [vmem:[%s1 + $0x880] sm:$0xff]
  %v353 = vld [vmem:[%s1 + $0x888] sm:$0xff]
  %v354 = vld [vmem:[%s1 + $0x890] sm:$0xff]
  %v355 = vld [vmem:[%s1 + $0x898] sm:$0xff]
  %v356 = vld [vmem:[%s1 + $0x8a0] sm:$0xff]
  %v357 = vld [vmem:[%s1 + $0x8a8] sm:$0xff]
  %v358 = vld [vmem:[%s1 + $0x8b0] sm:$0xff]
  %v359 = vld [vmem:[%s1 + $0x8b8] sm:$0xff]
  %v360 = vld [vmem:[%s1 + $0x8c0] sm:$0xff]
  %v361 = vld [vmem:[%s1 + $0x8c8] sm:$0xff]
  %v362 = vld [vmem:[%s1 + $0x8d0] sm:$0xff]
  %v363 = vld [vmem:[%s1 + $0x8d8] sm:$0xff]
  %v364 = vld [vmem:[%s1 + $0x8e0] sm:$0xff]
  %v365 = vld [vmem:[%s1 + $0x8e8] sm:$0xff]
  %v366 = vld [vmem:[%s1 + $0x8f0] sm:$0xff]
  %v367 = vld [vmem:[%s1 + $0x8f8] sm:$0xff]
  %v368 = vld [vmem:[%s2] sm:$0x3f]
  %v370 = vperm.slane %v368, 0
  %v371 = vperm.slane %v368, 1
  %v372 = vperm.slane %v368, 2
  %v373 = vperm.slane %v368, 3
  %v374 = vperm.slane %v368, 4
  %v375 = vperm.slane %v368, 5
  %v406 = vunpack.c.l.b16 %v56
  %v407 = vunpack.c.h.b16 %v56
  %v408 = vunpack.c.l.b16 %v57
  %v409 = vunpack.c.h.b16 %v57
  %v410 = vunpack.c.l.b16 %v58
  %v411 = vunpack.c.h.b16 %v58
  %v412 = vunpack.c.l.b16 %v59
  %v413 = vunpack.c.h.b16 %v59
  %v414 = vunpack.c.l.b16 %v60
  %v415 = vunpack.c.h.b16 %v60
  %v416 = vunpack.c.l.b16 %v61
  %v417 = vunpack.c.h.b16 %v61
  %v418 = vunpack.c.l.b16 %v62
  %v419 = vunpack.c.h.b16 %v62
  %v420 = vunpack.c.l.b16 %v63
  %v421 = vunpack.c.h.b16 %v63
  %v422 = vunpack.c.l.b16 %v64
  %v423 = vunpack.c.h.b16 %v64
  %v424 = vunpack.c.l.b16 %v65
  %v425 = vunpack.c.h.b16 %v65
  %v426 = vunpack.c.l.b16 %v66
  %v427 = vunpack.c.h.b16 %v66
  %v428 = vunpack.c.l.b16 %v67
  %v429 = vunpack.c.h.b16 %v67
  %v430 = vunpack.c.l.b16 %v68
  %v431 = vunpack.c.h.b16 %v68
  %v432 = vunpack.c.l.b16 %v69
  %v433 = vunpack.c.h.b16 %v69
  %v434 = vunpack.c.l.b16 %v70
  %v435 = vunpack.c.h.b16 %v70
  %v436 = vunpack.c.l.b16 %v71
  %v437 = vunpack.c.h.b16 %v71
  %v438 = vunpack.c.l.b16 %v72
  %v439 = vunpack.c.h.b16 %v72
  %v440 = vunpack.c.l.b16 %v73
  %v441 = vunpack.c.h.b16 %v73
  %v442 = vunpack.c.l.b16 %v74
  %v443 = vunpack.c.h.b16 %v74
  %v444 = vunpack.c.l.b16 %v75
  %v445 = vunpack.c.h.b16 %v75
  %v446 = vunpack.c.l.b16 %v76
  %v447 = vunpack.c.h.b16 %v76
  %v448 = vunpack.c.l.b16 %v77
  %v449 = vunpack.c.h.b16 %v77
  %v450 = vunpack.c.l.b16 %v78
  %v451 = vunpack.c.h.b16 %v78
  %v452 = vunpack.c.l.b16 %v79
  %v453 = vunpack.c.h.b16 %v79
  %v454 = vpack.c.b16 %v412, %v406
  %v455 = vpack.c.b16 %v413, %v407
  %v456 = vpack.c.b16 %v414, %v408
  %v457 = vpack.c.b16 %v415, %v409
  %v458 = vpack.c.b16 %v416, %v410
  %v459 = vpack.c.b16 %v417, %v411
  %v460 = vpack.c.b16 %v424, %v418
  %v461 = vpack.c.b16 %v425, %v419
  %v462 = vpack.c.b16 %v426, %v420
  %v463 = vpack.c.b16 %v427, %v421
  %v464 = vpack.c.b16 %v428, %v422
  %v465 = vpack.c.b16 %v429, %v423
  %v466 = vpack.c.b16 %v436, %v430
  %v467 = vpack.c.b16 %v437, %v431
  %v468 = vpack.c.b16 %v438, %v432
  %v469 = vpack.c.b16 %v439, %v433
  %v470 = vpack.c.b16 %v440, %v434
  %v471 = vpack.c.b16 %v441, %v435
  %v472 = vpack.c.b16 %v448, %v442
  %v473 = vpack.c.b16 %v449, %v443
  %v474 = vpack.c.b16 %v450, %v444
  %v475 = vpack.c.b16 %v451, %v445
  %v476 = vpack.c.b16 %v452, %v446
  %v477 = vpack.c.b16 %v453, %v447
  %v790 = vunpack.c.l.b16 %v80
  %v791 = vunpack.c.h.b16 %v80
  %v792 = vunpack.c.l.b16 %v81
  %v793 = vunpack.c.h.b16 %v81
  %v794 = vunpack.c.l.b16 %v82
  %v795 = vunpack.c.h.b16 %v82
  %v796 = vunpack.c.l.b16 %v83
  %v797 = vunpack.c.h.b16 %v83
  %v798 = vunpack.c.l.b16 %v84
  %v799 = vunpack.c.h.b16 %v84
  %v800 = vunpack.c.l.b16 %v85
  %v801 = vunpack.c.h.b16 %v85
  %v802 = vunpack.c.l.b16 %v86
  %v803 = vunpack.c.h.b16 %v86
  %v804 = vunpack.c.l.b16 %v87
  %v805 = vunpack.c.h.b16 %v87
  %v806 = vunpack.c.l.b16 %v88
  %v807 = vunpack.c.h.b16 %v88
  %v808 = vunpack.c.l.b16 %v89
  %v809 = vunpack.c.h.b16 %v89
  %v810 = vunpack.c.l.b16 %v90
  %v811 = vunpack.c.h.b16 %v90
  %v812 = vunpack.c.l.b16 %v91
  %v813 = vunpack.c.h.b16 %v91
  %v814 = vunpack.c.l.b16 %v92
  %v815 = vunpack.c.h.b16 %v92
  %v816 = vunpack.c.l.b16 %v93
  %v817 = vunpack.c.h.b16 %v93
  %v818 = vunpack.c.l.b16 %v94
  %v819 = vunpack.c.h.b16 %v94
  %v820 = vunpack.c.l.b16 %v95
  %v821 = vunpack.c.h.b16 %v95
  %v822 = vunpack.c.l.b16 %v96
  %v823 = vunpack.c.h.b16 %v96
  %v824 = vunpack.c.l.b16 %v97
  %v825 = vunpack.c.h.b16 %v97
  %v826 = vunpack.c.l.b16 %v98
  %v827 = vunpack.c.h.b16 %v98
  %v828 = vunpack.c.l.b16 %v99
  %v829 = vunpack.c.h.b16 %v99
  %v830 = vunpack.c.l.b16 %v100
  %v831 = vunpack.c.h.b16 %v100
  %v832 = vunpack.c.l.b16 %v101
  %v833 = vunpack.c.h.b16 %v101
  %v834 = vunpack.c.l.b16 %v102
  %v835 = vunpack.c.h.b16 %v102
  %v836 = vunpack.c.l.b16 %v103
  %v837 = vunpack.c.h.b16 %v103
  %v838 = vunpack.c.l.b16 %v104
  %v839 = vunpack.c.h.b16 %v104
  %v840 = vunpack.c.l.b16 %v105
  %v841 = vunpack.c.h.b16 %v105
  %v842 = vunpack.c.l.b16 %v106
  %v843 = vunpack.c.h.b16 %v106
  %v844 = vunpack.c.l.b16 %v107
  %v845 = vunpack.c.h.b16 %v107
  %v846 = vunpack.c.l.b16 %v108
  %v847 = vunpack.c.h.b16 %v108
  %v848 = vunpack.c.l.b16 %v109
  %v849 = vunpack.c.h.b16 %v109
  %v850 = vunpack.c.l.b16 %v110
  %v851 = vunpack.c.h.b16 %v110
  %v852 = vunpack.c.l.b16 %v111
  %v853 = vunpack.c.h.b16 %v111
  %v854 = vunpack.c.l.b16 %v112
  %v855 = vunpack.c.h.b16 %v112
  %v856 = vunpack.c.l.b16 %v113
  %v857 = vunpack.c.h.b16 %v113
  %v858 = vunpack.c.l.b16 %v114
  %v859 = vunpack.c.h.b16 %v114
  %v860 = vunpack.c.l.b16 %v115
  %v861 = vunpack.c.h.b16 %v115
  %v862 = vunpack.c.l.b16 %v116
  %v863 = vunpack.c.h.b16 %v116
  %v864 = vunpack.c.l.b16 %v117
  %v865 = vunpack.c.h.b16 %v117
  %v866 = vunpack.c.l.b16 %v118
  %v867 = vunpack.c.h.b16 %v118
  %v868 = vunpack.c.l.b16 %v119
  %v869 = vunpack.c.h.b16 %v119
  %v870 = vunpack.c.l.b16 %v120
  %v871 = vunpack.c.h.b16 %v120
  %v872 = vunpack.c.l.b16 %v121
  %v873 = vunpack.c.h.b16 %v121
  %v874 = vunpack.c.l.b16 %v122
  %v875 = vunpack.c.h.b16 %v122
  %v876 = vunpack.c.l.b16 %v123
  %v877 = vunpack.c.h.b16 %v123
  %v878 = vunpack.c.l.b16 %v124
  %v879 = vunpack.c.h.b16 %v124
  %v880 = vunpack.c.l.b16 %v125
  %v881 = vunpack.c.h.b16 %v125
  %v882 = vunpack.c.l.b16 %v126
  %v883 = vunpack.c.h.b16 %v126
  %v884 = vunpack.c.l.b16 %v127
  %v885 = vunpack.c.h.b16 %v127
  %v886 = vunpack.c.l.b16 %v128
  %v887 = vunpack.c.h.b16 %v128
  %v888 = vunpack.c.l.b16 %v129
  %v889 = vunpack.c.h.b16 %v129
  %v890 = vunpack.c.l.b16 %v130
  %v891 = vunpack.c.h.b16 %v130
  %v892 = vunpack.c.l.b16 %v131
  %v893 = vunpack.c.h.b16 %v131
  %v894 = vunpack.c.l.b16 %v132
  %v895 = vunpack.c.h.b16 %v132
  %v896 = vunpack.c.l.b16 %v133
  %v897 = vunpack.c.h.b16 %v133
  %v898 = vunpack.c.l.b16 %v134
  %v899 = vunpack.c.h.b16 %v134
  %v900 = vunpack.c.l.b16 %v135
  %v901 = vunpack.c.h.b16 %v135
  %v902 = vunpack.c.l.b16 %v136
  %v903 = vunpack.c.h.b16 %v136
  %v904 = vunpack.c.l.b16 %v137
  %v905 = vunpack.c.h.b16 %v137
  %v906 = vunpack.c.l.b16 %v138
  %v907 = vunpack.c.h.b16 %v138
  %v908 = vunpack.c.l.b16 %v139
  %v909 = vunpack.c.h.b16 %v139
  %v910 = vunpack.c.l.b16 %v140
  %v911 = vunpack.c.h.b16 %v140
  %v912 = vunpack.c.l.b16 %v141
  %v913 = vunpack.c.h.b16 %v141
  %v914 = vunpack.c.l.b16 %v142
  %v915 = vunpack.c.h.b16 %v142
  %v916 = vunpack.c.l.b16 %v143
  %v917 = vunpack.c.h.b16 %v143
  %v918 = vunpack.c.l.b16 %v144
  %v919 = vunpack.c.h.b16 %v144
  %v920 = vunpack.c.l.b16 %v145
  %v921 = vunpack.c.h.b16 %v145
  %v922 = vunpack.c.l.b16 %v146
  %v923 = vunpack.c.h.b16 %v146
  %v924 = vunpack.c.l.b16 %v147
  %v925 = vunpack.c.h.b16 %v147
  %v926 = vunpack.c.l.b16 %v148
  %v927 = vunpack.c.h.b16 %v148
  %v928 = vunpack.c.l.b16 %v149
  %v929 = vunpack.c.h.b16 %v149
  %v930 = vunpack.c.l.b16 %v150
  %v931 = vunpack.c.h.b16 %v150
  %v932 = vunpack.c.l.b16 %v151
  %v933 = vunpack.c.h.b16 %v151
  %v934 = vunpack.c.l.b16 %v152
  %v935 = vunpack.c.h.b16 %v152
  %v936 = vunpack.c.l.b16 %v153
  %v937 = vunpack.c.h.b16 %v153
  %v938 = vunpack.c.l.b16 %v154
  %v939 = vunpack.c.h.b16 %v154
  %v940 = vunpack.c.l.b16 %v155
  %v941 = vunpack.c.h.b16 %v155
  %v942 = vunpack.c.l.b16 %v156
  %v943 = vunpack.c.h.b16 %v156
  %v944 = vunpack.c.l.b16 %v157
  %v945 = vunpack.c.h.b16 %v157
  %v946 = vunpack.c.l.b16 %v158
  %v947 = vunpack.c.h.b16 %v158
  %v948 = vunpack.c.l.b16 %v159
  %v949 = vunpack.c.h.b16 %v159
  %v950 = vunpack.c.l.b16 %v160
  %v951 = vunpack.c.h.b16 %v160
  %v952 = vunpack.c.l.b16 %v161
  %v953 = vunpack.c.h.b16 %v161
  %v954 = vunpack.c.l.b16 %v162
  %v955 = vunpack.c.h.b16 %v162
  %v956 = vunpack.c.l.b16 %v163
  %v957 = vunpack.c.h.b16 %v163
  %v958 = vunpack.c.l.b16 %v164
  %v959 = vunpack.c.h.b16 %v164
  %v960 = vunpack.c.l.b16 %v165
  %v961 = vunpack.c.h.b16 %v165
  %v962 = vunpack.c.l.b16 %v166
  %v963 = vunpack.c.h.b16 %v166
  %v964 = vunpack.c.l.b16 %v167
  %v965 = vunpack.c.h.b16 %v167
  %v966 = vunpack.c.l.b16 %v168
  %v967 = vunpack.c.h.b16 %v168
  %v968 = vunpack.c.l.b16 %v169
  %v969 = vunpack.c.h.b16 %v169
  %v970 = vunpack.c.l.b16 %v170
  %v971 = vunpack.c.h.b16 %v170
  %v972 = vunpack.c.l.b16 %v171
  %v973 = vunpack.c.h.b16 %v171
  %v974 = vunpack.c.l.b16 %v172
  %v975 = vunpack.c.h.b16 %v172
  %v976 = vunpack.c.l.b16 %v173
  %v977 = vunpack.c.h.b16 %v173
  %v978 = vunpack.c.l.b16 %v174
  %v979 = vunpack.c.h.b16 %v174
  %v980 = vunpack.c.l.b16 %v175
  %v981 = vunpack.c.h.b16 %v175
  %v982 = vunpack.c.l.b16 %v176
  %v983 = vunpack.c.h.b16 %v176
  %v984 = vunpack.c.l.b16 %v177
  %v985 = vunpack.c.h.b16 %v177
  %v986 = vunpack.c.l.b16 %v178
  %v987 = vunpack.c.h.b16 %v178
  %v988 = vunpack.c.l.b16 %v179
  %v989 = vunpack.c.h.b16 %v179
  %v990 = vunpack.c.l.b16 %v180
  %v991 = vunpack.c.h.b16 %v180
  %v992 = vunpack.c.l.b16 %v181
  %v993 = vunpack.c.h.b16 %v181
  %v994 = vunpack.c.l.b16 %v182
  %v995 = vunpack.c.h.b16 %v182
  %v996 = vunpack.c.l.b16 %v183
  %v997 = vunpack.c.h.b16 %v183
  %v998 = vunpack.c.l.b16 %v184
  %v999 = vunpack.c.h.b16 %v184
  %v1000 = vunpack.c.l.b16 %v185
  %v1001 = vunpack.c.h.b16 %v185
  %v1002 = vunpack.c.l.b16 %v186
  %v1003 = vunpack.c.h.b16 %v186
  %v1004 = vunpack.c.l.b16 %v187
  %v1005 = vunpack.c.h.b16 %v187
  %v1006 = vunpack.c.l.b16 %v188
  %v1007 = vunpack.c.h.b16 %v188
  %v1008 = vunpack.c.l.b16 %v189
  %v1009 = vunpack.c.h.b16 %v189
  %v1010 = vunpack.c.l.b16 %v190
  %v1011 = vunpack.c.h.b16 %v190
  %v1012 = vunpack.c.l.b16 %v191
  %v1013 = vunpack.c.h.b16 %v191
  %v1014 = vunpack.c.l.b16 %v192
  %v1015 = vunpack.c.h.b16 %v192
  %v1016 = vunpack.c.l.b16 %v193
  %v1017 = vunpack.c.h.b16 %v193
  %v1018 = vunpack.c.l.b16 %v194
  %v1019 = vunpack.c.h.b16 %v194
  %v1020 = vunpack.c.l.b16 %v195
  %v1021 = vunpack.c.h.b16 %v195
  %v1022 = vunpack.c.l.b16 %v196
  %v1023 = vunpack.c.h.b16 %v196
  %v1024 = vunpack.c.l.b16 %v197
  %v1025 = vunpack.c.h.b16 %v197
  %v1026 = vunpack.c.l.b16 %v198
  %v1027 = vunpack.c.h.b16 %v198
  %v1028 = vunpack.c.l.b16 %v199
  %v1029 = vunpack.c.h.b16 %v199
  %v1030 = vunpack.c.l.b16 %v200
  %v1031 = vunpack.c.h.b16 %v200
  %v1032 = vunpack.c.l.b16 %v201
  %v1033 = vunpack.c.h.b16 %v201
  %v1034 = vunpack.c.l.b16 %v202
  %v1035 = vunpack.c.h.b16 %v202
  %v1036 = vunpack.c.l.b16 %v203
  %v1037 = vunpack.c.h.b16 %v203
  %v1038 = vunpack.c.l.b16 %v204
  %v1039 = vunpack.c.h.b16 %v204
  %v1040 = vunpack.c.l.b16 %v205
  %v1041 = vunpack.c.h.b16 %v205
  %v1042 = vunpack.c.l.b16 %v206
  %v1043 = vunpack.c.h.b16 %v206
  %v1044 = vunpack.c.l.b16 %v207
  %v1045 = vunpack.c.h.b16 %v207
  %v1046 = vunpack.c.l.b16 %v208
  %v1047 = vunpack.c.h.b16 %v208
  %v1048 = vunpack.c.l.b16 %v209
  %v1049 = vunpack.c.h.b16 %v209
  %v1050 = vunpack.c.l.b16 %v210
  %v1051 = vunpack.c.h.b16 %v210
  %v1052 = vunpack.c.l.b16 %v211
  %v1053 = vunpack.c.h.b16 %v211
  %v1054 = vunpack.c.l.b16 %v212
  %v1055 = vunpack.c.h.b16 %v212
  %v1056 = vunpack.c.l.b16 %v213
  %v1057 = vunpack.c.h.b16 %v213
  %v1058 = vunpack.c.l.b16 %v214
  %v1059 = vunpack.c.h.b16 %v214
  %v1060 = vunpack.c.l.b16 %v215
  %v1061 = vunpack.c.h.b16 %v215
  %v1062 = vunpack.c.l.b16 %v216
  %v1063 = vunpack.c.h.b16 %v216
  %v1064 = vunpack.c.l.b16 %v217
  %v1065 = vunpack.c.h.b16 %v217
  %v1066 = vunpack.c.l.b16 %v218
  %v1067 = vunpack.c.h.b16 %v218
  %v1068 = vunpack.c.l.b16 %v219
  %v1069 = vunpack.c.h.b16 %v219
  %v1070 = vunpack.c.l.b16 %v220
  %v1071 = vunpack.c.h.b16 %v220
  %v1072 = vunpack.c.l.b16 %v221
  %v1073 = vunpack.c.h.b16 %v221
  %v1074 = vunpack.c.l.b16 %v222
  %v1075 = vunpack.c.h.b16 %v222
  %v1076 = vunpack.c.l.b16 %v223
  %v1077 = vunpack.c.h.b16 %v223
  %v1078 = vunpack.c.l.b16 %v224
  %v1079 = vunpack.c.h.b16 %v224
  %v1080 = vunpack.c.l.b16 %v225
  %v1081 = vunpack.c.h.b16 %v225
  %v1082 = vunpack.c.l.b16 %v226
  %v1083 = vunpack.c.h.b16 %v226
  %v1084 = vunpack.c.l.b16 %v227
  %v1085 = vunpack.c.h.b16 %v227
  %v1086 = vunpack.c.l.b16 %v228
  %v1087 = vunpack.c.h.b16 %v228
  %v1088 = vunpack.c.l.b16 %v229
  %v1089 = vunpack.c.h.b16 %v229
  %v1090 = vunpack.c.l.b16 %v230
  %v1091 = vunpack.c.h.b16 %v230
  %v1092 = vunpack.c.l.b16 %v231
  %v1093 = vunpack.c.h.b16 %v231
  %v1094 = vunpack.c.l.b16 %v232
  %v1095 = vunpack.c.h.b16 %v232
  %v1096 = vunpack.c.l.b16 %v233
  %v1097 = vunpack.c.h.b16 %v233
  %v1098 = vunpack.c.l.b16 %v234
  %v1099 = vunpack.c.h.b16 %v234
  %v1100 = vunpack.c.l.b16 %v235
  %v1101 = vunpack.c.h.b16 %v235
  %v1102 = vunpack.c.l.b16 %v236
  %v1103 = vunpack.c.h.b16 %v236
  %v1104 = vunpack.c.l.b16 %v237
  %v1105 = vunpack.c.h.b16 %v237
  %v1106 = vunpack.c.l.b16 %v238
  %v1107 = vunpack.c.h.b16 %v238
  %v1108 = vunpack.c.l.b16 %v239
  %v1109 = vunpack.c.h.b16 %v239
  %v1110 = vunpack.c.l.b16 %v240
  %v1111 = vunpack.c.h.b16 %v240
  %v1112 = vunpack.c.l.b16 %v241
  %v1113 = vunpack.c.h.b16 %v241
  %v1114 = vunpack.c.l.b16 %v242
  %v1115 = vunpack.c.h.b16 %v242
  %v1116 = vunpack.c.l.b16 %v243
  %v1117 = vunpack.c.h.b16 %v243
  %v1118 = vunpack.c.l.b16 %v244
  %v1119 = vunpack.c.h.b16 %v244
  %v1120 = vunpack.c.l.b16 %v245
  %v1121 = vunpack.c.h.b16 %v245
  %v1122 = vunpack.c.l.b16 %v246
  %v1123 = vunpack.c.h.b16 %v246
  %v1124 = vunpack.c.l.b16 %v247
  %v1125 = vunpack.c.h.b16 %v247
  %v1126 = vunpack.c.l.b16 %v248
  %v1127 = vunpack.c.h.b16 %v248
  %v1128 = vunpack.c.l.b16 %v249
  %v1129 = vunpack.c.h.b16 %v249
  %v1130 = vunpack.c.l.b16 %v250
  %v1131 = vunpack.c.h.b16 %v250
  %v1132 = vunpack.c.l.b16 %v251
  %v1133 = vunpack.c.h.b16 %v251
  %v1134 = vunpack.c.l.b16 %v252
  %v1135 = vunpack.c.h.b16 %v252
  %v1136 = vunpack.c.l.b16 %v253
  %v1137 = vunpack.c.h.b16 %v253
  %v1138 = vunpack.c.l.b16 %v254
  %v1139 = vunpack.c.h.b16 %v254
  %v1140 = vunpack.c.l.b16 %v255
  %v1141 = vunpack.c.h.b16 %v255
  %v1142 = vunpack.c.l.b16 %v256
  %v1143 = vunpack.c.h.b16 %v256
  %v1144 = vunpack.c.l.b16 %v257
  %v1145 = vunpack.c.h.b16 %v257
  %v1146 = vunpack.c.l.b16 %v258
  %v1147 = vunpack.c.h.b16 %v258
  %v1148 = vunpack.c.l.b16 %v259
  %v1149 = vunpack.c.h.b16 %v259
  %v1150 = vunpack.c.l.b16 %v260
  %v1151 = vunpack.c.h.b16 %v260
  %v1152 = vunpack.c.l.b16 %v261
  %v1153 = vunpack.c.h.b16 %v261
  %v1154 = vunpack.c.l.b16 %v262
  %v1155 = vunpack.c.h.b16 %v262
  %v1156 = vunpack.c.l.b16 %v263
  %v1157 = vunpack.c.h.b16 %v263
  %v1158 = vunpack.c.l.b16 %v264
  %v1159 = vunpack.c.h.b16 %v264
  %v1160 = vunpack.c.l.b16 %v265
  %v1161 = vunpack.c.h.b16 %v265
  %v1162 = vunpack.c.l.b16 %v266
  %v1163 = vunpack.c.h.b16 %v266
  %v1164 = vunpack.c.l.b16 %v267
  %v1165 = vunpack.c.h.b16 %v267
  %v1166 = vunpack.c.l.b16 %v268
  %v1167 = vunpack.c.h.b16 %v268
  %v1168 = vunpack.c.l.b16 %v269
  %v1169 = vunpack.c.h.b16 %v269
  %v1170 = vunpack.c.l.b16 %v270
  %v1171 = vunpack.c.h.b16 %v270
  %v1172 = vunpack.c.l.b16 %v271
  %v1173 = vunpack.c.h.b16 %v271
  %v1174 = vunpack.c.l.b16 %v272
  %v1175 = vunpack.c.h.b16 %v272
  %v1176 = vunpack.c.l.b16 %v273
  %v1177 = vunpack.c.h.b16 %v273
  %v1178 = vunpack.c.l.b16 %v274
  %v1179 = vunpack.c.h.b16 %v274
  %v1180 = vunpack.c.l.b16 %v275
  %v1181 = vunpack.c.h.b16 %v275
  %v1182 = vunpack.c.l.b16 %v276
  %v1183 = vunpack.c.h.b16 %v276
  %v1184 = vunpack.c.l.b16 %v277
  %v1185 = vunpack.c.h.b16 %v277
  %v1186 = vunpack.c.l.b16 %v278
  %v1187 = vunpack.c.h.b16 %v278
  %v1188 = vunpack.c.l.b16 %v279
  %v1189 = vunpack.c.h.b16 %v279
  %v1190 = vunpack.c.l.b16 %v280
  %v1191 = vunpack.c.h.b16 %v280
  %v1192 = vunpack.c.l.b16 %v281
  %v1193 = vunpack.c.h.b16 %v281
  %v1194 = vunpack.c.l.b16 %v282
  %v1195 = vunpack.c.h.b16 %v282
  %v1196 = vunpack.c.l.b16 %v283
  %v1197 = vunpack.c.h.b16 %v283
  %v1198 = vunpack.c.l.b16 %v284
  %v1199 = vunpack.c.h.b16 %v284
  %v1200 = vunpack.c.l.b16 %v285
  %v1201 = vunpack.c.h.b16 %v285
  %v1202 = vunpack.c.l.b16 %v286
  %v1203 = vunpack.c.h.b16 %v286
  %v1204 = vunpack.c.l.b16 %v287
  %v1205 = vunpack.c.h.b16 %v287
  %v1206 = vunpack.c.l.b16 %v288
  %v1207 = vunpack.c.h.b16 %v288
  %v1208 = vunpack.c.l.b16 %v289
  %v1209 = vunpack.c.h.b16 %v289
  %v1210 = vunpack.c.l.b16 %v290
  %v1211 = vunpack.c.h.b16 %v290
  %v1212 = vunpack.c.l.b16 %v291
  %v1213 = vunpack.c.h.b16 %v291
  %v1214 = vunpack.c.l.b16 %v292
  %v1215 = vunpack.c.h.b16 %v292
  %v1216 = vunpack.c.l.b16 %v293
  %v1217 = vunpack.c.h.b16 %v293
  %v1218 = vunpack.c.l.b16 %v294
  %v1219 = vunpack.c.h.b16 %v294
  %v1220 = vunpack.c.l.b16 %v295
  %v1221 = vunpack.c.h.b16 %v295
  %v1222 = vunpack.c.l.b16 %v296
  %v1223 = vunpack.c.h.b16 %v296
  %v1224 = vunpack.c.l.b16 %v297
  %v1225 = vunpack.c.h.b16 %v297
  %v1226 = vunpack.c.l.b16 %v298
  %v1227 = vunpack.c.h.b16 %v298
  %v1228 = vunpack.c.l.b16 %v299
  %v1229 = vunpack.c.h.b16 %v299
  %v1230 = vunpack.c.l.b16 %v300
  %v1231 = vunpack.c.h.b16 %v300
  %v1232 = vunpack.c.l.b16 %v301
  %v1233 = vunpack.c.h.b16 %v301
  %v1234 = vunpack.c.l.b16 %v302
  %v1235 = vunpack.c.h.b16 %v302
  %v1236 = vunpack.c.l.b16 %v303
  %v1237 = vunpack.c.h.b16 %v303
  %v1238 = vunpack.c.l.b16 %v304
  %v1239 = vunpack.c.h.b16 %v304
  %v1240 = vunpack.c.l.b16 %v305
  %v1241 = vunpack.c.h.b16 %v305
  %v1242 = vunpack.c.l.b16 %v306
  %v1243 = vunpack.c.h.b16 %v306
  %v1244 = vunpack.c.l.b16 %v307
  %v1245 = vunpack.c.h.b16 %v307
  %v1246 = vunpack.c.l.b16 %v308
  %v1247 = vunpack.c.h.b16 %v308
  %v1248 = vunpack.c.l.b16 %v309
  %v1249 = vunpack.c.h.b16 %v309
  %v1250 = vunpack.c.l.b16 %v310
  %v1251 = vunpack.c.h.b16 %v310
  %v1252 = vunpack.c.l.b16 %v311
  %v1253 = vunpack.c.h.b16 %v311
  %v1254 = vunpack.c.l.b16 %v312
  %v1255 = vunpack.c.h.b16 %v312
  %v1256 = vunpack.c.l.b16 %v313
  %v1257 = vunpack.c.h.b16 %v313
  %v1258 = vunpack.c.l.b16 %v314
  %v1259 = vunpack.c.h.b16 %v314
  %v1260 = vunpack.c.l.b16 %v315
  %v1261 = vunpack.c.h.b16 %v315
  %v1262 = vunpack.c.l.b16 %v316
  %v1263 = vunpack.c.h.b16 %v316
  %v1264 = vunpack.c.l.b16 %v317
  %v1265 = vunpack.c.h.b16 %v317
  %v1266 = vunpack.c.l.b16 %v318
  %v1267 = vunpack.c.h.b16 %v318
  %v1268 = vunpack.c.l.b16 %v319
  %v1269 = vunpack.c.h.b16 %v319
  %v1270 = vunpack.c.l.b16 %v320
  %v1271 = vunpack.c.h.b16 %v320
  %v1272 = vunpack.c.l.b16 %v321
  %v1273 = vunpack.c.h.b16 %v321
  %v1274 = vunpack.c.l.b16 %v322
  %v1275 = vunpack.c.h.b16 %v322
  %v1276 = vunpack.c.l.b16 %v323
  %v1277 = vunpack.c.h.b16 %v323
  %v1278 = vunpack.c.l.b16 %v324
  %v1279 = vunpack.c.h.b16 %v324
  %v1280 = vunpack.c.l.b16 %v325
  %v1281 = vunpack.c.h.b16 %v325
  %v1282 = vunpack.c.l.b16 %v326
  %v1283 = vunpack.c.h.b16 %v326
  %v1284 = vunpack.c.l.b16 %v327
  %v1285 = vunpack.c.h.b16 %v327
  %v1286 = vunpack.c.l.b16 %v328
  %v1287 = vunpack.c.h.b16 %v328
  %v1288 = vunpack.c.l.b16 %v329
  %v1289 = vunpack.c.h.b16 %v329
  %v1290 = vunpack.c.l.b16 %v330
  %v1291 = vunpack.c.h.b16 %v330
  %v1292 = vunpack.c.l.b16 %v331
  %v1293 = vunpack.c.h.b16 %v331
  %v1294 = vunpack.c.l.b16 %v332
  %v1295 = vunpack.c.h.b16 %v332
  %v1296 = vunpack.c.l.b16 %v333
  %v1297 = vunpack.c.h.b16 %v333
  %v1298 = vunpack.c.l.b16 %v334
  %v1299 = vunpack.c.h.b16 %v334
  %v1300 = vunpack.c.l.b16 %v335
  %v1301 = vunpack.c.h.b16 %v335
  %v1302 = vunpack.c.l.b16 %v336
  %v1303 = vunpack.c.h.b16 %v336
  %v1304 = vunpack.c.l.b16 %v337
  %v1305 = vunpack.c.h.b16 %v337
  %v1306 = vunpack.c.l.b16 %v338
  %v1307 = vunpack.c.h.b16 %v338
  %v1308 = vunpack.c.l.b16 %v339
  %v1309 = vunpack.c.h.b16 %v339
  %v1310 = vunpack.c.l.b16 %v340
  %v1311 = vunpack.c.h.b16 %v340
  %v1312 = vunpack.c.l.b16 %v341
  %v1313 = vunpack.c.h.b16 %v341
  %v1314 = vunpack.c.l.b16 %v342
  %v1315 = vunpack.c.h.b16 %v342
  %v1316 = vunpack.c.l.b16 %v343
  %v1317 = vunpack.c.h.b16 %v343
  %v1318 = vunpack.c.l.b16 %v344
  %v1319 = vunpack.c.h.b16 %v344
  %v1320 = vunpack.c.l.b16 %v345
  %v1321 = vunpack.c.h.b16 %v345
  %v1322 = vunpack.c.l.b16 %v346
  %v1323 = vunpack.c.h.b16 %v346
  %v1324 = vunpack.c.l.b16 %v347
  %v1325 = vunpack.c.h.b16 %v347
  %v1326 = vunpack.c.l.b16 %v348
  %v1327 = vunpack.c.h.b16 %v348
  %v1328 = vunpack.c.l.b16 %v349
  %v1329 = vunpack.c.h.b16 %v349
  %v1330 = vunpack.c.l.b16 %v350
  %v1331 = vunpack.c.h.b16 %v350
  %v1332 = vunpack.c.l.b16 %v351
  %v1333 = vunpack.c.h.b16 %v351
  %v1334 = vunpack.c.l.b16 %v352
  %v1335 = vunpack.c.h.b16 %v352
  %v1336 = vunpack.c.l.b16 %v353
  %v1337 = vunpack.c.h.b16 %v353
  %v1338 = vunpack.c.l.b16 %v354
  %v1339 = vunpack.c.h.b16 %v354
  %v1340 = vunpack.c.l.b16 %v355
  %v1341 = vunpack.c.h.b16 %v355
  %v1342 = vunpack.c.l.b16 %v356
  %v1343 = vunpack.c.h.b16 %v356
  %v1344 = vunpack.c.l.b16 %v357
  %v1345 = vunpack.c.h.b16 %v357
  %v1346 = vunpack.c.l.b16 %v358
  %v1347 = vunpack.c.h.b16 %v358
  %v1348 = vunpack.c.l.b16 %v359
  %v1349 = vunpack.c.h.b16 %v359
  %v1350 = vunpack.c.l.b16 %v360
  %v1351 = vunpack.c.h.b16 %v360
  %v1352 = vunpack.c.l.b16 %v361
  %v1353 = vunpack.c.h.b16 %v361
  %v1354 = vunpack.c.l.b16 %v362
  %v1355 = vunpack.c.h.b16 %v362
  %v1356 = vunpack.c.l.b16 %v363
  %v1357 = vunpack.c.h.b16 %v363
  %v1358 = vunpack.c.l.b16 %v364
  %v1359 = vunpack.c.h.b16 %v364
  %v1360 = vunpack.c.l.b16 %v365
  %v1361 = vunpack.c.h.b16 %v365
  %v1362 = vunpack.c.l.b16 %v366
  %v1363 = vunpack.c.h.b16 %v366
  %v1364 = vunpack.c.l.b16 %v367
  %v1365 = vunpack.c.h.b16 %v367
  %v1366 = vpack.c.b16 %v796, %v790
  %v1367 = vpack.c.b16 %v797, %v791
  %v1368 = vpack.c.b16 %v798, %v792
  %v1369 = vpack.c.b16 %v799, %v793
  %v1370 = vpack.c.b16 %v800, %v794
  %v1371 = vpack.c.b16 %v801, %v795
  %v1372 = vpack.c.b16 %v808, %v802
  %v1373 = vpack.c.b16 %v809, %v803
  %v1374 = vpack.c.b16 %v810, %v804
  %v1375 = vpack.c.b16 %v811, %v805
  %v1376 = vpack.c.b16 %v812, %v806
  %v1377 = vpack.c.b16 %v813, %v807
  %v1378 = vpack.c.b16 %v820, %v814
  %v1379 = vpack.c.b16 %v821, %v815
  %v1380 = vpack.c.b16 %v822, %v816
  %v1381 = vpack.c.b16 %v823, %v817
  %v1382 = vpack.c.b16 %v824, %v818
  %v1383 = vpack.c.b16 %v825, %v819
  %v1384 = vpack.c.b16 %v832, %v826
  %v1385 = vpack.c.b16 %v833, %v827
  %v1386 = vpack.c.b16 %v834, %v828
  %v1387 = vpack.c.b16 %v835, %v829
  %v1388 = vpack.c.b16 %v836, %v830
  %v1389 = vpack.c.b16 %v837, %v831
  %v1390 = vpack.c.b16 %v844, %v838
  %v1391 = vpack.c.b16 %v845, %v839
  %v1392 = vpack.c.b16 %v846, %v840
  %v1393 = vpack.c.b16 %v847, %v841
  %v1394 = vpack.c.b16 %v848, %v842
  %v1395 = vpack.c.b16 %v849, %v843
  %v1396 = vpack.c.b16 %v856, %v850
  %v1397 = vpack.c.b16 %v857, %v851
  %v1398 = vpack.c.b16 %v858, %v852
  %v1399 = vpack.c.b16 %v859, %v853
  %v1400 = vpack.c.b16 %v860, %v854
  %v1401 = vpack.c.b16 %v861, %v855
  %v1402 = vpack.c.b16 %v868, %v862
  %v1403 = vpack.c.b16 %v869, %v863
  %v1404 = vpack.c.b16 %v870, %v864
  %v1405 = vpack.c.b16 %v871, %v865
  %v1406 = vpack.c.b16 %v872, %v866
  %v1407 = vpack.c.b16 %v873, %v867
  %v1408 = vpack.c.b16 %v880, %v874
  %v1409 = vpack.c.b16 %v881, %v875
  %v1410 = vpack.c.b16 %v882, %v876
  %v1411 = vpack.c.b16 %v883, %v877
  %v1412 = vpack.c.b16 %v884, %v878
  %v1413 = vpack.c.b16 %v885, %v879
  %v1414 = vpack.c.b16 %v892, %v886
  %v1415 = vpack.c.b16 %v893, %v887
  %v1416 = vpack.c.b16 %v894, %v888
  %v1417 = vpack.c.b16 %v895, %v889
  %v1418 = vpack.c.b16 %v896, %v890
  %v1419 = vpack.c.b16 %v897, %v891
  %v1420 = vpack.c.b16 %v904, %v898
  %v1421 = vpack.c.b16 %v905, %v899
  %v1422 = vpack.c.b16 %v906, %v900
  %v1423 = vpack.c.b16 %v907, %v901
  %v1424 = vpack.c.b16 %v908, %v902
  %v1425 = vpack.c.b16 %v909, %v903
  %v1426 = vpack.c.b16 %v916, %v910
  %v1427 = vpack.c.b16 %v917, %v911
  %v1428 = vpack.c.b16 %v918, %v912
  %v1429 = vpack.c.b16 %v919, %v913
  %v1430 = vpack.c.b16 %v920, %v914
  %v1431 = vpack.c.b16 %v921, %v915
  %v1432 = vpack.c.b16 %v928, %v922
  %v1433 = vpack.c.b16 %v929, %v923
  %v1434 = vpack.c.b16 %v930, %v924
  %v1435 = vpack.c.b16 %v931, %v925
  %v1436 = vpack.c.b16 %v932, %v926
  %v1437 = vpack.c.b16 %v933, %v927
  %v1438 = vpack.c.b16 %v940, %v934
  %v1439 = vpack.c.b16 %v941, %v935
  %v1440 = vpack.c.b16 %v942, %v936
  %v1441 = vpack.c.b16 %v943, %v937
  %v1442 = vpack.c.b16 %v944, %v938
  %v1443 = vpack.c.b16 %v945, %v939
  %v1444 = vpack.c.b16 %v952, %v946
  %v1445 = vpack.c.b16 %v953, %v947
  %v1446 = vpack.c.b16 %v954, %v948
  %v1447 = vpack.c.b16 %v955, %v949
  %v1448 = vpack.c.b16 %v956, %v950
  %v1449 = vpack.c.b16 %v957, %v951
  %v1450 = vpack.c.b16 %v964, %v958
  %v1451 = vpack.c.b16 %v965, %v959
  %v1452 = vpack.c.b16 %v966, %v960
  %v1453 = vpack.c.b16 %v967, %v961
  %v1454 = vpack.c.b16 %v968, %v962
  %v1455 = vpack.c.b16 %v969, %v963
  %v1456 = vpack.c.b16 %v976, %v970
  %v1457 = vpack.c.b16 %v977, %v971
  %v1458 = vpack.c.b16 %v978, %v972
  %v1459 = vpack.c.b16 %v979, %v973
  %v1460 = vpack.c.b16 %v980, %v974
  %v1461 = vpack.c.b16 %v981, %v975
  %v1462 = vpack.c.b16 %v988, %v982
  %v1463 = vpack.c.b16 %v989, %v983
  %v1464 = vpack.c.b16 %v990, %v984
  %v1465 = vpack.c.b16 %v991, %v985
  %v1466 = vpack.c.b16 %v992, %v986
  %v1467 = vpack.c.b16 %v993, %v987
  %v1468 = vpack.c.b16 %v1000, %v994
  %v1469 = vpack.c.b16 %v1001, %v995
  %v1470 = vpack.c.b16 %v1002, %v996
  %v1471 = vpack.c.b16 %v1003, %v997
  %v1472 = vpack.c.b16 %v1004, %v998
  %v1473 = vpack.c.b16 %v1005, %v999
  %v1474 = vpack.c.b16 %v1012, %v1006
  %v1475 = vpack.c.b16 %v1013, %v1007
  %v1476 = vpack.c.b16 %v1014, %v1008
  %v1477 = vpack.c.b16 %v1015, %v1009
  %v1478 = vpack.c.b16 %v1016, %v1010
  %v1479 = vpack.c.b16 %v1017, %v1011
  %v1480 = vpack.c.b16 %v1024, %v1018
  %v1481 = vpack.c.b16 %v1025, %v1019
  %v1482 = vpack.c.b16 %v1026, %v1020
  %v1483 = vpack.c.b16 %v1027, %v1021
  %v1484 = vpack.c.b16 %v1028, %v1022
  %v1485 = vpack.c.b16 %v1029, %v1023
  %v1486 = vpack.c.b16 %v1036, %v1030
  %v1487 = vpack.c.b16 %v1037, %v1031
  %v1488 = vpack.c.b16 %v1038, %v1032
  %v1489 = vpack.c.b16 %v1039, %v1033
  %v1490 = vpack.c.b16 %v1040, %v1034
  %v1491 = vpack.c.b16 %v1041, %v1035
  %v1492 = vpack.c.b16 %v1048, %v1042
  %v1493 = vpack.c.b16 %v1049, %v1043
  %v1494 = vpack.c.b16 %v1050, %v1044
  %v1495 = vpack.c.b16 %v1051, %v1045
  %v1496 = vpack.c.b16 %v1052, %v1046
  %v1497 = vpack.c.b16 %v1053, %v1047
  %v1498 = vpack.c.b16 %v1060, %v1054
  %v1499 = vpack.c.b16 %v1061, %v1055
  %v1500 = vpack.c.b16 %v1062, %v1056
  %v1501 = vpack.c.b16 %v1063, %v1057
  %v1502 = vpack.c.b16 %v1064, %v1058
  %v1503 = vpack.c.b16 %v1065, %v1059
  %v1504 = vpack.c.b16 %v1072, %v1066
  %v1505 = vpack.c.b16 %v1073, %v1067
  %v1506 = vpack.c.b16 %v1074, %v1068
  %v1507 = vpack.c.b16 %v1075, %v1069
  %v1508 = vpack.c.b16 %v1076, %v1070
  %v1509 = vpack.c.b16 %v1077, %v1071
  %v1510 = vpack.c.b16 %v1084, %v1078
  %v1511 = vpack.c.b16 %v1085, %v1079
  %v1512 = vpack.c.b16 %v1086, %v1080
  %v1513 = vpack.c.b16 %v1087, %v1081
  %v1514 = vpack.c.b16 %v1088, %v1082
  %v1515 = vpack.c.b16 %v1089, %v1083
  %v1516 = vpack.c.b16 %v1096, %v1090
  %v1517 = vpack.c.b16 %v1097, %v1091
  %v1518 = vpack.c.b16 %v1098, %v1092
  %v1519 = vpack.c.b16 %v1099, %v1093
  %v1520 = vpack.c.b16 %v1100, %v1094
  %v1521 = vpack.c.b16 %v1101, %v1095
  %v1522 = vpack.c.b16 %v1108, %v1102
  %v1523 = vpack.c.b16 %v1109, %v1103
  %v1524 = vpack.c.b16 %v1110, %v1104
  %v1525 = vpack.c.b16 %v1111, %v1105
  %v1526 = vpack.c.b16 %v1112, %v1106
  %v1527 = vpack.c.b16 %v1113, %v1107
  %v1528 = vpack.c.b16 %v1120, %v1114
  %v1529 = vpack.c.b16 %v1121, %v1115
  %v1530 = vpack.c.b16 %v1122, %v1116
  %v1531 = vpack.c.b16 %v1123, %v1117
  %v1532 = vpack.c.b16 %v1124, %v1118
  %v1533 = vpack.c.b16 %v1125, %v1119
  %v1534 = vpack.c.b16 %v1132, %v1126
  %v1535 = vpack.c.b16 %v1133, %v1127
  %v1536 = vpack.c.b16 %v1134, %v1128
  %v1537 = vpack.c.b16 %v1135, %v1129
  %v1538 = vpack.c.b16 %v1136, %v1130
  %v1539 = vpack.c.b16 %v1137, %v1131
  %v1540 = vpack.c.b16 %v1144, %v1138
  %v1541 = vpack.c.b16 %v1145, %v1139
  %v1542 = vpack.c.b16 %v1146, %v1140
  %v1543 = vpack.c.b16 %v1147, %v1141
  %v1544 = vpack.c.b16 %v1148, %v1142
  %v1545 = vpack.c.b16 %v1149, %v1143
  %v1546 = vpack.c.b16 %v1156, %v1150
  %v1547 = vpack.c.b16 %v1157, %v1151
  %v1548 = vpack.c.b16 %v1158, %v1152
  %v1549 = vpack.c.b16 %v1159, %v1153
  %v1550 = vpack.c.b16 %v1160, %v1154
  %v1551 = vpack.c.b16 %v1161, %v1155
  %v1552 = vpack.c.b16 %v1168, %v1162
  %v1553 = vpack.c.b16 %v1169, %v1163
  %v1554 = vpack.c.b16 %v1170, %v1164
  %v1555 = vpack.c.b16 %v1171, %v1165
  %v1556 = vpack.c.b16 %v1172, %v1166
  %v1557 = vpack.c.b16 %v1173, %v1167
  %v1558 = vpack.c.b16 %v1180, %v1174
  %v1559 = vpack.c.b16 %v1181, %v1175
  %v1560 = vpack.c.b16 %v1182, %v1176
  %v1561 = vpack.c.b16 %v1183, %v1177
  %v1562 = vpack.c.b16 %v1184, %v1178
  %v1563 = vpack.c.b16 %v1185, %v1179
  %v1564 = vpack.c.b16 %v1192, %v1186
  %v1565 = vpack.c.b16 %v1193, %v1187
  %v1566 = vpack.c.b16 %v1194, %v1188
  %v1567 = vpack.c.b16 %v1195, %v1189
  %v1568 = vpack.c.b16 %v1196, %v1190
  %v1569 = vpack.c.b16 %v1197, %v1191
  %v1570 = vpack.c.b16 %v1204, %v1198
  %v1571 = vpack.c.b16 %v1205, %v1199
  %v1572 = vpack.c.b16 %v1206, %v1200
  %v1573 = vpack.c.b16 %v1207, %v1201
  %v1574 = vpack.c.b16 %v1208, %v1202
  %v1575 = vpack.c.b16 %v1209, %v1203
  %v1576 = vpack.c.b16 %v1216, %v1210
  %v1577 = vpack.c.b16 %v1217, %v1211
  %v1578 = vpack.c.b16 %v1218, %v1212
  %v1579 = vpack.c.b16 %v1219, %v1213
  %v1580 = vpack.c.b16 %v1220, %v1214
  %v1581 = vpack.c.b16 %v1221, %v1215
  %v1582 = vpack.c.b16 %v1228, %v1222
  %v1583 = vpack.c.b16 %v1229, %v1223
  %v1584 = vpack.c.b16 %v1230, %v1224
  %v1585 = vpack.c.b16 %v1231, %v1225
  %v1586 = vpack.c.b16 %v1232, %v1226
  %v1587 = vpack.c.b16 %v1233, %v1227
  %v1588 = vpack.c.b16 %v1240, %v1234
  %v1589 = vpack.c.b16 %v1241, %v1235
  %v1590 = vpack.c.b16 %v1242, %v1236
  %v1591 = vpack.c.b16 %v1243, %v1237
  %v1592 = vpack.c.b16 %v1244, %v1238
  %v1593 = vpack.c.b16 %v1245, %v1239
  %v1594 = vpack.c.b16 %v1252, %v1246
  %v1595 = vpack.c.b16 %v1253, %v1247
  %v1596 = vpack.c.b16 %v1254, %v1248
  %v1597 = vpack.c.b16 %v1255, %v1249
  %v1598 = vpack.c.b16 %v1256, %v1250
  %v1599 = vpack.c.b16 %v1257, %v1251
  %v1600 = vpack.c.b16 %v1264, %v1258
  %v1601 = vpack.c.b16 %v1265, %v1259
  %v1602 = vpack.c.b16 %v1266, %v1260
  %v1603 = vpack.c.b16 %v1267, %v1261
  %v1604 = vpack.c.b16 %v1268, %v1262
  %v1605 = vpack.c.b16 %v1269, %v1263
  %v1606 = vpack.c.b16 %v1276, %v1270
  %v1607 = vpack.c.b16 %v1277, %v1271
  %v1608 = vpack.c.b16 %v1278, %v1272
  %v1609 = vpack.c.b16 %v1279, %v1273
  %v1610 = vpack.c.b16 %v1280, %v1274
  %v1611 = vpack.c.b16 %v1281, %v1275
  %v1612 = vpack.c.b16 %v1288, %v1282
  %v1613 = vpack.c.b16 %v1289, %v1283
  %v1614 = vpack.c.b16 %v1290, %v1284
  %v1615 = vpack.c.b16 %v1291, %v1285
  %v1616 = vpack.c.b16 %v1292, %v1286
  %v1617 = vpack.c.b16 %v1293, %v1287
  %v1618 = vpack.c.b16 %v1300, %v1294
  %v1619 = vpack.c.b16 %v1301, %v1295
  %v1620 = vpack.c.b16 %v1302, %v1296
  %v1621 = vpack.c.b16 %v1303, %v1297
  %v1622 = vpack.c.b16 %v1304, %v1298
  %v1623 = vpack.c.b16 %v1305, %v1299
  %v1624 = vpack.c.b16 %v1312, %v1306
  %v1625 = vpack.c.b16 %v1313, %v1307
  %v1626 = vpack.c.b16 %v1314, %v1308
  %v1627 = vpack.c.b16 %v1315, %v1309
  %v1628 = vpack.c.b16 %v1316, %v1310
  %v1629 = vpack.c.b16 %v1317, %v1311
  %v1630 = vpack.c.b16 %v1324, %v1318
  %v1631 = vpack.c.b16 %v1325, %v1319
  %v1632 = vpack.c.b16 %v1326, %v1320
  %v1633 = vpack.c.b16 %v1327, %v1321
  %v1634 = vpack.c.b16 %v1328, %v1322
  %v1635 = vpack.c.b16 %v1329, %v1323
  %v1636 = vpack.c.b16 %v1336, %v1330
  %v1637 = vpack.c.b16 %v1337, %v1331
  %v1638 = vpack.c.b16 %v1338, %v1332
  %v1639 = vpack.c.b16 %v1339, %v1333
  %v1640 = vpack.c.b16 %v1340, %v1334
  %v1641 = vpack.c.b16 %v1341, %v1335
  %v1642 = vpack.c.b16 %v1348, %v1342
  %v1643 = vpack.c.b16 %v1349, %v1343
  %v1644 = vpack.c.b16 %v1350, %v1344
  %v1645 = vpack.c.b16 %v1351, %v1345
  %v1646 = vpack.c.b16 %v1352, %v1346
  %v1647 = vpack.c.b16 %v1353, %v1347
  %v1648 = vpack.c.b16 %v1360, %v1354
  %v1649 = vpack.c.b16 %v1361, %v1355
  %v1650 = vpack.c.b16 %v1362, %v1356
  %v1651 = vpack.c.b16 %v1363, %v1357
  %v1652 = vpack.c.b16 %v1364, %v1358
  %v1653 = vpack.c.b16 %v1365, %v1359
  %1942 = vmatpush.bf16.msra.mxu0 %v1408
  %1943 = vmatpush.bf16.msra.mxu0 %v1402
  %1944 = vmatpush.bf16.msra.mxu0 %v1396
  %1945 = vmatpush.bf16.msra.mxu0 %v1390
  %1946 = vmatpush.bf16.msra.mxu0 %v1384
  %1947 = vmatpush.bf16.msra.mxu0 %v1378
  %1948 = vmatpush.bf16.msra.mxu0 %v1372
  %1949 = vmatpush.bf16.msra.mxu0 %v1366
  %1950 = vmatmul.bf16.gmra.mxu0 %v454
  %v1951 = vpop.f32.mrf.mxu0
  %v1952 = vadd.f32 %v370, %v1951
  %v1953 = vpop.f32.mrf.mxu0
  %v1954 = vadd.f32 %v370, %v1953
  %1955 = vmatmul.bf16.gmra.mxu0 %v460
  %v1956 = vpop.f32.mrf.mxu0
  %v1957 = vadd.f32 %v370, %v1956
  %v1958 = vpop.f32.mrf.mxu0
  %v1959 = vadd.f32 %v370, %v1958
  %1960 = vmatmul.bf16.gmra.mxu0 %v466
  %v1961 = vpop.f32.mrf.mxu0
  %v1962 = vadd.f32 %v370, %v1961
  %v1963 = vpop.f32.mrf.mxu0
  %v1964 = vadd.f32 %v370, %v1963
  %1965 = vmatmul.bf16.gmra.mxu0 %v472
  %v1966 = vpop.f32.mrf.mxu0
  %v1967 = vadd.f32 %v370, %v1966
  %v1968 = vpop.f32.mrf.mxu0
  %v1969 = vadd.f32 %v370, %v1968
  %1970 = vdwg.mxu0
  %1971 = vmatpush.bf16.msra.mxu0 %v1456
  %1972 = vmatpush.bf16.msra.mxu0 %v1450
  %1973 = vmatpush.bf16.msra.mxu0 %v1444
  %1974 = vmatpush.bf16.msra.mxu0 %v1438
  %1975 = vmatpush.bf16.msra.mxu0 %v1432
  %1976 = vmatpush.bf16.msra.mxu0 %v1426
  %1977 = vmatpush.bf16.msra.mxu0 %v1420
  %1978 = vmatpush.bf16.msra.mxu0 %v1414
  %1979 = vmatmul.bf16.gmra.mxu0 %v455
  %v1980 = vpop.f32.mrf.mxu0
  %v1981 = vadd.f32 %v1952, %v1980
  %v1982 = vpop.f32.mrf.mxu0
  %v1983 = vadd.f32 %v1954, %v1982
  %1984 = vmatmul.bf16.gmra.mxu0 %v461
  %v1985 = vpop.f32.mrf.mxu0
  %v1986 = vadd.f32 %v1957, %v1985
  %v1987 = vpop.f32.mrf.mxu0
  %v1988 = vadd.f32 %v1959, %v1987
  %1989 = vmatmul.bf16.gmra.mxu0 %v467
  %v1990 = vpop.f32.mrf.mxu0
  %v1991 = vadd.f32 %v1962, %v1990
  %v1992 = vpop.f32.mrf.mxu0
  %v1993 = vadd.f32 %v1964, %v1992
  %1994 = vmatmul.bf16.gmra.mxu0 %v473
  %v1995 = vpop.f32.mrf.mxu0
  %v1996 = vadd.f32 %v1967, %v1995
  %v1997 = vpop.f32.mrf.mxu0
  %v1998 = vadd.f32 %v1969, %v1997
  %1999 = vdwg.mxu0
  %2000 = vmatpush.bf16.msra.mxu0 %v1504
  %2001 = vmatpush.bf16.msra.mxu0 %v1498
  %2002 = vmatpush.bf16.msra.mxu0 %v1492
  %2003 = vmatpush.bf16.msra.mxu0 %v1486
  %2004 = vmatpush.bf16.msra.mxu0 %v1480
  %2005 = vmatpush.bf16.msra.mxu0 %v1474
  %2006 = vmatpush.bf16.msra.mxu0 %v1468
  %2007 = vmatpush.bf16.msra.mxu0 %v1462
  %2008 = vmatmul.bf16.gmra.mxu0 %v456
  %v2009 = vpop.f32.mrf.mxu0
  %v2010 = vadd.f32 %v1981, %v2009
  %v2011 = vpop.f32.mrf.mxu0
  %v2012 = vadd.f32 %v1983, %v2011
  %2013 = vmatmul.bf16.gmra.mxu0 %v462
  %v2014 = vpop.f32.mrf.mxu0
  %v2015 = vadd.f32 %v1986, %v2014
  %v2016 = vpop.f32.mrf.mxu0
  %v2017 = vadd.f32 %v1988, %v2016
  %2018 = vmatmul.bf16.gmra.mxu0 %v468
  %v2019 = vpop.f32.mrf.mxu0
  %v2020 = vadd.f32 %v1991, %v2019
  %v2021 = vpop.f32.mrf.mxu0
  %v2022 = vadd.f32 %v1993, %v2021
  %2023 = vmatmul.bf16.gmra.mxu0 %v474
  %v2024 = vpop.f32.mrf.mxu0
  %v2025 = vadd.f32 %v1996, %v2024
  %v2026 = vpop.f32.mrf.mxu0
  %v2027 = vadd.f32 %v1998, %v2026
  %2028 = vdwg.mxu0
  %2029 = vmatpush.bf16.msra.mxu0 %v1552
  %2030 = vmatpush.bf16.msra.mxu0 %v1546
  %2031 = vmatpush.bf16.msra.mxu0 %v1540
  %2032 = vmatpush.bf16.msra.mxu0 %v1534
  %2033 = vmatpush.bf16.msra.mxu0 %v1528
  %2034 = vmatpush.bf16.msra.mxu0 %v1522
  %2035 = vmatpush.bf16.msra.mxu0 %v1516
  %2036 = vmatpush.bf16.msra.mxu0 %v1510
  %2037 = vmatmul.bf16.gmra.mxu0 %v457
  %v2038 = vpop.f32.mrf.mxu0
  %v2039 = vadd.f32 %v2010, %v2038
  %v2040 = vpop.f32.mrf.mxu0
  %v2041 = vadd.f32 %v2012, %v2040
  %2042 = vmatmul.bf16.gmra.mxu0 %v463
  %v2043 = vpop.f32.mrf.mxu0
  %v2044 = vadd.f32 %v2015, %v2043
  %v2045 = vpop.f32.mrf.mxu0
  %v2046 = vadd.f32 %v2017, %v2045
  %2047 = vmatmul.bf16.gmra.mxu0 %v469
  %v2048 = vpop.f32.mrf.mxu0
  %v2049 = vadd.f32 %v2020, %v2048
  %v2050 = vpop.f32.mrf.mxu0
  %v2051 = vadd.f32 %v2022, %v2050
  %2052 = vmatmul.bf16.gmra.mxu0 %v475
  %v2053 = vpop.f32.mrf.mxu0
  %v2054 = vadd.f32 %v2025, %v2053
  %v2055 = vpop.f32.mrf.mxu0
  %v2056 = vadd.f32 %v2027, %v2055
  %2057 = vdwg.mxu0
  %2058 = vmatpush.bf16.msra.mxu0 %v1600
  %2059 = vmatpush.bf16.msra.mxu0 %v1594
  %2060 = vmatpush.bf16.msra.mxu0 %v1588
  %2061 = vmatpush.bf16.msra.mxu0 %v1582
  %2062 = vmatpush.bf16.msra.mxu0 %v1576
  %2063 = vmatpush.bf16.msra.mxu0 %v1570
  %2064 = vmatpush.bf16.msra.mxu0 %v1564
  %2065 = vmatpush.bf16.msra.mxu0 %v1558
  %2066 = vmatmul.bf16.gmra.mxu0 %v458
  %v2067 = vpop.f32.mrf.mxu0
  %v2068 = vadd.f32 %v2039, %v2067
  %v2069 = vpop.f32.mrf.mxu0
  %v2070 = vadd.f32 %v2041, %v2069
  %2071 = vmatmul.bf16.gmra.mxu0 %v464
  %v2072 = vpop.f32.mrf.mxu0
  %v2073 = vadd.f32 %v2044, %v2072
  %v2074 = vpop.f32.mrf.mxu0
  %v2075 = vadd.f32 %v2046, %v2074
  %2076 = vmatmul.bf16.gmra.mxu0 %v470
  %v2077 = vpop.f32.mrf.mxu0
  %v2078 = vadd.f32 %v2049, %v2077
  %v2079 = vpop.f32.mrf.mxu0
  %v2080 = vadd.f32 %v2051, %v2079
  %2081 = vmatmul.bf16.gmra.mxu0 %v476
  %v2082 = vpop.f32.mrf.mxu0
  %v2083 = vadd.f32 %v2054, %v2082
  %v2084 = vpop.f32.mrf.mxu0
  %v2085 = vadd.f32 %v2056, %v2084
  %2086 = vdwg.mxu0
  %2087 = vmatpush.bf16.msra.mxu0 %v1648
  %2088 = vmatpush.bf16.msra.mxu0 %v1642
  %2089 = vmatpush.bf16.msra.mxu0 %v1636
  %2090 = vmatpush.bf16.msra.mxu0 %v1630
  %2091 = vmatpush.bf16.msra.mxu0 %v1624
  %2092 = vmatpush.bf16.msra.mxu0 %v1618
  %2093 = vmatpush.bf16.msra.mxu0 %v1612
  %2094 = vmatpush.bf16.msra.mxu0 %v1606
  %2095 = vmatmul.bf16.gmra.mxu0 %v459
  %v2096 = vpop.f32.mrf.mxu0
  %v2097 = vadd.f32 %v2068, %v2096
  %v2098 = vpop.f32.mrf.mxu0
  %v2099 = vadd.f32 %v2070, %v2098
  %2100 = vmatmul.bf16.gmra.mxu0 %v465
  %v2101 = vpop.f32.mrf.mxu0
  %v2102 = vadd.f32 %v2073, %v2101
  %v2103 = vpop.f32.mrf.mxu0
  %v2104 = vadd.f32 %v2075, %v2103
  %2105 = vmatmul.bf16.gmra.mxu0 %v471
  %v2106 = vpop.f32.mrf.mxu0
  %v2107 = vadd.f32 %v2078, %v2106
  %v2108 = vpop.f32.mrf.mxu0
  %v2109 = vadd.f32 %v2080, %v2108
  %2110 = vmatmul.bf16.gmra.mxu0 %v477
  %v2111 = vpop.f32.mrf.mxu0
  %v2112 = vadd.f32 %v2083, %v2111
  %v2113 = vpop.f32.mrf.mxu0
  %v2114 = vadd.f32 %v2085, %v2113
  %2115 = vdwg.mxu0
  %2116 = vmatpush.bf16.msra.mxu0 %v1409
  %2117 = vmatpush.bf16.msra.mxu0 %v1403
  %2118 = vmatpush.bf16.msra.mxu0 %v1397
  %2119 = vmatpush.bf16.msra.mxu0 %v1391
  %2120 = vmatpush.bf16.msra.mxu0 %v1385
  %2121 = vmatpush.bf16.msra.mxu0 %v1379
  %2122 = vmatpush.bf16.msra.mxu0 %v1373
  %2123 = vmatpush.bf16.msra.mxu0 %v1367
  %2124 = vmatmul.bf16.gmra.mxu0 %v454
  %v2125 = vpop.f32.mrf.mxu0
  %v2126 = vadd.f32 %v371, %v2125
  %v2127 = vpop.f32.mrf.mxu0
  %v2128 = vadd.f32 %v371, %v2127
  %2129 = vmatmul.bf16.gmra.mxu0 %v460
  %v2130 = vpop.f32.mrf.mxu0
  %v2131 = vadd.f32 %v371, %v2130
  %v2132 = vpop.f32.mrf.mxu0
  %v2133 = vadd.f32 %v371, %v2132
  %2134 = vmatmul.bf16.gmra.mxu0 %v466
  %v2135 = vpop.f32.mrf.mxu0
  %v2136 = vadd.f32 %v371, %v2135
  %v2137 = vpop.f32.mrf.mxu0
  %v2138 = vadd.f32 %v371, %v2137
  %2139 = vmatmul.bf16.gmra.mxu0 %v472
  %v2140 = vpop.f32.mrf.mxu0
  %v2141 = vadd.f32 %v371, %v2140
  %v2142 = vpop.f32.mrf.mxu0
  %v2143 = vadd.f32 %v371, %v2142
  %2144 = vdwg.mxu0
  %2145 = vmatpush.bf16.msra.mxu0 %v1457
  %2146 = vmatpush.bf16.msra.mxu0 %v1451
  %2147 = vmatpush.bf16.msra.mxu0 %v1445
  %2148 = vmatpush.bf16.msra.mxu0 %v1439
  %2149 = vmatpush.bf16.msra.mxu0 %v1433
  %2150 = vmatpush.bf16.msra.mxu0 %v1427
  %2151 = vmatpush.bf16.msra.mxu0 %v1421
  %2152 = vmatpush.bf16.msra.mxu0 %v1415
  %2153 = vmatmul.bf16.gmra.mxu0 %v455
  %v2154 = vpop.f32.mrf.mxu0
  %v2155 = vadd.f32 %v2126, %v2154
  %v2156 = vpop.f32.mrf.mxu0
  %v2157 = vadd.f32 %v2128, %v2156
  %2158 = vmatmul.bf16.gmra.mxu0 %v461
  %v2159 = vpop.f32.mrf.mxu0
  %v2160 = vadd.f32 %v2131, %v2159
  %v2161 = vpop.f32.mrf.mxu0
  %v2162 = vadd.f32 %v2133, %v2161
  %2163 = vmatmul.bf16.gmra.mxu0 %v467
  %v2164 = vpop.f32.mrf.mxu0
  %v2165 = vadd.f32 %v2136, %v2164
  %v2166 = vpop.f32.mrf.mxu0
  %v2167 = vadd.f32 %v2138, %v2166
  %2168 = vmatmul.bf16.gmra.mxu0 %v473
  %v2169 = vpop.f32.mrf.mxu0
  %v2170 = vadd.f32 %v2141, %v2169
  %v2171 = vpop.f32.mrf.mxu0
  %v2172 = vadd.f32 %v2143, %v2171
  %2173 = vdwg.mxu0
  %2174 = vmatpush.bf16.msra.mxu0 %v1505
  %2175 = vmatpush.bf16.msra.mxu0 %v1499
  %2176 = vmatpush.bf16.msra.mxu0 %v1493
  %2177 = vmatpush.bf16.msra.mxu0 %v1487
  %2178 = vmatpush.bf16.msra.mxu0 %v1481
  %2179 = vmatpush.bf16.msra.mxu0 %v1475
  %2180 = vmatpush.bf16.msra.mxu0 %v1469
  %2181 = vmatpush.bf16.msra.mxu0 %v1463
  %2182 = vmatmul.bf16.gmra.mxu0 %v456
  %v2183 = vpop.f32.mrf.mxu0
  %v2184 = vadd.f32 %v2155, %v2183
  %v2185 = vpop.f32.mrf.mxu0
  %v2186 = vadd.f32 %v2157, %v2185
  %2187 = vmatmul.bf16.gmra.mxu0 %v462
  %v2188 = vpop.f32.mrf.mxu0
  %v2189 = vadd.f32 %v2160, %v2188
  %v2190 = vpop.f32.mrf.mxu0
  %v2191 = vadd.f32 %v2162, %v2190
  %2192 = vmatmul.bf16.gmra.mxu0 %v468
  %v2193 = vpop.f32.mrf.mxu0
  %v2194 = vadd.f32 %v2165, %v2193
  %v2195 = vpop.f32.mrf.mxu0
  %v2196 = vadd.f32 %v2167, %v2195
  %2197 = vmatmul.bf16.gmra.mxu0 %v474
  %v2198 = vpop.f32.mrf.mxu0
  %v2199 = vadd.f32 %v2170, %v2198
  %v2200 = vpop.f32.mrf.mxu0
  %v2201 = vadd.f32 %v2172, %v2200
  %2202 = vdwg.mxu0
  %2203 = vmatpush.bf16.msra.mxu0 %v1553
  %2204 = vmatpush.bf16.msra.mxu0 %v1547
  %2205 = vmatpush.bf16.msra.mxu0 %v1541
  %2206 = vmatpush.bf16.msra.mxu0 %v1535
  %2207 = vmatpush.bf16.msra.mxu0 %v1529
  %2208 = vmatpush.bf16.msra.mxu0 %v1523
  %2209 = vmatpush.bf16.msra.mxu0 %v1517
  %2210 = vmatpush.bf16.msra.mxu0 %v1511
  %2211 = vmatmul.bf16.gmra.mxu0 %v457
  %v2212 = vpop.f32.mrf.mxu0
  %v2213 = vadd.f32 %v2184, %v2212
  %v2214 = vpop.f32.mrf.mxu0
  %v2215 = vadd.f32 %v2186, %v2214
  %2216 = vmatmul.bf16.gmra.mxu0 %v463
  %v2217 = vpop.f32.mrf.mxu0
  %v2218 = vadd.f32 %v2189, %v2217
  %v2219 = vpop.f32.mrf.mxu0
  %v2220 = vadd.f32 %v2191, %v2219
  %2221 = vmatmul.bf16.gmra.mxu0 %v469
  %v2222 = vpop.f32.mrf.mxu0
  %v2223 = vadd.f32 %v2194, %v2222
  %v2224 = vpop.f32.mrf.mxu0
  %v2225 = vadd.f32 %v2196, %v2224
  %2226 = vmatmul.bf16.gmra.mxu0 %v475
  %v2227 = vpop.f32.mrf.mxu0
  %v2228 = vadd.f32 %v2199, %v2227
  %v2229 = vpop.f32.mrf.mxu0
  %v2230 = vadd.f32 %v2201, %v2229
  %2231 = vdwg.mxu0
  %2232 = vmatpush.bf16.msra.mxu0 %v1601
  %2233 = vmatpush.bf16.msra.mxu0 %v1595
  %2234 = vmatpush.bf16.msra.mxu0 %v1589
  %2235 = vmatpush.bf16.msra.mxu0 %v1583
  %2236 = vmatpush.bf16.msra.mxu0 %v1577
  %2237 = vmatpush.bf16.msra.mxu0 %v1571
  %2238 = vmatpush.bf16.msra.mxu0 %v1565
  %2239 = vmatpush.bf16.msra.mxu0 %v1559
  %2240 = vmatmul.bf16.gmra.mxu0 %v458
  %v2241 = vpop.f32.mrf.mxu0
  %v2242 = vadd.f32 %v2213, %v2241
  %v2243 = vpop.f32.mrf.mxu0
  %v2244 = vadd.f32 %v2215, %v2243
  %2245 = vmatmul.bf16.gmra.mxu0 %v464
  %v2246 = vpop.f32.mrf.mxu0
  %v2247 = vadd.f32 %v2218, %v2246
  %v2248 = vpop.f32.mrf.mxu0
  %v2249 = vadd.f32 %v2220, %v2248
  %2250 = vmatmul.bf16.gmra.mxu0 %v470
  %v2251 = vpop.f32.mrf.mxu0
  %v2252 = vadd.f32 %v2223, %v2251
  %v2253 = vpop.f32.mrf.mxu0
  %v2254 = vadd.f32 %v2225, %v2253
  %2255 = vmatmul.bf16.gmra.mxu0 %v476
  %v2256 = vpop.f32.mrf.mxu0
  %v2257 = vadd.f32 %v2228, %v2256
  %v2258 = vpop.f32.mrf.mxu0
  %v2259 = vadd.f32 %v2230, %v2258
  %2260 = vdwg.mxu0
  %2261 = vmatpush.bf16.msra.mxu0 %v1649
  %2262 = vmatpush.bf16.msra.mxu0 %v1643
  %2263 = vmatpush.bf16.msra.mxu0 %v1637
  %2264 = vmatpush.bf16.msra.mxu0 %v1631
  %2265 = vmatpush.bf16.msra.mxu0 %v1625
  %2266 = vmatpush.bf16.msra.mxu0 %v1619
  %2267 = vmatpush.bf16.msra.mxu0 %v1613
  %2268 = vmatpush.bf16.msra.mxu0 %v1607
  %2269 = vmatmul.bf16.gmra.mxu0 %v459
  %v2270 = vpop.f32.mrf.mxu0
  %v2271 = vadd.f32 %v2242, %v2270
  %v2272 = vpop.f32.mrf.mxu0
  %v2273 = vadd.f32 %v2244, %v2272
  %2274 = vmatmul.bf16.gmra.mxu0 %v465
  %v2275 = vpop.f32.mrf.mxu0
  %v2276 = vadd.f32 %v2247, %v2275
  %v2277 = vpop.f32.mrf.mxu0
  %v2278 = vadd.f32 %v2249, %v2277
  %2279 = vmatmul.bf16.gmra.mxu0 %v471
  %v2280 = vpop.f32.mrf.mxu0
  %v2281 = vadd.f32 %v2252, %v2280
  %v2282 = vpop.f32.mrf.mxu0
  %v2283 = vadd.f32 %v2254, %v2282
  %2284 = vmatmul.bf16.gmra.mxu0 %v477
  %v2285 = vpop.f32.mrf.mxu0
  %v2286 = vadd.f32 %v2257, %v2285
  %v2287 = vpop.f32.mrf.mxu0
  %v2288 = vadd.f32 %v2259, %v2287
  %2289 = vdwg.mxu0
  %2290 = vmatpush.bf16.msra.mxu0 %v1410
  %2291 = vmatpush.bf16.msra.mxu0 %v1404
  %2292 = vmatpush.bf16.msra.mxu0 %v1398
  %2293 = vmatpush.bf16.msra.mxu0 %v1392
  %2294 = vmatpush.bf16.msra.mxu0 %v1386
  %2295 = vmatpush.bf16.msra.mxu0 %v1380
  %2296 = vmatpush.bf16.msra.mxu0 %v1374
  %2297 = vmatpush.bf16.msra.mxu0 %v1368
  %2298 = vmatmul.bf16.gmra.mxu0 %v454
  %v2299 = vpop.f32.mrf.mxu0
  %v2300 = vadd.f32 %v372, %v2299
  %v2301 = vpop.f32.mrf.mxu0
  %v2302 = vadd.f32 %v372, %v2301
  %2303 = vmatmul.bf16.gmra.mxu0 %v460
  %v2304 = vpop.f32.mrf.mxu0
  %v2305 = vadd.f32 %v372, %v2304
  %v2306 = vpop.f32.mrf.mxu0
  %v2307 = vadd.f32 %v372, %v2306
  %2308 = vmatmul.bf16.gmra.mxu0 %v466
  %v2309 = vpop.f32.mrf.mxu0
  %v2310 = vadd.f32 %v372, %v2309
  %v2311 = vpop.f32.mrf.mxu0
  %v2312 = vadd.f32 %v372, %v2311
  %2313 = vmatmul.bf16.gmra.mxu0 %v472
  %v2314 = vpop.f32.mrf.mxu0
  %v2315 = vadd.f32 %v372, %v2314
  %v2316 = vpop.f32.mrf.mxu0
  %v2317 = vadd.f32 %v372, %v2316
  %2318 = vdwg.mxu0
  %2319 = vmatpush.bf16.msra.mxu0 %v1458
  %2320 = vmatpush.bf16.msra.mxu0 %v1452
  %2321 = vmatpush.bf16.msra.mxu0 %v1446
  %2322 = vmatpush.bf16.msra.mxu0 %v1440
  %2323 = vmatpush.bf16.msra.mxu0 %v1434
  %2324 = vmatpush.bf16.msra.mxu0 %v1428
  %2325 = vmatpush.bf16.msra.mxu0 %v1422
  %2326 = vmatpush.bf16.msra.mxu0 %v1416
  %2327 = vmatmul.bf16.gmra.mxu0 %v455
  %v2328 = vpop.f32.mrf.mxu0
  %v2329 = vadd.f32 %v2300, %v2328
  %v2330 = vpop.f32.mrf.mxu0
  %v2331 = vadd.f32 %v2302, %v2330
  %2332 = vmatmul.bf16.gmra.mxu0 %v461
  %v2333 = vpop.f32.mrf.mxu0
  %v2334 = vadd.f32 %v2305, %v2333
  %v2335 = vpop.f32.mrf.mxu0
  %v2336 = vadd.f32 %v2307, %v2335
  %2337 = vmatmul.bf16.gmra.mxu0 %v467
  %v2338 = vpop.f32.mrf.mxu0
  %v2339 = vadd.f32 %v2310, %v2338
  %v2340 = vpop.f32.mrf.mxu0
  %v2341 = vadd.f32 %v2312, %v2340
  %2342 = vmatmul.bf16.gmra.mxu0 %v473
  %v2343 = vpop.f32.mrf.mxu0
  %v2344 = vadd.f32 %v2315, %v2343
  %v2345 = vpop.f32.mrf.mxu0
  %v2346 = vadd.f32 %v2317, %v2345
  %2347 = vdwg.mxu0
  %2348 = vmatpush.bf16.msra.mxu0 %v1506
  %2349 = vmatpush.bf16.msra.mxu0 %v1500
  %2350 = vmatpush.bf16.msra.mxu0 %v1494
  %2351 = vmatpush.bf16.msra.mxu0 %v1488
  %2352 = vmatpush.bf16.msra.mxu0 %v1482
  %2353 = vmatpush.bf16.msra.mxu0 %v1476
  %2354 = vmatpush.bf16.msra.mxu0 %v1470
  %2355 = vmatpush.bf16.msra.mxu0 %v1464
  %2356 = vmatmul.bf16.gmra.mxu0 %v456
  %v2357 = vpop.f32.mrf.mxu0
  %v2358 = vadd.f32 %v2329, %v2357
  %v2359 = vpop.f32.mrf.mxu0
  %v2360 = vadd.f32 %v2331, %v2359
  %2361 = vmatmul.bf16.gmra.mxu0 %v462
  %v2362 = vpop.f32.mrf.mxu0
  %v2363 = vadd.f32 %v2334, %v2362
  %v2364 = vpop.f32.mrf.mxu0
  %v2365 = vadd.f32 %v2336, %v2364
  %2366 = vmatmul.bf16.gmra.mxu0 %v468
  %v2367 = vpop.f32.mrf.mxu0
  %v2368 = vadd.f32 %v2339, %v2367
  %v2369 = vpop.f32.mrf.mxu0
  %v2370 = vadd.f32 %v2341, %v2369
  %2371 = vmatmul.bf16.gmra.mxu0 %v474
  %v2372 = vpop.f32.mrf.mxu0
  %v2373 = vadd.f32 %v2344, %v2372
  %v2374 = vpop.f32.mrf.mxu0
  %v2375 = vadd.f32 %v2346, %v2374
  %2376 = vdwg.mxu0
  %2377 = vmatpush.bf16.msra.mxu0 %v1554
  %2378 = vmatpush.bf16.msra.mxu0 %v1548
  %2379 = vmatpush.bf16.msra.mxu0 %v1542
  %2380 = vmatpush.bf16.msra.mxu0 %v1536
  %2381 = vmatpush.bf16.msra.mxu0 %v1530
  %2382 = vmatpush.bf16.msra.mxu0 %v1524
  %2383 = vmatpush.bf16.msra.mxu0 %v1518
  %2384 = vmatpush.bf16.msra.mxu0 %v1512
  %2385 = vmatmul.bf16.gmra.mxu0 %v457
  %v2386 = vpop.f32.mrf.mxu0
  %v2387 = vadd.f32 %v2358, %v2386
  %v2388 = vpop.f32.mrf.mxu0
  %v2389 = vadd.f32 %v2360, %v2388
  %2390 = vmatmul.bf16.gmra.mxu0 %v463
  %v2391 = vpop.f32.mrf.mxu0
  %v2392 = vadd.f32 %v2363, %v2391
  %v2393 = vpop.f32.mrf.mxu0
  %v2394 = vadd.f32 %v2365, %v2393
  %2395 = vmatmul.bf16.gmra.mxu0 %v469
  %v2396 = vpop.f32.mrf.mxu0
  %v2397 = vadd.f32 %v2368, %v2396
  %v2398 = vpop.f32.mrf.mxu0
  %v2399 = vadd.f32 %v2370, %v2398
  %2400 = vmatmul.bf16.gmra.mxu0 %v475
  %v2401 = vpop.f32.mrf.mxu0
  %v2402 = vadd.f32 %v2373, %v2401
  %v2403 = vpop.f32.mrf.mxu0
  %v2404 = vadd.f32 %v2375, %v2403
  %2405 = vdwg.mxu0
  %2406 = vmatpush.bf16.msra.mxu0 %v1602
  %2407 = vmatpush.bf16.msra.mxu0 %v1596
  %2408 = vmatpush.bf16.msra.mxu0 %v1590
  %2409 = vmatpush.bf16.msra.mxu0 %v1584
  %2410 = vmatpush.bf16.msra.mxu0 %v1578
  %2411 = vmatpush.bf16.msra.mxu0 %v1572
  %2412 = vmatpush.bf16.msra.mxu0 %v1566
  %2413 = vmatpush.bf16.msra.mxu0 %v1560
  %2414 = vmatmul.bf16.gmra.mxu0 %v458
  %v2415 = vpop.f32.mrf.mxu0
  %v2416 = vadd.f32 %v2387, %v2415
  %v2417 = vpop.f32.mrf.mxu0
  %v2418 = vadd.f32 %v2389, %v2417
  %2419 = vmatmul.bf16.gmra.mxu0 %v464
  %v2420 = vpop.f32.mrf.mxu0
  %v2421 = vadd.f32 %v2392, %v2420
  %v2422 = vpop.f32.mrf.mxu0
  %v2423 = vadd.f32 %v2394, %v2422
  %2424 = vmatmul.bf16.gmra.mxu0 %v470
  %v2425 = vpop.f32.mrf.mxu0
  %v2426 = vadd.f32 %v2397, %v2425
  %v2427 = vpop.f32.mrf.mxu0
  %v2428 = vadd.f32 %v2399, %v2427
  %2429 = vmatmul.bf16.gmra.mxu0 %v476
  %v2430 = vpop.f32.mrf.mxu0
  %v2431 = vadd.f32 %v2402, %v2430
  %v2432 = vpop.f32.mrf.mxu0
  %v2433 = vadd.f32 %v2404, %v2432
  %2434 = vdwg.mxu0
  %2435 = vmatpush.bf16.msra.mxu0 %v1650
  %2436 = vmatpush.bf16.msra.mxu0 %v1644
  %2437 = vmatpush.bf16.msra.mxu0 %v1638
  %2438 = vmatpush.bf16.msra.mxu0 %v1632
  %2439 = vmatpush.bf16.msra.mxu0 %v1626
  %2440 = vmatpush.bf16.msra.mxu0 %v1620
  %2441 = vmatpush.bf16.msra.mxu0 %v1614
  %2442 = vmatpush.bf16.msra.mxu0 %v1608
  %2443 = vmatmul.bf16.gmra.mxu0 %v459
  %v2444 = vpop.f32.mrf.mxu0
  %v2445 = vadd.f32 %v2416, %v2444
  %v2446 = vpop.f32.mrf.mxu0
  %v2447 = vadd.f32 %v2418, %v2446
  %2448 = vmatmul.bf16.gmra.mxu0 %v465
  %v2449 = vpop.f32.mrf.mxu0
  %v2450 = vadd.f32 %v2421, %v2449
  %v2451 = vpop.f32.mrf.mxu0
  %v2452 = vadd.f32 %v2423, %v2451
  %2453 = vmatmul.bf16.gmra.mxu0 %v471
  %v2454 = vpop.f32.mrf.mxu0
  %v2455 = vadd.f32 %v2426, %v2454
  %v2456 = vpop.f32.mrf.mxu0
  %v2457 = vadd.f32 %v2428, %v2456
  %2458 = vmatmul.bf16.gmra.mxu0 %v477
  %v2459 = vpop.f32.mrf.mxu0
  %v2460 = vadd.f32 %v2431, %v2459
  %v2461 = vpop.f32.mrf.mxu0
  %v2462 = vadd.f32 %v2433, %v2461
  %2463 = vdwg.mxu0
  %2464 = vmatpush.bf16.msra.mxu0 %v1411
  %2465 = vmatpush.bf16.msra.mxu0 %v1405
  %2466 = vmatpush.bf16.msra.mxu0 %v1399
  %2467 = vmatpush.bf16.msra.mxu0 %v1393
  %2468 = vmatpush.bf16.msra.mxu0 %v1387
  %2469 = vmatpush.bf16.msra.mxu0 %v1381
  %2470 = vmatpush.bf16.msra.mxu0 %v1375
  %2471 = vmatpush.bf16.msra.mxu0 %v1369
  %2472 = vmatmul.bf16.gmra.mxu0 %v454
  %v2473 = vpop.f32.mrf.mxu0
  %v2474 = vadd.f32 %v373, %v2473
  %v2475 = vpop.f32.mrf.mxu0
  %v2476 = vadd.f32 %v373, %v2475
  %2477 = vmatmul.bf16.gmra.mxu0 %v460
  %v2478 = vpop.f32.mrf.mxu0
  %v2479 = vadd.f32 %v373, %v2478
  %v2480 = vpop.f32.mrf.mxu0
  %v2481 = vadd.f32 %v373, %v2480
  %2482 = vmatmul.bf16.gmra.mxu0 %v466
  %v2483 = vpop.f32.mrf.mxu0
  %v2484 = vadd.f32 %v373, %v2483
  %v2485 = vpop.f32.mrf.mxu0
  %v2486 = vadd.f32 %v373, %v2485
  %2487 = vmatmul.bf16.gmra.mxu0 %v472
  %v2488 = vpop.f32.mrf.mxu0
  %v2489 = vadd.f32 %v373, %v2488
  %v2490 = vpop.f32.mrf.mxu0
  %v2491 = vadd.f32 %v373, %v2490
  %2492 = vdwg.mxu0
  %2493 = vmatpush.bf16.msra.mxu0 %v1459
  %2494 = vmatpush.bf16.msra.mxu0 %v1453
  %2495 = vmatpush.bf16.msra.mxu0 %v1447
  %2496 = vmatpush.bf16.msra.mxu0 %v1441
  %2497 = vmatpush.bf16.msra.mxu0 %v1435
  %2498 = vmatpush.bf16.msra.mxu0 %v1429
  %2499 = vmatpush.bf16.msra.mxu0 %v1423
  %2500 = vmatpush.bf16.msra.mxu0 %v1417
  %2501 = vmatmul.bf16.gmra.mxu0 %v455
  %v2502 = vpop.f32.mrf.mxu0
  %v2503 = vadd.f32 %v2474, %v2502
  %v2504 = vpop.f32.mrf.mxu0
  %v2505 = vadd.f32 %v2476, %v2504
  %2506 = vmatmul.bf16.gmra.mxu0 %v461
  %v2507 = vpop.f32.mrf.mxu0
  %v2508 = vadd.f32 %v2479, %v2507
  %v2509 = vpop.f32.mrf.mxu0
  %v2510 = vadd.f32 %v2481, %v2509
  %2511 = vmatmul.bf16.gmra.mxu0 %v467
  %v2512 = vpop.f32.mrf.mxu0
  %v2513 = vadd.f32 %v2484, %v2512
  %v2514 = vpop.f32.mrf.mxu0
  %v2515 = vadd.f32 %v2486, %v2514
  %2516 = vmatmul.bf16.gmra.mxu0 %v473
  %v2517 = vpop.f32.mrf.mxu0
  %v2518 = vadd.f32 %v2489, %v2517
  %v2519 = vpop.f32.mrf.mxu0
  %v2520 = vadd.f32 %v2491, %v2519
  %2521 = vdwg.mxu0
  %2522 = vmatpush.bf16.msra.mxu0 %v1507
  %2523 = vmatpush.bf16.msra.mxu0 %v1501
  %2524 = vmatpush.bf16.msra.mxu0 %v1495
  %2525 = vmatpush.bf16.msra.mxu0 %v1489
  %2526 = vmatpush.bf16.msra.mxu0 %v1483
  %2527 = vmatpush.bf16.msra.mxu0 %v1477
  %2528 = vmatpush.bf16.msra.mxu0 %v1471
  %2529 = vmatpush.bf16.msra.mxu0 %v1465
  %2530 = vmatmul.bf16.gmra.mxu0 %v456
  %v2531 = vpop.f32.mrf.mxu0
  %v2532 = vadd.f32 %v2503, %v2531
  %v2533 = vpop.f32.mrf.mxu0
  %v2534 = vadd.f32 %v2505, %v2533
  %2535 = vmatmul.bf16.gmra.mxu0 %v462
  %v2536 = vpop.f32.mrf.mxu0
  %v2537 = vadd.f32 %v2508, %v2536
  %v2538 = vpop.f32.mrf.mxu0
  %v2539 = vadd.f32 %v2510, %v2538
  %2540 = vmatmul.bf16.gmra.mxu0 %v468
  %v2541 = vpop.f32.mrf.mxu0
  %v2542 = vadd.f32 %v2513, %v2541
  %v2543 = vpop.f32.mrf.mxu0
  %v2544 = vadd.f32 %v2515, %v2543
  %2545 = vmatmul.bf16.gmra.mxu0 %v474
  %v2546 = vpop.f32.mrf.mxu0
  %v2547 = vadd.f32 %v2518, %v2546
  %v2548 = vpop.f32.mrf.mxu0
  %v2549 = vadd.f32 %v2520, %v2548
  %2550 = vdwg.mxu0
  %2551 = vmatpush.bf16.msra.mxu0 %v1555
  %2552 = vmatpush.bf16.msra.mxu0 %v1549
  %2553 = vmatpush.bf16.msra.mxu0 %v1543
  %2554 = vmatpush.bf16.msra.mxu0 %v1537
  %2555 = vmatpush.bf16.msra.mxu0 %v1531
  %2556 = vmatpush.bf16.msra.mxu0 %v1525
  %2557 = vmatpush.bf16.msra.mxu0 %v1519
  %2558 = vmatpush.bf16.msra.mxu0 %v1513
  %2559 = vmatmul.bf16.gmra.mxu0 %v457
  %v2560 = vpop.f32.mrf.mxu0
  %v2561 = vadd.f32 %v2532, %v2560
  %v2562 = vpop.f32.mrf.mxu0
  %v2563 = vadd.f32 %v2534, %v2562
  %2564 = vmatmul.bf16.gmra.mxu0 %v463
  %v2565 = vpop.f32.mrf.mxu0
  %v2566 = vadd.f32 %v2537, %v2565
  %v2567 = vpop.f32.mrf.mxu0
  %v2568 = vadd.f32 %v2539, %v2567
  %2569 = vmatmul.bf16.gmra.mxu0 %v469
  %v2570 = vpop.f32.mrf.mxu0
  %v2571 = vadd.f32 %v2542, %v2570
  %v2572 = vpop.f32.mrf.mxu0
  %v2573 = vadd.f32 %v2544, %v2572
  %2574 = vmatmul.bf16.gmra.mxu0 %v475
  %v2575 = vpop.f32.mrf.mxu0
  %v2576 = vadd.f32 %v2547, %v2575
  %v2577 = vpop.f32.mrf.mxu0
  %v2578 = vadd.f32 %v2549, %v2577
  %2579 = vdwg.mxu0
  %2580 = vmatpush.bf16.msra.mxu0 %v1603
  %2581 = vmatpush.bf16.msra.mxu0 %v1597
  %2582 = vmatpush.bf16.msra.mxu0 %v1591
  %2583 = vmatpush.bf16.msra.mxu0 %v1585
  %2584 = vmatpush.bf16.msra.mxu0 %v1579
  %2585 = vmatpush.bf16.msra.mxu0 %v1573
  %2586 = vmatpush.bf16.msra.mxu0 %v1567
  %2587 = vmatpush.bf16.msra.mxu0 %v1561
  %2588 = vmatmul.bf16.gmra.mxu0 %v458
  %v2589 = vpop.f32.mrf.mxu0
  %v2590 = vadd.f32 %v2561, %v2589
  %v2591 = vpop.f32.mrf.mxu0
  %v2592 = vadd.f32 %v2563, %v2591
  %2593 = vmatmul.bf16.gmra.mxu0 %v464
  %v2594 = vpop.f32.mrf.mxu0
  %v2595 = vadd.f32 %v2566, %v2594
  %v2596 = vpop.f32.mrf.mxu0
  %v2597 = vadd.f32 %v2568, %v2596
  %2598 = vmatmul.bf16.gmra.mxu0 %v470
  %v2599 = vpop.f32.mrf.mxu0
  %v2600 = vadd.f32 %v2571, %v2599
  %v2601 = vpop.f32.mrf.mxu0
  %v2602 = vadd.f32 %v2573, %v2601
  %2603 = vmatmul.bf16.gmra.mxu0 %v476
  %v2604 = vpop.f32.mrf.mxu0
  %v2605 = vadd.f32 %v2576, %v2604
  %v2606 = vpop.f32.mrf.mxu0
  %v2607 = vadd.f32 %v2578, %v2606
  %2608 = vdwg.mxu0
  %2609 = vmatpush.bf16.msra.mxu0 %v1651
  %2610 = vmatpush.bf16.msra.mxu0 %v1645
  %2611 = vmatpush.bf16.msra.mxu0 %v1639
  %2612 = vmatpush.bf16.msra.mxu0 %v1633
  %2613 = vmatpush.bf16.msra.mxu0 %v1627
  %2614 = vmatpush.bf16.msra.mxu0 %v1621
  %2615 = vmatpush.bf16.msra.mxu0 %v1615
  %2616 = vmatpush.bf16.msra.mxu0 %v1609
  %2617 = vmatmul.bf16.gmra.mxu0 %v459
  %v2618 = vpop.f32.mrf.mxu0
  %v2619 = vadd.f32 %v2590, %v2618
  %v2620 = vpop.f32.mrf.mxu0
  %v2621 = vadd.f32 %v2592, %v2620
  %2622 = vmatmul.bf16.gmra.mxu0 %v465
  %v2623 = vpop.f32.mrf.mxu0
  %v2624 = vadd.f32 %v2595, %v2623
  %v2625 = vpop.f32.mrf.mxu0
  %v2626 = vadd.f32 %v2597, %v2625
  %2627 = vmatmul.bf16.gmra.mxu0 %v471
  %v2628 = vpop.f32.mrf.mxu0
  %v2629 = vadd.f32 %v2600, %v2628
  %v2630 = vpop.f32.mrf.mxu0
  %v2631 = vadd.f32 %v2602, %v2630
  %2632 = vmatmul.bf16.gmra.mxu0 %v477
  %v2633 = vpop.f32.mrf.mxu0
  %v2634 = vadd.f32 %v2605, %v2633
  %v2635 = vpop.f32.mrf.mxu0
  %v2636 = vadd.f32 %v2607, %v2635
  %2637 = vdwg.mxu0
  %2638 = vmatpush.bf16.msra.mxu0 %v1412
  %2639 = vmatpush.bf16.msra.mxu0 %v1406
  %2640 = vmatpush.bf16.msra.mxu0 %v1400
  %2641 = vmatpush.bf16.msra.mxu0 %v1394
  %2642 = vmatpush.bf16.msra.mxu0 %v1388
  %2643 = vmatpush.bf16.msra.mxu0 %v1382
  %2644 = vmatpush.bf16.msra.mxu0 %v1376
  %2645 = vmatpush.bf16.msra.mxu0 %v1370
  %2646 = vmatmul.bf16.gmra.mxu0 %v454
  %v2647 = vpop.f32.mrf.mxu0
  %v2648 = vadd.f32 %v374, %v2647
  %v2649 = vpop.f32.mrf.mxu0
  %v2650 = vadd.f32 %v374, %v2649
  %2651 = vmatmul.bf16.gmra.mxu0 %v460
  %v2652 = vpop.f32.mrf.mxu0
  %v2653 = vadd.f32 %v374, %v2652
  %v2654 = vpop.f32.mrf.mxu0
  %v2655 = vadd.f32 %v374, %v2654
  %2656 = vmatmul.bf16.gmra.mxu0 %v466
  %v2657 = vpop.f32.mrf.mxu0
  %v2658 = vadd.f32 %v374, %v2657
  %v2659 = vpop.f32.mrf.mxu0
  %v2660 = vadd.f32 %v374, %v2659
  %2661 = vmatmul.bf16.gmra.mxu0 %v472
  %v2662 = vpop.f32.mrf.mxu0
  %v2663 = vadd.f32 %v374, %v2662
  %v2664 = vpop.f32.mrf.mxu0
  %v2665 = vadd.f32 %v374, %v2664
  %2666 = vdwg.mxu0
  %2667 = vmatpush.bf16.msra.mxu0 %v1460
  %2668 = vmatpush.bf16.msra.mxu0 %v1454
  %2669 = vmatpush.bf16.msra.mxu0 %v1448
  %2670 = vmatpush.bf16.msra.mxu0 %v1442
  %2671 = vmatpush.bf16.msra.mxu0 %v1436
  %2672 = vmatpush.bf16.msra.mxu0 %v1430
  %2673 = vmatpush.bf16.msra.mxu0 %v1424
  %2674 = vmatpush.bf16.msra.mxu0 %v1418
  %2675 = vmatmul.bf16.gmra.mxu0 %v455
  %v2676 = vpop.f32.mrf.mxu0
  %v2677 = vadd.f32 %v2648, %v2676
  %v2678 = vpop.f32.mrf.mxu0
  %v2679 = vadd.f32 %v2650, %v2678
  %2680 = vmatmul.bf16.gmra.mxu0 %v461
  %v2681 = vpop.f32.mrf.mxu0
  %v2682 = vadd.f32 %v2653, %v2681
  %v2683 = vpop.f32.mrf.mxu0
  %v2684 = vadd.f32 %v2655, %v2683
  %2685 = vmatmul.bf16.gmra.mxu0 %v467
  %v2686 = vpop.f32.mrf.mxu0
  %v2687 = vadd.f32 %v2658, %v2686
  %v2688 = vpop.f32.mrf.mxu0
  %v2689 = vadd.f32 %v2660, %v2688
  %2690 = vmatmul.bf16.gmra.mxu0 %v473
  %v2691 = vpop.f32.mrf.mxu0
  %v2692 = vadd.f32 %v2663, %v2691
  %v2693 = vpop.f32.mrf.mxu0
  %v2694 = vadd.f32 %v2665, %v2693
  %2695 = vdwg.mxu0
  %2696 = vmatpush.bf16.msra.mxu0 %v1508
  %2697 = vmatpush.bf16.msra.mxu0 %v1502
  %2698 = vmatpush.bf16.msra.mxu0 %v1496
  %2699 = vmatpush.bf16.msra.mxu0 %v1490
  %2700 = vmatpush.bf16.msra.mxu0 %v1484
  %2701 = vmatpush.bf16.msra.mxu0 %v1478
  %2702 = vmatpush.bf16.msra.mxu0 %v1472
  %2703 = vmatpush.bf16.msra.mxu0 %v1466
  %2704 = vmatmul.bf16.gmra.mxu0 %v456
  %v2705 = vpop.f32.mrf.mxu0
  %v2706 = vadd.f32 %v2677, %v2705
  %v2707 = vpop.f32.mrf.mxu0
  %v2708 = vadd.f32 %v2679, %v2707
  %2709 = vmatmul.bf16.gmra.mxu0 %v462
  %v2710 = vpop.f32.mrf.mxu0
  %v2711 = vadd.f32 %v2682, %v2710
  %v2712 = vpop.f32.mrf.mxu0
  %v2713 = vadd.f32 %v2684, %v2712
  %2714 = vmatmul.bf16.gmra.mxu0 %v468
  %v2715 = vpop.f32.mrf.mxu0
  %v2716 = vadd.f32 %v2687, %v2715
  %v2717 = vpop.f32.mrf.mxu0
  %v2718 = vadd.f32 %v2689, %v2717
  %2719 = vmatmul.bf16.gmra.mxu0 %v474
  %v2720 = vpop.f32.mrf.mxu0
  %v2721 = vadd.f32 %v2692, %v2720
  %v2722 = vpop.f32.mrf.mxu0
  %v2723 = vadd.f32 %v2694, %v2722
  %2724 = vdwg.mxu0
  %2725 = vmatpush.bf16.msra.mxu0 %v1556
  %2726 = vmatpush.bf16.msra.mxu0 %v1550
  %2727 = vmatpush.bf16.msra.mxu0 %v1544
  %2728 = vmatpush.bf16.msra.mxu0 %v1538
  %2729 = vmatpush.bf16.msra.mxu0 %v1532
  %2730 = vmatpush.bf16.msra.mxu0 %v1526
  %2731 = vmatpush.bf16.msra.mxu0 %v1520
  %2732 = vmatpush.bf16.msra.mxu0 %v1514
  %2733 = vmatmul.bf16.gmra.mxu0 %v457
  %v2734 = vpop.f32.mrf.mxu0
  %v2735 = vadd.f32 %v2706, %v2734
  %v2736 = vpop.f32.mrf.mxu0
  %v2737 = vadd.f32 %v2708, %v2736
  %2738 = vmatmul.bf16.gmra.mxu0 %v463
  %v2739 = vpop.f32.mrf.mxu0
  %v2740 = vadd.f32 %v2711, %v2739
  %v2741 = vpop.f32.mrf.mxu0
  %v2742 = vadd.f32 %v2713, %v2741
  %2743 = vmatmul.bf16.gmra.mxu0 %v469
  %v2744 = vpop.f32.mrf.mxu0
  %v2745 = vadd.f32 %v2716, %v2744
  %v2746 = vpop.f32.mrf.mxu0
  %v2747 = vadd.f32 %v2718, %v2746
  %2748 = vmatmul.bf16.gmra.mxu0 %v475
  %v2749 = vpop.f32.mrf.mxu0
  %v2750 = vadd.f32 %v2721, %v2749
  %v2751 = vpop.f32.mrf.mxu0
  %v2752 = vadd.f32 %v2723, %v2751
  %2753 = vdwg.mxu0
  %2754 = vmatpush.bf16.msra.mxu0 %v1604
  %2755 = vmatpush.bf16.msra.mxu0 %v1598
  %2756 = vmatpush.bf16.msra.mxu0 %v1592
  %2757 = vmatpush.bf16.msra.mxu0 %v1586
  %2758 = vmatpush.bf16.msra.mxu0 %v1580
  %2759 = vmatpush.bf16.msra.mxu0 %v1574
  %2760 = vmatpush.bf16.msra.mxu0 %v1568
  %2761 = vmatpush.bf16.msra.mxu0 %v1562
  %2762 = vmatmul.bf16.gmra.mxu0 %v458
  %v2763 = vpop.f32.mrf.mxu0
  %v2764 = vadd.f32 %v2735, %v2763
  %v2765 = vpop.f32.mrf.mxu0
  %v2766 = vadd.f32 %v2737, %v2765
  %2767 = vmatmul.bf16.gmra.mxu0 %v464
  %v2768 = vpop.f32.mrf.mxu0
  %v2769 = vadd.f32 %v2740, %v2768
  %v2770 = vpop.f32.mrf.mxu0
  %v2771 = vadd.f32 %v2742, %v2770
  %2772 = vmatmul.bf16.gmra.mxu0 %v470
  %v2773 = vpop.f32.mrf.mxu0
  %v2774 = vadd.f32 %v2745, %v2773
  %v2775 = vpop.f32.mrf.mxu0
  %v2776 = vadd.f32 %v2747, %v2775
  %2777 = vmatmul.bf16.gmra.mxu0 %v476
  %v2778 = vpop.f32.mrf.mxu0
  %v2779 = vadd.f32 %v2750, %v2778
  %v2780 = vpop.f32.mrf.mxu0
  %v2781 = vadd.f32 %v2752, %v2780
  %2782 = vdwg.mxu0
  %2783 = vmatpush.bf16.msra.mxu0 %v1652
  %2784 = vmatpush.bf16.msra.mxu0 %v1646
  %2785 = vmatpush.bf16.msra.mxu0 %v1640
  %2786 = vmatpush.bf16.msra.mxu0 %v1634
  %2787 = vmatpush.bf16.msra.mxu0 %v1628
  %2788 = vmatpush.bf16.msra.mxu0 %v1622
  %2789 = vmatpush.bf16.msra.mxu0 %v1616
  %2790 = vmatpush.bf16.msra.mxu0 %v1610
  %2791 = vmatmul.bf16.gmra.mxu0 %v459
  %v2792 = vpop.f32.mrf.mxu0
  %v2793 = vadd.f32 %v2764, %v2792
  %v2794 = vpop.f32.mrf.mxu0
  %v2795 = vadd.f32 %v2766, %v2794
  %2796 = vmatmul.bf16.gmra.mxu0 %v465
  %v2797 = vpop.f32.mrf.mxu0
  %v2798 = vadd.f32 %v2769, %v2797
  %v2799 = vpop.f32.mrf.mxu0
  %v2800 = vadd.f32 %v2771, %v2799
  %2801 = vmatmul.bf16.gmra.mxu0 %v471
  %v2802 = vpop.f32.mrf.mxu0
  %v2803 = vadd.f32 %v2774, %v2802
  %v2804 = vpop.f32.mrf.mxu0
  %v2805 = vadd.f32 %v2776, %v2804
  %2806 = vmatmul.bf16.gmra.mxu0 %v477
  %v2807 = vpop.f32.mrf.mxu0
  %v2808 = vadd.f32 %v2779, %v2807
  %v2809 = vpop.f32.mrf.mxu0
  %v2810 = vadd.f32 %v2781, %v2809
  %2811 = vdwg.mxu0
  %2812 = vmatpush.bf16.msra.mxu0 %v1413
  %2813 = vmatpush.bf16.msra.mxu0 %v1407
  %2814 = vmatpush.bf16.msra.mxu0 %v1401
  %2815 = vmatpush.bf16.msra.mxu0 %v1395
  %2816 = vmatpush.bf16.msra.mxu0 %v1389
  %2817 = vmatpush.bf16.msra.mxu0 %v1383
  %2818 = vmatpush.bf16.msra.mxu0 %v1377
  %2819 = vmatpush.bf16.msra.mxu0 %v1371
  %2820 = vmatmul.bf16.gmra.mxu0 %v454
  %v2821 = vpop.f32.mrf.mxu0
  %v2822 = vadd.f32 %v375, %v2821
  %v2823 = vpop.f32.mrf.mxu0
  %v2824 = vadd.f32 %v375, %v2823
  %2825 = vmatmul.bf16.gmra.mxu0 %v460
  %v2826 = vpop.f32.mrf.mxu0
  %v2827 = vadd.f32 %v375, %v2826
  %v2828 = vpop.f32.mrf.mxu0
  %v2829 = vadd.f32 %v375, %v2828
  %2830 = vmatmul.bf16.gmra.mxu0 %v466
  %v2831 = vpop.f32.mrf.mxu0
  %v2832 = vadd.f32 %v375, %v2831
  %v2833 = vpop.f32.mrf.mxu0
  %v2834 = vadd.f32 %v375, %v2833
  %2835 = vmatmul.bf16.gmra.mxu0 %v472
  %v2836 = vpop.f32.mrf.mxu0
  %v2837 = vadd.f32 %v375, %v2836
  %v2838 = vpop.f32.mrf.mxu0
  %v2839 = vadd.f32 %v375, %v2838
  %2840 = vdwg.mxu0
  %2841 = vmatpush.bf16.msra.mxu0 %v1461
  %2842 = vmatpush.bf16.msra.mxu0 %v1455
  %2843 = vmatpush.bf16.msra.mxu0 %v1449
  %2844 = vmatpush.bf16.msra.mxu0 %v1443
  %2845 = vmatpush.bf16.msra.mxu0 %v1437
  %2846 = vmatpush.bf16.msra.mxu0 %v1431
  %2847 = vmatpush.bf16.msra.mxu0 %v1425
  %2848 = vmatpush.bf16.msra.mxu0 %v1419
  %2849 = vmatmul.bf16.gmra.mxu0 %v455
  %v2850 = vpop.f32.mrf.mxu0
  %v2851 = vadd.f32 %v2822, %v2850
  %v2852 = vpop.f32.mrf.mxu0
  %v2853 = vadd.f32 %v2824, %v2852
  %2854 = vmatmul.bf16.gmra.mxu0 %v461
  %v2855 = vpop.f32.mrf.mxu0
  %v2856 = vadd.f32 %v2827, %v2855
  %v2857 = vpop.f32.mrf.mxu0
  %v2858 = vadd.f32 %v2829, %v2857
  %2859 = vmatmul.bf16.gmra.mxu0 %v467
  %v2860 = vpop.f32.mrf.mxu0
  %v2861 = vadd.f32 %v2832, %v2860
  %v2862 = vpop.f32.mrf.mxu0
  %v2863 = vadd.f32 %v2834, %v2862
  %2864 = vmatmul.bf16.gmra.mxu0 %v473
  %v2865 = vpop.f32.mrf.mxu0
  %v2866 = vadd.f32 %v2837, %v2865
  %v2867 = vpop.f32.mrf.mxu0
  %v2868 = vadd.f32 %v2839, %v2867
  %2869 = vdwg.mxu0
  %2870 = vmatpush.bf16.msra.mxu0 %v1509
  %2871 = vmatpush.bf16.msra.mxu0 %v1503
  %2872 = vmatpush.bf16.msra.mxu0 %v1497
  %2873 = vmatpush.bf16.msra.mxu0 %v1491
  %2874 = vmatpush.bf16.msra.mxu0 %v1485
  %2875 = vmatpush.bf16.msra.mxu0 %v1479
  %2876 = vmatpush.bf16.msra.mxu0 %v1473
  %2877 = vmatpush.bf16.msra.mxu0 %v1467
  %2878 = vmatmul.bf16.gmra.mxu0 %v456
  %v2879 = vpop.f32.mrf.mxu0
  %v2880 = vadd.f32 %v2851, %v2879
  %v2881 = vpop.f32.mrf.mxu0
  %v2882 = vadd.f32 %v2853, %v2881
  %2883 = vmatmul.bf16.gmra.mxu0 %v462
  %v2884 = vpop.f32.mrf.mxu0
  %v2885 = vadd.f32 %v2856, %v2884
  %v2886 = vpop.f32.mrf.mxu0
  %v2887 = vadd.f32 %v2858, %v2886
  %2888 = vmatmul.bf16.gmra.mxu0 %v468
  %v2889 = vpop.f32.mrf.mxu0
  %v2890 = vadd.f32 %v2861, %v2889
  %v2891 = vpop.f32.mrf.mxu0
  %v2892 = vadd.f32 %v2863, %v2891
  %2893 = vmatmul.bf16.gmra.mxu0 %v474
  %v2894 = vpop.f32.mrf.mxu0
  %v2895 = vadd.f32 %v2866, %v2894
  %v2896 = vpop.f32.mrf.mxu0
  %v2897 = vadd.f32 %v2868, %v2896
  %2898 = vdwg.mxu0
  %2899 = vmatpush.bf16.msra.mxu0 %v1557
  %2900 = vmatpush.bf16.msra.mxu0 %v1551
  %2901 = vmatpush.bf16.msra.mxu0 %v1545
  %2902 = vmatpush.bf16.msra.mxu0 %v1539
  %2903 = vmatpush.bf16.msra.mxu0 %v1533
  %2904 = vmatpush.bf16.msra.mxu0 %v1527
  %2905 = vmatpush.bf16.msra.mxu0 %v1521
  %2906 = vmatpush.bf16.msra.mxu0 %v1515
  %2907 = vmatmul.bf16.gmra.mxu0 %v457
  %v2908 = vpop.f32.mrf.mxu0
  %v2909 = vadd.f32 %v2880, %v2908
  %v2910 = vpop.f32.mrf.mxu0
  %v2911 = vadd.f32 %v2882, %v2910
  %2912 = vmatmul.bf16.gmra.mxu0 %v463
  %v2913 = vpop.f32.mrf.mxu0
  %v2914 = vadd.f32 %v2885, %v2913
  %v2915 = vpop.f32.mrf.mxu0
  %v2916 = vadd.f32 %v2887, %v2915
  %2917 = vmatmul.bf16.gmra.mxu0 %v469
  %v2918 = vpop.f32.mrf.mxu0
  %v2919 = vadd.f32 %v2890, %v2918
  %v2920 = vpop.f32.mrf.mxu0
  %v2921 = vadd.f32 %v2892, %v2920
  %2922 = vmatmul.bf16.gmra.mxu0 %v475
  %v2923 = vpop.f32.mrf.mxu0
  %v2924 = vadd.f32 %v2895, %v2923
  %v2925 = vpop.f32.mrf.mxu0
  %v2926 = vadd.f32 %v2897, %v2925
  %2927 = vdwg.mxu0
  %2928 = vmatpush.bf16.msra.mxu0 %v1605
  %2929 = vmatpush.bf16.msra.mxu0 %v1599
  %2930 = vmatpush.bf16.msra.mxu0 %v1593
  %2931 = vmatpush.bf16.msra.mxu0 %v1587
  %2932 = vmatpush.bf16.msra.mxu0 %v1581
  %2933 = vmatpush.bf16.msra.mxu0 %v1575
  %2934 = vmatpush.bf16.msra.mxu0 %v1569
  %2935 = vmatpush.bf16.msra.mxu0 %v1563
  %2936 = vmatmul.bf16.gmra.mxu0 %v458
  %v2937 = vpop.f32.mrf.mxu0
  %v2938 = vadd.f32 %v2909, %v2937
  %v2939 = vpop.f32.mrf.mxu0
  %v2940 = vadd.f32 %v2911, %v2939
  %2941 = vmatmul.bf16.gmra.mxu0 %v464
  %v2942 = vpop.f32.mrf.mxu0
  %v2943 = vadd.f32 %v2914, %v2942
  %v2944 = vpop.f32.mrf.mxu0
  %v2945 = vadd.f32 %v2916, %v2944
  %2946 = vmatmul.bf16.gmra.mxu0 %v470
  %v2947 = vpop.f32.mrf.mxu0
  %v2948 = vadd.f32 %v2919, %v2947
  %v2949 = vpop.f32.mrf.mxu0
  %v2950 = vadd.f32 %v2921, %v2949
  %2951 = vmatmul.bf16.gmra.mxu0 %v476
  %v2952 = vpop.f32.mrf.mxu0
  %v2953 = vadd.f32 %v2924, %v2952
  %v2954 = vpop.f32.mrf.mxu0
  %v2955 = vadd.f32 %v2926, %v2954
  %2956 = vdwg.mxu0
  %2957 = vmatpush.bf16.msra.mxu0 %v1653
  %2958 = vmatpush.bf16.msra.mxu0 %v1647
  %2959 = vmatpush.bf16.msra.mxu0 %v1641
  %2960 = vmatpush.bf16.msra.mxu0 %v1635
  %2961 = vmatpush.bf16.msra.mxu0 %v1629
  %2962 = vmatpush.bf16.msra.mxu0 %v1623
  %2963 = vmatpush.bf16.msra.mxu0 %v1617
  %2964 = vmatpush.bf16.msra.mxu0 %v1611
  %2965 = vmatmul.bf16.gmra.mxu0 %v459
  %v2966 = vpop.f32.mrf.mxu0
  %v2967 = vadd.f32 %v2938, %v2966
  %v2968 = vpop.f32.mrf.mxu0
  %v2969 = vadd.f32 %v2940, %v2968
  %2970 = vmatmul.bf16.gmra.mxu0 %v465
  %v2971 = vpop.f32.mrf.mxu0
  %v2972 = vadd.f32 %v2943, %v2971
  %v2973 = vpop.f32.mrf.mxu0
  %v2974 = vadd.f32 %v2945, %v2973
  %2975 = vmatmul.bf16.gmra.mxu0 %v471
  %v2976 = vpop.f32.mrf.mxu0
  %v2977 = vadd.f32 %v2948, %v2976
  %v2978 = vpop.f32.mrf.mxu0
  %v2979 = vadd.f32 %v2950, %v2978
  %2980 = vmatmul.bf16.gmra.mxu0 %v477
  %v2981 = vpop.f32.mrf.mxu0
  %v2982 = vadd.f32 %v2953, %v2981
  %v2983 = vpop.f32.mrf.mxu0
  %v2984 = vadd.f32 %v2955, %v2983
  %2985 = vdwg.mxu0
  %v2986 = vpack.c.bf16 %v2271, %v2097
  %v2987 = vpack.c.bf16 %v2445, %v2445
  %v2988 = vpack.c.bf16 %v2273, %v2099
  %v2989 = vpack.c.bf16 %v2447, %v2447
  %v2990 = vpack.c.bf16 %v2276, %v2102
  %v2991 = vpack.c.bf16 %v2450, %v2450
  %v2992 = vpack.c.bf16 %v2278, %v2104
  %v2993 = vpack.c.bf16 %v2452, %v2452
  %v2994 = vpack.c.bf16 %v2281, %v2107
  %v2995 = vpack.c.bf16 %v2455, %v2455
  %v2996 = vpack.c.bf16 %v2283, %v2109
  %v2997 = vpack.c.bf16 %v2457, %v2457
  %v2998 = vpack.c.bf16 %v2286, %v2112
  %v2999 = vpack.c.bf16 %v2460, %v2460
  %v3000 = vpack.c.bf16 %v2288, %v2114
  %v3001 = vpack.c.bf16 %v2462, %v2462
  %3002 = vst [vmem:[#allocation2] sm:$0xff] %v2986
  %3003 = vst [vmem:[#allocation2 + $0x8] sm:$0xf] %v2987
  %3004 = vst [vmem:[#allocation2 + $0xc] sm:$0xff] %v2988
  %3005 = vst [vmem:[#allocation2 + $0x14] sm:$0xf] %v2989
  %3006 = vst [vmem:[#allocation2 + $0x18] sm:$0xff] %v2990
  %3007 = vst [vmem:[#allocation2 + $0x20] sm:$0xf] %v2991
  %3008 = vst [vmem:[#allocation2 + $0x24] sm:$0xff] %v2992
  %3009 = vst [vmem:[#allocation2 + $0x2c] sm:$0xf] %v2993
  %3010 = vst [vmem:[#allocation2 + $0x30] sm:$0xff] %v2994
  %3011 = vst [vmem:[#allocation2 + $0x38] sm:$0xf] %v2995
  %3012 = vst [vmem:[#allocation2 + $0x3c] sm:$0xff] %v2996
  %3013 = vst [vmem:[#allocation2 + $0x44] sm:$0xf] %v2997
  %3014 = vst [vmem:[#allocation2 + $0x48] sm:$0xff] %v2998
  %3015 = vst [vmem:[#allocation2 + $0x50] sm:$0xf] %v2999
  %3016 = vst [vmem:[#allocation2 + $0x54] sm:$0xff] %v3000
  %3017 = vst [vmem:[#allocation2 + $0x5c] sm:$0xf] %v3001
  %v3018 = vpack.c.bf16 %v2793, %v2619
  %v3019 = vpack.c.bf16 %v2967, %v2967
  %v3020 = vpack.c.bf16 %v2795, %v2621
  %v3021 = vpack.c.bf16 %v2969, %v2969
  %v3022 = vpack.c.bf16 %v2798, %v2624
  %v3023 = vpack.c.bf16 %v2972, %v2972
  %v3024 = vpack.c.bf16 %v2800, %v2626
  %v3025 = vpack.c.bf16 %v2974, %v2974
  %v3026 = vpack.c.bf16 %v2803, %v2629
  %v3027 = vpack.c.bf16 %v2977, %v2977
  %v3028 = vpack.c.bf16 %v2805, %v2631
  %v3029 = vpack.c.bf16 %v2979, %v2979
  %v3030 = vpack.c.bf16 %v2808, %v2634
  %v3031 = vpack.c.bf16 %v2982, %v2982
  %v3032 = vpack.c.bf16 %v2810, %v2636
  %v3033 = vpack.c.bf16 %v2984, %v2984
  %3034 = vst [vmem:[#allocation3] sm:$0xff] %v3018
  %3035 = vst [vmem:[#allocation3 + $0x8] sm:$0xf] %v3019
  %3036 = vst [vmem:[#allocation3 + $0xc] sm:$0xff] %v3020
  %3037 = vst [vmem:[#allocation3 + $0x14] sm:$0xf] %v3021
  %3038 = vst [vmem:[#allocation3 + $0x18] sm:$0xff] %v3022
  %3039 = vst [vmem:[#allocation3 + $0x20] sm:$0xf] %v3023
  %3040 = vst [vmem:[#allocation3 + $0x24] sm:$0xff] %v3024
  %3041 = vst [vmem:[#allocation3 + $0x2c] sm:$0xf] %v3025
  %3042 = vst [vmem:[#allocation3 + $0x30] sm:$0xff] %v3026
  %3043 = vst [vmem:[#allocation3 + $0x38] sm:$0xf] %v3027
  %3044 = vst [vmem:[#allocation3 + $0x3c] sm:$0xff] %v3028
  %3045 = vst [vmem:[#allocation3 + $0x44] sm:$0xf] %v3029
  %3046 = vst [vmem:[#allocation3 + $0x48] sm:$0xff] %v3030
  %3047 = vst [vmem:[#allocation3 + $0x50] sm:$0xf] %v3031
  %3048 = vst [vmem:[#allocation3 + $0x54] sm:$0xff] %v3032
  %3049 = vst [vmem:[#allocation3 + $0x5c] sm:$0xf] %v3033
  %v3050 = vld [vmem:[%s3] sm:$0xff]
  %v3051 = vld [vmem:[%s3 + $0x8] sm:$0xff]
  %v3052 = vld [vmem:[%s3 + $0x10] sm:$0xff]
  %v3053 = vld [vmem:[%s3 + $0x18] sm:$0xff]
  %v3054 = vld [vmem:[%s3 + $0x20] sm:$0xff]
  %v3055 = vld [vmem:[%s3 + $0x28] sm:$0xff]
  %v3056 = vld [vmem:[%s3 + $0x30] sm:$0xff]
  %v3057 = vld [vmem:[%s3 + $0x38] sm:$0xff]
  %v3058 = vld [vmem:[%s3 + $0x40] sm:$0xff]
  %v3059 = vld [vmem:[%s3 + $0x48] sm:$0xff]
  %v3060 = vld [vmem:[%s3 + $0x50] sm:$0xff]
  %v3061 = vld [vmem:[%s3 + $0x58] sm:$0xff]
  %v3062 = vld [vmem:[%s3 + $0x60] sm:$0xff]
  %v3063 = vld [vmem:[%s3 + $0x68] sm:$0xff]
  %v3064 = vld [vmem:[%s3 + $0x70] sm:$0xff]
  %v3065 = vld [vmem:[%s3 + $0x78] sm:$0xff]
  %v3066 = vld [vmem:[%s3 + $0x80] sm:$0xff]
  %v3067 = vld [vmem:[%s3 + $0x88] sm:$0xff]
  %v3068 = vld [vmem:[%s3 + $0x90] sm:$0xff]
  %v3069 = vld [vmem:[%s3 + $0x98] sm:$0xff]
  %v3070 = vld [vmem:[%s3 + $0xa0] sm:$0xff]
  %v3071 = vld [vmem:[%s3 + $0xa8] sm:$0xff]
  %v3072 = vld [vmem:[%s3 + $0xb0] sm:$0xff]
  %v3073 = vld [vmem:[%s3 + $0xb8] sm:$0xff]
  %v3074 = vld [vmem:[%s3 + $0xc0] sm:$0xff]
  %v3075 = vld [vmem:[%s3 + $0xc8] sm:$0xff]
  %v3076 = vld [vmem:[%s3 + $0xd0] sm:$0xff]
  %v3077 = vld [vmem:[%s3 + $0xd8] sm:$0xff]
  %v3078 = vld [vmem:[%s3 + $0xe0] sm:$0xff]
  %v3079 = vld [vmem:[%s3 + $0xe8] sm:$0xff]
  %v3080 = vld [vmem:[%s3 + $0xf0] sm:$0xff]
  %v3081 = vld [vmem:[%s3 + $0xf8] sm:$0xff]
  %v3082 = vld [vmem:[%s3 + $0x100] sm:$0xff]
  %v3083 = vld [vmem:[%s3 + $0x108] sm:$0xff]
  %v3084 = vld [vmem:[%s3 + $0x110] sm:$0xff]
  %v3085 = vld [vmem:[%s3 + $0x118] sm:$0xff]
  %v3086 = vld [vmem:[%s3 + $0x120] sm:$0xff]
  %v3087 = vld [vmem:[%s3 + $0x128] sm:$0xff]
  %v3088 = vld [vmem:[%s3 + $0x130] sm:$0xff]
  %v3089 = vld [vmem:[%s3 + $0x138] sm:$0xff]
  %v3090 = vld [vmem:[%s3 + $0x140] sm:$0xff]
  %v3091 = vld [vmem:[%s3 + $0x148] sm:$0xff]
  %v3092 = vld [vmem:[%s3 + $0x150] sm:$0xff]
  %v3093 = vld [vmem:[%s3 + $0x158] sm:$0xff]
  %v3094 = vld [vmem:[%s3 + $0x160] sm:$0xff]
  %v3095 = vld [vmem:[%s3 + $0x168] sm:$0xff]
  %v3096 = vld [vmem:[%s3 + $0x170] sm:$0xff]
  %v3097 = vld [vmem:[%s3 + $0x178] sm:$0xff]
  %v3098 = vld [vmem:[%s3 + $0x180] sm:$0xff]
  %v3099 = vld [vmem:[%s3 + $0x188] sm:$0xff]
  %v3100 = vld [vmem:[%s3 + $0x190] sm:$0xff]
  %v3101 = vld [vmem:[%s3 + $0x198] sm:$0xff]
  %v3102 = vld [vmem:[%s3 + $0x1a0] sm:$0xff]
  %v3103 = vld [vmem:[%s3 + $0x1a8] sm:$0xff]
  %v3104 = vld [vmem:[%s3 + $0x1b0] sm:$0xff]
  %v3105 = vld [vmem:[%s3 + $0x1b8] sm:$0xff]
  %v3106 = vld [vmem:[%s3 + $0x1c0] sm:$0xff]
  %v3107 = vld [vmem:[%s3 + $0x1c8] sm:$0xff]
  %v3108 = vld [vmem:[%s3 + $0x1d0] sm:$0xff]
  %v3109 = vld [vmem:[%s3 + $0x1d8] sm:$0xff]
  %v3110 = vld [vmem:[%s3 + $0x1e0] sm:$0xff]
  %v3111 = vld [vmem:[%s3 + $0x1e8] sm:$0xff]
  %v3112 = vld [vmem:[%s3 + $0x1f0] sm:$0xff]
  %v3113 = vld [vmem:[%s3 + $0x1f8] sm:$0xff]
  %v3114 = vld [vmem:[%s3 + $0x200] sm:$0xff]
  %v3115 = vld [vmem:[%s3 + $0x208] sm:$0xff]
  %v3116 = vld [vmem:[%s3 + $0x210] sm:$0xff]
  %v3117 = vld [vmem:[%s3 + $0x218] sm:$0xff]
  %v3118 = vld [vmem:[%s3 + $0x220] sm:$0xff]
  %v3119 = vld [vmem:[%s3 + $0x228] sm:$0xff]
  %v3120 = vld [vmem:[%s3 + $0x230] sm:$0xff]
  %v3121 = vld [vmem:[%s3 + $0x238] sm:$0xff]
  %v3122 = vld [vmem:[%s3 + $0x240] sm:$0xff]
  %v3123 = vld [vmem:[%s3 + $0x248] sm:$0xff]
  %v3124 = vld [vmem:[%s3 + $0x250] sm:$0xff]
  %v3125 = vld [vmem:[%s3 + $0x258] sm:$0xff]
  %v3126 = vld [vmem:[%s3 + $0x260] sm:$0xff]
  %v3127 = vld [vmem:[%s3 + $0x268] sm:$0xff]
  %v3128 = vld [vmem:[%s3 + $0x270] sm:$0xff]
  %v3129 = vld [vmem:[%s3 + $0x278] sm:$0xff]
  %v3130 = vld [vmem:[%s3 + $0x280] sm:$0xff]
  %v3131 = vld [vmem:[%s3 + $0x288] sm:$0xff]
  %v3132 = vld [vmem:[%s3 + $0x290] sm:$0xff]
  %v3133 = vld [vmem:[%s3 + $0x298] sm:$0xff]
  %v3134 = vld [vmem:[%s3 + $0x2a0] sm:$0xff]
  %v3135 = vld [vmem:[%s3 + $0x2a8] sm:$0xff]
  %v3136 = vld [vmem:[%s3 + $0x2b0] sm:$0xff]
  %v3137 = vld [vmem:[%s3 + $0x2b8] sm:$0xff]
  %v3138 = vld [vmem:[%s3 + $0x2c0] sm:$0xff]
  %v3139 = vld [vmem:[%s3 + $0x2c8] sm:$0xff]
  %v3140 = vld [vmem:[%s3 + $0x2d0] sm:$0xff]
  %v3141 = vld [vmem:[%s3 + $0x2d8] sm:$0xff]
  %v3142 = vld [vmem:[%s3 + $0x2e0] sm:$0xff]
  %v3143 = vld [vmem:[%s3 + $0x2e8] sm:$0xff]
  %v3144 = vld [vmem:[%s3 + $0x2f0] sm:$0xff]
  %v3145 = vld [vmem:[%s3 + $0x2f8] sm:$0xff]
  %v3146 = vld [vmem:[%s4] sm:$0x7]
  %v3147 = vld [vmem:[%s4 + $0x3] sm:$0x7]
  loop: start=0, step=1, limit=8
  $region70: #{bert_seq_tagger_forward.3} parent=0 // loop_pre_header
    _
  $region71: #{bert_seq_tagger_forward.3} parent=0 // loop_header
    %s3149 = sphi 0, %s3153
    %p3150 = scmp.ge.s32.totalorder %s3149, 8
    %v3154 = vphi 0.0, %v3399
    %v3155 = vphi 0.0, %v3400
  $region72: #{bert_seq_tagger_forward.3} parent=0 // loop_header_branch
    %3152 = sbr.rel (%p3150) target = $region76
  $region73: #{bert_seq_tagger_forward.3} parent=0 // loop_body
    %s3156 = ssub.s32 7, %s3149
    %s3157 = smul.u32 %s3149, 3
    %s3158 = smul.addr %s3157, 4
    %s3159 = scalar_lea.vmem [#allocation2], %s3158
    %v3160 = vld [vmem:[%s3159] sm:$0xff]
    %v3161 = vld [vmem:[%s3159 + $0x8] sm:$0xf]
    %v3162 = vunpack.c.l.bf16 %v3160
    %v3163 = vunpack.c.h.bf16 %v3160
    %v3164 = vunpack.c.l.bf16 %v3161
    %s3165 = smul.u32 %s3156, 3
    %s3166 = smul.addr %s3165, 4
    %s3167 = scalar_lea.vmem [#allocation3], %s3166
    %v3168 = vld [vmem:[%s3167] sm:$0xff]
    %v3169 = vld [vmem:[%s3167 + $0x8] sm:$0xf]
    %v3170 = vunpack.c.l.bf16 %v3168
    %v3171 = vunpack.c.h.bf16 %v3168
    %v3172 = vunpack.c.l.bf16 %v3169
    %v3175 = vperm.slane %v3146, 0
    %v3176 = vperm.slane %v3146, 1
    %v3177 = vperm.slane %v3146, 2
    %v3178 = vperm.slane %v3147, 0
    %v3179 = vperm.slane %v3147, 1
    %v3180 = vperm.slane %v3147, 2
    %3187 = vmatpush.msra.mxu0 %v3095
    %3188 = vmatpush.msra.mxu0 %v3092
    %3189 = vmatpush.msra.mxu0 %v3089
    %3190 = vmatpush.msra.mxu0 %v3086
    %3191 = vmatpush.msra.mxu0 %v3083
    %3192 = vmatpush.msra.mxu0 %v3080
    %3193 = vmatpush.msra.mxu0 %v3077
    %3194 = vmatpush.msra.mxu0 %v3074
    %3195 = vmatpush.msra.mxu0 %v3071
    %3196 = vmatpush.msra.mxu0 %v3068
    %3197 = vmatpush.msra.mxu0 %v3065
    %3198 = vmatpush.msra.mxu0 %v3062
    %3199 = vmatpush.msra.mxu0 %v3059
    %3200 = vmatpush.msra.mxu0 %v3056
    %3201 = vmatpush.msra.mxu0 %v3053
    %3202 = vmatpush.msra.mxu0 %v3050
    %3203 = vmatmul.f32.gmra.mxu0 %v3154
    %v3204 = vpop.f32.mrf.mxu0
    %v3205 = vadd.f32 %v3175, %v3204
    %3206 = vdwg.mxu0
    %3207 = vmatpush.msra.mxu0 %v3096
    %3208 = vmatpush.msra.mxu0 %v3093
    %3209 = vmatpush.msra.mxu0 %v3090
    %3210 = vmatpush.msra.mxu0 %v3087
    %3211 = vmatpush.msra.mxu0 %v3084
    %3212 = vmatpush.msra.mxu0 %v3081
    %3213 = vmatpush.msra.mxu0 %v3078
    %3214 = vmatpush.msra.mxu0 %v3075
    %3215 = vmatpush.msra.mxu0 %v3072
    %3216 = vmatpush.msra.mxu0 %v3069
    %3217 = vmatpush.msra.mxu0 %v3066
    %3218 = vmatpush.msra.mxu0 %v3063
    %3219 = vmatpush.msra.mxu0 %v3060
    %3220 = vmatpush.msra.mxu0 %v3057
    %3221 = vmatpush.msra.mxu0 %v3054
    %3222 = vmatpush.msra.mxu0 %v3051
    %3223 = vmatmul.f32.gmra.mxu0 %v3154
    %v3224 = vpop.f32.mrf.mxu0
    %v3225 = vadd.f32 %v3176, %v3224
    %3226 = vdwg.mxu0
    %3227 = vmatpush.msra.mxu0 %v3097
    %3228 = vmatpush.msra.mxu0 %v3094
    %3229 = vmatpush.msra.mxu0 %v3091
    %3230 = vmatpush.msra.mxu0 %v3088
    %3231 = vmatpush.msra.mxu0 %v3085
    %3232 = vmatpush.msra.mxu0 %v3082
    %3233 = vmatpush.msra.mxu0 %v3079
    %3234 = vmatpush.msra.mxu0 %v3076
    %3235 = vmatpush.msra.mxu0 %v3073
    %3236 = vmatpush.msra.mxu0 %v3070
    %3237 = vmatpush.msra.mxu0 %v3067
    %3238 = vmatpush.msra.mxu0 %v3064
    %3239 = vmatpush.msra.mxu0 %v3061
    %3240 = vmatpush.msra.mxu0 %v3058
    %3241 = vmatpush.msra.mxu0 %v3055
    %3242 = vmatpush.msra.mxu0 %v3052
    %3243 = vmatmul.f32.gmra.mxu0 %v3154
    %v3244 = vpop.f32.mrf.mxu0
    %v3245 = vadd.f32 %v3177, %v3244
    %3246 = vdwg.mxu0
    %3247 = vmatpush.msra.mxu0 %v3143
    %3248 = vmatpush.msra.mxu0 %v3140
    %3249 = vmatpush.msra.mxu0 %v3137
    %3250 = vmatpush.msra.mxu0 %v3134
    %3251 = vmatpush.msra.mxu0 %v3131
    %3252 = vmatpush.msra.mxu0 %v3128
    %3253 = vmatpush.msra.mxu0 %v3125
    %3254 = vmatpush.msra.mxu0 %v3122
    %3255 = vmatpush.msra.mxu0 %v3119
    %3256 = vmatpush.msra.mxu0 %v3116
    %3257 = vmatpush.msra.mxu0 %v3113
    %3258 = vmatpush.msra.mxu0 %v3110
    %3259 = vmatpush.msra.mxu0 %v3107
    %3260 = vmatpush.msra.mxu0 %v3104
    %3261 = vmatpush.msra.mxu0 %v3101
    %3262 = vmatpush.msra.mxu0 %v3098
    %3263 = vmatmul.f32.gmra.mxu0 %v3155
    %v3264 = vpop.f32.mrf.mxu0
    %v3265 = vadd.f32 %v3178, %v3264
    %3266 = vdwg.mxu0
    %3267 = vmatpush.msra.mxu0 %v3144
    %3268 = vmatpush.msra.mxu0 %v3141
    %3269 = vmatpush.msra.mxu0 %v3138
    %3270 = vmatpush.msra.mxu0 %v3135
    %3271 = vmatpush.msra.mxu0 %v3132
    %3272 = vmatpush.msra.mxu0 %v3129
    %3273 = vmatpush.msra.mxu0 %v3126
    %3274 = vmatpush.msra.mxu0 %v3123
    %3275 = vmatpush.msra.mxu0 %v3120
    %3276 = vmatpush.msra.mxu0 %v3117
    %3277 = vmatpush.msra.mxu0 %v3114
    %3278 = vmatpush.msra.mxu0 %v3111
    %3279 = vmatpush.msra.mxu0 %v3108
    %3280 = vmatpush.msra.mxu0 %v3105
    %3281 = vmatpush.msra.mxu0 %v3102
    %3282 = vmatpush.msra.mxu0 %v3099
    %3283 = vmatmul.f32.gmra.mxu0 %v3155
    %v3284 = vpop.f32.mrf.mxu0
    %v3285 = vadd.f32 %v3179, %v3284
    %3286 = vdwg.mxu0
    %3287 = vmatpush.msra.mxu0 %v3145
    %3288 = vmatpush.msra.mxu0 %v3142
    %3289 = vmatpush.msra.mxu0 %v3139
    %3290 = vmatpush.msra.mxu0 %v3136
    %3291 = vmatpush.msra.mxu0 %v3133
    %3292 = vmatpush.msra.mxu0 %v3130
    %3293 = vmatpush.msra.mxu0 %v3127
    %3294 = vmatpush.msra.mxu0 %v3124
    %3295 = vmatpush.msra.mxu0 %v3121
    %3296 = vmatpush.msra.mxu0 %v3118
    %3297 = vmatpush.msra.mxu0 %v3115
    %3298 = vmatpush.msra.mxu0 %v3112
    %3299 = vmatpush.msra.mxu0 %v3109
    %3300 = vmatpush.msra.mxu0 %v3106
    %3301 = vmatpush.msra.mxu0 %v3103
    %3302 = vmatpush.msra.mxu0 %v3100
    %3303 = vmatmul.f32.gmra.mxu0 %v3155
    %v3304 = vpop.f32.mrf.mxu0
    %v3305 = vadd.f32 %v3180, %v3304
    %3306 = vdwg.mxu0
    %v3307 = vadd.f32 %v3162, %v3205
    %v3308 = vadd.f32 %v3170, %v3265
    %v3309 = vsub.f32 0.0, %v3307
    %v3310 = vsub.f32 0.0, %v3308
    %v3311 = vmul.f32 %v3309, 1.442695
    %v3312 = vpow.pop %v3311
    %v3313 = vmul.f32 %v3310, 1.442695
    %v3314 = vpow.pop %v3313
    %v3315 = vadd.f32 %v3312, 1.0
    %v3316 = vadd.f32 %v3314, 1.0
    %v3317 = vrcp.pop %v3315
    %v3318 = vmul.f32 %v3315, %v3317
    %v3319 = vsub.f32 1.0, %v3318
    %v3320 = vmul.f32 %v3317, %v3319
    %v3321 = vadd.f32 %v3317, %v3320
    %vm3322 = vweird.f32 %v3315
    %vm3323 = vweird.f32 %v3317
    %vm3324 = vmor %vm3322, %vm3323
    %v3325 = vsel %vm3324, %v3317, %v3321
    %v3326 = vand.u32 2147483647, %v3315
    %vm3327 = vcmp.eq.f32.partialorder %v3326, 8.507059e+37
    %v3328 = vand.u32 %v3315, 2147483648
    %v3329 = vor.u32 1.1754944e-38, %v3328
    %v3330 = vsel %vm3327, %v3329, %v3325
    %v3331 = vmul.f32 1.0, %v3330
    %v3332 = vrcp.pop %v3316
    %v3333 = vmul.f32 %v3316, %v3332
    %v3334 = vsub.f32 1.0, %v3333
    %v3335 = vmul.f32 %v3332, %v3334
    %v3336 = vadd.f32 %v3332, %v3335
    %vm3337 = vweird.f32 %v3316
    %vm3338 = vweird.f32 %v3332
    %vm3339 = vmor %vm3337, %vm3338
    %v3340 = vsel %vm3339, %v3332, %v3336
    %v3341 = vand.u32 2147483647, %v3316
    %vm3342 = vcmp.eq.f32.partialorder %v3341, 8.507059e+37
    %v3343 = vand.u32 %v3316, 2147483648
    %v3344 = vor.u32 1.1754944e-38, %v3343
    %v3345 = vsel %vm3342, %v3344, %v3340
    %v3346 = vmul.f32 1.0, %v3345
    %v3347 = vadd.f32 %v3163, %v3225
    %v3348 = vadd.f32 %v3171, %v3285
    %v3349 = vsub.f32 0.0, %v3347
    %v3350 = vsub.f32 0.0, %v3348
    %v3351 = vmul.f32 %v3349, 1.442695
    %v3352 = vpow.pop %v3351
    %v3353 = vmul.f32 %v3350, 1.442695
    %v3354 = vpow.pop %v3353
    %v3355 = vadd.f32 %v3352, 1.0
    %v3356 = vadd.f32 %v3354, 1.0
    %v3357 = vrcp.pop %v3355
    %v3358 = vmul.f32 %v3355, %v3357
    %v3359 = vsub.f32 1.0, %v3358
    %v3360 = vmul.f32 %v3357, %v3359
    %v3361 = vadd.f32 %v3357, %v3360
    %vm3362 = vweird.f32 %v3355
    %vm3363 = vweird.f32 %v3357
    %vm3364 = vmor %vm3362, %vm3363
    %v3365 = vsel %vm3364, %v3357, %v3361
    %v3366 = vand.u32 2147483647, %v3355
    %vm3367 = vcmp.eq.f32.partialorder %v3366, 8.507059e+37
    %v3368 = vand.u32 %v3355, 2147483648
    %v3369 = vor.u32 1.1754944e-38, %v3368
    %v3370 = vsel %vm3367, %v3369, %v3365
    %v3371 = vmul.f32 1.0, %v3370
    %v3372 = vrcp.pop %v3356
    %v3373 = vmul.f32 %v3356, %v3372
    %v3374 = vsub.f32 1.0, %v3373
    %v3375 = vmul.f32 %v3372, %v3374
    %v3376 = vadd.f32 %v3372, %v3375
    %vm3377 = vweird.f32 %v3356
    %vm3378 = vweird.f32 %v3372
    %vm3379 = vmor %vm3377, %vm3378
    %v3380 = vsel %vm3379, %v3372, %v3376
    %v3381 = vand.u32 2147483647, %v3356
    %vm3382 = vcmp.eq.f32.partialorder %v3381, 8.507059e+37
    %v3383 = vand.u32 %v3356, 2147483648
    %v3384 = vor.u32 1.1754944e-38, %v3383
    %v3385 = vsel %vm3382, %v3384, %v3380
    %v3386 = vmul.f32 1.0, %v3385
    %v3387 = vmul.f32 %v3331, %v3245
    %v3388 = vmul.f32 %v3346, %v3305
    %v3389 = vadd.f32 %v3164, %v3387
    %v3390 = vadd.f32 %v3172, %v3388
    %v3391 = vtanh.pop %v3389
    %v3392 = vtanh.pop %v3390
    %v3393 = vsub.f32 1.0, %v3371
    %v3394 = vsub.f32 1.0, %v3386
    %v3395 = vmul.f32 %v3393, %v3391
    %v3396 = vmul.f32 %v3394, %v3392
    %v3397 = vmul.f32 %v3371, %v3154
    %v3398 = vmul.f32 %v3386, %v3155
    %v3399 = vadd.f32 %v3395, %v3397
    %v3400 = vadd.f32 %v3396, %v3398
    %s3401 = smul.u32 %s3149, 8
    %s3402 = scalar_lea.vmem [#allocation4], %s3401
    %3403 = vst [vmem:[%s3402] sm:$0xff] %v3399
    %s3404 = smul.u32 %s3156, 8
    %s3405 = scalar_lea.vmem [#allocation5], %s3404
    %3406 = vst [vmem:[%s3405] sm:$0xff] %v3400
  $region74: #{bert_seq_tagger_forward.3} parent=0 // loop_footer
    %s3153 = sadd.s32 1, %s3149
  $region75: #{bert_seq_tagger_forward.3} parent=0 // loop_footer_branch
    %3148 = sbr.rel target = $region71
  $region76: #{bert_seq_tagger_forward.3} parent=0 // loop_exit
    _
  %v3407 = vld [vmem:[#allocation4] sm:$0xff]
  %v3408 = vld [vmem:[#allocation4 + $0x8] sm:$0xff]
  %v3409 = vld [vmem:[#allocation4 + $0x10] sm:$0xff]
  %v3410 = vld [vmem:[#allocation4 + $0x18] sm:$0xff]
  %v3411 = vld [vmem:[#allocation4 + $0x20] sm:$0xff]
  %v3412 = vld [vmem:[#allocation4 + $0x28] sm:$0xff]
  %v3413 = vld [vmem:[#allocation4 + $0x30] sm:$0xff]
  %v3414 = vld [vmem:[#allocation4 + $0x38] sm:$0xff]
  %v3415 = vld [vmem:[#allocation5] sm:$0xff]
  %v3416 = vld [vmem:[#allocation5 + $0x8] sm:$0xff]
  %v3417 = vld [vmem:[#allocation5 + $0x10] sm:$0xff]
  %v3418 = vld [vmem:[#allocation5 + $0x18] sm:$0xff]
  %v3419 = vld [vmem:[#allocation5 + $0x20] sm:$0xff]
  %v3420 = vld [vmem:[#allocation5 + $0x28] sm:$0xff]
  %v3421 = vld [vmem:[#allocation5 + $0x30] sm:$0xff]
  %v3422 = vld [vmem:[#allocation5 + $0x38] sm:$0xff]
  %v3423 = vld [vmem:[%s5] sm:$0xff]
  %v3424 = vld [vmem:[%s5 + $0x8] sm:$0xff]
  %v3425 = vld [vmem:[%s5 + $0x10] sm:$0xff]
  %v3426 = vld [vmem:[%s5 + $0x18] sm:$0xff]
  %v3427 = vld [vmem:[%s5 + $0x20] sm:$0xff]
  %v3428 = vld [vmem:[%s5 + $0x28] sm:$0xff]
  %v3429 = vld [vmem:[%s5 + $0x30] sm:$0xff]
  %v3430 = vld [vmem:[%s5 + $0x38] sm:$0xff]
  %v3431 = vld [vmem:[%s5 + $0x40] sm:$0xff]
  %v3432 = vld [vmem:[%s5 + $0x48] sm:$0xff]
  %v3433 = vld [vmem:[%s5 + $0x50] sm:$0xff]
  %v3434 = vld [vmem:[%s5 + $0x58] sm:$0xff]
  %v3435 = vld [vmem:[%s5 + $0x60] sm:$0xff]
  %v3436 = vld [vmem:[%s5 + $0x68] sm:$0xff]
  %v3437 = vld [vmem:[%s5 + $0x70] sm:$0xff]
  %v3438 = vld [vmem:[%s5 + $0x78] sm:$0xff]
  %v3439 = vld [vmem:[%s5 + $0x80] sm:$0xff]
  %v3440 = vld [vmem:[%s5 + $0x88] sm:$0xff]
  %v3441 = vld [vmem:[%s5 + $0x90] sm:$0xff]
  %v3442 = vld [vmem:[%s5 + $0x98] sm:$0xff]
  %v3443 = vld [vmem:[%s5 + $0xa0] sm:$0xff]
  %v3444 = vld [vmem:[%s5 + $0xa8] sm:$0xff]
  %v3445 = vld [vmem:[%s5 + $0xb0] sm:$0xff]
  %v3446 = vld [vmem:[%s5 + $0xb8] sm:$0xff]
  %v3447 = vld [vmem:[%s5 + $0xc0] sm:$0xff]
  %v3448 = vld [vmem:[%s5 + $0xc8] sm:$0xff]
  %v3449 = vld [vmem:[%s5 + $0xd0] sm:$0xff]
  %v3450 = vld [vmem:[%s5 + $0xd8] sm:$0xff]
  %v3451 = vld [vmem:[%s5 + $0xe0] sm:$0xff]
  %v3452 = vld [vmem:[%s5 + $0xe8] sm:$0xff]
  %v3453 = vld [vmem:[%s5 + $0xf0] sm:$0xff]
  %v3454 = vld [vmem:[%s5 + $0xf8] sm:$0xff]
  %3455 = vmatpush.msra.mxu0 %v3454
  %3456 = vmatpush.msra.mxu0 %v3453
  %3457 = vmatpush.msra.mxu0 %v3452
  %3458 = vmatpush.msra.mxu0 %v3451
  %3459 = vmatpush.msra.mxu0 %v3450
  %3460 = vmatpush.msra.mxu0 %v3449
  %3461 = vmatpush.msra.mxu0 %v3448
  %3462 = vmatpush.msra.mxu0 %v3447
  %3463 = vmatpush.msra.mxu0 %v3446
  %3464 = vmatpush.msra.mxu0 %v3445
  %3465 = vmatpush.msra.mxu0 %v3444
  %3466 = vmatpush.msra.mxu0 %v3443
  %3467 = vmatpush.msra.mxu0 %v3442
  %3468 = vmatpush.msra.mxu0 %v3441
  %3469 = vmatpush.msra.mxu0 %v3440
  %3470 = vmatpush.msra.mxu0 %v3439
  %3471 = vmatmul.f32.gmra.mxu0 %v3415
  %v3472 = vpop.f32.mrf.mxu0
  %v3473 = vadd.f32 0.0, %v3472
  %3474 = vmatmul.f32.gmra.mxu0 %v3416
  %v3475 = vpop.f32.mrf.mxu0
  %v3476 = vadd.f32 0.0, %v3475
  %3477 = vmatmul.f32.gmra.mxu0 %v3417
  %v3478 = vpop.f32.mrf.mxu0
  %v3479 = vadd.f32 0.0, %v3478
  %3480 = vmatmul.f32.gmra.mxu0 %v3418
  %v3481 = vpop.f32.mrf.mxu0
  %v3482 = vadd.f32 0.0, %v3481
  %3483 = vmatmul.f32.gmra.mxu0 %v3419
  %v3484 = vpop.f32.mrf.mxu0
  %v3485 = vadd.f32 0.0, %v3484
  %3486 = vmatmul.f32.gmra.mxu0 %v3420
  %v3487 = vpop.f32.mrf.mxu0
  %v3488 = vadd.f32 0.0, %v3487
  %3489 = vmatmul.f32.gmra.mxu0 %v3421
  %v3490 = vpop.f32.mrf.mxu0
  %v3491 = vadd.f32 0.0, %v3490
  %3492 = vmatmul.f32.gmra.mxu0 %v3422
  %v3493 = vpop.f32.mrf.mxu0
  %v3494 = vadd.f32 0.0, %v3493
  %3495 = vdwg.mxu0
  %3496 = vmatpush.msra.mxu0 %v3438
  %3497 = vmatpush.msra.mxu0 %v3437
  %3498 = vmatpush.msra.mxu0 %v3436
  %3499 = vmatpush.msra.mxu0 %v3435
  %3500 = vmatpush.msra.mxu0 %v3434
  %3501 = vmatpush.msra.mxu0 %v3433
  %3502 = vmatpush.msra.mxu0 %v3432
  %3503 = vmatpush.msra.mxu0 %v3431
  %3504 = vmatpush.msra.mxu0 %v3430
  %3505 = vmatpush.msra.mxu0 %v3429
  %3506 = vmatpush.msra.mxu0 %v3428
  %3507 = vmatpush.msra.mxu0 %v3427
  %3508 = vmatpush.msra.mxu0 %v3426
  %3509 = vmatpush.msra.mxu0 %v3425
  %3510 = vmatpush.msra.mxu0 %v3424
  %3511 = vmatpush.msra.mxu0 %v3423
  %3512 = vmatmul.f32.gmra.mxu0 %v3407
  %v3513 = vpop.f32.mrf.mxu0
  %v3514 = vadd.f32 %v3473, %v3513
  %3515 = vmatmul.f32.gmra.mxu0 %v3408
  %v3516 = vpop.f32.mrf.mxu0
  %v3517 = vadd.f32 %v3476, %v3516
  %3518 = vmatmul.f32.gmra.mxu0 %v3409
  %v3519 = vpop.f32.mrf.mxu0
  %v3520 = vadd.f32 %v3479, %v3519
  %3521 = vmatmul.f32.gmra.mxu0 %v3410
  %v3522 = vpop.f32.mrf.mxu0
  %v3523 = vadd.f32 %v3482, %v3522
  %3524 = vmatmul.f32.gmra.mxu0 %v3411
  %v3525 = vpop.f32.mrf.mxu0
  %v3526 = vadd.f32 %v3485, %v3525
  %3527 = vmatmul.f32.gmra.mxu0 %v3412
  %v3528 = vpop.f32.mrf.mxu0
  %v3529 = vadd.f32 %v3488, %v3528
  %3530 = vmatmul.f32.gmra.mxu0 %v3413
  %v3531 = vpop.f32.mrf.mxu0
  %v3532 = vadd.f32 %v3491, %v3531
  %3533 = vmatmul.f32.gmra.mxu0 %v3414
  %v3534 = vpop.f32.mrf.mxu0
  %v3535 = vadd.f32 %v3494, %v3534
  %3536 = vdwg.mxu0
  %v3537 = vld [vmem:[%s6] sm:$0x1]
  %v3539 = vperm.slane %v3537, 0
  %v3541 = vadd.f32 %v3514, %v3539
  %v3542 = vadd.f32 %v3517, %v3539
  %v3543 = vadd.f32 %v3520, %v3539
  %v3544 = vadd.f32 %v3523, %v3539
  %v3545 = vadd.f32 %v3526, %v3539
  %v3546 = vadd.f32 %v3529, %v3539
  %v3547 = vadd.f32 %v3532, %v3539
  %v3548 = vadd.f32 %v3535, %v3539
  %v3549 = vld [vmem:[%s7] sm:$0xff]
  %v3550 = vld [vmem:[%s7 + $0x8] sm:$0xff]
  %v3551 = vld [vmem:[%s7 + $0x10] sm:$0xff]
  %v3552 = vld [vmem:[%s7 + $0x18] sm:$0xff]
  %v3553 = vld [vmem:[%s7 + $0x20] sm:$0xff]
  %v3554 = vld [vmem:[%s7 + $0x28] sm:$0xff]
  %v3555 = vld [vmem:[%s7 + $0x30] sm:$0xff]
  %v3556 = vld [vmem:[%s7 + $0x38] sm:$0xff]
  %v3557 = vld [vmem:[%s7 + $0x40] sm:$0xff]
  %v3558 = vld [vmem:[%s7 + $0x48] sm:$0xff]
  %v3559 = vld [vmem:[%s7 + $0x50] sm:$0xff]
  %v3560 = vld [vmem:[%s7 + $0x58] sm:$0xff]
  %v3561 = vld [vmem:[%s7 + $0x60] sm:$0xff]
  %v3562 = vld [vmem:[%s7 + $0x68] sm:$0xff]
  %v3563 = vld [vmem:[%s7 + $0x70] sm:$0xff]
  %v3564 = vld [vmem:[%s7 + $0x78] sm:$0xff]
  %v3565 = vld [vmem:[%s11] sm:$0x1]
  %v3567 = vperm.slane %v3565, 0
  %3569 = vmatpush.msra.mxu0 %v3564
  %3570 = vmatpush.msra.mxu0 %v3563
  %3571 = vmatpush.msra.mxu0 %v3562
  %3572 = vmatpush.msra.mxu0 %v3561
  %3573 = vmatpush.msra.mxu0 %v3560
  %3574 = vmatpush.msra.mxu0 %v3559
  %3575 = vmatpush.msra.mxu0 %v3558
  %3576 = vmatpush.msra.mxu0 %v3557
  %3577 = vmatpush.msra.mxu0 %v3556
  %3578 = vmatpush.msra.mxu0 %v3555
  %3579 = vmatpush.msra.mxu0 %v3554
  %3580 = vmatpush.msra.mxu0 %v3553
  %3581 = vmatpush.msra.mxu0 %v3552
  %3582 = vmatpush.msra.mxu0 %v3551
  %3583 = vmatpush.msra.mxu0 %v3550
  %3584 = vmatpush.msra.mxu0 %v3549
  %3585 = vmatmul.f32.gmra.mxu0 %v3541
  %v3586 = vpop.f32.mrf.mxu0
  %v3587 = vadd.f32 %v3567, %v3586
  %3588 = vmatmul.f32.gmra.mxu0 %v3542
  %v3589 = vpop.f32.mrf.mxu0
  %v3590 = vadd.f32 %v3567, %v3589
  %3591 = vmatmul.f32.gmra.mxu0 %v3543
  %v3592 = vpop.f32.mrf.mxu0
  %v3593 = vadd.f32 %v3567, %v3592
  %3594 = vmatmul.f32.gmra.mxu0 %v3544
  %v3595 = vpop.f32.mrf.mxu0
  %v3596 = vadd.f32 %v3567, %v3595
  %3597 = vmatmul.f32.gmra.mxu0 %v3545
  %v3598 = vpop.f32.mrf.mxu0
  %v3599 = vadd.f32 %v3567, %v3598
  %3600 = vmatmul.f32.gmra.mxu0 %v3546
  %v3601 = vpop.f32.mrf.mxu0
  %v3602 = vadd.f32 %v3567, %v3601
  %3603 = vmatmul.f32.gmra.mxu0 %v3547
  %v3604 = vpop.f32.mrf.mxu0
  %v3605 = vadd.f32 %v3567, %v3604
  %3606 = vmatmul.f32.gmra.mxu0 %v3548
  %v3607 = vpop.f32.mrf.mxu0
  %v3608 = vadd.f32 %v3567, %v3607
  %3609 = vdwg.mxu0
  %v3610 = vld [vmem:[%s8] sm:$0xff]
  %v3611 = vld [vmem:[%s8 + $0x8] sm:$0xff]
  %v3612 = vld [vmem:[%s8 + $0x10] sm:$0xff]
  %v3613 = vld [vmem:[%s8 + $0x18] sm:$0xff]
  %v3614 = vld [vmem:[%s8 + $0x20] sm:$0xff]
  %v3615 = vld [vmem:[%s8 + $0x28] sm:$0xff]
  %v3616 = vld [vmem:[%s8 + $0x30] sm:$0xff]
  %v3617 = vld [vmem:[%s8 + $0x38] sm:$0xff]
  %v3618 = vld [vmem:[%s8 + $0x40] sm:$0xff]
  %v3619 = vld [vmem:[%s8 + $0x48] sm:$0xff]
  %v3620 = vld [vmem:[%s8 + $0x50] sm:$0xff]
  %v3621 = vld [vmem:[%s8 + $0x58] sm:$0xff]
  %v3622 = vld [vmem:[%s8 + $0x60] sm:$0xff]
  %v3623 = vld [vmem:[%s8 + $0x68] sm:$0xff]
  %v3624 = vld [vmem:[%s8 + $0x70] sm:$0xff]
  %v3625 = vld [vmem:[%s8 + $0x78] sm:$0xff]
  %v3626 = vld [vmem:[%s12] sm:$0x1]
  %v3628 = vperm.slane %v3626, 0
  %3630 = vmatpush.msra.mxu0 %v3625
  %3631 = vmatpush.msra.mxu0 %v3624
  %3632 = vmatpush.msra.mxu0 %v3623
  %3633 = vmatpush.msra.mxu0 %v3622
  %3634 = vmatpush.msra.mxu0 %v3621
  %3635 = vmatpush.msra.mxu0 %v3620
  %3636 = vmatpush.msra.mxu0 %v3619
  %3637 = vmatpush.msra.mxu0 %v3618
  %3638 = vmatpush.msra.mxu0 %v3617
  %3639 = vmatpush.msra.mxu0 %v3616
  %3640 = vmatpush.msra.mxu0 %v3615
  %3641 = vmatpush.msra.mxu0 %v3614
  %3642 = vmatpush.msra.mxu0 %v3613
  %3643 = vmatpush.msra.mxu0 %v3612
  %3644 = vmatpush.msra.mxu0 %v3611
  %3645 = vmatpush.msra.mxu0 %v3610
  %3646 = vmatmul.f32.gmra.mxu0 %v3541
  %v3647 = vpop.f32.mrf.mxu0
  %v3648 = vadd.f32 %v3628, %v3647
  %3649 = vmatmul.f32.gmra.mxu0 %v3542
  %v3650 = vpop.f32.mrf.mxu0
  %v3651 = vadd.f32 %v3628, %v3650
  %3652 = vmatmul.f32.gmra.mxu0 %v3543
  %v3653 = vpop.f32.mrf.mxu0
  %v3654 = vadd.f32 %v3628, %v3653
  %3655 = vmatmul.f32.gmra.mxu0 %v3544
  %v3656 = vpop.f32.mrf.mxu0
  %v3657 = vadd.f32 %v3628, %v3656
  %3658 = vmatmul.f32.gmra.mxu0 %v3545
  %v3659 = vpop.f32.mrf.mxu0
  %v3660 = vadd.f32 %v3628, %v3659
  %3661 = vmatmul.f32.gmra.mxu0 %v3546
  %v3662 = vpop.f32.mrf.mxu0
  %v3663 = vadd.f32 %v3628, %v3662
  %3664 = vmatmul.f32.gmra.mxu0 %v3547
  %v3665 = vpop.f32.mrf.mxu0
  %v3666 = vadd.f32 %v3628, %v3665
  %3667 = vmatmul.f32.gmra.mxu0 %v3548
  %v3668 = vpop.f32.mrf.mxu0
  %v3669 = vadd.f32 %v3628, %v3668
  %3670 = vdwg.mxu0
  %v3671 = vld [vmem:[%s9] sm:$0xff]
  %v3672 = vld [vmem:[%s9 + $0x8] sm:$0xff]
  %v3673 = vld [vmem:[%s9 + $0x10] sm:$0xff]
  %v3674 = vld [vmem:[%s9 + $0x18] sm:$0xff]
  %v3675 = vld [vmem:[%s9 + $0x20] sm:$0xff]
  %v3676 = vld [vmem:[%s9 + $0x28] sm:$0xff]
  %v3677 = vld [vmem:[%s9 + $0x30] sm:$0xff]
  %v3678 = vld [vmem:[%s9 + $0x38] sm:$0xff]
  %v3679 = vld [vmem:[%s9 + $0x40] sm:$0xff]
  %v3680 = vld [vmem:[%s9 + $0x48] sm:$0xff]
  %v3681 = vld [vmem:[%s9 + $0x50] sm:$0xff]
  %v3682 = vld [vmem:[%s9 + $0x58] sm:$0xff]
  %v3683 = vld [vmem:[%s9 + $0x60] sm:$0xff]
  %v3684 = vld [vmem:[%s9 + $0x68] sm:$0xff]
  %v3685 = vld [vmem:[%s9 + $0x70] sm:$0xff]
  %v3686 = vld [vmem:[%s9 + $0x78] sm:$0xff]
  %v3687 = vld [vmem:[%s13] sm:$0x1]
  %v3689 = vperm.slane %v3687, 0
  %3691 = vmatpush.msra.mxu0 %v3686
  %3692 = vmatpush.msra.mxu0 %v3685
  %3693 = vmatpush.msra.mxu0 %v3684
  %3694 = vmatpush.msra.mxu0 %v3683
  %3695 = vmatpush.msra.mxu0 %v3682
  %3696 = vmatpush.msra.mxu0 %v3681
  %3697 = vmatpush.msra.mxu0 %v3680
  %3698 = vmatpush.msra.mxu0 %v3679
  %3699 = vmatpush.msra.mxu0 %v3678
  %3700 = vmatpush.msra.mxu0 %v3677
  %3701 = vmatpush.msra.mxu0 %v3676
  %3702 = vmatpush.msra.mxu0 %v3675
  %3703 = vmatpush.msra.mxu0 %v3674
  %3704 = vmatpush.msra.mxu0 %v3673
  %3705 = vmatpush.msra.mxu0 %v3672
  %3706 = vmatpush.msra.mxu0 %v3671
  %3707 = vmatmul.f32.gmra.mxu0 %v3541
  %v3708 = vpop.f32.mrf.mxu0
  %v3709 = vadd.f32 %v3689, %v3708
  %3710 = vmatmul.f32.gmra.mxu0 %v3542
  %v3711 = vpop.f32.mrf.mxu0
  %v3712 = vadd.f32 %v3689, %v3711
  %3713 = vmatmul.f32.gmra.mxu0 %v3543
  %v3714 = vpop.f32.mrf.mxu0
  %v3715 = vadd.f32 %v3689, %v3714
  %3716 = vmatmul.f32.gmra.mxu0 %v3544
  %v3717 = vpop.f32.mrf.mxu0
  %v3718 = vadd.f32 %v3689, %v3717
  %3719 = vmatmul.f32.gmra.mxu0 %v3545
  %v3720 = vpop.f32.mrf.mxu0
  %v3721 = vadd.f32 %v3689, %v3720
  %3722 = vmatmul.f32.gmra.mxu0 %v3546
  %v3723 = vpop.f32.mrf.mxu0
  %v3724 = vadd.f32 %v3689, %v3723
  %3725 = vmatmul.f32.gmra.mxu0 %v3547
  %v3726 = vpop.f32.mrf.mxu0
  %v3727 = vadd.f32 %v3689, %v3726
  %3728 = vmatmul.f32.gmra.mxu0 %v3548
  %v3729 = vpop.f32.mrf.mxu0
  %v3730 = vadd.f32 %v3689, %v3729
  %3731 = vdwg.mxu0
  %v3732 = vmul.f32 %v3587, 0.125
  %v3733 = vmul.f32 %v3590, 0.125
  %v3734 = vmul.f32 %v3593, 0.125
  %v3735 = vmul.f32 %v3596, 0.125
  %v3736 = vmul.f32 %v3599, 0.125
  %v3737 = vmul.f32 %v3602, 0.125
  %v3738 = vmul.f32 %v3605, 0.125
  %v3739 = vmul.f32 %v3608, 0.125
  %v3748 = vrot.slane %v3733, 7
  %vm3749 = vcmask 1041409
  %v3750 = vsel %vm3749, %v3748, %v3732
  %v3751 = vrot.slane %v3734, 6
  %vm3752 = vcmask 1042434
  %v3753 = vsel %vm3752, %v3751, %v3750
  %v3754 = vrot.slane %v3735, 5
  %vm3755 = vcmask 1043459
  %v3756 = vsel %vm3755, %v3754, %v3753
  %v3757 = vrot.slane %v3736, 4
  %vm3758 = vcmask 1044484
  %v3759 = vsel %vm3758, %v3757, %v3756
  %v3760 = vrot.slane %v3737, 3
  %vm3761 = vcmask 1045509
  %v3762 = vsel %vm3761, %v3760, %v3759
  %v3763 = vrot.slane %v3738, 2
  %vm3764 = vcmask 1046534
  %v3765 = vsel %vm3764, %v3763, %v3762
  %v3766 = vrot.slane %v3739, 1
  %vm3767 = vcmask 1047559
  %v3768 = vsel %vm3767, %v3766, %v3765
  %v3777 = vrot.slane %v3651, 7
  %v3778 = vsel %vm3749, %v3777, %v3648
  %v3779 = vrot.slane %v3654, 6
  %v3780 = vsel %vm3752, %v3779, %v3778
  %v3781 = vrot.slane %v3657, 5
  %v3782 = vsel %vm3755, %v3781, %v3780
  %v3783 = vrot.slane %v3660, 4
  %v3784 = vsel %vm3758, %v3783, %v3782
  %v3785 = vrot.slane %v3663, 3
  %v3786 = vsel %vm3761, %v3785, %v3784
  %v3787 = vrot.slane %v3666, 2
  %v3788 = vsel %vm3764, %v3787, %v3786
  %v3789 = vrot.slane %v3669, 1
  %v3790 = vsel %vm3767, %v3789, %v3788
  %vm3791 = vcmask 523264
  %v3792 = vsel %vm3791, %v3768, 0
  %v3794 = vsel %vm3791, %v3790, 0
  %3796 = vmatpush.xpose.msra.mxu0 0.0
  %3797 = vmatpush.xpose.msra.mxu0 0.0
  %3798 = vmatpush.xpose.msra.mxu0 0.0
  %3799 = vmatpush.xpose.msra.mxu0 0.0
  %3800 = vmatpush.xpose.msra.mxu0 0.0
  %3801 = vmatpush.xpose.msra.mxu0 0.0
  %3802 = vmatpush.xpose.msra.mxu0 0.0
  %3803 = vmatpush.xpose.msra.mxu0 0.0
  %3804 = vmatpush.xpose.msra.mxu0 0.0
  %3805 = vmatpush.xpose.msra.mxu0 0.0
  %3806 = vmatpush.xpose.msra.mxu0 0.0
  %3807 = vmatpush.xpose.msra.mxu0 0.0
  %3808 = vmatpush.xpose.msra.mxu0 0.0
  %3809 = vmatpush.xpose.msra.mxu0 0.0
  %3810 = vmatpush.xpose.msra.mxu0 0.0
  %3811 = vmatpush.xpose.msra.mxu0 %v3794
  %3812 = vmatmul.f32.gmra.mxu0 %v3792
  %v3813 = vpop.f32.mrf.mxu0
  %v3814 = vadd.f32 0.0, %v3813
  %3815 = vdwg.mxu0
  %vm3816 = vcmask 64512
  %v3817 = vsel %vm3816, %v3814, -inf
  %3818 = vmax.xlane.f32.xlu0 %v3817
  %v3819 = vpop.xlane.xlu0 %3818
  %v3820 = vsub.f32 %v3814, %v3819
  %v3821 = vmul.f32 %v3820, 1.442695
  %v3822 = vpow.pop %v3821
  %v3823 = vsel %vm3816, %v3822, 0.0
  %3824 = vadd.xlane.f32.xlu0 %v3823
  %v3825 = vpop.xlane.xlu0 %3824
  %v3826 = vrcp.pop %v3825
  %v3827 = vmul.f32 %v3822, %v3826
  %v3836 = vrot.slane %v3712, 7
  %v3837 = vsel %vm3749, %v3836, %v3709
  %v3838 = vrot.slane %v3715, 6
  %v3839 = vsel %vm3752, %v3838, %v3837
  %v3840 = vrot.slane %v3718, 5
  %v3841 = vsel %vm3755, %v3840, %v3839
  %v3842 = vrot.slane %v3721, 4
  %v3843 = vsel %vm3758, %v3842, %v3841
  %v3844 = vrot.slane %v3724, 3
  %v3845 = vsel %vm3761, %v3844, %v3843
  %v3846 = vrot.slane %v3727, 2
  %v3847 = vsel %vm3764, %v3846, %v3845
  %v3848 = vrot.slane %v3730, 1
  %v3849 = vsel %vm3767, %v3848, %v3847
  %v3852 = vsel %vm3816, %v3827, 0
  %3854 = vmatpush.msra.mxu0 0.0
  %3855 = vmatpush.msra.mxu0 0.0
  %3856 = vmatpush.msra.mxu0 0.0
  %3857 = vmatpush.msra.mxu0 0.0
  %3858 = vmatpush.msra.mxu0 0.0
  %3859 = vmatpush.msra.mxu0 0.0
  %3860 = vmatpush.msra.mxu0 0.0
  %3861 = vmatpush.msra.mxu0 0.0
  %3862 = vmatpush.msra.mxu0 0.0
  %3863 = vmatpush.msra.mxu0 0.0
  %3864 = vmatpush.msra.mxu0 0.0
  %3865 = vmatpush.msra.mxu0 0.0
  %3866 = vmatpush.msra.mxu0 0.0
  %3867 = vmatpush.msra.mxu0 0.0
  %3868 = vmatpush.msra.mxu0 0.0
  %3869 = vmatpush.msra.mxu0 %v3849
  %3870 = vmatmul.f32.gmra.mxu0 %v3852
  %v3871 = vpop.f32.mrf.mxu0
  %v3872 = vadd.f32 0.0, %v3871
  %3873 = vdwg.mxu0
  %3874 = vrot.lane.b32.xlu0 %v3768, 64
  %v3875 = vpop.permute.xlu0 %3874
  %3876 = vrot.lane.b32.xlu0 %v3790, 64
  %v3877 = vpop.permute.xlu0 %3876
  %v3878 = vsel %vm3791, %v3875, 0
  %v3880 = vsel %vm3791, %v3877, 0
  %3882 = vmatpush.xpose.msra.mxu0 0.0
  %3883 = vmatpush.xpose.msra.mxu0 0.0
  %3884 = vmatpush.xpose.msra.mxu0 0.0
  %3885 = vmatpush.xpose.msra.mxu0 0.0
  %3886 = vmatpush.xpose.msra.mxu0 0.0
  %3887 = vmatpush.xpose.msra.mxu0 0.0
  %3888 = vmatpush.xpose.msra.mxu0 0.0
  %3889 = vmatpush.xpose.msra.mxu0 0.0
  %3890 = vmatpush.xpose.msra.mxu0 0.0
  %3891 = vmatpush.xpose.msra.mxu0 0.0
  %3892 = vmatpush.xpose.msra.mxu0 0.0
  %3893 = vmatpush.xpose.msra.mxu0 0.0
  %3894 = vmatpush.xpose.msra.mxu0 0.0
  %3895 = vmatpush.xpose.msra.mxu0 0.0
  %3896 = vmatpush.xpose.msra.mxu0 0.0
  %3897 = vmatpush.xpose.msra.mxu0 %v3880
  %3898 = vmatmul.f32.gmra.mxu0 %v3878
  %v3899 = vpop.f32.mrf.mxu0
  %v3900 = vadd.f32 0.0, %v3899
  %3901 = vdwg.mxu0
  %v3902 = vsel %vm3816, %v3900, -inf
  %3903 = vmax.xlane.f32.xlu0 %v3902
  %v3904 = vpop.xlane.xlu0 %3903
  %v3905 = vsub.f32 %v3900, %v3904
  %v3906 = vmul.f32 %v3905, 1.442695
  %v3907 = vpow.pop %v3906
  %v3908 = vsel %vm3816, %v3907, 0.0
  %3909 = vadd.xlane.f32.xlu0 %v3908
  %v3910 = vpop.xlane.xlu0 %3909
  %v3911 = vrcp.pop %v3910
  %v3912 = vmul.f32 %v3907, %v3911
  %3913 = vrot.lane.b32.xlu0 %v3849, 64
  %v3914 = vpop.permute.xlu0 %3913
  %v3917 = vsel %vm3816, %v3912, 0
  %3919 = vmatpush.msra.mxu0 0.0
  %3920 = vmatpush.msra.mxu0 0.0
  %3921 = vmatpush.msra.mxu0 0.0
  %3922 = vmatpush.msra.mxu0 0.0
  %3923 = vmatpush.msra.mxu0 0.0
  %3924 = vmatpush.msra.mxu0 0.0
  %3925 = vmatpush.msra.mxu0 0.0
  %3926 = vmatpush.msra.mxu0 0.0
  %3927 = vmatpush.msra.mxu0 0.0
  %3928 = vmatpush.msra.mxu0 0.0
  %3929 = vmatpush.msra.mxu0 0.0
  %3930 = vmatpush.msra.mxu0 0.0
  %3931 = vmatpush.msra.mxu0 0.0
  %3932 = vmatpush.msra.mxu0 0.0
  %3933 = vmatpush.msra.mxu0 0.0
  %3934 = vmatpush.msra.mxu0 %v3914
  %3935 = vmatmul.f32.gmra.mxu0 %v3917
  %v3936 = vpop.f32.mrf.mxu0
  %v3937 = vadd.f32 0.0, %v3936
  %3938 = vdwg.mxu0
  %3940 = vrot.lane.b32.xlu0 %v3937, 64
  %v3941 = vpop.permute.xlu0 %3940
  %v3943 = vsel %vm3791, %v3872, %v3941
  %v3944 = vrot.slane %v3732, 1
  %v3945 = vsel %vm3749, %v3733, %v3944
  %v3946 = vrot.slane %v3734, 7
  %v3947 = vsel %vm3752, %v3946, %v3945
  %v3948 = vrot.slane %v3735, 6
  %v3949 = vsel %vm3755, %v3948, %v3947
  %v3950 = vrot.slane %v3736, 5
  %v3951 = vsel %vm3758, %v3950, %v3949
  %v3952 = vrot.slane %v3737, 4
  %v3953 = vsel %vm3761, %v3952, %v3951
  %v3954 = vrot.slane %v3738, 3
  %v3955 = vsel %vm3764, %v3954, %v3953
  %v3956 = vrot.slane %v3739, 2
  %v3957 = vsel %vm3767, %v3956, %v3955
  %v3958 = vrot.slane %v3648, 1
  %v3959 = vsel %vm3749, %v3651, %v3958
  %v3960 = vrot.slane %v3654, 7
  %v3961 = vsel %vm3752, %v3960, %v3959
  %v3962 = vrot.slane %v3657, 6
  %v3963 = vsel %vm3755, %v3962, %v3961
  %v3964 = vrot.slane %v3660, 5
  %v3965 = vsel %vm3758, %v3964, %v3963
  %v3966 = vrot.slane %v3663, 4
  %v3967 = vsel %vm3761, %v3966, %v3965
  %v3968 = vrot.slane %v3666, 3
  %v3969 = vsel %vm3764, %v3968, %v3967
  %v3970 = vrot.slane %v3669, 2
  %v3971 = vsel %vm3767, %v3970, %v3969
  %v3972 = vsel %vm3791, %v3957, 0
  %v3974 = vsel %vm3791, %v3971, 0
  %3976 = vmatpush.xpose.msra.mxu0 0.0
  %3977 = vmatpush.xpose.msra.mxu0 0.0
  %3978 = vmatpush.xpose.msra.mxu0 0.0
  %3979 = vmatpush.xpose.msra.mxu0 0.0
  %3980 = vmatpush.xpose.msra.mxu0 0.0
  %3981 = vmatpush.xpose.msra.mxu0 0.0
  %3982 = vmatpush.xpose.msra.mxu0 0.0
  %3983 = vmatpush.xpose.msra.mxu0 0.0
  %3984 = vmatpush.xpose.msra.mxu0 0.0
  %3985 = vmatpush.xpose.msra.mxu0 0.0
  %3986 = vmatpush.xpose.msra.mxu0 0.0
  %3987 = vmatpush.xpose.msra.mxu0 0.0
  %3988 = vmatpush.xpose.msra.mxu0 0.0
  %3989 = vmatpush.xpose.msra.mxu0 0.0
  %3990 = vmatpush.xpose.msra.mxu0 0.0
  %3991 = vmatpush.xpose.msra.mxu0 %v3974
  %3992 = vmatmul.f32.gmra.mxu0 %v3972
  %v3993 = vpop.f32.mrf.mxu0
  %v3994 = vadd.f32 0.0, %v3993
  %3995 = vdwg.mxu0
  %v3996 = vsel %vm3816, %v3994, -inf
  %3997 = vmax.xlane.f32.xlu0 %v3996
  %v3998 = vpop.xlane.xlu0 %3997
  %v3999 = vsub.f32 %v3994, %v3998
  %v4000 = vmul.f32 %v3999, 1.442695
  %v4001 = vpow.pop %v4000
  %v4002 = vsel %vm3816, %v4001, 0.0
  %4003 = vadd.xlane.f32.xlu0 %v4002
  %v4004 = vpop.xlane.xlu0 %4003
  %v4005 = vrcp.pop %v4004
  %v4006 = vmul.f32 %v4001, %v4005
  %v4007 = vrot.slane %v3709, 1
  %v4008 = vsel %vm3749, %v3712, %v4007
  %v4009 = vrot.slane %v3715, 7
  %v4010 = vsel %vm3752, %v4009, %v4008
  %v4011 = vrot.slane %v3718, 6
  %v4012 = vsel %vm3755, %v4011, %v4010
  %v4013 = vrot.slane %v3721, 5
  %v4014 = vsel %vm3758, %v4013, %v4012
  %v4015 = vrot.slane %v3724, 4
  %v4016 = vsel %vm3761, %v4015, %v4014
  %v4017 = vrot.slane %v3727, 3
  %v4018 = vsel %vm3764, %v4017, %v4016
  %v4019 = vrot.slane %v3730, 2
  %v4020 = vsel %vm3767, %v4019, %v4018
  %v4023 = vsel %vm3816, %v4006, 0
  %4025 = vmatpush.msra.mxu0 0.0
  %4026 = vmatpush.msra.mxu0 0.0
  %4027 = vmatpush.msra.mxu0 0.0
  %4028 = vmatpush.msra.mxu0 0.0
  %4029 = vmatpush.msra.mxu0 0.0
  %4030 = vmatpush.msra.mxu0 0.0
  %4031 = vmatpush.msra.mxu0 0.0
  %4032 = vmatpush.msra.mxu0 0.0
  %4033 = vmatpush.msra.mxu0 0.0
  %4034 = vmatpush.msra.mxu0 0.0
  %4035 = vmatpush.msra.mxu0 0.0
  %4036 = vmatpush.msra.mxu0 0.0
  %4037 = vmatpush.msra.mxu0 0.0
  %4038 = vmatpush.msra.mxu0 0.0
  %4039 = vmatpush.msra.mxu0 0.0
  %4040 = vmatpush.msra.mxu0 %v4020
  %4041 = vmatmul.f32.gmra.mxu0 %v4023
  %v4042 = vpop.f32.mrf.mxu0
  %v4043 = vadd.f32 0.0, %v4042
  %4044 = vdwg.mxu0
  %4045 = vrot.lane.b32.xlu0 %v3957, 64
  %v4046 = vpop.permute.xlu0 %4045
  %4047 = vrot.lane.b32.xlu0 %v3971, 64
  %v4048 = vpop.permute.xlu0 %4047
  %v4049 = vsel %vm3791, %v4046, 0
  %v4051 = vsel %vm3791, %v4048, 0
  %4053 = vmatpush.xpose.msra.mxu0 0.0
  %4054 = vmatpush.xpose.msra.mxu0 0.0
  %4055 = vmatpush.xpose.msra.mxu0 0.0
  %4056 = vmatpush.xpose.msra.mxu0 0.0
  %4057 = vmatpush.xpose.msra.mxu0 0.0
  %4058 = vmatpush.xpose.msra.mxu0 0.0
  %4059 = vmatpush.xpose.msra.mxu0 0.0
  %4060 = vmatpush.xpose.msra.mxu0 0.0
  %4061 = vmatpush.xpose.msra.mxu0 0.0
  %4062 = vmatpush.xpose.msra.mxu0 0.0
  %4063 = vmatpush.xpose.msra.mxu0 0.0
  %4064 = vmatpush.xpose.msra.mxu0 0.0
  %4065 = vmatpush.xpose.msra.mxu0 0.0
  %4066 = vmatpush.xpose.msra.mxu0 0.0
  %4067 = vmatpush.xpose.msra.mxu0 0.0
  %4068 = vmatpush.xpose.msra.mxu0 %v4051
  %4069 = vmatmul.f32.gmra.mxu0 %v4049
  %v4070 = vpop.f32.mrf.mxu0
  %v4071 = vadd.f32 0.0, %v4070
  %4072 = vdwg.mxu0
  %v4073 = vsel %vm3816, %v4071, -inf
  %4074 = vmax.xlane.f32.xlu0 %v4073
  %v4075 = vpop.xlane.xlu0 %4074
  %v4076 = vsub.f32 %v4071, %v4075
  %v4077 = vmul.f32 %v4076, 1.442695
  %v4078 = vpow.pop %v4077
  %v4079 = vsel %vm3816, %v4078, 0.0
  %4080 = vadd.xlane.f32.xlu0 %v4079
  %v4081 = vpop.xlane.xlu0 %4080
  %v4082 = vrcp.pop %v4081
  %v4083 = vmul.f32 %v4078, %v4082
  %4084 = vrot.lane.b32.xlu0 %v4020, 64
  %v4085 = vpop.permute.xlu0 %4084
  %v4088 = vsel %vm3816, %v4083, 0
  %4090 = vmatpush.msra.mxu0 0.0
  %4091 = vmatpush.msra.mxu0 0.0
  %4092 = vmatpush.msra.mxu0 0.0
  %4093 = vmatpush.msra.mxu0 0.0
  %4094 = vmatpush.msra.mxu0 0.0
  %4095 = vmatpush.msra.mxu0 0.0
  %4096 = vmatpush.msra.mxu0 0.0
  %4097 = vmatpush.msra.mxu0 0.0
  %4098 = vmatpush.msra.mxu0 0.0
  %4099 = vmatpush.msra.mxu0 0.0
  %4100 = vmatpush.msra.mxu0 0.0
  %4101 = vmatpush.msra.mxu0 0.0
  %4102 = vmatpush.msra.mxu0 0.0
  %4103 = vmatpush.msra.mxu0 0.0
  %4104 = vmatpush.msra.mxu0 0.0
  %4105 = vmatpush.msra.mxu0 %v4085
  %4106 = vmatmul.f32.gmra.mxu0 %v4088
  %v4107 = vpop.f32.mrf.mxu0
  %v4108 = vadd.f32 0.0, %v4107
  %4109 = vdwg.mxu0
  %4111 = vrot.lane.b32.xlu0 %v4108, 64
  %v4112 = vpop.permute.xlu0 %4111
  %v4114 = vsel %vm3791, %v4043, %v4112
  %v4115 = vrot.slane %v3732, 2
  %v4116 = vrot.slane %v3733, 1
  %v4117 = vsel %vm3749, %v4116, %v4115
  %v4118 = vsel %vm3752, %v3734, %v4117
  %v4119 = vrot.slane %v3735, 7
  %v4120 = vsel %vm3755, %v4119, %v4118
  %v4121 = vrot.slane %v3736, 6
  %v4122 = vsel %vm3758, %v4121, %v4120
  %v4123 = vrot.slane %v3737, 5
  %v4124 = vsel %vm3761, %v4123, %v4122
  %v4125 = vrot.slane %v3738, 4
  %v4126 = vsel %vm3764, %v4125, %v4124
  %v4127 = vrot.slane %v3739, 3
  %v4128 = vsel %vm3767, %v4127, %v4126
  %v4129 = vrot.slane %v3648, 2
  %v4130 = vrot.slane %v3651, 1
  %v4131 = vsel %vm3749, %v4130, %v4129
  %v4132 = vsel %vm3752, %v3654, %v4131
  %v4133 = vrot.slane %v3657, 7
  %v4134 = vsel %vm3755, %v4133, %v4132
  %v4135 = vrot.slane %v3660, 6
  %v4136 = vsel %vm3758, %v4135, %v4134
  %v4137 = vrot.slane %v3663, 5
  %v4138 = vsel %vm3761, %v4137, %v4136
  %v4139 = vrot.slane %v3666, 4
  %v4140 = vsel %vm3764, %v4139, %v4138
  %v4141 = vrot.slane %v3669, 3
  %v4142 = vsel %vm3767, %v4141, %v4140
  %v4143 = vsel %vm3791, %v4128, 0
  %v4145 = vsel %vm3791, %v4142, 0
  %4147 = vmatpush.xpose.msra.mxu0 0.0
  %4148 = vmatpush.xpose.msra.mxu0 0.0
  %4149 = vmatpush.xpose.msra.mxu0 0.0
  %4150 = vmatpush.xpose.msra.mxu0 0.0
  %4151 = vmatpush.xpose.msra.mxu0 0.0
  %4152 = vmatpush.xpose.msra.mxu0 0.0
  %4153 = vmatpush.xpose.msra.mxu0 0.0
  %4154 = vmatpush.xpose.msra.mxu0 0.0
  %4155 = vmatpush.xpose.msra.mxu0 0.0
  %4156 = vmatpush.xpose.msra.mxu0 0.0
  %4157 = vmatpush.xpose.msra.mxu0 0.0
  %4158 = vmatpush.xpose.msra.mxu0 0.0
  %4159 = vmatpush.xpose.msra.mxu0 0.0
  %4160 = vmatpush.xpose.msra.mxu0 0.0
  %4161 = vmatpush.xpose.msra.mxu0 0.0
  %4162 = vmatpush.xpose.msra.mxu0 %v4145
  %4163 = vmatmul.f32.gmra.mxu0 %v4143
  %v4164 = vpop.f32.mrf.mxu0
  %v4165 = vadd.f32 0.0, %v4164
  %4166 = vdwg.mxu0
  %v4167 = vsel %vm3816, %v4165, -inf
  %4168 = vmax.xlane.f32.xlu0 %v4167
  %v4169 = vpop.xlane.xlu0 %4168
  %v4170 = vsub.f32 %v4165, %v4169
  %v4171 = vmul.f32 %v4170, 1.442695
  %v4172 = vpow.pop %v4171
  %v4173 = vsel %vm3816, %v4172, 0.0
  %4174 = vadd.xlane.f32.xlu0 %v4173
  %v4175 = vpop.xlane.xlu0 %4174
  %v4176 = vrcp.pop %v4175
  %v4177 = vmul.f32 %v4172, %v4176
  %v4178 = vrot.slane %v3709, 2
  %v4179 = vrot.slane %v3712, 1
  %v4180 = vsel %vm3749, %v4179, %v4178
  %v4181 = vsel %vm3752, %v3715, %v4180
  %v4182 = vrot.slane %v3718, 7
  %v4183 = vsel %vm3755, %v4182, %v4181
  %v4184 = vrot.slane %v3721, 6
  %v4185 = vsel %vm3758, %v4184, %v4183
  %v4186 = vrot.slane %v3724, 5
  %v4187 = vsel %vm3761, %v4186, %v4185
  %v4188 = vrot.slane %v3727, 4
  %v4189 = vsel %vm3764, %v4188, %v4187
  %v4190 = vrot.slane %v3730, 3
  %v4191 = vsel %vm3767, %v4190, %v4189
  %v4194 = vsel %vm3816, %v4177, 0
  %4196 = vmatpush.msra.mxu0 0.0
  %4197 = vmatpush.msra.mxu0 0.0
  %4198 = vmatpush.msra.mxu0 0.0
  %4199 = vmatpush.msra.mxu0 0.0
  %4200 = vmatpush.msra.mxu0 0.0
  %4201 = vmatpush.msra.mxu0 0.0
  %4202 = vmatpush.msra.mxu0 0.0
  %4203 = vmatpush.msra.mxu0 0.0
  %4204 = vmatpush.msra.mxu0 0.0
  %4205 = vmatpush.msra.mxu0 0.0
  %4206 = vmatpush.msra.mxu0 0.0
  %4207 = vmatpush.msra.mxu0 0.0
  %4208 = vmatpush.msra.mxu0 0.0
  %4209 = vmatpush.msra.mxu0 0.0
  %4210 = vmatpush.msra.mxu0 0.0
  %4211 = vmatpush.msra.mxu0 %v4191
  %4212 = vmatmul.f32.gmra.mxu0 %v4194
  %v4213 = vpop.f32.mrf.mxu0
  %v4214 = vadd.f32 0.0, %v4213
  %4215 = vdwg.mxu0
  %4216 = vrot.lane.b32.xlu0 %v4128, 64
  %v4217 = vpop.permute.xlu0 %4216
  %4218 = vrot.lane.b32.xlu0 %v4142, 64
  %v4219 = vpop.permute.xlu0 %4218
  %v4220 = vsel %vm3791, %v4217, 0
  %v4222 = vsel %vm3791, %v4219, 0
  %4224 = vmatpush.xpose.msra.mxu0 0.0
  %4225 = vmatpush.xpose.msra.mxu0 0.0
  %4226 = vmatpush.xpose.msra.mxu0 0.0
  %4227 = vmatpush.xpose.msra.mxu0 0.0
  %4228 = vmatpush.xpose.msra.mxu0 0.0
  %4229 = vmatpush.xpose.msra.mxu0 0.0
  %4230 = vmatpush.xpose.msra.mxu0 0.0
  %4231 = vmatpush.xpose.msra.mxu0 0.0
  %4232 = vmatpush.xpose.msra.mxu0 0.0
  %4233 = vmatpush.xpose.msra.mxu0 0.0
  %4234 = vmatpush.xpose.msra.mxu0 0.0
  %4235 = vmatpush.xpose.msra.mxu0 0.0
  %4236 = vmatpush.xpose.msra.mxu0 0.0
  %4237 = vmatpush.xpose.msra.mxu0 0.0
  %4238 = vmatpush.xpose.msra.mxu0 0.0
  %4239 = vmatpush.xpose.msra.mxu0 %v4222
  %4240 = vmatmul.f32.gmra.mxu0 %v4220
  %v4241 = vpop.f32.mrf.mxu0
  %v4242 = vadd.f32 0.0, %v4241
  %4243 = vdwg.mxu0
  %v4244 = vsel %vm3816, %v4242, -inf
  %4245 = vmax.xlane.f32.xlu0 %v4244
  %v4246 = vpop.xlane.xlu0 %4245
  %v4247 = vsub.f32 %v4242, %v4246
  %v4248 = vmul.f32 %v4247, 1.442695
  %v4249 = vpow.pop %v4248
  %v4250 = vsel %vm3816, %v4249, 0.0
  %4251 = vadd.xlane.f32.xlu0 %v4250
  %v4252 = vpop.xlane.xlu0 %4251
  %v4253 = vrcp.pop %v4252
  %v4254 = vmul.f32 %v4249, %v4253
  %4255 = vrot.lane.b32.xlu0 %v4191, 64
  %v4256 = vpop.permute.xlu0 %4255
  %v4259 = vsel %vm3816, %v4254, 0
  %4261 = vmatpush.msra.mxu0 0.0
  %4262 = vmatpush.msra.mxu0 0.0
  %4263 = vmatpush.msra.mxu0 0.0
  %4264 = vmatpush.msra.mxu0 0.0
  %4265 = vmatpush.msra.mxu0 0.0
  %4266 = vmatpush.msra.mxu0 0.0
  %4267 = vmatpush.msra.mxu0 0.0
  %4268 = vmatpush.msra.mxu0 0.0
  %4269 = vmatpush.msra.mxu0 0.0
  %4270 = vmatpush.msra.mxu0 0.0
  %4271 = vmatpush.msra.mxu0 0.0
  %4272 = vmatpush.msra.mxu0 0.0
  %4273 = vmatpush.msra.mxu0 0.0
  %4274 = vmatpush.msra.mxu0 0.0
  %4275 = vmatpush.msra.mxu0 0.0
  %4276 = vmatpush.msra.mxu0 %v4256
  %4277 = vmatmul.f32.gmra.mxu0 %v4259
  %v4278 = vpop.f32.mrf.mxu0
  %v4279 = vadd.f32 0.0, %v4278
  %4280 = vdwg.mxu0
  %4282 = vrot.lane.b32.xlu0 %v4279, 64
  %v4283 = vpop.permute.xlu0 %4282
  %v4285 = vsel %vm3791, %v4214, %v4283
  %v4286 = vrot.slane %v3732, 3
  %v4287 = vrot.slane %v3733, 2
  %v4288 = vsel %vm3749, %v4287, %v4286
  %v4289 = vrot.slane %v3734, 1
  %v4290 = vsel %vm3752, %v4289, %v4288
  %v4291 = vsel %vm3755, %v3735, %v4290
  %v4292 = vrot.slane %v3736, 7
  %v4293 = vsel %vm3758, %v4292, %v4291
  %v4294 = vrot.slane %v3737, 6
  %v4295 = vsel %vm3761, %v4294, %v4293
  %v4296 = vrot.slane %v3738, 5
  %v4297 = vsel %vm3764, %v4296, %v4295
  %v4298 = vrot.slane %v3739, 4
  %v4299 = vsel %vm3767, %v4298, %v4297
  %v4300 = vrot.slane %v3648, 3
  %v4301 = vrot.slane %v3651, 2
  %v4302 = vsel %vm3749, %v4301, %v4300
  %v4303 = vrot.slane %v3654, 1
  %v4304 = vsel %vm3752, %v4303, %v4302
  %v4305 = vsel %vm3755, %v3657, %v4304
  %v4306 = vrot.slane %v3660, 7
  %v4307 = vsel %vm3758, %v4306, %v4305
  %v4308 = vrot.slane %v3663, 6
  %v4309 = vsel %vm3761, %v4308, %v4307
  %v4310 = vrot.slane %v3666, 5
  %v4311 = vsel %vm3764, %v4310, %v4309
  %v4312 = vrot.slane %v3669, 4
  %v4313 = vsel %vm3767, %v4312, %v4311
  %v4314 = vsel %vm3791, %v4299, 0
  %v4316 = vsel %vm3791, %v4313, 0
  %4318 = vmatpush.xpose.msra.mxu0 0.0
  %4319 = vmatpush.xpose.msra.mxu0 0.0
  %4320 = vmatpush.xpose.msra.mxu0 0.0
  %4321 = vmatpush.xpose.msra.mxu0 0.0
  %4322 = vmatpush.xpose.msra.mxu0 0.0
  %4323 = vmatpush.xpose.msra.mxu0 0.0
  %4324 = vmatpush.xpose.msra.mxu0 0.0
  %4325 = vmatpush.xpose.msra.mxu0 0.0
  %4326 = vmatpush.xpose.msra.mxu0 0.0
  %4327 = vmatpush.xpose.msra.mxu0 0.0
  %4328 = vmatpush.xpose.msra.mxu0 0.0
  %4329 = vmatpush.xpose.msra.mxu0 0.0
  %4330 = vmatpush.xpose.msra.mxu0 0.0
  %4331 = vmatpush.xpose.msra.mxu0 0.0
  %4332 = vmatpush.xpose.msra.mxu0 0.0
  %4333 = vmatpush.xpose.msra.mxu0 %v4316
  %4334 = vmatmul.f32.gmra.mxu0 %v4314
  %v4335 = vpop.f32.mrf.mxu0
  %v4336 = vadd.f32 0.0, %v4335
  %4337 = vdwg.mxu0
  %v4338 = vsel %vm3816, %v4336, -inf
  %4339 = vmax.xlane.f32.xlu0 %v4338
  %v4340 = vpop.xlane.xlu0 %4339
  %v4341 = vsub.f32 %v4336, %v4340
  %v4342 = vmul.f32 %v4341, 1.442695
  %v4343 = vpow.pop %v4342
  %v4344 = vsel %vm3816, %v4343, 0.0
  %4345 = vadd.xlane.f32.xlu0 %v4344
  %v4346 = vpop.xlane.xlu0 %4345
  %v4347 = vrcp.pop %v4346
  %v4348 = vmul.f32 %v4343, %v4347
  %v4349 = vrot.slane %v3709, 3
  %v4350 = vrot.slane %v3712, 2
  %v4351 = vsel %vm3749, %v4350, %v4349
  %v4352 = vrot.slane %v3715, 1
  %v4353 = vsel %vm3752, %v4352, %v4351
  %v4354 = vsel %vm3755, %v3718, %v4353
  %v4355 = vrot.slane %v3721, 7
  %v4356 = vsel %vm3758, %v4355, %v4354
  %v4357 = vrot.slane %v3724, 6
  %v4358 = vsel %vm3761, %v4357, %v4356
  %v4359 = vrot.slane %v3727, 5
  %v4360 = vsel %vm3764, %v4359, %v4358
  %v4361 = vrot.slane %v3730, 4
  %v4362 = vsel %vm3767, %v4361, %v4360
  %v4365 = vsel %vm3816, %v4348, 0
  %4367 = vmatpush.msra.mxu0 0.0
  %4368 = vmatpush.msra.mxu0 0.0
  %4369 = vmatpush.msra.mxu0 0.0
  %4370 = vmatpush.msra.mxu0 0.0
  %4371 = vmatpush.msra.mxu0 0.0
  %4372 = vmatpush.msra.mxu0 0.0
  %4373 = vmatpush.msra.mxu0 0.0
  %4374 = vmatpush.msra.mxu0 0.0
  %4375 = vmatpush.msra.mxu0 0.0
  %4376 = vmatpush.msra.mxu0 0.0
  %4377 = vmatpush.msra.mxu0 0.0
  %4378 = vmatpush.msra.mxu0 0.0
  %4379 = vmatpush.msra.mxu0 0.0
  %4380 = vmatpush.msra.mxu0 0.0
  %4381 = vmatpush.msra.mxu0 0.0
  %4382 = vmatpush.msra.mxu0 %v4362
  %4383 = vmatmul.f32.gmra.mxu0 %v4365
  %v4384 = vpop.f32.mrf.mxu0
  %v4385 = vadd.f32 0.0, %v4384
  %4386 = vdwg.mxu0
  %4387 = vrot.lane.b32.xlu0 %v4299, 64
  %v4388 = vpop.permute.xlu0 %4387
  %4389 = vrot.lane.b32.xlu0 %v4313, 64
  %v4390 = vpop.permute.xlu0 %4389
  %v4391 = vsel %vm3791, %v4388, 0
  %v4393 = vsel %vm3791, %v4390, 0
  %4395 = vmatpush.xpose.msra.mxu0 0.0
  %4396 = vmatpush.xpose.msra.mxu0 0.0
  %4397 = vmatpush.xpose.msra.mxu0 0.0
  %4398 = vmatpush.xpose.msra.mxu0 0.0
  %4399 = vmatpush.xpose.msra.mxu0 0.0
  %4400 = vmatpush.xpose.msra.mxu0 0.0
  %4401 = vmatpush.xpose.msra.mxu0 0.0
  %4402 = vmatpush.xpose.msra.mxu0 0.0
  %4403 = vmatpush.xpose.msra.mxu0 0.0
  %4404 = vmatpush.xpose.msra.mxu0 0.0
  %4405 = vmatpush.xpose.msra.mxu0 0.0
  %4406 = vmatpush.xpose.msra.mxu0 0.0
  %4407 = vmatpush.xpose.msra.mxu0 0.0
  %4408 = vmatpush.xpose.msra.mxu0 0.0
  %4409 = vmatpush.xpose.msra.mxu0 0.0
  %4410 = vmatpush.xpose.msra.mxu0 %v4393
  %4411 = vmatmul.f32.gmra.mxu0 %v4391
  %v4412 = vpop.f32.mrf.mxu0
  %v4413 = vadd.f32 0.0, %v4412
  %4414 = vdwg.mxu0
  %v4415 = vsel %vm3816, %v4413, -inf
  %4416 = vmax.xlane.f32.xlu0 %v4415
  %v4417 = vpop.xlane.xlu0 %4416
  %v4418 = vsub.f32 %v4413, %v4417
  %v4419 = vmul.f32 %v4418, 1.442695
  %v4420 = vpow.pop %v4419
  %v4421 = vsel %vm3816, %v4420, 0.0
  %4422 = vadd.xlane.f32.xlu0 %v4421
  %v4423 = vpop.xlane.xlu0 %4422
  %v4424 = vrcp.pop %v4423
  %v4425 = vmul.f32 %v4420, %v4424
  %4426 = vrot.lane.b32.xlu0 %v4362, 64
  %v4427 = vpop.permute.xlu0 %4426
  %v4430 = vsel %vm3816, %v4425, 0
  %4432 = vmatpush.msra.mxu0 0.0
  %4433 = vmatpush.msra.mxu0 0.0
  %4434 = vmatpush.msra.mxu0 0.0
  %4435 = vmatpush.msra.mxu0 0.0
  %4436 = vmatpush.msra.mxu0 0.0
  %4437 = vmatpush.msra.mxu0 0.0
  %4438 = vmatpush.msra.mxu0 0.0
  %4439 = vmatpush.msra.mxu0 0.0
  %4440 = vmatpush.msra.mxu0 0.0
  %4441 = vmatpush.msra.mxu0 0.0
  %4442 = vmatpush.msra.mxu0 0.0
  %4443 = vmatpush.msra.mxu0 0.0
  %4444 = vmatpush.msra.mxu0 0.0
  %4445 = vmatpush.msra.mxu0 0.0
  %4446 = vmatpush.msra.mxu0 0.0
  %4447 = vmatpush.msra.mxu0 %v4427
  %4448 = vmatmul.f32.gmra.mxu0 %v4430
  %v4449 = vpop.f32.mrf.mxu0
  %v4450 = vadd.f32 0.0, %v4449
  %4451 = vdwg.mxu0
  %4453 = vrot.lane.b32.xlu0 %v4450, 64
  %v4454 = vpop.permute.xlu0 %4453
  %v4456 = vsel %vm3791, %v4385, %v4454
  %v4457 = vrot.slane %v3732, 4
  %v4458 = vrot.slane %v3733, 3
  %v4459 = vsel %vm3749, %v4458, %v4457
  %v4460 = vrot.slane %v3734, 2
  %v4461 = vsel %vm3752, %v4460, %v4459
  %v4462 = vrot.slane %v3735, 1
  %v4463 = vsel %vm3755, %v4462, %v4461
  %v4464 = vsel %vm3758, %v3736, %v4463
  %v4465 = vrot.slane %v3737, 7
  %v4466 = vsel %vm3761, %v4465, %v4464
  %v4467 = vrot.slane %v3738, 6
  %v4468 = vsel %vm3764, %v4467, %v4466
  %v4469 = vrot.slane %v3739, 5
  %v4470 = vsel %vm3767, %v4469, %v4468
  %v4471 = vrot.slane %v3648, 4
  %v4472 = vrot.slane %v3651, 3
  %v4473 = vsel %vm3749, %v4472, %v4471
  %v4474 = vrot.slane %v3654, 2
  %v4475 = vsel %vm3752, %v4474, %v4473
  %v4476 = vrot.slane %v3657, 1
  %v4477 = vsel %vm3755, %v4476, %v4475
  %v4478 = vsel %vm3758, %v3660, %v4477
  %v4479 = vrot.slane %v3663, 7
  %v4480 = vsel %vm3761, %v4479, %v4478
  %v4481 = vrot.slane %v3666, 6
  %v4482 = vsel %vm3764, %v4481, %v4480
  %v4483 = vrot.slane %v3669, 5
  %v4484 = vsel %vm3767, %v4483, %v4482
  %v4485 = vsel %vm3791, %v4470, 0
  %v4487 = vsel %vm3791, %v4484, 0
  %4489 = vmatpush.xpose.msra.mxu0 0.0
  %4490 = vmatpush.xpose.msra.mxu0 0.0
  %4491 = vmatpush.xpose.msra.mxu0 0.0
  %4492 = vmatpush.xpose.msra.mxu0 0.0
  %4493 = vmatpush.xpose.msra.mxu0 0.0
  %4494 = vmatpush.xpose.msra.mxu0 0.0
  %4495 = vmatpush.xpose.msra.mxu0 0.0
  %4496 = vmatpush.xpose.msra.mxu0 0.0
  %4497 = vmatpush.xpose.msra.mxu0 0.0
  %4498 = vmatpush.xpose.msra.mxu0 0.0
  %4499 = vmatpush.xpose.msra.mxu0 0.0
  %4500 = vmatpush.xpose.msra.mxu0 0.0
  %4501 = vmatpush.xpose.msra.mxu0 0.0
  %4502 = vmatpush.xpose.msra.mxu0 0.0
  %4503 = vmatpush.xpose.msra.mxu0 0.0
  %4504 = vmatpush.xpose.msra.mxu0 %v4487
  %4505 = vmatmul.f32.gmra.mxu0 %v4485
  %v4506 = vpop.f32.mrf.mxu0
  %v4507 = vadd.f32 0.0, %v4506
  %4508 = vdwg.mxu0
  %v4509 = vsel %vm3816, %v4507, -inf
  %4510 = vmax.xlane.f32.xlu0 %v4509
  %v4511 = vpop.xlane.xlu0 %4510
  %v4512 = vsub.f32 %v4507, %v4511
  %v4513 = vmul.f32 %v4512, 1.442695
  %v4514 = vpow.pop %v4513
  %v4515 = vsel %vm3816, %v4514, 0.0
  %4516 = vadd.xlane.f32.xlu0 %v4515
  %v4517 = vpop.xlane.xlu0 %4516
  %v4518 = vrcp.pop %v4517
  %v4519 = vmul.f32 %v4514, %v4518
  %v4520 = vrot.slane %v3709, 4
  %v4521 = vrot.slane %v3712, 3
  %v4522 = vsel %vm3749, %v4521, %v4520
  %v4523 = vrot.slane %v3715, 2
  %v4524 = vsel %vm3752, %v4523, %v4522
  %v4525 = vrot.slane %v3718, 1
  %v4526 = vsel %vm3755, %v4525, %v4524
  %v4527 = vsel %vm3758, %v3721, %v4526
  %v4528 = vrot.slane %v3724, 7
  %v4529 = vsel %vm3761, %v4528, %v4527
  %v4530 = vrot.slane %v3727, 6
  %v4531 = vsel %vm3764, %v4530, %v4529
  %v4532 = vrot.slane %v3730, 5
  %v4533 = vsel %vm3767, %v4532, %v4531
  %v4536 = vsel %vm3816, %v4519, 0
  %4538 = vmatpush.msra.mxu0 0.0
  %4539 = vmatpush.msra.mxu0 0.0
  %4540 = vmatpush.msra.mxu0 0.0
  %4541 = vmatpush.msra.mxu0 0.0
  %4542 = vmatpush.msra.mxu0 0.0
  %4543 = vmatpush.msra.mxu0 0.0
  %4544 = vmatpush.msra.mxu0 0.0
  %4545 = vmatpush.msra.mxu0 0.0
  %4546 = vmatpush.msra.mxu0 0.0
  %4547 = vmatpush.msra.mxu0 0.0
  %4548 = vmatpush.msra.mxu0 0.0
  %4549 = vmatpush.msra.mxu0 0.0
  %4550 = vmatpush.msra.mxu0 0.0
  %4551 = vmatpush.msra.mxu0 0.0
  %4552 = vmatpush.msra.mxu0 0.0
  %4553 = vmatpush.msra.mxu0 %v4533
  %4554 = vmatmul.f32.gmra.mxu0 %v4536
  %v4555 = vpop.f32.mrf.mxu0
  %v4556 = vadd.f32 0.0, %v4555
  %4557 = vdwg.mxu0
  %4558 = vrot.lane.b32.xlu0 %v4470, 64
  %v4559 = vpop.permute.xlu0 %4558
  %4560 = vrot.lane.b32.xlu0 %v4484, 64
  %v4561 = vpop.permute.xlu0 %4560
  %v4562 = vsel %vm3791, %v4559, 0
  %v4564 = vsel %vm3791, %v4561, 0
  %4566 = vmatpush.xpose.msra.mxu0 0.0
  %4567 = vmatpush.xpose.msra.mxu0 0.0
  %4568 = vmatpush.xpose.msra.mxu0 0.0
  %4569 = vmatpush.xpose.msra.mxu0 0.0
  %4570 = vmatpush.xpose.msra.mxu0 0.0
  %4571 = vmatpush.xpose.msra.mxu0 0.0
  %4572 = vmatpush.xpose.msra.mxu0 0.0
  %4573 = vmatpush.xpose.msra.mxu0 0.0
  %4574 = vmatpush.xpose.msra.mxu0 0.0
  %4575 = vmatpush.xpose.msra.mxu0 0.0
  %4576 = vmatpush.xpose.msra.mxu0 0.0
  %4577 = vmatpush.xpose.msra.mxu0 0.0
  %4578 = vmatpush.xpose.msra.mxu0 0.0
  %4579 = vmatpush.xpose.msra.mxu0 0.0
  %4580 = vmatpush.xpose.msra.mxu0 0.0
  %4581 = vmatpush.xpose.msra.mxu0 %v4564
  %4582 = vmatmul.f32.gmra.mxu0 %v4562
  %v4583 = vpop.f32.mrf.mxu0
  %v4584 = vadd.f32 0.0, %v4583
  %4585 = vdwg.mxu0
  %v4586 = vsel %vm3816, %v4584, -inf
  %4587 = vmax.xlane.f32.xlu0 %v4586
  %v4588 = vpop.xlane.xlu0 %4587
  %v4589 = vsub.f32 %v4584, %v4588
  %v4590 = vmul.f32 %v4589, 1.442695
  %v4591 = vpow.pop %v4590
  %v4592 = vsel %vm3816, %v4591, 0.0
  %4593 = vadd.xlane.f32.xlu0 %v4592
  %v4594 = vpop.xlane.xlu0 %4593
  %v4595 = vrcp.pop %v4594
  %v4596 = vmul.f32 %v4591, %v4595
  %4597 = vrot.lane.b32.xlu0 %v4533, 64
  %v4598 = vpop.permute.xlu0 %4597
  %v4601 = vsel %vm3816, %v4596, 0
  %4603 = vmatpush.msra.mxu0 0.0
  %4604 = vmatpush.msra.mxu0 0.0
  %4605 = vmatpush.msra.mxu0 0.0
  %4606 = vmatpush.msra.mxu0 0.0
  %4607 = vmatpush.msra.mxu0 0.0
  %4608 = vmatpush.msra.mxu0 0.0
  %4609 = vmatpush.msra.mxu0 0.0
  %4610 = vmatpush.msra.mxu0 0.0
  %4611 = vmatpush.msra.mxu0 0.0
  %4612 = vmatpush.msra.mxu0 0.0
  %4613 = vmatpush.msra.mxu0 0.0
  %4614 = vmatpush.msra.mxu0 0.0
  %4615 = vmatpush.msra.mxu0 0.0
  %4616 = vmatpush.msra.mxu0 0.0
  %4617 = vmatpush.msra.mxu0 0.0
  %4618 = vmatpush.msra.mxu0 %v4598
  %4619 = vmatmul.f32.gmra.mxu0 %v4601
  %v4620 = vpop.f32.mrf.mxu0
  %v4621 = vadd.f32 0.0, %v4620
  %4622 = vdwg.mxu0
  %4624 = vrot.lane.b32.xlu0 %v4621, 64
  %v4625 = vpop.permute.xlu0 %4624
  %v4627 = vsel %vm3791, %v4556, %v4625
  %v4628 = vrot.slane %v3732, 5
  %v4629 = vrot.slane %v3733, 4
  %v4630 = vsel %vm3749, %v4629, %v4628
  %v4631 = vrot.slane %v3734, 3
  %v4632 = vsel %vm3752, %v4631, %v4630
  %v4633 = vrot.slane %v3735, 2
  %v4634 = vsel %vm3755, %v4633, %v4632
  %v4635 = vrot.slane %v3736, 1
  %v4636 = vsel %vm3758, %v4635, %v4634
  %v4637 = vsel %vm3761, %v3737, %v4636
  %v4638 = vrot.slane %v3738, 7
  %v4639 = vsel %vm3764, %v4638, %v4637
  %v4640 = vrot.slane %v3739, 6
  %v4641 = vsel %vm3767, %v4640, %v4639
  %v4642 = vrot.slane %v3648, 5
  %v4643 = vrot.slane %v3651, 4
  %v4644 = vsel %vm3749, %v4643, %v4642
  %v4645 = vrot.slane %v3654, 3
  %v4646 = vsel %vm3752, %v4645, %v4644
  %v4647 = vrot.slane %v3657, 2
  %v4648 = vsel %vm3755, %v4647, %v4646
  %v4649 = vrot.slane %v3660, 1
  %v4650 = vsel %vm3758, %v4649, %v4648
  %v4651 = vsel %vm3761, %v3663, %v4650
  %v4652 = vrot.slane %v3666, 7
  %v4653 = vsel %vm3764, %v4652, %v4651
  %v4654 = vrot.slane %v3669, 6
  %v4655 = vsel %vm3767, %v4654, %v4653
  %v4656 = vsel %vm3791, %v4641, 0
  %v4658 = vsel %vm3791, %v4655, 0
  %4660 = vmatpush.xpose.msra.mxu0 0.0
  %4661 = vmatpush.xpose.msra.mxu0 0.0
  %4662 = vmatpush.xpose.msra.mxu0 0.0
  %4663 = vmatpush.xpose.msra.mxu0 0.0
  %4664 = vmatpush.xpose.msra.mxu0 0.0
  %4665 = vmatpush.xpose.msra.mxu0 0.0
  %4666 = vmatpush.xpose.msra.mxu0 0.0
  %4667 = vmatpush.xpose.msra.mxu0 0.0
  %4668 = vmatpush.xpose.msra.mxu0 0.0
  %4669 = vmatpush.xpose.msra.mxu0 0.0
  %4670 = vmatpush.xpose.msra.mxu0 0.0
  %4671 = vmatpush.xpose.msra.mxu0 0.0
  %4672 = vmatpush.xpose.msra.mxu0 0.0
  %4673 = vmatpush.xpose.msra.mxu0 0.0
  %4674 = vmatpush.xpose.msra.mxu0 0.0
  %4675 = vmatpush.xpose.msra.mxu0 %v4658
  %4676 = vmatmul.f32.gmra.mxu0 %v4656
  %v4677 = vpop.f32.mrf.mxu0
  %v4678 = vadd.f32 0.0, %v4677
  %4679 = vdwg.mxu0
  %v4680 = vsel %vm3816, %v4678, -inf
  %4681 = vmax.xlane.f32.xlu0 %v4680
  %v4682 = vpop.xlane.xlu0 %4681
  %v4683 = vsub.f32 %v4678, %v4682
  %v4684 = vmul.f32 %v4683, 1.442695
  %v4685 = vpow.pop %v4684
  %v4686 = vsel %vm3816, %v4685, 0.0
  %4687 = vadd.xlane.f32.xlu0 %v4686
  %v4688 = vpop.xlane.xlu0 %4687
  %v4689 = vrcp.pop %v4688
  %v4690 = vmul.f32 %v4685, %v4689
  %v4691 = vrot.slane %v3709, 5
  %v4692 = vrot.slane %v3712, 4
  %v4693 = vsel %vm3749, %v4692, %v4691
  %v4694 = vrot.slane %v3715, 3
  %v4695 = vsel %vm3752, %v4694, %v4693
  %v4696 = vrot.slane %v3718, 2
  %v4697 = vsel %vm3755, %v4696, %v4695
  %v4698 = vrot.slane %v3721, 1
  %v4699 = vsel %vm3758, %v4698, %v4697
  %v4700 = vsel %vm3761, %v3724, %v4699
  %v4701 = vrot.slane %v3727, 7
  %v4702 = vsel %vm3764, %v4701, %v4700
  %v4703 = vrot.slane %v3730, 6
  %v4704 = vsel %vm3767, %v4703, %v4702
  %v4707 = vsel %vm3816, %v4690, 0
  %4709 = vmatpush.msra.mxu0 0.0
  %4710 = vmatpush.msra.mxu0 0.0
  %4711 = vmatpush.msra.mxu0 0.0
  %4712 = vmatpush.msra.mxu0 0.0
  %4713 = vmatpush.msra.mxu0 0.0
  %4714 = vmatpush.msra.mxu0 0.0
  %4715 = vmatpush.msra.mxu0 0.0
  %4716 = vmatpush.msra.mxu0 0.0
  %4717 = vmatpush.msra.mxu0 0.0
  %4718 = vmatpush.msra.mxu0 0.0
  %4719 = vmatpush.msra.mxu0 0.0
  %4720 = vmatpush.msra.mxu0 0.0
  %4721 = vmatpush.msra.mxu0 0.0
  %4722 = vmatpush.msra.mxu0 0.0
  %4723 = vmatpush.msra.mxu0 0.0
  %4724 = vmatpush.msra.mxu0 %v4704
  %4725 = vmatmul.f32.gmra.mxu0 %v4707
  %v4726 = vpop.f32.mrf.mxu0
  %v4727 = vadd.f32 0.0, %v4726
  %4728 = vdwg.mxu0
  %4729 = vrot.lane.b32.xlu0 %v4641, 64
  %v4730 = vpop.permute.xlu0 %4729
  %4731 = vrot.lane.b32.xlu0 %v4655, 64
  %v4732 = vpop.permute.xlu0 %4731
  %v4733 = vsel %vm3791, %v4730, 0
  %v4735 = vsel %vm3791, %v4732, 0
  %4737 = vmatpush.xpose.msra.mxu0 0.0
  %4738 = vmatpush.xpose.msra.mxu0 0.0
  %4739 = vmatpush.xpose.msra.mxu0 0.0
  %4740 = vmatpush.xpose.msra.mxu0 0.0
  %4741 = vmatpush.xpose.msra.mxu0 0.0
  %4742 = vmatpush.xpose.msra.mxu0 0.0
  %4743 = vmatpush.xpose.msra.mxu0 0.0
  %4744 = vmatpush.xpose.msra.mxu0 0.0
  %4745 = vmatpush.xpose.msra.mxu0 0.0
  %4746 = vmatpush.xpose.msra.mxu0 0.0
  %4747 = vmatpush.xpose.msra.mxu0 0.0
  %4748 = vmatpush.xpose.msra.mxu0 0.0
  %4749 = vmatpush.xpose.msra.mxu0 0.0
  %4750 = vmatpush.xpose.msra.mxu0 0.0
  %4751 = vmatpush.xpose.msra.mxu0 0.0
  %4752 = vmatpush.xpose.msra.mxu0 %v4735
  %4753 = vmatmul.f32.gmra.mxu0 %v4733
  %v4754 = vpop.f32.mrf.mxu0
  %v4755 = vadd.f32 0.0, %v4754
  %4756 = vdwg.mxu0
  %v4757 = vsel %vm3816, %v4755, -inf
  %4758 = vmax.xlane.f32.xlu0 %v4757
  %v4759 = vpop.xlane.xlu0 %4758
  %v4760 = vsub.f32 %v4755, %v4759
  %v4761 = vmul.f32 %v4760, 1.442695
  %v4762 = vpow.pop %v4761
  %v4763 = vsel %vm3816, %v4762, 0.0
  %4764 = vadd.xlane.f32.xlu0 %v4763
  %v4765 = vpop.xlane.xlu0 %4764
  %v4766 = vrcp.pop %v4765
  %v4767 = vmul.f32 %v4762, %v4766
  %4768 = vrot.lane.b32.xlu0 %v4704, 64
  %v4769 = vpop.permute.xlu0 %4768
  %v4772 = vsel %vm3816, %v4767, 0
  %4774 = vmatpush.msra.mxu0 0.0
  %4775 = vmatpush.msra.mxu0 0.0
  %4776 = vmatpush.msra.mxu0 0.0
  %4777 = vmatpush.msra.mxu0 0.0
  %4778 = vmatpush.msra.mxu0 0.0
  %4779 = vmatpush.msra.mxu0 0.0
  %4780 = vmatpush.msra.mxu0 0.0
  %4781 = vmatpush.msra.mxu0 0.0
  %4782 = vmatpush.msra.mxu0 0.0
  %4783 = vmatpush.msra.mxu0 0.0
  %4784 = vmatpush.msra.mxu0 0.0
  %4785 = vmatpush.msra.mxu0 0.0
  %4786 = vmatpush.msra.mxu0 0.0
  %4787 = vmatpush.msra.mxu0 0.0
  %4788 = vmatpush.msra.mxu0 0.0
  %4789 = vmatpush.msra.mxu0 %v4769
  %4790 = vmatmul.f32.gmra.mxu0 %v4772
  %v4791 = vpop.f32.mrf.mxu0
  %v4792 = vadd.f32 0.0, %v4791
  %4793 = vdwg.mxu0
  %4795 = vrot.lane.b32.xlu0 %v4792, 64
  %v4796 = vpop.permute.xlu0 %4795
  %v4798 = vsel %vm3791, %v4727, %v4796
  %v4799 = vrot.slane %v3732, 6
  %v4800 = vrot.slane %v3733, 5
  %v4801 = vsel %vm3749, %v4800, %v4799
  %v4802 = vrot.slane %v3734, 4
  %v4803 = vsel %vm3752, %v4802, %v4801
  %v4804 = vrot.slane %v3735, 3
  %v4805 = vsel %vm3755, %v4804, %v4803
  %v4806 = vrot.slane %v3736, 2
  %v4807 = vsel %vm3758, %v4806, %v4805
  %v4808 = vrot.slane %v3737, 1
  %v4809 = vsel %vm3761, %v4808, %v4807
  %v4810 = vsel %vm3764, %v3738, %v4809
  %v4811 = vrot.slane %v3739, 7
  %v4812 = vsel %vm3767, %v4811, %v4810
  %v4813 = vrot.slane %v3648, 6
  %v4814 = vrot.slane %v3651, 5
  %v4815 = vsel %vm3749, %v4814, %v4813
  %v4816 = vrot.slane %v3654, 4
  %v4817 = vsel %vm3752, %v4816, %v4815
  %v4818 = vrot.slane %v3657, 3
  %v4819 = vsel %vm3755, %v4818, %v4817
  %v4820 = vrot.slane %v3660, 2
  %v4821 = vsel %vm3758, %v4820, %v4819
  %v4822 = vrot.slane %v3663, 1
  %v4823 = vsel %vm3761, %v4822, %v4821
  %v4824 = vsel %vm3764, %v3666, %v4823
  %v4825 = vrot.slane %v3669, 7
  %v4826 = vsel %vm3767, %v4825, %v4824
  %v4827 = vsel %vm3791, %v4812, 0
  %v4829 = vsel %vm3791, %v4826, 0
  %4831 = vmatpush.xpose.msra.mxu0 0.0
  %4832 = vmatpush.xpose.msra.mxu0 0.0
  %4833 = vmatpush.xpose.msra.mxu0 0.0
  %4834 = vmatpush.xpose.msra.mxu0 0.0
  %4835 = vmatpush.xpose.msra.mxu0 0.0
  %4836 = vmatpush.xpose.msra.mxu0 0.0
  %4837 = vmatpush.xpose.msra.mxu0 0.0
  %4838 = vmatpush.xpose.msra.mxu0 0.0
  %4839 = vmatpush.xpose.msra.mxu0 0.0
  %4840 = vmatpush.xpose.msra.mxu0 0.0
  %4841 = vmatpush.xpose.msra.mxu0 0.0
  %4842 = vmatpush.xpose.msra.mxu0 0.0
  %4843 = vmatpush.xpose.msra.mxu0 0.0
  %4844 = vmatpush.xpose.msra.mxu0 0.0
  %4845 = vmatpush.xpose.msra.mxu0 0.0
  %4846 = vmatpush.xpose.msra.mxu0 %v4829
  %4847 = vmatmul.f32.gmra.mxu0 %v4827
  %v4848 = vpop.f32.mrf.mxu0
  %v4849 = vadd.f32 0.0, %v4848
  %4850 = vdwg.mxu0
  %v4851 = vsel %vm3816, %v4849, -inf
  %4852 = vmax.xlane.f32.xlu0 %v4851
  %v4853 = vpop.xlane.xlu0 %4852
  %v4854 = vsub.f32 %v4849, %v4853
  %v4855 = vmul.f32 %v4854, 1.442695
  %v4856 = vpow.pop %v4855
  %v4857 = vsel %vm3816, %v4856, 0.0
  %4858 = vadd.xlane.f32.xlu0 %v4857
  %v4859 = vpop.xlane.xlu0 %4858
  %v4860 = vrcp.pop %v4859
  %v4861 = vmul.f32 %v4856, %v4860
  %v4862 = vrot.slane %v3709, 6
  %v4863 = vrot.slane %v3712, 5
  %v4864 = vsel %vm3749, %v4863, %v4862
  %v4865 = vrot.slane %v3715, 4
  %v4866 = vsel %vm3752, %v4865, %v4864
  %v4867 = vrot.slane %v3718, 3
  %v4868 = vsel %vm3755, %v4867, %v4866
  %v4869 = vrot.slane %v3721, 2
  %v4870 = vsel %vm3758, %v4869, %v4868
  %v4871 = vrot.slane %v3724, 1
  %v4872 = vsel %vm3761, %v4871, %v4870
  %v4873 = vsel %vm3764, %v3727, %v4872
  %v4874 = vrot.slane %v3730, 7
  %v4875 = vsel %vm3767, %v4874, %v4873
  %v4878 = vsel %vm3816, %v4861, 0
  %4880 = vmatpush.msra.mxu0 0.0
  %4881 = vmatpush.msra.mxu0 0.0
  %4882 = vmatpush.msra.mxu0 0.0
  %4883 = vmatpush.msra.mxu0 0.0
  %4884 = vmatpush.msra.mxu0 0.0
  %4885 = vmatpush.msra.mxu0 0.0
  %4886 = vmatpush.msra.mxu0 0.0
  %4887 = vmatpush.msra.mxu0 0.0
  %4888 = vmatpush.msra.mxu0 0.0
  %4889 = vmatpush.msra.mxu0 0.0
  %4890 = vmatpush.msra.mxu0 0.0
  %4891 = vmatpush.msra.mxu0 0.0
  %4892 = vmatpush.msra.mxu0 0.0
  %4893 = vmatpush.msra.mxu0 0.0
  %4894 = vmatpush.msra.mxu0 0.0
  %4895 = vmatpush.msra.mxu0 %v4875
  %4896 = vmatmul.f32.gmra.mxu0 %v4878
  %v4897 = vpop.f32.mrf.mxu0
  %v4898 = vadd.f32 0.0, %v4897
  %4899 = vdwg.mxu0
  %4900 = vrot.lane.b32.xlu0 %v4812, 64
  %v4901 = vpop.permute.xlu0 %4900
  %4902 = vrot.lane.b32.xlu0 %v4826, 64
  %v4903 = vpop.permute.xlu0 %4902
  %v4904 = vsel %vm3791, %v4901, 0
  %v4906 = vsel %vm3791, %v4903, 0
  %4908 = vmatpush.xpose.msra.mxu0 0.0
  %4909 = vmatpush.xpose.msra.mxu0 0.0
  %4910 = vmatpush.xpose.msra.mxu0 0.0
  %4911 = vmatpush.xpose.msra.mxu0 0.0
  %4912 = vmatpush.xpose.msra.mxu0 0.0
  %4913 = vmatpush.xpose.msra.mxu0 0.0
  %4914 = vmatpush.xpose.msra.mxu0 0.0
  %4915 = vmatpush.xpose.msra.mxu0 0.0
  %4916 = vmatpush.xpose.msra.mxu0 0.0
  %4917 = vmatpush.xpose.msra.mxu0 0.0
  %4918 = vmatpush.xpose.msra.mxu0 0.0
  %4919 = vmatpush.xpose.msra.mxu0 0.0
  %4920 = vmatpush.xpose.msra.mxu0 0.0
  %4921 = vmatpush.xpose.msra.mxu0 0.0
  %4922 = vmatpush.xpose.msra.mxu0 0.0
  %4923 = vmatpush.xpose.msra.mxu0 %v4906
  %4924 = vmatmul.f32.gmra.mxu0 %v4904
  %v4925 = vpop.f32.mrf.mxu0
  %v4926 = vadd.f32 0.0, %v4925
  %4927 = vdwg.mxu0
  %v4928 = vsel %vm3816, %v4926, -inf
  %4929 = vmax.xlane.f32.xlu0 %v4928
  %v4930 = vpop.xlane.xlu0 %4929
  %v4931 = vsub.f32 %v4926, %v4930
  %v4932 = vmul.f32 %v4931, 1.442695
  %v4933 = vpow.pop %v4932
  %v4934 = vsel %vm3816, %v4933, 0.0
  %4935 = vadd.xlane.f32.xlu0 %v4934
  %v4936 = vpop.xlane.xlu0 %4935
  %v4937 = vrcp.pop %v4936
  %v4938 = vmul.f32 %v4933, %v4937
  %4939 = vrot.lane.b32.xlu0 %v4875, 64
  %v4940 = vpop.permute.xlu0 %4939
  %v4943 = vsel %vm3816, %v4938, 0
  %4945 = vmatpush.msra.mxu0 0.0
  %4946 = vmatpush.msra.mxu0 0.0
  %4947 = vmatpush.msra.mxu0 0.0
  %4948 = vmatpush.msra.mxu0 0.0
  %4949 = vmatpush.msra.mxu0 0.0
  %4950 = vmatpush.msra.mxu0 0.0
  %4951 = vmatpush.msra.mxu0 0.0
  %4952 = vmatpush.msra.mxu0 0.0
  %4953 = vmatpush.msra.mxu0 0.0
  %4954 = vmatpush.msra.mxu0 0.0
  %4955 = vmatpush.msra.mxu0 0.0
  %4956 = vmatpush.msra.mxu0 0.0
  %4957 = vmatpush.msra.mxu0 0.0
  %4958 = vmatpush.msra.mxu0 0.0
  %4959 = vmatpush.msra.mxu0 0.0
  %4960 = vmatpush.msra.mxu0 %v4940
  %4961 = vmatmul.f32.gmra.mxu0 %v4943
  %v4962 = vpop.f32.mrf.mxu0
  %v4963 = vadd.f32 0.0, %v4962
  %4964 = vdwg.mxu0
  %4966 = vrot.lane.b32.xlu0 %v4963, 64
  %v4967 = vpop.permute.xlu0 %4966
  %v4969 = vsel %vm3791, %v4898, %v4967
  %v4970 = vrot.slane %v3732, 7
  %v4971 = vrot.slane %v3733, 6
  %v4972 = vsel %vm3749, %v4971, %v4970
  %v4973 = vrot.slane %v3734, 5
  %v4974 = vsel %vm3752, %v4973, %v4972
  %v4975 = vrot.slane %v3735, 4
  %v4976 = vsel %vm3755, %v4975, %v4974
  %v4977 = vrot.slane %v3736, 3
  %v4978 = vsel %vm3758, %v4977, %v4976
  %v4979 = vrot.slane %v3737, 2
  %v4980 = vsel %vm3761, %v4979, %v4978
  %v4981 = vrot.slane %v3738, 1
  %v4982 = vsel %vm3764, %v4981, %v4980
  %v4983 = vsel %vm3767, %v3739, %v4982
  %v4984 = vrot.slane %v3648, 7
  %v4985 = vrot.slane %v3651, 6
  %v4986 = vsel %vm3749, %v4985, %v4984
  %v4987 = vrot.slane %v3654, 5
  %v4988 = vsel %vm3752, %v4987, %v4986
  %v4989 = vrot.slane %v3657, 4
  %v4990 = vsel %vm3755, %v4989, %v4988
  %v4991 = vrot.slane %v3660, 3
  %v4992 = vsel %vm3758, %v4991, %v4990
  %v4993 = vrot.slane %v3663, 2
  %v4994 = vsel %vm3761, %v4993, %v4992
  %v4995 = vrot.slane %v3666, 1
  %v4996 = vsel %vm3764, %v4995, %v4994
  %v4997 = vsel %vm3767, %v3669, %v4996
  %v4998 = vsel %vm3791, %v4983, 0
  %v5000 = vsel %vm3791, %v4997, 0
  %5002 = vmatpush.xpose.msra.mxu0 0.0
  %5003 = vmatpush.xpose.msra.mxu0 0.0
  %5004 = vmatpush.xpose.msra.mxu0 0.0
  %5005 = vmatpush.xpose.msra.mxu0 0.0
  %5006 = vmatpush.xpose.msra.mxu0 0.0
  %5007 = vmatpush.xpose.msra.mxu0 0.0
  %5008 = vmatpush.xpose.msra.mxu0 0.0
  %5009 = vmatpush.xpose.msra.mxu0 0.0
  %5010 = vmatpush.xpose.msra.mxu0 0.0
  %5011 = vmatpush.xpose.msra.mxu0 0.0
  %5012 = vmatpush.xpose.msra.mxu0 0.0
  %5013 = vmatpush.xpose.msra.mxu0 0.0
  %5014 = vmatpush.xpose.msra.mxu0 0.0
  %5015 = vmatpush.xpose.msra.mxu0 0.0
  %5016 = vmatpush.xpose.msra.mxu0 0.0
  %5017 = vmatpush.xpose.msra.mxu0 %v5000
  %5018 = vmatmul.f32.gmra.mxu0 %v4998
  %v5019 = vpop.f32.mrf.mxu0
  %v5020 = vadd.f32 0.0, %v5019
  %5021 = vdwg.mxu0
  %v5022 = vsel %vm3816, %v5020, -inf
  %5023 = vmax.xlane.f32.xlu0 %v5022
  %v5024 = vpop.xlane.xlu0 %5023
  %v5025 = vsub.f32 %v5020, %v5024
  %v5026 = vmul.f32 %v5025, 1.442695
  %v5027 = vpow.pop %v5026
  %v5028 = vsel %vm3816, %v5027, 0.0
  %5029 = vadd.xlane.f32.xlu0 %v5028
  %v5030 = vpop.xlane.xlu0 %5029
  %v5031 = vrcp.pop %v5030
  %v5032 = vmul.f32 %v5027, %v5031
  %v5033 = vrot.slane %v3709, 7
  %v5034 = vrot.slane %v3712, 6
  %v5035 = vsel %vm3749, %v5034, %v5033
  %v5036 = vrot.slane %v3715, 5
  %v5037 = vsel %vm3752, %v5036, %v5035
  %v5038 = vrot.slane %v3718, 4
  %v5039 = vsel %vm3755, %v5038, %v5037
  %v5040 = vrot.slane %v3721, 3
  %v5041 = vsel %vm3758, %v5040, %v5039
  %v5042 = vrot.slane %v3724, 2
  %v5043 = vsel %vm3761, %v5042, %v5041
  %v5044 = vrot.slane %v3727, 1
  %v5045 = vsel %vm3764, %v5044, %v5043
  %v5046 = vsel %vm3767, %v3730, %v5045
  %v5049 = vsel %vm3816, %v5032, 0
  %5051 = vmatpush.msra.mxu0 0.0
  %5052 = vmatpush.msra.mxu0 0.0
  %5053 = vmatpush.msra.mxu0 0.0
  %5054 = vmatpush.msra.mxu0 0.0
  %5055 = vmatpush.msra.mxu0 0.0
  %5056 = vmatpush.msra.mxu0 0.0
  %5057 = vmatpush.msra.mxu0 0.0
  %5058 = vmatpush.msra.mxu0 0.0
  %5059 = vmatpush.msra.mxu0 0.0
  %5060 = vmatpush.msra.mxu0 0.0
  %5061 = vmatpush.msra.mxu0 0.0
  %5062 = vmatpush.msra.mxu0 0.0
  %5063 = vmatpush.msra.mxu0 0.0
  %5064 = vmatpush.msra.mxu0 0.0
  %5065 = vmatpush.msra.mxu0 0.0
  %5066 = vmatpush.msra.mxu0 %v5046
  %5067 = vmatmul.f32.gmra.mxu0 %v5049
  %v5068 = vpop.f32.mrf.mxu0
  %v5069 = vadd.f32 0.0, %v5068
  %5070 = vdwg.mxu0
  %5071 = vrot.lane.b32.xlu0 %v4983, 64
  %v5072 = vpop.permute.xlu0 %5071
  %5073 = vrot.lane.b32.xlu0 %v4997, 64
  %v5074 = vpop.permute.xlu0 %5073
  %v5075 = vsel %vm3791, %v5072, 0
  %v5077 = vsel %vm3791, %v5074, 0
  %5079 = vmatpush.xpose.msra.mxu0 0.0
  %5080 = vmatpush.xpose.msra.mxu0 0.0
  %5081 = vmatpush.xpose.msra.mxu0 0.0
  %5082 = vmatpush.xpose.msra.mxu0 0.0
  %5083 = vmatpush.xpose.msra.mxu0 0.0
  %5084 = vmatpush.xpose.msra.mxu0 0.0
  %5085 = vmatpush.xpose.msra.mxu0 0.0
  %5086 = vmatpush.xpose.msra.mxu0 0.0
  %5087 = vmatpush.xpose.msra.mxu0 0.0
  %5088 = vmatpush.xpose.msra.mxu0 0.0
  %5089 = vmatpush.xpose.msra.mxu0 0.0
  %5090 = vmatpush.xpose.msra.mxu0 0.0
  %5091 = vmatpush.xpose.msra.mxu0 0.0
  %5092 = vmatpush.xpose.msra.mxu0 0.0
  %5093 = vmatpush.xpose.msra.mxu0 0.0
  %5094 = vmatpush.xpose.msra.mxu0 %v5077
  %5095 = vmatmul.f32.gmra.mxu0 %v5075
  %v5096 = vpop.f32.mrf.mxu0
  %v5097 = vadd.f32 0.0, %v5096
  %5098 = vdwg.mxu0
  %v5099 = vsel %vm3816, %v5097, -inf
  %5100 = vmax.xlane.f32.xlu0 %v5099
  %v5101 = vpop.xlane.xlu0 %5100
  %v5102 = vsub.f32 %v5097, %v5101
  %v5103 = vmul.f32 %v5102, 1.442695
  %v5104 = vpow.pop %v5103
  %v5105 = vsel %vm3816, %v5104, 0.0
  %5106 = vadd.xlane.f32.xlu0 %v5105
  %v5107 = vpop.xlane.xlu0 %5106
  %v5108 = vrcp.pop %v5107
  %v5109 = vmul.f32 %v5104, %v5108
  %5110 = vrot.lane.b32.xlu0 %v5046, 64
  %v5111 = vpop.permute.xlu0 %5110
  %v5114 = vsel %vm3816, %v5109, 0
  %5116 = vmatpush.msra.mxu0 0.0
  %5117 = vmatpush.msra.mxu0 0.0
  %5118 = vmatpush.msra.mxu0 0.0
  %5119 = vmatpush.msra.mxu0 0.0
  %5120 = vmatpush.msra.mxu0 0.0
  %5121 = vmatpush.msra.mxu0 0.0
  %5122 = vmatpush.msra.mxu0 0.0
  %5123 = vmatpush.msra.mxu0 0.0
  %5124 = vmatpush.msra.mxu0 0.0
  %5125 = vmatpush.msra.mxu0 0.0
  %5126 = vmatpush.msra.mxu0 0.0
  %5127 = vmatpush.msra.mxu0 0.0
  %5128 = vmatpush.msra.mxu0 0.0
  %5129 = vmatpush.msra.mxu0 0.0
  %5130 = vmatpush.msra.mxu0 0.0
  %5131 = vmatpush.msra.mxu0 %v5111
  %5132 = vmatmul.f32.gmra.mxu0 %v5114
  %v5133 = vpop.f32.mrf.mxu0
  %v5134 = vadd.f32 0.0, %v5133
  %5135 = vdwg.mxu0
  %5137 = vrot.lane.b32.xlu0 %v5134, 64
  %v5138 = vpop.permute.xlu0 %5137
  %v5140 = vsel %vm3791, %v5069, %v5138
  %v5141 = vld [vmem:[%s10] sm:$0xff]
  %v5142 = vld [vmem:[%s10 + $0x8] sm:$0xff]
  %v5143 = vld [vmem:[%s10 + $0x10] sm:$0xff]
  %v5144 = vld [vmem:[%s10 + $0x18] sm:$0xff]
  %v5145 = vld [vmem:[%s10 + $0x20] sm:$0xff]
  %v5146 = vld [vmem:[%s10 + $0x28] sm:$0xff]
  %v5147 = vld [vmem:[%s10 + $0x30] sm:$0xff]
  %v5148 = vld [vmem:[%s10 + $0x38] sm:$0xff]
  %v5149 = vld [vmem:[%s10 + $0x40] sm:$0xff]
  %v5150 = vld [vmem:[%s10 + $0x48] sm:$0xff]
  %v5151 = vld [vmem:[%s10 + $0x50] sm:$0xff]
  %v5152 = vld [vmem:[%s10 + $0x58] sm:$0xff]
  %v5153 = vld [vmem:[%s10 + $0x60] sm:$0xff]
  %v5154 = vld [vmem:[%s10 + $0x68] sm:$0xff]
  %v5155 = vld [vmem:[%s10 + $0x70] sm:$0xff]
  %v5156 = vld [vmem:[%s10 + $0x78] sm:$0xff]
  %v5157 = vld [vmem:[%s14] sm:$0x1]
  %v5159 = vperm.slane %v5157, 0
  %5161 = vmatpush.msra.mxu0 %v5156
  %5162 = vmatpush.msra.mxu0 %v5155
  %5163 = vmatpush.msra.mxu0 %v5154
  %5164 = vmatpush.msra.mxu0 %v5153
  %5165 = vmatpush.msra.mxu0 %v5152
  %5166 = vmatpush.msra.mxu0 %v5151
  %5167 = vmatpush.msra.mxu0 %v5150
  %5168 = vmatpush.msra.mxu0 %v5149
  %5169 = vmatpush.msra.mxu0 %v5148
  %5170 = vmatpush.msra.mxu0 %v5147
  %5171 = vmatpush.msra.mxu0 %v5146
  %5172 = vmatpush.msra.mxu0 %v5145
  %5173 = vmatpush.msra.mxu0 %v5144
  %5174 = vmatpush.msra.mxu0 %v5143
  %5175 = vmatpush.msra.mxu0 %v5142
  %5176 = vmatpush.msra.mxu0 %v5141
  %5177 = vmatmul.f32.gmra.mxu0 %v3943
  %v5178 = vpop.f32.mrf.mxu0
  %v5179 = vadd.f32 %v5159, %v5178
  %5180 = vmatmul.f32.gmra.mxu0 %v4114
  %v5181 = vpop.f32.mrf.mxu0
  %v5182 = vadd.f32 %v5159, %v5181
  %5183 = vmatmul.f32.gmra.mxu0 %v4285
  %v5184 = vpop.f32.mrf.mxu0
  %v5185 = vadd.f32 %v5159, %v5184
  %5186 = vmatmul.f32.gmra.mxu0 %v4456
  %v5187 = vpop.f32.mrf.mxu0
  %v5188 = vadd.f32 %v5159, %v5187
  %5189 = vmatmul.f32.gmra.mxu0 %v4627
  %v5190 = vpop.f32.mrf.mxu0
  %v5191 = vadd.f32 %v5159, %v5190
  %5192 = vmatmul.f32.gmra.mxu0 %v4798
  %v5193 = vpop.f32.mrf.mxu0
  %v5194 = vadd.f32 %v5159, %v5193
  %5195 = vmatmul.f32.gmra.mxu0 %v4969
  %v5196 = vpop.f32.mrf.mxu0
  %v5197 = vadd.f32 %v5159, %v5196
  %5198 = vmatmul.f32.gmra.mxu0 %v5140
  %v5199 = vpop.f32.mrf.mxu0
  %v5200 = vadd.f32 %v5159, %v5199
  %5201 = vdwg.mxu0
  %5202 = vadd.xlane.f32.xlu0 %v5179
  %v5203 = vpop.xlane.xlu0 %5202
  %5204 = vadd.xlane.f32.xlu0 %v5182
  %v5205 = vpop.xlane.xlu0 %5204
  %5206 = vadd.xlane.f32.xlu0 %v5185
  %v5207 = vpop.xlane.xlu0 %5206
  %5208 = vadd.xlane.f32.xlu0 %v5188
  %v5209 = vpop.xlane.xlu0 %5208
  %5210 = vadd.xlane.f32.xlu0 %v5191
  %v5211 = vpop.xlane.xlu0 %5210
  %5212 = vadd.xlane.f32.xlu0 %v5194
  %v5213 = vpop.xlane.xlu0 %5212
  %5214 = vadd.xlane.f32.xlu0 %v5197
  %v5215 = vpop.xlane.xlu0 %5214
  %5216 = vadd.xlane.f32.xlu0 %v5200
  %v5217 = vpop.xlane.xlu0 %5216
  %v5218 = vrcp.pop 128.0
  %v5219 = vmul.f32 128.0, %v5218
  %v5220 = vsub.f32 1.0, %v5219
  %v5221 = vmul.f32 %v5218, %v5220
  %v5222 = vadd.f32 %v5218, %v5221
  %vm5223 = vweird.f32 %v5218
  %v5224 = vsel %vm5223, %v5218, %v5222
  %v5225 = vmul.f32 %v5203, %v5224
  %v5226 = vmul.f32 %v5205, %v5224
  %v5227 = vmul.f32 %v5207, %v5224
  %v5228 = vmul.f32 %v5209, %v5224
  %v5229 = vmul.f32 %v5211, %v5224
  %v5230 = vmul.f32 %v5213, %v5224
  %v5231 = vmul.f32 %v5215, %v5224
  %v5232 = vmul.f32 %v5217, %v5224
  %v5233 = vsub.f32 %v5179, %v5225
  %v5234 = vsub.f32 %v5182, %v5226
  %v5235 = vsub.f32 %v5185, %v5227
  %v5236 = vsub.f32 %v5188, %v5228
  %v5237 = vsub.f32 %v5191, %v5229
  %v5238 = vsub.f32 %v5194, %v5230
  %v5239 = vsub.f32 %v5197, %v5231
  %v5240 = vsub.f32 %v5200, %v5232
  %v5241 = vmul.f32 %v5233, %v5233
  %v5242 = vmul.f32 %v5234, %v5234
  %v5243 = vmul.f32 %v5235, %v5235
  %v5244 = vmul.f32 %v5236, %v5236
  %v5245 = vmul.f32 %v5237, %v5237
  %v5246 = vmul.f32 %v5238, %v5238
  %v5247 = vmul.f32 %v5239, %v5239
  %v5248 = vmul.f32 %v5240, %v5240
  %5249 = vadd.xlane.f32.xlu0 %v5241
  %v5250 = vpop.xlane.xlu0 %5249
  %5251 = vadd.xlane.f32.xlu0 %v5242
  %v5252 = vpop.xlane.xlu0 %5251
  %5253 = vadd.xlane.f32.xlu0 %v5243
  %v5254 = vpop.xlane.xlu0 %5253
  %5255 = vadd.xlane.f32.xlu0 %v5244
  %v5256 = vpop.xlane.xlu0 %5255
  %5257 = vadd.xlane.f32.xlu0 %v5245
  %v5258 = vpop.xlane.xlu0 %5257
  %5259 = vadd.xlane.f32.xlu0 %v5246
  %v5260 = vpop.xlane.xlu0 %5259
  %5261 = vadd.xlane.f32.xlu0 %v5247
  %v5262 = vpop.xlane.xlu0 %5261
  %5263 = vadd.xlane.f32.xlu0 %v5248
  %v5264 = vpop.xlane.xlu0 %5263
  %v5265 = vmul.f32 %v5250, %v5224
  %v5266 = vmul.f32 %v5252, %v5224
  %v5267 = vmul.f32 %v5254, %v5224
  %v5268 = vmul.f32 %v5256, %v5224
  %v5269 = vmul.f32 %v5258, %v5224
  %v5270 = vmul.f32 %v5260, %v5224
  %v5271 = vmul.f32 %v5262, %v5224
  %v5272 = vmul.f32 %v5264, %v5224
  %v5273 = vadd.f32 %v5265, 1e-05
  %v5274 = vadd.f32 %v5266, 1e-05
  %v5275 = vadd.f32 %v5267, 1e-05
  %v5276 = vadd.f32 %v5268, 1e-05
  %v5277 = vadd.f32 %v5269, 1e-05
  %v5278 = vadd.f32 %v5270, 1e-05
  %v5279 = vadd.f32 %v5271, 1e-05
  %v5280 = vadd.f32 %v5272, 1e-05
  %v5281 = vrsqrt.pop %v5273
  %v5282 = vmul.f32 %v5281, %v5273
  %v5283 = vmul.f32 %v5282, %v5281
  %v5284 = vmul.f32 0.5, %v5283
  %v5285 = vsub.f32 1.5, %v5284
  %v5286 = vmul.f32 %v5281, %v5285
  %vm5287 = vweird.f32 %v5273
  %vm5288 = vweird.f32 %v5281
  %vm5289 = vmor %vm5287, %vm5288
  %v5290 = vsel %vm5289, %v5281, %v5286
  %v5291 = vrsqrt.pop %v5274
  %v5292 = vmul.f32 %v5291, %v5274
  %v5293 = vmul.f32 %v5292, %v5291
  %v5294 = vmul.f32 0.5, %v5293
  %v5295 = vsub.f32 1.5, %v5294
  %v5296 = vmul.f32 %v5291, %v5295
  %vm5297 = vweird.f32 %v5274
  %vm5298 = vweird.f32 %v5291
  %vm5299 = vmor %vm5297, %vm5298
  %v5300 = vsel %vm5299, %v5291, %v5296
  %v5301 = vrsqrt.pop %v5275
  %v5302 = vmul.f32 %v5301, %v5275
  %v5303 = vmul.f32 %v5302, %v5301
  %v5304 = vmul.f32 0.5, %v5303
  %v5305 = vsub.f32 1.5, %v5304
  %v5306 = vmul.f32 %v5301, %v5305
  %vm5307 = vweird.f32 %v5275
  %vm5308 = vweird.f32 %v5301
  %vm5309 = vmor %vm5307, %vm5308
  %v5310 = vsel %vm5309, %v5301, %v5306
  %v5311 = vrsqrt.pop %v5276
  %v5312 = vmul.f32 %v5311, %v5276
  %v5313 = vmul.f32 %v5312, %v5311
  %v5314 = vmul.f32 0.5, %v5313
  %v5315 = vsub.f32 1.5, %v5314
  %v5316 = vmul.f32 %v5311, %v5315
  %vm5317 = vweird.f32 %v5276
  %vm5318 = vweird.f32 %v5311
  %vm5319 = vmor %vm5317, %vm5318
  %v5320 = vsel %vm5319, %v5311, %v5316
  %v5321 = vrsqrt.pop %v5277
  %v5322 = vmul.f32 %v5321, %v5277
  %v5323 = vmul.f32 %v5322, %v5321
  %v5324 = vmul.f32 0.5, %v5323
  %v5325 = vsub.f32 1.5, %v5324
  %v5326 = vmul.f32 %v5321, %v5325
  %vm5327 = vweird.f32 %v5277
  %vm5328 = vweird.f32 %v5321
  %vm5329 = vmor %vm5327, %vm5328
  %v5330 = vsel %vm5329, %v5321, %v5326
  %v5331 = vrsqrt.pop %v5278
  %v5332 = vmul.f32 %v5331, %v5278
  %v5333 = vmul.f32 %v5332, %v5331
  %v5334 = vmul.f32 0.5, %v5333
  %v5335 = vsub.f32 1.5, %v5334
  %v5336 = vmul.f32 %v5331, %v5335
  %vm5337 = vweird.f32 %v5278
  %vm5338 = vweird.f32 %v5331
  %vm5339 = vmor %vm5337, %vm5338
  %v5340 = vsel %vm5339, %v5331, %v5336
  %v5341 = vrsqrt.pop %v5279
  %v5342 = vmul.f32 %v5341, %v5279
  %v5343 = vmul.f32 %v5342, %v5341
  %v5344 = vmul.f32 0.5, %v5343
  %v5345 = vsub.f32 1.5, %v5344
  %v5346 = vmul.f32 %v5341, %v5345
  %vm5347 = vweird.f32 %v5279
  %vm5348 = vweird.f32 %v5341
  %vm5349 = vmor %vm5347, %vm5348
  %v5350 = vsel %vm5349, %v5341, %v5346
  %v5351 = vrsqrt.pop %v5280
  %v5352 = vmul.f32 %v5351, %v5280
  %v5353 = vmul.f32 %v5352, %v5351
  %v5354 = vmul.f32 0.5, %v5353
  %v5355 = vsub.f32 1.5, %v5354
  %v5356 = vmul.f32 %v5351, %v5355
  %vm5357 = vweird.f32 %v5280
  %vm5358 = vweird.f32 %v5351
  %vm5359 = vmor %vm5357, %vm5358
  %v5360 = vsel %vm5359, %v5351, %v5356
  %v5361 = vmul.f32 %v5233, %v5290
  %v5362 = vmul.f32 %v5234, %v5300
  %v5363 = vmul.f32 %v5235, %v5310
  %v5364 = vmul.f32 %v5236, %v5320
  %v5365 = vmul.f32 %v5237, %v5330
  %v5366 = vmul.f32 %v5238, %v5340
  %v5367 = vmul.f32 %v5239, %v5350
  %v5368 = vmul.f32 %v5240, %v5360
  %v5369 = vld [vmem:[%s15] sm:$0x1]
  %v5371 = vperm.slane %v5369, 0
  %v5373 = vmul.f32 %v5361, %v5371
  %v5374 = vmul.f32 %v5362, %v5371
  %v5375 = vmul.f32 %v5363, %v5371
  %v5376 = vmul.f32 %v5364, %v5371
  %v5377 = vmul.f32 %v5365, %v5371
  %v5378 = vmul.f32 %v5366, %v5371
  %v5379 = vmul.f32 %v5367, %v5371
  %v5380 = vmul.f32 %v5368, %v5371
  %v5381 = vld [vmem:[%s16] sm:$0x1]
  %v5383 = vperm.slane %v5381, 0
  %v5385 = vadd.f32 %v5373, %v5383
  %v5386 = vadd.f32 %v5374, %v5383
  %v5387 = vadd.f32 %v5375, %v5383
  %v5388 = vadd.f32 %v5376, %v5383
  %v5389 = vadd.f32 %v5377, %v5383
  %v5390 = vadd.f32 %v5378, %v5383
  %v5391 = vadd.f32 %v5379, %v5383
  %v5392 = vadd.f32 %v5380, %v5383
  %5393 = vst [vmem:[%s17] sm:$0xff] %v5385
  %5394 = vst [vmem:[%s17 + $0x8] sm:$0xff] %v5386
  %5395 = vst [vmem:[%s17 + $0x10] sm:$0xff] %v5387
  %5396 = vst [vmem:[%s17 + $0x18] sm:$0xff] %v5388
  %5397 = vst [vmem:[%s17 + $0x20] sm:$0xff] %v5389
  %5398 = vst [vmem:[%s17 + $0x28] sm:$0xff] %v5390
  %5399 = vst [vmem:[%s17 + $0x30] sm:$0xff] %v5391
  %5400 = vst [vmem:[%s17 + $0x38] sm:$0xff] %v5392
  // Predicated region
  $region77: #{bert_seq_tagger_forward.3} parent=0 // pred_check
    _
  $region78: #{bert_seq_tagger_forward.3} parent=0 // pred_check_branch
    %5402 = sbr.rel (0) target = $region80
  $region79: #{bert_seq_tagger_forward.3} parent=0 // pred_region
    _
  $region80: #{bert_seq_tagger_forward.3} parent=0 // pred_fallthru
    _
  // Predicated region
  $region81: #{bert_seq_tagger_forward.3} parent=0 // pred_check
    _
  $region82: #{bert_seq_tagger_forward.3} parent=0 // pred_check_branch
    %5404 = sbr.rel (0) target = $region84
  $region83: #{bert_seq_tagger_forward.3} parent=0 // pred_region
    _
  $region84: #{bert_seq_tagger_forward.3} parent=0 // pred_fallthru
    _

</llo_original>
